<compile_context>
chip_gen: v7x
topology: tpu7x:2x2x1
jax: 0.10.0
libtpu: 0.0.40
codegen_flags: <defaults>
</compile_context>

<pallas_src>
import numpy as np

import jax
import jax.numpy as jnp
from jax.experimental import pallas as pl
from jax.experimental.pallas import tpu as pltpu


# ----------------------------------------------------------------------------
# Fused forward kernel.  Every activation is a 2-D (features, lanes) array with
# the pair/batch index in lanes; the two weight-shared images of each pair are
# the two lane halves [img1 | img2] of the tile.
# ----------------------------------------------------------------------------
def fused_forward_kernel(x_ref, t1_ref, t2_ref, w3_ref, wf1_ref, wf2_ref,
                         wcp_ref, out_ref):
    f32, bf16 = jnp.float32, jnp.bfloat16
    L = x_ref.shape[-1]                      # 2*tb lanes: [img1 tile | img2 tile]
    tb = L // 2

    def as_rhs(parts, lanes):
        # f32 parts -> append ones row (bias fold) -> bf16 matmul operand.
        return jnp.concatenate(parts + [jnp.ones((1, lanes), f32)], axis=0).astype(bf16)

    # conv1 over the whole image (bias folded): (4608, 197) @ (197, L) -> f32
    y1 = jnp.dot(t1_ref[...], x_ref[...], preferred_element_type=f32)

    # MaxPool2d(2) + ReLU.  y1 rows are ordered (oh*12 + pos(ow))*32 + c with the
    # even-ow positions in the first half, so column pooling is one half/half max.
    p1 = []
    for ph in range(6):
        rmax = jnp.maximum(y1[768 * ph:768 * ph + 384], y1[768 * ph + 384:768 * ph + 768])
        cmax = jnp.maximum(rmax[:192], rmax[192:])
        p1.append(jnp.maximum(cmax, 0.0))                     # (192, L), (pw*32+c)
    x2 = as_rhs(p1, L)                                        # (1153, L) = 6*6*32 + 1

    # conv2 over the whole pooled map (bias folded): (512, 1153) @ (1153, L)
    y2 = jnp.dot(t2_ref[...], x2, preferred_element_type=f32)

    # MaxPool2d(2) + ReLU (same even/odd column-split trick).
    p2 = []
    for ph in range(2):
        rmax = jnp.maximum(y2[256 * ph:256 * ph + 128], y2[256 * ph + 128:256 * ph + 256])
        cmax = jnp.maximum(rmax[:64], rmax[64:])
        p2.append(jnp.maximum(cmax, 0.0))                     # (64, L)
    x3 = as_rhs(p2, L)                                        # (129, L) = 2*2*32 + 1

    # Conv2d(32,64,2) on a 2x2 map == one matmul; then ReLU.
    y3 = jnp.maximum(jnp.dot(w3_ref[...], x3, preferred_element_type=f32), 0.0)   # (64, L)

    # Flatten -> Linear(64,200) + ReLU -> Linear(200,10)     (biases folded)
    x4 = as_rhs([y3], L)                                                           # (65, L)
    h1 = jnp.maximum(jnp.dot(wf1_ref[...], x4, preferred_element_type=f32), 0.0)   # (200, L)
    x5 = as_rhs([h1], L)                                                           # (201, L)
    logits = jnp.dot(wf2_ref[...], x5, preferred_element_type=f32)                 # (10, L)

    l1 = logits[:, :tb]                      # image-1 logits of this pair tile
    l2 = logits[:, tb:]                      # image-2 logits

    # comp head: ReLU -> Linear(20, 2), as one (2,21)@(21,tb) matmul (bias folded).
    r = as_rhs([jnp.maximum(l1, 0.0), jnp.maximum(l2, 0.0)], tb)                   # (21, tb)
    pred = jnp.dot(wcp_ref[...], r, preferred_element_type=f32)                    # (2, tb)

    # Single lane-dense output block; split into pred / l1 / l2 on the host.
    out_ref[...] = jnp.concatenate([pred, l1, l2], axis=0)                         # (22, tb)


# ----------------------------------------------------------------------------
# Host-side parameter preparation (one-time, plain numpy).
# ----------------------------------------------------------------------------
def _full_conv_toeplitz(w, b, in_h, in_w):
    """Whole-image VALID conv as one banded matrix, with a MaxPool2d(2)-friendly
    output-row ordering (even output columns first, then odd) and the bias folded
    in as a trailing column (the RHS carries a trailing ones row).

      row:  (oh*out_w + pos(ow))*cout + co,   pos(ow) = ow//2 (+ out_w//2 if ow odd)
      col:  (ih*in_w + iw)*cin + ci,          plus one trailing bias column
    """
    cout, cin, kh, kw = w.shape
    out_h, out_w = in_h - kh + 1, in_w - kw + 1
    half = out_w // 2
    T = np.zeros((out_h * out_w * cout, in_h * in_w * cin + 1), np.float32)
    for oh in range(out_h):
        for ow in range(out_w):
            pos = ow // 2 if ow % 2 == 0 else half + ow // 2
            r0 = (oh * out_w + pos) * cout
            for i in range(kh):
                for j in range(kw):
                    c0 = ((oh + i) * in_w + (ow + j)) * cin
                    T[r0:r0 + cout, c0:c0 + cin] = w[:, :, i, j]
            T[r0:r0 + cout, -1] = b
    return T


def prepare_kernel_params(tp, matmul_dtype=jnp.bfloat16):
    f = lambda a: np.asarray(a, np.float32)
    t1 = _full_conv_toeplitz(f(tp["w_c1"]), f(tp["b_c1"]), 14, 14)             # (4608, 197)
    t2 = _full_conv_toeplitz(f(tp["w_c2"]), f(tp["b_c2"]), 6, 6)               # (512, 1153)
    w3 = np.concatenate([np.transpose(f(tp["w_c3"]), (0, 2, 3, 1)).reshape(64, 128),
                         f(tp["b_c3"])[:, None]], axis=1)                       # (64, 129)
    wf1 = np.concatenate([f(tp["w_f1"]), f(tp["b_f1"])[:, None]], axis=1)       # (200, 65)
    wf2 = np.concatenate([f(tp["w_f2"]), f(tp["b_f2"])[:, None]], axis=1)       # (10, 201)
    wcp = np.concatenate([f(tp["w_cp"]), f(tp["b_cp"])[:, None]], axis=1)       # (2, 21)
    return {k: jnp.asarray(v, matmul_dtype)
            for k, v in dict(t1=t1, t2=t2, w3=w3, wf1=wf1, wf2=wf2, wcp=wcp).items()}


# ----------------------------------------------------------------------------
# Forward wrapper: one pallas_call for the whole model.
# ----------------------------------------------------------------------------
def _round_up(n, m):
    return ((n + m - 1) // m) * m


def deep_model_ws_forward(x_nchw, kp, tb=256):
    """x_nchw: (N, 2, 14, 14) -> (pred (N,2), img_1_pred (N,10), img_2_pred (N,10))."""
    N = x_nchw.shape[0]
    # Clamp the lane tile so large batches always give >= 2 grid tiles (v7x: both
    # TensorCores get work on the "parallel" axis) and tiny batches are not over-padded.
    tb_eff = int(min(tb, max(128, _round_up(int(pl.cdiv(N, 2)), 128))))
    n_tiles = int(pl.cdiv(N, tb_eff))
    Np = n_tiles * tb_eff
    L = 2 * tb_eff                             # lanes per grid step: [img1 | img2]

    # Host-side layout: (N,2,14,14) -> pixels (h*14+w) on sublanes, pair idx in lanes,
    # append ones row (bias fold), per-tile lane order [img1 | img2], ship as bf16.
    x = jnp.transpose(x_nchw.astype(jnp.float32).reshape(N, 2, 196), (2, 1, 0))   # (196,2,N)
    x = jnp.pad(x, ((0, 0), (0, 0), (0, Np - N)))
    x = jnp.concatenate([x, jnp.ones((1, 2, Np), jnp.float32)], axis=0)           # (197,2,Np)
    x = jnp.transpose(x.reshape(197, 2, n_tiles, tb_eff), (0, 2, 1, 3))
    x = x.reshape(197, n_tiles * L).astype(kp["t1"].dtype)

    weights = (kp["t1"], kp["t2"], kp["w3"], kp["wf1"], kp["wf2"], kp["wcp"])
    in_specs = ([pl.BlockSpec((197, L), lambda t: (0, t))]
                + [pl.BlockSpec(w.shape, lambda t: (0, 0)) for w in weights])

    out = pl.pallas_call(
        fused_forward_kernel,
        out_shape=jax.ShapeDtypeStruct((22, Np), jnp.float32),
        grid=(n_tiles,),
        in_specs=in_specs,
        out_specs=pl.BlockSpec((22, tb_eff), lambda t: (0, t)),
        compiler_params=pltpu.CompilerParams(
            dimension_semantics=("parallel",),     # v7x: shard pair tiles over both TCs
            vmem_limit_bytes=48 * 1024 * 1024,     # sized for tb<=256; bump if tb raised
        ),
    )(x, *weights)

    pred = out[0:2, :N].T
    img_1_pred = out[2:12, :N].T
    img_2_pred = out[12:22, :N].T
    return pred, img_1_pred, img_2_pred
    # TODO(synk): train_model (SGD loop / CrossEntropyLoss) is training code, not the
    # forward pass; intentionally not ported.


# ----------------------------------------------------------------------------
# Deterministic synthetic parameters (PyTorch layouts) + plain-JAX references.
# ----------------------------------------------------------------------------
def init_torch_params(key, nb_hidden=200):
    ks = jax.random.split(key, 12)
    s = 0.1
    return {
        "w_c1": s * jax.random.normal(ks[0], (32, 1, 3, 3), jnp.float32),
        "b_c1": s * jax.random.normal(ks[1], (32,), jnp.float32),
        "w_c2": s * jax.random.normal(ks[2], (32, 32, 3, 3), jnp.float32),
        "b_c2": s * jax.random.normal(ks[3], (32,), jnp.float32),
        "w_c3": s * jax.random.normal(ks[4], (64, 32, 2, 2), jnp.float32),
        "b_c3": s * jax.random.normal(ks[5], (64,), jnp.float32),
        "w_f1": s * jax.random.normal(ks[6], (nb_hidden, 64), jnp.float32),
        "b_f1": s * jax.random.normal(ks[7], (nb_hidden,), jnp.float32),
        "w_f2": s * jax.random.normal(ks[8], (10, nb_hidden), jnp.float32),
        "b_f2": s * jax.random.normal(ks[9], (10,), jnp.float32),
        "w_cp": s * jax.random.normal(ks[10], (2, 20), jnp.float32),
        "b_cp": s * jax.random.normal(ks[11], (2,), jnp.float32),
    }


def _ref_conv(x, w, b, dt):
    y = jax.lax.conv_general_dilated(
        x.astype(dt), w.astype(dt), window_strides=(1, 1), padding="VALID",
        dimension_numbers=("NCHW", "OIHW", "NCHW"),
        preferred_element_type=jnp.float32)
    return y + b.astype(dt).astype(jnp.float32)[None, :, None, None]


def _ref_pool_relu(x):
    y = jax.lax.reduce_window(x, -jnp.inf, jax.lax.max,
                              (1, 1, 2, 2), (1, 1, 2, 2), "VALID")
    return jnp.maximum(y, 0.0)


def _ref_linear(x, w, b, dt):
    return (jnp.dot(x.astype(dt), w.astype(dt).T, preferred_element_type=jnp.float32)
            + b.astype(dt).astype(jnp.float32))


def _ref_trunk(img, tp, dt):
    y = _ref_pool_relu(_ref_conv(img, tp["w_c1"], tp["b_c1"], dt))
    y = _ref_pool_relu(_ref_conv(y, tp["w_c2"], tp["b_c2"], dt))
    y = jnp.maximum(_ref_conv(y, tp["w_c3"], tp["b_c3"], dt), 0.0)
    y = y.reshape(y.shape[0], -1)
    y = jnp.maximum(_ref_linear(y, tp["w_f1"], tp["b_f1"], dt), 0.0)
    return _ref_linear(y, tp["w_f2"], tp["b_f2"], dt)


def reference_forward(x, tp, matmul_dtype=jnp.float32):
    l1 = _ref_trunk(x[:, 0:1], tp, matmul_dtype)
    l2 = _ref_trunk(x[:, 1:2], tp, matmul_dtype)
    lab = jnp.maximum(jnp.concatenate([l1, l2], axis=1), 0.0)
    pred = _ref_linear(lab, tp["w_cp"], tp["b_cp"], matmul_dtype)
    return pred, l1, l2


if __name__ == "__main__":
    key = jax.random.PRNGKey(0)
    k_x, k_p = jax.random.split(key)

    N = 2  # pairs of 14x14 single-channel images, as the module expects
    x = jax.random.normal(k_x, (N, 2, 14, 14), jnp.float32)
    tparams = init_torch_params(k_p, nb_hidden=200)
    kparams = prepare_kernel_params(tparams)

    fwd = jax.jit(lambda xx: deep_model_ws_forward(xx, kparams))
    pred, p1, p2 = fwd(x)
    jax.block_until_ready((pred, p1, p2))
    assert pred.shape == (N, 2) and p1.shape == (N, 10) and p2.shape == (N, 10)

    # (1) Tight check vs a bf16-matched plain-JAX reference (same operand rounding,
    #     f32 accumulation) -- validates the Toeplitz / pooling / bias-fold logic.
    mpred, mp1, mp2 = jax.jit(
        lambda xx: reference_forward(xx, tparams, matmul_dtype=jnp.bfloat16))(x)
    for got, ref in ((pred, mpred), (p1, mp1), (p2, mp2)):
        err = float(jnp.max(jnp.abs(got - ref)))
        assert jnp.allclose(got, ref, atol=2e-3, rtol=2e-3), err

    # (2) Loose sanity check vs the pure-f32 reference (slack accounts for the
    #     bf16 matmul operands used in the kernel).
    fpred, fp1, fp2 = jax.jit(
        lambda xx: reference_forward(xx, tparams, matmul_dtype=jnp.float32))(x)
    for got, ref in ((pred, fpred), (p1, fp1), (p2, fp2)):
        err = float(jnp.max(jnp.abs(got - ref)))
        assert jnp.allclose(got, ref, atol=8e-2, rtol=8e-2), err

    print("KERNEL_OK")
</pallas_src>

<mosaic_0001>
module attributes {stable_mosaic.version = 11 : i64} {
  func.func @fused_forward_kernel(%arg0: i32, %arg1: memref<197x256xbf16, #tpu.memory_space<vmem>>, %arg2: memref<4608x197xbf16, #tpu.memory_space<vmem>>, %arg3: memref<512x1153xbf16, #tpu.memory_space<vmem>>, %arg4: memref<64x129xbf16, #tpu.memory_space<vmem>>, %arg5: memref<200x65xbf16, #tpu.memory_space<vmem>>, %arg6: memref<10x201xbf16, #tpu.memory_space<vmem>>, %arg7: memref<2x21xbf16, #tpu.memory_space<vmem>>, %arg8: memref<22x128xf32, #tpu.memory_space<vmem>>) attributes {dimension_semantics = [#tpu.dimension_semantics<parallel>], iteration_bounds = array<i64: 1>, scalar_prefetch = 0 : i64, scratch_operands = 0 : i64, tpu.core_type = #tpu.core_type<tc>, window_params = [{transform_indices = @transform_0, window_bounds = array<i64: 197, 256>}, {pipeline_mode = #tpu.pipeline_mode<synchronous>, transform_indices = @transform_1, window_bounds = array<i64: 4608, 197>}, {pipeline_mode = #tpu.pipeline_mode<synchronous>, transform_indices = @transform_2, window_bounds = array<i64: 512, 1153>}, {pipeline_mode = #tpu.pipeline_mode<synchronous>, transform_indices = @transform_3, window_bounds = array<i64: 64, 129>}, {pipeline_mode = #tpu.pipeline_mode<synchronous>, transform_indices = @transform_4, window_bounds = array<i64: 200, 65>}, {pipeline_mode = #tpu.pipeline_mode<synchronous>, transform_indices = @transform_5, window_bounds = array<i64: 10, 201>}, {pipeline_mode = #tpu.pipeline_mode<synchronous>, transform_indices = @transform_6, window_bounds = array<i64: 2, 21>}, {transform_indices = @transform_7, window_bounds = array<i64: 22, 128>}]} {
    %c0 = arith.constant 0 : index
    %c0_0 = arith.constant 0 : index
    %0 = vector.load %arg2[%c0, %c0_0] : memref<4608x197xbf16, #tpu.memory_space<vmem>>, vector<4608x197xbf16>
    %c0_1 = arith.constant 0 : index
    %c0_2 = arith.constant 0 : index
    %1 = vector.load %arg1[%c0_1, %c0_2] : memref<197x256xbf16, #tpu.memory_space<vmem>>, vector<197x256xbf16>
    %cst = arith.constant dense<0.000000e+00> : vector<4608x256xf32>
    %2 = tpu.matmul %0, %1, %cst {dimension_numbers = #tpu.dot_dimension_numbers<[1], [0], [0], [1], [0, 0, 1, 1], [], []>} : vector<4608x197xbf16>, vector<197x256xbf16>, vector<4608x256xf32> -> vector<4608x256xf32>
    %3 = vector.extract_strided_slice %2 {offsets = [0, 0], sizes = [384, 256], strides = [1, 1]} : vector<4608x256xf32> to vector<384x256xf32>
    %4 = vector.extract_strided_slice %2 {offsets = [384, 0], sizes = [384, 256], strides = [1, 1]} : vector<4608x256xf32> to vector<384x256xf32>
    %5 = arith.maximumf %3, %4 : vector<384x256xf32>
    %6 = vector.extract_strided_slice %5 {offsets = [0, 0], sizes = [192, 256], strides = [1, 1]} : vector<384x256xf32> to vector<192x256xf32>
    %7 = vector.extract_strided_slice %5 {offsets = [192, 0], sizes = [192, 256], strides = [1, 1]} : vector<384x256xf32> to vector<192x256xf32>
    %8 = arith.maximumf %6, %7 : vector<192x256xf32>
    %cst_3 = arith.constant 0.000000e+00 : f32
    %9 = vector.broadcast %cst_3 : f32 to vector<192x256xf32>
    %10 = arith.maximumf %8, %9 : vector<192x256xf32>
    %11 = vector.extract_strided_slice %2 {offsets = [768, 0], sizes = [384, 256], strides = [1, 1]} : vector<4608x256xf32> to vector<384x256xf32>
    %12 = vector.extract_strided_slice %2 {offsets = [1152, 0], sizes = [384, 256], strides = [1, 1]} : vector<4608x256xf32> to vector<384x256xf32>
    %13 = arith.maximumf %11, %12 : vector<384x256xf32>
    %14 = vector.extract_strided_slice %13 {offsets = [0, 0], sizes = [192, 256], strides = [1, 1]} : vector<384x256xf32> to vector<192x256xf32>
    %15 = vector.extract_strided_slice %13 {offsets = [192, 0], sizes = [192, 256], strides = [1, 1]} : vector<384x256xf32> to vector<192x256xf32>
    %16 = arith.maximumf %14, %15 : vector<192x256xf32>
    %cst_4 = arith.constant 0.000000e+00 : f32
    %17 = vector.broadcast %cst_4 : f32 to vector<192x256xf32>
    %18 = arith.maximumf %16, %17 : vector<192x256xf32>
    %19 = vector.extract_strided_slice %2 {offsets = [1536, 0], sizes = [384, 256], strides = [1, 1]} : vector<4608x256xf32> to vector<384x256xf32>
    %20 = vector.extract_strided_slice %2 {offsets = [1920, 0], sizes = [384, 256], strides = [1, 1]} : vector<4608x256xf32> to vector<384x256xf32>
    %21 = arith.maximumf %19, %20 : vector<384x256xf32>
    %22 = vector.extract_strided_slice %21 {offsets = [0, 0], sizes = [192, 256], strides = [1, 1]} : vector<384x256xf32> to vector<192x256xf32>
    %23 = vector.extract_strided_slice %21 {offsets = [192, 0], sizes = [192, 256], strides = [1, 1]} : vector<384x256xf32> to vector<192x256xf32>
    %24 = arith.maximumf %22, %23 : vector<192x256xf32>
    %cst_5 = arith.constant 0.000000e+00 : f32
    %25 = vector.broadcast %cst_5 : f32 to vector<192x256xf32>
    %26 = arith.maximumf %24, %25 : vector<192x256xf32>
    %27 = vector.extract_strided_slice %2 {offsets = [2304, 0], sizes = [384, 256], strides = [1, 1]} : vector<4608x256xf32> to vector<384x256xf32>
    %28 = vector.extract_strided_slice %2 {offsets = [2688, 0], sizes = [384, 256], strides = [1, 1]} : vector<4608x256xf32> to vector<384x256xf32>
    %29 = arith.maximumf %27, %28 : vector<384x256xf32>
    %30 = vector.extract_strided_slice %29 {offsets = [0, 0], sizes = [192, 256], strides = [1, 1]} : vector<384x256xf32> to vector<192x256xf32>
    %31 = vector.extract_strided_slice %29 {offsets = [192, 0], sizes = [192, 256], strides = [1, 1]} : vector<384x256xf32> to vector<192x256xf32>
    %32 = arith.maximumf %30, %31 : vector<192x256xf32>
    %cst_6 = arith.constant 0.000000e+00 : f32
    %33 = vector.broadcast %cst_6 : f32 to vector<192x256xf32>
    %34 = arith.maximumf %32, %33 : vector<192x256xf32>
    %35 = vector.extract_strided_slice %2 {offsets = [3072, 0], sizes = [384, 256], strides = [1, 1]} : vector<4608x256xf32> to vector<384x256xf32>
    %36 = vector.extract_strided_slice %2 {offsets = [3456, 0], sizes = [384, 256], strides = [1, 1]} : vector<4608x256xf32> to vector<384x256xf32>
    %37 = arith.maximumf %35, %36 : vector<384x256xf32>
    %38 = vector.extract_strided_slice %37 {offsets = [0, 0], sizes = [192, 256], strides = [1, 1]} : vector<384x256xf32> to vector<192x256xf32>
    %39 = vector.extract_strided_slice %37 {offsets = [192, 0], sizes = [192, 256], strides = [1, 1]} : vector<384x256xf32> to vector<192x256xf32>
    %40 = arith.maximumf %38, %39 : vector<192x256xf32>
    %cst_7 = arith.constant 0.000000e+00 : f32
    %41 = vector.broadcast %cst_7 : f32 to vector<192x256xf32>
    %42 = arith.maximumf %40, %41 : vector<192x256xf32>
    %43 = vector.extract_strided_slice %2 {offsets = [3840, 0], sizes = [384, 256], strides = [1, 1]} : vector<4608x256xf32> to vector<384x256xf32>
    %44 = vector.extract_strided_slice %2 {offsets = [4224, 0], sizes = [384, 256], strides = [1, 1]} : vector<4608x256xf32> to vector<384x256xf32>
    %45 = arith.maximumf %43, %44 : vector<384x256xf32>
    %46 = vector.extract_strided_slice %45 {offsets = [0, 0], sizes = [192, 256], strides = [1, 1]} : vector<384x256xf32> to vector<192x256xf32>
    %47 = vector.extract_strided_slice %45 {offsets = [192, 0], sizes = [192, 256], strides = [1, 1]} : vector<384x256xf32> to vector<192x256xf32>
    %48 = arith.maximumf %46, %47 : vector<192x256xf32>
    %cst_8 = arith.constant 0.000000e+00 : f32
    %49 = vector.broadcast %cst_8 : f32 to vector<192x256xf32>
    %50 = arith.maximumf %48, %49 : vector<192x256xf32>
    %cst_9 = arith.constant 1.000000e+00 : f32
    %51 = vector.broadcast %cst_9 : f32 to vector<1x256xf32>
    %52 = tpu.concatenate %10, %18, %26, %34, %42, %50, %51 in 0 : vector<192x256xf32>, vector<192x256xf32>, vector<192x256xf32>, vector<192x256xf32>, vector<192x256xf32>, vector<192x256xf32>, vector<1x256xf32> -> vector<1153x256xf32>
    %53 = arith.truncf %52 : vector<1153x256xf32> to vector<1153x256xbf16>
    %c0_10 = arith.constant 0 : index
    %c0_11 = arith.constant 0 : index
    %54 = vector.load %arg3[%c0_10, %c0_11] : memref<512x1153xbf16, #tpu.memory_space<vmem>>, vector<512x1153xbf16>
    %cst_12 = arith.constant dense<0.000000e+00> : vector<512x256xf32>
    %55 = tpu.matmul %54, %53, %cst_12 {dimension_numbers = #tpu.dot_dimension_numbers<[1], [0], [0], [1], [0, 0, 1, 1], [], []>} : vector<512x1153xbf16>, vector<1153x256xbf16>, vector<512x256xf32> -> vector<512x256xf32>
    %56 = vector.extract_strided_slice %55 {offsets = [0, 0], sizes = [128, 256], strides = [1, 1]} : vector<512x256xf32> to vector<128x256xf32>
    %57 = vector.extract_strided_slice %55 {offsets = [128, 0], sizes = [128, 256], strides = [1, 1]} : vector<512x256xf32> to vector<128x256xf32>
    %58 = arith.maximumf %56, %57 : vector<128x256xf32>
    %59 = vector.extract_strided_slice %58 {offsets = [0, 0], sizes = [64, 256], strides = [1, 1]} : vector<128x256xf32> to vector<64x256xf32>
    %60 = vector.extract_strided_slice %58 {offsets = [64, 0], sizes = [64, 256], strides = [1, 1]} : vector<128x256xf32> to vector<64x256xf32>
    %61 = arith.maximumf %59, %60 : vector<64x256xf32>
    %cst_13 = arith.constant 0.000000e+00 : f32
    %62 = vector.broadcast %cst_13 : f32 to vector<64x256xf32>
    %63 = arith.maximumf %61, %62 : vector<64x256xf32>
    %64 = vector.extract_strided_slice %55 {offsets = [256, 0], sizes = [128, 256], strides = [1, 1]} : vector<512x256xf32> to vector<128x256xf32>
    %65 = vector.extract_strided_slice %55 {offsets = [384, 0], sizes = [128, 256], strides = [1, 1]} : vector<512x256xf32> to vector<128x256xf32>
    %66 = arith.maximumf %64, %65 : vector<128x256xf32>
    %67 = vector.extract_strided_slice %66 {offsets = [0, 0], sizes = [64, 256], strides = [1, 1]} : vector<128x256xf32> to vector<64x256xf32>
    %68 = vector.extract_strided_slice %66 {offsets = [64, 0], sizes = [64, 256], strides = [1, 1]} : vector<128x256xf32> to vector<64x256xf32>
    %69 = arith.maximumf %67, %68 : vector<64x256xf32>
    %cst_14 = arith.constant 0.000000e+00 : f32
    %70 = vector.broadcast %cst_14 : f32 to vector<64x256xf32>
    %71 = arith.maximumf %69, %70 : vector<64x256xf32>
    %cst_15 = arith.constant 1.000000e+00 : f32
    %72 = vector.broadcast %cst_15 : f32 to vector<1x256xf32>
    %73 = tpu.concatenate %63, %71, %72 in 0 : vector<64x256xf32>, vector<64x256xf32>, vector<1x256xf32> -> vector<129x256xf32>
    %74 = arith.truncf %73 : vector<129x256xf32> to vector<129x256xbf16>
    %c0_16 = arith.constant 0 : index
    %c0_17 = arith.constant 0 : index
    %75 = vector.load %arg4[%c0_16, %c0_17] : memref<64x129xbf16, #tpu.memory_space<vmem>>, vector<64x129xbf16>
    %cst_18 = arith.constant dense<0.000000e+00> : vector<64x256xf32>
    %76 = tpu.matmul %75, %74, %cst_18 {dimension_numbers = #tpu.dot_dimension_numbers<[1], [0], [0], [1], [0, 0, 1, 1], [], []>} : vector<64x129xbf16>, vector<129x256xbf16>, vector<64x256xf32> -> vector<64x256xf32>
    %cst_19 = arith.constant 0.000000e+00 : f32
    %77 = vector.broadcast %cst_19 : f32 to vector<64x256xf32>
    %78 = arith.maximumf %76, %77 : vector<64x256xf32>
    %cst_20 = arith.constant 1.000000e+00 : f32
    %79 = vector.broadcast %cst_20 : f32 to vector<1x256xf32>
    %80 = tpu.concatenate %78, %79 in 0 : vector<64x256xf32>, vector<1x256xf32> -> vector<65x256xf32>
    %81 = arith.truncf %80 : vector<65x256xf32> to vector<65x256xbf16>
    %c0_21 = arith.constant 0 : index
    %c0_22 = arith.constant 0 : index
    %82 = vector.load %arg5[%c0_21, %c0_22] : memref<200x65xbf16, #tpu.memory_space<vmem>>, vector<200x65xbf16>
    %cst_23 = arith.constant dense<0.000000e+00> : vector<200x256xf32>
    %83 = tpu.matmul %82, %81, %cst_23 {dimension_numbers = #tpu.dot_dimension_numbers<[1], [0], [0], [1], [0, 0, 1, 1], [], []>} : vector<200x65xbf16>, vector<65x256xbf16>, vector<200x256xf32> -> vector<200x256xf32>
    %cst_24 = arith.constant 0.000000e+00 : f32
    %84 = vector.broadcast %cst_24 : f32 to vector<200x256xf32>
    %85 = arith.maximumf %83, %84 : vector<200x256xf32>
    %cst_25 = arith.constant 1.000000e+00 : f32
    %86 = vector.broadcast %cst_25 : f32 to vector<1x256xf32>
    %87 = tpu.concatenate %85, %86 in 0 : vector<200x256xf32>, vector<1x256xf32> -> vector<201x256xf32>
    %88 = arith.truncf %87 : vector<201x256xf32> to vector<201x256xbf16>
    %c0_26 = arith.constant 0 : index
    %c0_27 = arith.constant 0 : index
    %89 = vector.load %arg6[%c0_26, %c0_27] : memref<10x201xbf16, #tpu.memory_space<vmem>>, vector<10x201xbf16>
    %cst_28 = arith.constant dense<0.000000e+00> : vector<10x256xf32>
    %90 = tpu.matmul %89, %88, %cst_28 {dimension_numbers = #tpu.dot_dimension_numbers<[1], [0], [0], [1], [0, 0, 1, 1], [], []>} : vector<10x201xbf16>, vector<201x256xbf16>, vector<10x256xf32> -> vector<10x256xf32>
    %91 = vector.extract_strided_slice %90 {offsets = [0, 0], sizes = [10, 128], strides = [1, 1]} : vector<10x256xf32> to vector<10x128xf32>
    %92 = vector.extract_strided_slice %90 {offsets = [0, 128], sizes = [10, 128], strides = [1, 1]} : vector<10x256xf32> to vector<10x128xf32>
    %cst_29 = arith.constant 0.000000e+00 : f32
    %93 = vector.broadcast %cst_29 : f32 to vector<10x128xf32>
    %94 = arith.maximumf %91, %93 : vector<10x128xf32>
    %cst_30 = arith.constant 0.000000e+00 : f32
    %95 = vector.broadcast %cst_30 : f32 to vector<10x128xf32>
    %96 = arith.maximumf %92, %95 : vector<10x128xf32>
    %cst_31 = arith.constant 1.000000e+00 : f32
    %97 = vector.broadcast %cst_31 : f32 to vector<1x128xf32>
    %98 = tpu.concatenate %94, %96, %97 in 0 : vector<10x128xf32>, vector<10x128xf32>, vector<1x128xf32> -> vector<21x128xf32>
    %99 = arith.truncf %98 : vector<21x128xf32> to vector<21x128xbf16>
    %c0_32 = arith.constant 0 : index
    %c0_33 = arith.constant 0 : index
    %100 = vector.load %arg7[%c0_32, %c0_33] : memref<2x21xbf16, #tpu.memory_space<vmem>>, vector<2x21xbf16>
    %cst_34 = arith.constant dense<0.000000e+00> : vector<2x128xf32>
    %101 = tpu.matmul %100, %99, %cst_34 {dimension_numbers = #tpu.dot_dimension_numbers<[1], [0], [0], [1], [0, 0, 1, 1], [], []>} : vector<2x21xbf16>, vector<21x128xbf16>, vector<2x128xf32> -> vector<2x128xf32>
    %102 = tpu.concatenate %101, %91, %92 in 0 : vector<2x128xf32>, vector<10x128xf32>, vector<10x128xf32> -> vector<22x128xf32>
    %c0_35 = arith.constant 0 : index
    %c0_36 = arith.constant 0 : index
    %103 = vector.load %arg8[%c0_35, %c0_36] : memref<22x128xf32, #tpu.memory_space<vmem>>, vector<22x128xf32>
    tpu.vector_store %arg8[%c0_35, %c0_36], %102 {strides = array<i32>} : memref<22x128xf32, #tpu.memory_space<vmem>>, vector<22x128xf32>,
    return
  }
  func.func @transform_0(%arg0: i32) -> (i32, i32) {
    %c0_i32 = arith.constant 0 : i32
    %c0_i32_0 = arith.constant 0 : i32
    return %c0_i32, %arg0 : i32, i32
  }
  func.func @transform_1(%arg0: i32) -> (i32, i32) {
    %c0_i32 = arith.constant 0 : i32
    %c0_i32_0 = arith.constant 0 : i32
    %c0_i32_1 = arith.constant 0 : i32
    return %c0_i32, %c0_i32_0 : i32, i32
  }
  func.func @transform_2(%arg0: i32) -> (i32, i32) {
    %c0_i32 = arith.constant 0 : i32
    %c0_i32_0 = arith.constant 0 : i32
    %c0_i32_1 = arith.constant 0 : i32
    return %c0_i32, %c0_i32_0 : i32, i32
  }
  func.func @transform_3(%arg0: i32) -> (i32, i32) {
    %c0_i32 = arith.constant 0 : i32
    %c0_i32_0 = arith.constant 0 : i32
    %c0_i32_1 = arith.constant 0 : i32
    return %c0_i32, %c0_i32_0 : i32, i32
  }
  func.func @transform_4(%arg0: i32) -> (i32, i32) {
    %c0_i32 = arith.constant 0 : i32
    %c0_i32_0 = arith.constant 0 : i32
    %c0_i32_1 = arith.constant 0 : i32
    return %c0_i32, %c0_i32_0 : i32, i32
  }
  func.func @transform_5(%arg0: i32) -> (i32, i32) {
    %c0_i32 = arith.constant 0 : i32
    %c0_i32_0 = arith.constant 0 : i32
    %c0_i32_1 = arith.constant 0 : i32
    return %c0_i32, %c0_i32_0 : i32, i32
  }
  func.func @transform_6(%arg0: i32) -> (i32, i32) {
    %c0_i32 = arith.constant 0 : i32
    %c0_i32_0 = arith.constant 0 : i32
    %c0_i32_1 = arith.constant 0 : i32
    return %c0_i32, %c0_i32_0 : i32, i32
  }
  func.func @transform_7(%arg0: i32) -> (i32, i32) {
    %c0_i32 = arith.constant 0 : i32
    %c0_i32_0 = arith.constant 0 : i32
    return %c0_i32, %arg0 : i32, i32
  }
}

</mosaic_0001>

<llo_original>
// kernel: _lambda_.1
$region0: #{_lambda_.1}
  #allocation0 [shape = 'u32[]', space=smem, size = 0x4, offset = 0x4, fixed_abs, tag = 'smem constant byte address 0x4 - core index']
  #allocation1 [shape = 'u32[144,128]{1,0:T(1,128)}', space=vmem, size = 0x12000, scoped, tag = 'internal scratch']
  %s0 = inlined_call_operand.vmem [shape: bf16[197,256], index: 0, kind: input, shape index: {}]
  %s1 = inlined_call_operand.vmem [shape: bf16[4608,197], index: 1, kind: input, shape index: {}]
  %s2 = inlined_call_operand.vmem [shape: bf16[512,1153], index: 2, kind: input, shape index: {}]
  %s3 = inlined_call_operand.vmem [shape: bf16[64,129], index: 3, kind: input, shape index: {}]
  %s4 = inlined_call_operand.vmem [shape: bf16[200,65], index: 4, kind: input, shape index: {}]
  %s5 = inlined_call_operand.vmem [shape: bf16[10,201], index: 5, kind: input, shape index: {}]
  %s6 = inlined_call_operand.vmem [shape: bf16[2,21], index: 6, kind: input, shape index: {}]
  %s7 = inlined_call_operand.vmem [shape: f32[22,128], index: 7, kind: output, shape index: {}]
  %s8 = sld [smem:[#allocation0]]
  $region38: #{_lambda_.1} parent=0
    _
  %s10 = ssub.s32 1, %s8
  %s11 = scalar_select 0, %s10, %s8
  // Predicated region
  $region2: #{_lambda_.1} parent=0 // pred_check
    _
  $region3: #{_lambda_.1} parent=0 // pred_check_branch
    %13 = sbr.rel (0) target = $region5
  $region4: #{_lambda_.1} parent=0 // pred_region
    _
  $region5: #{_lambda_.1} parent=0 // pred_fallthru
    _
  // Predicated region
  $region6: #{_lambda_.1} parent=0 // pred_check
    _
  $region7: #{_lambda_.1} parent=0 // pred_check_branch
    %15 = sbr.rel (0) target = $region9
  $region8: #{_lambda_.1} parent=0 // pred_region
    _
  $region9: #{_lambda_.1} parent=0 // pred_fallthru
    _
  // Predicated region
  $region10: #{_lambda_.1} parent=0 // pred_check
    _
  $region11: #{_lambda_.1} parent=0 // pred_check_branch
    %17 = sbr.rel (0) target = $region13
  $region12: #{_lambda_.1} parent=0 // pred_region
    _
  $region13: #{_lambda_.1} parent=0 // pred_fallthru
    _
  // Predicated region
  $region14: #{_lambda_.1} parent=0 // pred_check
    _
  $region15: #{_lambda_.1} parent=0 // pred_check_branch
    %19 = sbr.rel (0) target = $region17
  $region16: #{_lambda_.1} parent=0 // pred_region
    _
  $region17: #{_lambda_.1} parent=0 // pred_fallthru
    _
  // Predicated region
  $region18: #{_lambda_.1} parent=0 // pred_check
    _
  $region19: #{_lambda_.1} parent=0 // pred_check_branch
    %21 = sbr.rel (0) target = $region21
  $region20: #{_lambda_.1} parent=0 // pred_region
    _
  $region21: #{_lambda_.1} parent=0 // pred_fallthru
    _
  // Predicated region
  $region22: #{_lambda_.1} parent=0 // pred_check
    _
  $region23: #{_lambda_.1} parent=0 // pred_check_branch
    %23 = sbr.rel (0) target = $region25
  $region24: #{_lambda_.1} parent=0 // pred_region
    _
  $region25: #{_lambda_.1} parent=0 // pred_fallthru
    _
  // Predicated region
  $region26: #{_lambda_.1} parent=0 // pred_check
    _
  $region27: #{_lambda_.1} parent=0 // pred_check_branch
    %25 = sbr.rel (0) target = $region29
  $region28: #{_lambda_.1} parent=0 // pred_region
    _
  $region29: #{_lambda_.1} parent=0 // pred_fallthru
    _
  %v27 = vld [vmem:[%s1] sm:$0xff]
  %v28 = vld [vmem:[%s1 + $0x8] sm:$0xff]
  %v29 = vld [vmem:[%s1 + $0x10] sm:$0xff]
  %v30 = vld [vmem:[%s1 + $0x18] sm:$0xff]
  %v31 = vld [vmem:[%s1 + $0x20] sm:$0xff]
  %v32 = vld [vmem:[%s1 + $0x28] sm:$0xff]
  %v33 = vld [vmem:[%s1 + $0x30] sm:$0xff]
  %v34 = vld [vmem:[%s1 + $0x38] sm:$0xff]
  %v35 = vld [vmem:[%s1 + $0x40] sm:$0xff]
  %v36 = vld [vmem:[%s1 + $0x48] sm:$0xff]
  %v37 = vld [vmem:[%s1 + $0x50] sm:$0xff]
  %v38 = vld [vmem:[%s1 + $0x58] sm:$0xff]
  %v39 = vld [vmem:[%s1 + $0x60] sm:$0xff]
  %v40 = vld [vmem:[%s1 + $0x68] sm:$0xff]
  %v41 = vld [vmem:[%s1 + $0x70] sm:$0xff]
  %v42 = vld [vmem:[%s1 + $0x78] sm:$0xff]
  %v43 = vld [vmem:[%s1 + $0x80] sm:$0xff]
  %v44 = vld [vmem:[%s1 + $0x88] sm:$0xff]
  %v45 = vld [vmem:[%s1 + $0x90] sm:$0xff]
  %v46 = vld [vmem:[%s1 + $0x98] sm:$0xff]
  %v47 = vld [vmem:[%s1 + $0xa0] sm:$0xff]
  %v48 = vld [vmem:[%s1 + $0xa8] sm:$0xff]
  %v49 = vld [vmem:[%s1 + $0xb0] sm:$0xff]
  %v50 = vld [vmem:[%s1 + $0xb8] sm:$0xff]
  %v51 = vld [vmem:[%s1 + $0xc0] sm:$0xff]
  %v52 = vld [vmem:[%s1 + $0xc8] sm:$0xff]
  %v53 = vld [vmem:[%s1 + $0xd0] sm:$0xff]
  %v54 = vld [vmem:[%s1 + $0xd8] sm:$0xff]
  %v55 = vld [vmem:[%s1 + $0xe0] sm:$0xff]
  %v56 = vld [vmem:[%s1 + $0xe8] sm:$0xff]
  %v57 = vld [vmem:[%s1 + $0xf0] sm:$0xff]
  %v58 = vld [vmem:[%s1 + $0xf8] sm:$0xff]
  %v59 = vld [vmem:[%s1 + $0x100] sm:$0xff]
  %v60 = vld [vmem:[%s1 + $0x108] sm:$0xff]
  %v61 = vld [vmem:[%s1 + $0x110] sm:$0xff]
  %v62 = vld [vmem:[%s1 + $0x118] sm:$0xff]
  %v63 = vld [vmem:[%s1 + $0x120] sm:$0xff]
  %v64 = vld [vmem:[%s1 + $0x128] sm:$0xff]
  %v65 = vld [vmem:[%s1 + $0x130] sm:$0xff]
  %v66 = vld [vmem:[%s1 + $0x138] sm:$0xff]
  %v67 = vld [vmem:[%s1 + $0x140] sm:$0xff]
  %v68 = vld [vmem:[%s1 + $0x148] sm:$0xff]
  %v69 = vld [vmem:[%s1 + $0x150] sm:$0xff]
  %v70 = vld [vmem:[%s1 + $0x158] sm:$0xff]
  %v71 = vld [vmem:[%s1 + $0x160] sm:$0xff]
  %v72 = vld [vmem:[%s1 + $0x168] sm:$0xff]
  %v73 = vld [vmem:[%s1 + $0x170] sm:$0xff]
  %v74 = vld [vmem:[%s1 + $0x178] sm:$0xff]
  %v75 = vld [vmem:[%s1 + $0x180] sm:$0xff]
  %v76 = vld [vmem:[%s1 + $0x188] sm:$0xff]
  %v77 = vld [vmem:[%s1 + $0x190] sm:$0xff]
  %v78 = vld [vmem:[%s1 + $0x198] sm:$0xff]
  %v79 = vld [vmem:[%s1 + $0x1a0] sm:$0xff]
  %v80 = vld [vmem:[%s1 + $0x1a8] sm:$0xff]
  %v81 = vld [vmem:[%s1 + $0x1b0] sm:$0xff]
  %v82 = vld [vmem:[%s1 + $0x1b8] sm:$0xff]
  %v83 = vld [vmem:[%s1 + $0x1c0] sm:$0xff]
  %v84 = vld [vmem:[%s1 + $0x1c8] sm:$0xff]
  %v85 = vld [vmem:[%s1 + $0x1d0] sm:$0xff]
  %v86 = vld [vmem:[%s1 + $0x1d8] sm:$0xff]
  %v87 = vld [vmem:[%s1 + $0x1e0] sm:$0xff]
  %v88 = vld [vmem:[%s1 + $0x1e8] sm:$0xff]
  %v89 = vld [vmem:[%s1 + $0x1f0] sm:$0xff]
  %v90 = vld [vmem:[%s1 + $0x1f8] sm:$0xff]
  %v91 = vld [vmem:[%s1 + $0x200] sm:$0xff]
  %v92 = vld [vmem:[%s1 + $0x208] sm:$0xff]
  %v93 = vld [vmem:[%s1 + $0x210] sm:$0xff]
  %v94 = vld [vmem:[%s1 + $0x218] sm:$0xff]
  %v95 = vld [vmem:[%s1 + $0x220] sm:$0xff]
  %v96 = vld [vmem:[%s1 + $0x228] sm:$0xff]
  %v97 = vld [vmem:[%s1 + $0x230] sm:$0xff]
  %v98 = vld [vmem:[%s1 + $0x238] sm:$0xff]
  %v99 = vld [vmem:[%s1 + $0x240] sm:$0xff]
  %v100 = vld [vmem:[%s1 + $0x248] sm:$0xff]
  %v101 = vld [vmem:[%s1 + $0x250] sm:$0xff]
  %v102 = vld [vmem:[%s1 + $0x258] sm:$0xff]
  %v103 = vld [vmem:[%s1 + $0x260] sm:$0xff]
  %v104 = vld [vmem:[%s1 + $0x268] sm:$0xff]
  %v105 = vld [vmem:[%s1 + $0x270] sm:$0xff]
  %v106 = vld [vmem:[%s1 + $0x278] sm:$0xff]
  %v107 = vld [vmem:[%s1 + $0x280] sm:$0xff]
  %v108 = vld [vmem:[%s1 + $0x288] sm:$0xff]
  %v109 = vld [vmem:[%s1 + $0x290] sm:$0xff]
  %v110 = vld [vmem:[%s1 + $0x298] sm:$0xff]
  %v111 = vld [vmem:[%s1 + $0x2a0] sm:$0xff]
  %v112 = vld [vmem:[%s1 + $0x2a8] sm:$0xff]
  %v113 = vld [vmem:[%s1 + $0x2b0] sm:$0xff]
  %v114 = vld [vmem:[%s1 + $0x2b8] sm:$0xff]
  %v115 = vld [vmem:[%s1 + $0x2c0] sm:$0xff]
  %v116 = vld [vmem:[%s1 + $0x2c8] sm:$0xff]
  %v117 = vld [vmem:[%s1 + $0x2d0] sm:$0xff]
  %v118 = vld [vmem:[%s1 + $0x2d8] sm:$0xff]
  %v119 = vld [vmem:[%s1 + $0x2e0] sm:$0xff]
  %v120 = vld [vmem:[%s1 + $0x2e8] sm:$0xff]
  %v121 = vld [vmem:[%s1 + $0x2f0] sm:$0xff]
  %v122 = vld [vmem:[%s1 + $0x2f8] sm:$0xff]
  %v123 = vld [vmem:[%s1 + $0x300] sm:$0xff]
  %v124 = vld [vmem:[%s1 + $0x308] sm:$0xff]
  %v125 = vld [vmem:[%s1 + $0x310] sm:$0xff]
  %v126 = vld [vmem:[%s1 + $0x318] sm:$0xff]
  %v127 = vld [vmem:[%s1 + $0x320] sm:$0xff]
  %v128 = vld [vmem:[%s1 + $0x328] sm:$0xff]
  %v129 = vld [vmem:[%s1 + $0x330] sm:$0xff]
  %v130 = vld [vmem:[%s1 + $0x338] sm:$0xff]
  %v131 = vld [vmem:[%s1 + $0x340] sm:$0xff]
  %v132 = vld [vmem:[%s1 + $0x348] sm:$0xff]
  %v133 = vld [vmem:[%s1 + $0x350] sm:$0xff]
  %v134 = vld [vmem:[%s1 + $0x358] sm:$0xff]
  %v135 = vld [vmem:[%s1 + $0x360] sm:$0xff]
  %v136 = vld [vmem:[%s1 + $0x368] sm:$0xff]
  %v137 = vld [vmem:[%s1 + $0x370] sm:$0xff]
  %v138 = vld [vmem:[%s1 + $0x378] sm:$0xff]
  %v139 = vld [vmem:[%s1 + $0x380] sm:$0xff]
  %v140 = vld [vmem:[%s1 + $0x388] sm:$0xff]
  %v141 = vld [vmem:[%s1 + $0x390] sm:$0xff]
  %v142 = vld [vmem:[%s1 + $0x398] sm:$0xff]
  %v143 = vld [vmem:[%s1 + $0x3a0] sm:$0xff]
  %v144 = vld [vmem:[%s1 + $0x3a8] sm:$0xff]
  %v145 = vld [vmem:[%s1 + $0x3b0] sm:$0xff]
  %v146 = vld [vmem:[%s1 + $0x3b8] sm:$0xff]
  %v147 = vld [vmem:[%s1 + $0x3c0] sm:$0xff]
  %v148 = vld [vmem:[%s1 + $0x3c8] sm:$0xff]
  %v149 = vld [vmem:[%s1 + $0x3d0] sm:$0xff]
  %v150 = vld [vmem:[%s1 + $0x3d8] sm:$0xff]
  %v151 = vld [vmem:[%s1 + $0x3e0] sm:$0xff]
  %v152 = vld [vmem:[%s1 + $0x3e8] sm:$0xff]
  %v153 = vld [vmem:[%s1 + $0x3f0] sm:$0xff]
  %v154 = vld [vmem:[%s1 + $0x3f8] sm:$0xff]
  %v155 = vld [vmem:[%s1 + $0x400] sm:$0xff]
  %v156 = vld [vmem:[%s1 + $0x408] sm:$0xff]
  %v157 = vld [vmem:[%s1 + $0x410] sm:$0xff]
  %v158 = vld [vmem:[%s1 + $0x418] sm:$0xff]
  %v159 = vld [vmem:[%s1 + $0x420] sm:$0xff]
  %v160 = vld [vmem:[%s1 + $0x428] sm:$0xff]
  %v161 = vld [vmem:[%s1 + $0x430] sm:$0xff]
  %v162 = vld [vmem:[%s1 + $0x438] sm:$0xff]
  %v163 = vld [vmem:[%s1 + $0x440] sm:$0xff]
  %v164 = vld [vmem:[%s1 + $0x448] sm:$0xff]
  %v165 = vld [vmem:[%s1 + $0x450] sm:$0xff]
  %v166 = vld [vmem:[%s1 + $0x458] sm:$0xff]
  %v167 = vld [vmem:[%s1 + $0x460] sm:$0xff]
  %v168 = vld [vmem:[%s1 + $0x468] sm:$0xff]
  %v169 = vld [vmem:[%s1 + $0x470] sm:$0xff]
  %v170 = vld [vmem:[%s1 + $0x478] sm:$0xff]
  %v171 = vld [vmem:[%s1 + $0x480] sm:$0xff]
  %v172 = vld [vmem:[%s1 + $0x488] sm:$0xff]
  %v173 = vld [vmem:[%s1 + $0x490] sm:$0xff]
  %v174 = vld [vmem:[%s1 + $0x498] sm:$0xff]
  %v175 = vld [vmem:[%s1 + $0x4a0] sm:$0xff]
  %v176 = vld [vmem:[%s1 + $0x4a8] sm:$0xff]
  %v177 = vld [vmem:[%s1 + $0x4b0] sm:$0xff]
  %v178 = vld [vmem:[%s1 + $0x4b8] sm:$0xff]
  %v179 = vld [vmem:[%s1 + $0x4c0] sm:$0xff]
  %v180 = vld [vmem:[%s1 + $0x4c8] sm:$0xff]
  %v181 = vld [vmem:[%s1 + $0x4d0] sm:$0xff]
  %v182 = vld [vmem:[%s1 + $0x4d8] sm:$0xff]
  %v183 = vld [vmem:[%s1 + $0x4e0] sm:$0xff]
  %v184 = vld [vmem:[%s1 + $0x4e8] sm:$0xff]
  %v185 = vld [vmem:[%s1 + $0x4f0] sm:$0xff]
  %v186 = vld [vmem:[%s1 + $0x4f8] sm:$0xff]
  %v187 = vld [vmem:[%s1 + $0x500] sm:$0xff]
  %v188 = vld [vmem:[%s1 + $0x508] sm:$0xff]
  %v189 = vld [vmem:[%s1 + $0x510] sm:$0xff]
  %v190 = vld [vmem:[%s1 + $0x518] sm:$0xff]
  %v191 = vld [vmem:[%s1 + $0x520] sm:$0xff]
  %v192 = vld [vmem:[%s1 + $0x528] sm:$0xff]
  %v193 = vld [vmem:[%s1 + $0x530] sm:$0xff]
  %v194 = vld [vmem:[%s1 + $0x538] sm:$0xff]
  %v195 = vld [vmem:[%s1 + $0x540] sm:$0xff]
  %v196 = vld [vmem:[%s1 + $0x548] sm:$0xff]
  %v197 = vld [vmem:[%s1 + $0x550] sm:$0xff]
  %v198 = vld [vmem:[%s1 + $0x558] sm:$0xff]
  %v199 = vld [vmem:[%s1 + $0x560] sm:$0xff]
  %v200 = vld [vmem:[%s1 + $0x568] sm:$0xff]
  %v201 = vld [vmem:[%s1 + $0x570] sm:$0xff]
  %v202 = vld [vmem:[%s1 + $0x578] sm:$0xff]
  %v203 = vld [vmem:[%s1 + $0x580] sm:$0xff]
  %v204 = vld [vmem:[%s1 + $0x588] sm:$0xff]
  %v205 = vld [vmem:[%s1 + $0x590] sm:$0xff]
  %v206 = vld [vmem:[%s1 + $0x598] sm:$0xff]
  %v207 = vld [vmem:[%s1 + $0x5a0] sm:$0xff]
  %v208 = vld [vmem:[%s1 + $0x5a8] sm:$0xff]
  %v209 = vld [vmem:[%s1 + $0x5b0] sm:$0xff]
  %v210 = vld [vmem:[%s1 + $0x5b8] sm:$0xff]
  %v211 = vld [vmem:[%s1 + $0x5c0] sm:$0xff]
  %v212 = vld [vmem:[%s1 + $0x5c8] sm:$0xff]
  %v213 = vld [vmem:[%s1 + $0x5d0] sm:$0xff]
  %v214 = vld [vmem:[%s1 + $0x5d8] sm:$0xff]
  %v215 = vld [vmem:[%s1 + $0x5e0] sm:$0xff]
  %v216 = vld [vmem:[%s1 + $0x5e8] sm:$0xff]
  %v217 = vld [vmem:[%s1 + $0x5f0] sm:$0xff]
  %v218 = vld [vmem:[%s1 + $0x5f8] sm:$0xff]
  %v219 = vld [vmem:[%s1 + $0x600] sm:$0xff]
  %v220 = vld [vmem:[%s1 + $0x608] sm:$0xff]
  %v221 = vld [vmem:[%s1 + $0x610] sm:$0xff]
  %v222 = vld [vmem:[%s1 + $0x618] sm:$0xff]
  %v223 = vld [vmem:[%s1 + $0x620] sm:$0xff]
  %v224 = vld [vmem:[%s1 + $0x628] sm:$0xff]
  %v225 = vld [vmem:[%s1 + $0x630] sm:$0xff]
  %v226 = vld [vmem:[%s1 + $0x638] sm:$0xff]
  %v227 = vld [vmem:[%s1 + $0x640] sm:$0xff]
  %v228 = vld [vmem:[%s1 + $0x648] sm:$0xff]
  %v229 = vld [vmem:[%s1 + $0x650] sm:$0xff]
  %v230 = vld [vmem:[%s1 + $0x658] sm:$0xff]
  %v231 = vld [vmem:[%s1 + $0x660] sm:$0xff]
  %v232 = vld [vmem:[%s1 + $0x668] sm:$0xff]
  %v233 = vld [vmem:[%s1 + $0x670] sm:$0xff]
  %v234 = vld [vmem:[%s1 + $0x678] sm:$0xff]
  %v235 = vld [vmem:[%s1 + $0x680] sm:$0xff]
  %v236 = vld [vmem:[%s1 + $0x688] sm:$0xff]
  %v237 = vld [vmem:[%s1 + $0x690] sm:$0xff]
  %v238 = vld [vmem:[%s1 + $0x698] sm:$0xff]
  %v239 = vld [vmem:[%s1 + $0x6a0] sm:$0xff]
  %v240 = vld [vmem:[%s1 + $0x6a8] sm:$0xff]
  %v241 = vld [vmem:[%s1 + $0x6b0] sm:$0xff]
  %v242 = vld [vmem:[%s1 + $0x6b8] sm:$0xff]
  %v243 = vld [vmem:[%s1 + $0x6c0] sm:$0xff]
  %v244 = vld [vmem:[%s1 + $0x6c8] sm:$0xff]
  %v245 = vld [vmem:[%s1 + $0x6d0] sm:$0xff]
  %v246 = vld [vmem:[%s1 + $0x6d8] sm:$0xff]
  %v247 = vld [vmem:[%s1 + $0x6e0] sm:$0xff]
  %v248 = vld [vmem:[%s1 + $0x6e8] sm:$0xff]
  %v249 = vld [vmem:[%s1 + $0x6f0] sm:$0xff]
  %v250 = vld [vmem:[%s1 + $0x6f8] sm:$0xff]
  %v251 = vld [vmem:[%s1 + $0x700] sm:$0xff]
  %v252 = vld [vmem:[%s1 + $0x708] sm:$0xff]
  %v253 = vld [vmem:[%s1 + $0x710] sm:$0xff]
  %v254 = vld [vmem:[%s1 + $0x718] sm:$0xff]
  %v255 = vld [vmem:[%s1 + $0x720] sm:$0xff]
  %v256 = vld [vmem:[%s1 + $0x728] sm:$0xff]
  %v257 = vld [vmem:[%s1 + $0x730] sm:$0xff]
  %v258 = vld [vmem:[%s1 + $0x738] sm:$0xff]
  %v259 = vld [vmem:[%s1 + $0x740] sm:$0xff]
  %v260 = vld [vmem:[%s1 + $0x748] sm:$0xff]
  %v261 = vld [vmem:[%s1 + $0x750] sm:$0xff]
  %v262 = vld [vmem:[%s1 + $0x758] sm:$0xff]
  %v263 = vld [vmem:[%s1 + $0x760] sm:$0xff]
  %v264 = vld [vmem:[%s1 + $0x768] sm:$0xff]
  %v265 = vld [vmem:[%s1 + $0x770] sm:$0xff]
  %v266 = vld [vmem:[%s1 + $0x778] sm:$0xff]
  %v267 = vld [vmem:[%s1 + $0x780] sm:$0xff]
  %v268 = vld [vmem:[%s1 + $0x788] sm:$0xff]
  %v269 = vld [vmem:[%s1 + $0x790] sm:$0xff]
  %v270 = vld [vmem:[%s1 + $0x798] sm:$0xff]
  %v271 = vld [vmem:[%s1 + $0x7a0] sm:$0xff]
  %v272 = vld [vmem:[%s1 + $0x7a8] sm:$0xff]
  %v273 = vld [vmem:[%s1 + $0x7b0] sm:$0xff]
  %v274 = vld [vmem:[%s1 + $0x7b8] sm:$0xff]
  %v275 = vld [vmem:[%s1 + $0x7c0] sm:$0xff]
  %v276 = vld [vmem:[%s1 + $0x7c8] sm:$0xff]
  %v277 = vld [vmem:[%s1 + $0x7d0] sm:$0xff]
  %v278 = vld [vmem:[%s1 + $0x7d8] sm:$0xff]
  %v279 = vld [vmem:[%s1 + $0x7e0] sm:$0xff]
  %v280 = vld [vmem:[%s1 + $0x7e8] sm:$0xff]
  %v281 = vld [vmem:[%s1 + $0x7f0] sm:$0xff]
  %v282 = vld [vmem:[%s1 + $0x7f8] sm:$0xff]
  %v283 = vld [vmem:[%s1 + $0x800] sm:$0xff]
  %v284 = vld [vmem:[%s1 + $0x808] sm:$0xff]
  %v285 = vld [vmem:[%s1 + $0x810] sm:$0xff]
  %v286 = vld [vmem:[%s1 + $0x818] sm:$0xff]
  %v287 = vld [vmem:[%s1 + $0x820] sm:$0xff]
  %v288 = vld [vmem:[%s1 + $0x828] sm:$0xff]
  %v289 = vld [vmem:[%s1 + $0x830] sm:$0xff]
  %v290 = vld [vmem:[%s1 + $0x838] sm:$0xff]
  %v291 = vld [vmem:[%s1 + $0x840] sm:$0xff]
  %v292 = vld [vmem:[%s1 + $0x848] sm:$0xff]
  %v293 = vld [vmem:[%s1 + $0x850] sm:$0xff]
  %v294 = vld [vmem:[%s1 + $0x858] sm:$0xff]
  %v295 = vld [vmem:[%s1 + $0x860] sm:$0xff]
  %v296 = vld [vmem:[%s1 + $0x868] sm:$0xff]
  %v297 = vld [vmem:[%s1 + $0x870] sm:$0xff]
  %v298 = vld [vmem:[%s1 + $0x878] sm:$0xff]
  %v299 = vld [vmem:[%s1 + $0x880] sm:$0xff]
  %v300 = vld [vmem:[%s1 + $0x888] sm:$0xff]
  %v301 = vld [vmem:[%s1 + $0x890] sm:$0xff]
  %v302 = vld [vmem:[%s1 + $0x898] sm:$0xff]
  %v303 = vld [vmem:[%s1 + $0x8a0] sm:$0xff]
  %v304 = vld [vmem:[%s1 + $0x8a8] sm:$0xff]
  %v305 = vld [vmem:[%s1 + $0x8b0] sm:$0xff]
  %v306 = vld [vmem:[%s1 + $0x8b8] sm:$0xff]
  %v307 = vld [vmem:[%s1 + $0x8c0] sm:$0xff]
  %v308 = vld [vmem:[%s1 + $0x8c8] sm:$0xff]
  %v309 = vld [vmem:[%s1 + $0x8d0] sm:$0xff]
  %v310 = vld [vmem:[%s1 + $0x8d8] sm:$0xff]
  %v311 = vld [vmem:[%s1 + $0x8e0] sm:$0xff]
  %v312 = vld [vmem:[%s1 + $0x8e8] sm:$0xff]
  %v313 = vld [vmem:[%s1 + $0x8f0] sm:$0xff]
  %v314 = vld [vmem:[%s1 + $0x8f8] sm:$0xff]
  %v315 = vld [vmem:[%s1 + $0x900] sm:$0xff]
  %v316 = vld [vmem:[%s1 + $0x908] sm:$0xff]
  %v317 = vld [vmem:[%s1 + $0x910] sm:$0xff]
  %v318 = vld [vmem:[%s1 + $0x918] sm:$0xff]
  %v319 = vld [vmem:[%s1 + $0x920] sm:$0xff]
  %v320 = vld [vmem:[%s1 + $0x928] sm:$0xff]
  %v321 = vld [vmem:[%s1 + $0x930] sm:$0xff]
  %v322 = vld [vmem:[%s1 + $0x938] sm:$0xff]
  %v323 = vld [vmem:[%s1 + $0x940] sm:$0xff]
  %v324 = vld [vmem:[%s1 + $0x948] sm:$0xff]
  %v325 = vld [vmem:[%s1 + $0x950] sm:$0xff]
  %v326 = vld [vmem:[%s1 + $0x958] sm:$0xff]
  %v327 = vld [vmem:[%s1 + $0x960] sm:$0xff]
  %v328 = vld [vmem:[%s1 + $0x968] sm:$0xff]
  %v329 = vld [vmem:[%s1 + $0x970] sm:$0xff]
  %v330 = vld [vmem:[%s1 + $0x978] sm:$0xff]
  %v331 = vld [vmem:[%s1 + $0x980] sm:$0xff]
  %v332 = vld [vmem:[%s1 + $0x988] sm:$0xff]
  %v333 = vld [vmem:[%s1 + $0x990] sm:$0xff]
  %v334 = vld [vmem:[%s1 + $0x998] sm:$0xff]
  %v335 = vld [vmem:[%s1 + $0x9a0] sm:$0xff]
  %v336 = vld [vmem:[%s1 + $0x9a8] sm:$0xff]
  %v337 = vld [vmem:[%s1 + $0x9b0] sm:$0xff]
  %v338 = vld [vmem:[%s1 + $0x9b8] sm:$0xff]
  %v339 = vld [vmem:[%s1 + $0x9c0] sm:$0xff]
  %v340 = vld [vmem:[%s1 + $0x9c8] sm:$0xff]
  %v341 = vld [vmem:[%s1 + $0x9d0] sm:$0xff]
  %v342 = vld [vmem:[%s1 + $0x9d8] sm:$0xff]
  %v343 = vld [vmem:[%s1 + $0x9e0] sm:$0xff]
  %v344 = vld [vmem:[%s1 + $0x9e8] sm:$0xff]
  %v345 = vld [vmem:[%s1 + $0x9f0] sm:$0xff]
  %v346 = vld [vmem:[%s1 + $0x9f8] sm:$0xff]
  %v347 = vld [vmem:[%s1 + $0xa00] sm:$0xff]
  %v348 = vld [vmem:[%s1 + $0xa08] sm:$0xff]
  %v349 = vld [vmem:[%s1 + $0xa10] sm:$0xff]
  %v350 = vld [vmem:[%s1 + $0xa18] sm:$0xff]
  %v351 = vld [vmem:[%s1 + $0xa20] sm:$0xff]
  %v352 = vld [vmem:[%s1 + $0xa28] sm:$0xff]
  %v353 = vld [vmem:[%s1 + $0xa30] sm:$0xff]
  %v354 = vld [vmem:[%s1 + $0xa38] sm:$0xff]
  %v355 = vld [vmem:[%s1 + $0xa40] sm:$0xff]
  %v356 = vld [vmem:[%s1 + $0xa48] sm:$0xff]
  %v357 = vld [vmem:[%s1 + $0xa50] sm:$0xff]
  %v358 = vld [vmem:[%s1 + $0xa58] sm:$0xff]
  %v359 = vld [vmem:[%s1 + $0xa60] sm:$0xff]
  %v360 = vld [vmem:[%s1 + $0xa68] sm:$0xff]
  %v361 = vld [vmem:[%s1 + $0xa70] sm:$0xff]
  %v362 = vld [vmem:[%s1 + $0xa78] sm:$0xff]
  %v363 = vld [vmem:[%s1 + $0xa80] sm:$0xff]
  %v364 = vld [vmem:[%s1 + $0xa88] sm:$0xff]
  %v365 = vld [vmem:[%s1 + $0xa90] sm:$0xff]
  %v366 = vld [vmem:[%s1 + $0xa98] sm:$0xff]
  %v367 = vld [vmem:[%s1 + $0xaa0] sm:$0xff]
  %v368 = vld [vmem:[%s1 + $0xaa8] sm:$0xff]
  %v369 = vld [vmem:[%s1 + $0xab0] sm:$0xff]
  %v370 = vld [vmem:[%s1 + $0xab8] sm:$0xff]
  %v371 = vld [vmem:[%s1 + $0xac0] sm:$0xff]
  %v372 = vld [vmem:[%s1 + $0xac8] sm:$0xff]
  %v373 = vld [vmem:[%s1 + $0xad0] sm:$0xff]
  %v374 = vld [vmem:[%s1 + $0xad8] sm:$0xff]
  %v375 = vld [vmem:[%s1 + $0xae0] sm:$0xff]
  %v376 = vld [vmem:[%s1 + $0xae8] sm:$0xff]
  %v377 = vld [vmem:[%s1 + $0xaf0] sm:$0xff]
  %v378 = vld [vmem:[%s1 + $0xaf8] sm:$0xff]
  %v379 = vld [vmem:[%s1 + $0xb00] sm:$0xff]
  %v380 = vld [vmem:[%s1 + $0xb08] sm:$0xff]
  %v381 = vld [vmem:[%s1 + $0xb10] sm:$0xff]
  %v382 = vld [vmem:[%s1 + $0xb18] sm:$0xff]
  %v383 = vld [vmem:[%s1 + $0xb20] sm:$0xff]
  %v384 = vld [vmem:[%s1 + $0xb28] sm:$0xff]
  %v385 = vld [vmem:[%s1 + $0xb30] sm:$0xff]
  %v386 = vld [vmem:[%s1 + $0xb38] sm:$0xff]
  %v387 = vld [vmem:[%s1 + $0xb40] sm:$0xff]
  %v388 = vld [vmem:[%s1 + $0xb48] sm:$0xff]
  %v389 = vld [vmem:[%s1 + $0xb50] sm:$0xff]
  %v390 = vld [vmem:[%s1 + $0xb58] sm:$0xff]
  %v391 = vld [vmem:[%s1 + $0xb60] sm:$0xff]
  %v392 = vld [vmem:[%s1 + $0xb68] sm:$0xff]
  %v393 = vld [vmem:[%s1 + $0xb70] sm:$0xff]
  %v394 = vld [vmem:[%s1 + $0xb78] sm:$0xff]
  %v395 = vld [vmem:[%s1 + $0xb80] sm:$0xff]
  %v396 = vld [vmem:[%s1 + $0xb88] sm:$0xff]
  %v397 = vld [vmem:[%s1 + $0xb90] sm:$0xff]
  %v398 = vld [vmem:[%s1 + $0xb98] sm:$0xff]
  %v399 = vld [vmem:[%s1 + $0xba0] sm:$0xff]
  %v400 = vld [vmem:[%s1 + $0xba8] sm:$0xff]
  %v401 = vld [vmem:[%s1 + $0xbb0] sm:$0xff]
  %v402 = vld [vmem:[%s1 + $0xbb8] sm:$0xff]
  %v403 = vld [vmem:[%s1 + $0xbc0] sm:$0xff]
  %v404 = vld [vmem:[%s1 + $0xbc8] sm:$0xff]
  %v405 = vld [vmem:[%s1 + $0xbd0] sm:$0xff]
  %v406 = vld [vmem:[%s1 + $0xbd8] sm:$0xff]
  %v407 = vld [vmem:[%s1 + $0xbe0] sm:$0xff]
  %v408 = vld [vmem:[%s1 + $0xbe8] sm:$0xff]
  %v409 = vld [vmem:[%s1 + $0xbf0] sm:$0xff]
  %v410 = vld [vmem:[%s1 + $0xbf8] sm:$0xff]
  %v411 = vld [vmem:[%s1 + $0xc00] sm:$0xff]
  %v412 = vld [vmem:[%s1 + $0xc08] sm:$0xff]
  %v413 = vld [vmem:[%s1 + $0xc10] sm:$0xff]
  %v414 = vld [vmem:[%s1 + $0xc18] sm:$0xff]
  %v415 = vld [vmem:[%s1 + $0xc20] sm:$0xff]
  %v416 = vld [vmem:[%s1 + $0xc28] sm:$0xff]
  %v417 = vld [vmem:[%s1 + $0xc30] sm:$0xff]
  %v418 = vld [vmem:[%s1 + $0xc38] sm:$0xff]
  %v419 = vld [vmem:[%s1 + $0xc40] sm:$0xff]
  %v420 = vld [vmem:[%s1 + $0xc48] sm:$0xff]
  %v421 = vld [vmem:[%s1 + $0xc50] sm:$0xff]
  %v422 = vld [vmem:[%s1 + $0xc58] sm:$0xff]
  %v423 = vld [vmem:[%s1 + $0xc60] sm:$0xff]
  %v424 = vld [vmem:[%s1 + $0xc68] sm:$0xff]
  %v425 = vld [vmem:[%s1 + $0xc70] sm:$0xff]
  %v426 = vld [vmem:[%s1 + $0xc78] sm:$0xff]
  %v427 = vld [vmem:[%s1 + $0xc80] sm:$0xff]
  %v428 = vld [vmem:[%s1 + $0xc88] sm:$0xff]
  %v429 = vld [vmem:[%s1 + $0xc90] sm:$0xff]
  %v430 = vld [vmem:[%s1 + $0xc98] sm:$0xff]
  %v431 = vld [vmem:[%s1 + $0xca0] sm:$0xff]
  %v432 = vld [vmem:[%s1 + $0xca8] sm:$0xff]
  %v433 = vld [vmem:[%s1 + $0xcb0] sm:$0xff]
  %v434 = vld [vmem:[%s1 + $0xcb8] sm:$0xff]
  %v435 = vld [vmem:[%s1 + $0xcc0] sm:$0xff]
  %v436 = vld [vmem:[%s1 + $0xcc8] sm:$0xff]
  %v437 = vld [vmem:[%s1 + $0xcd0] sm:$0xff]
  %v438 = vld [vmem:[%s1 + $0xcd8] sm:$0xff]
  %v439 = vld [vmem:[%s1 + $0xce0] sm:$0xff]
  %v440 = vld [vmem:[%s1 + $0xce8] sm:$0xff]
  %v441 = vld [vmem:[%s1 + $0xcf0] sm:$0xff]
  %v442 = vld [vmem:[%s1 + $0xcf8] sm:$0xff]
  %v443 = vld [vmem:[%s1 + $0xd00] sm:$0xff]
  %v444 = vld [vmem:[%s1 + $0xd08] sm:$0xff]
  %v445 = vld [vmem:[%s1 + $0xd10] sm:$0xff]
  %v446 = vld [vmem:[%s1 + $0xd18] sm:$0xff]
  %v447 = vld [vmem:[%s1 + $0xd20] sm:$0xff]
  %v448 = vld [vmem:[%s1 + $0xd28] sm:$0xff]
  %v449 = vld [vmem:[%s1 + $0xd30] sm:$0xff]
  %v450 = vld [vmem:[%s1 + $0xd38] sm:$0xff]
  %v451 = vld [vmem:[%s1 + $0xd40] sm:$0xff]
  %v452 = vld [vmem:[%s1 + $0xd48] sm:$0xff]
  %v453 = vld [vmem:[%s1 + $0xd50] sm:$0xff]
  %v454 = vld [vmem:[%s1 + $0xd58] sm:$0xff]
  %v455 = vld [vmem:[%s1 + $0xd60] sm:$0xff]
  %v456 = vld [vmem:[%s1 + $0xd68] sm:$0xff]
  %v457 = vld [vmem:[%s1 + $0xd70] sm:$0xff]
  %v458 = vld [vmem:[%s1 + $0xd78] sm:$0xff]
  %v459 = vld [vmem:[%s1 + $0xd80] sm:$0xff]
  %v460 = vld [vmem:[%s1 + $0xd88] sm:$0xff]
  %v461 = vld [vmem:[%s1 + $0xd90] sm:$0xff]
  %v462 = vld [vmem:[%s1 + $0xd98] sm:$0xff]
  %v463 = vld [vmem:[%s1 + $0xda0] sm:$0xff]
  %v464 = vld [vmem:[%s1 + $0xda8] sm:$0xff]
  %v465 = vld [vmem:[%s1 + $0xdb0] sm:$0xff]
  %v466 = vld [vmem:[%s1 + $0xdb8] sm:$0xff]
  %v467 = vld [vmem:[%s1 + $0xdc0] sm:$0xff]
  %v468 = vld [vmem:[%s1 + $0xdc8] sm:$0xff]
  %v469 = vld [vmem:[%s1 + $0xdd0] sm:$0xff]
  %v470 = vld [vmem:[%s1 + $0xdd8] sm:$0xff]
  %v471 = vld [vmem:[%s1 + $0xde0] sm:$0xff]
  %v472 = vld [vmem:[%s1 + $0xde8] sm:$0xff]
  %v473 = vld [vmem:[%s1 + $0xdf0] sm:$0xff]
  %v474 = vld [vmem:[%s1 + $0xdf8] sm:$0xff]
  %v475 = vld [vmem:[%s1 + $0xe00] sm:$0xff]
  %v476 = vld [vmem:[%s1 + $0xe08] sm:$0xff]
  %v477 = vld [vmem:[%s1 + $0xe10] sm:$0xff]
  %v478 = vld [vmem:[%s1 + $0xe18] sm:$0xff]
  %v479 = vld [vmem:[%s1 + $0xe20] sm:$0xff]
  %v480 = vld [vmem:[%s1 + $0xe28] sm:$0xff]
  %v481 = vld [vmem:[%s1 + $0xe30] sm:$0xff]
  %v482 = vld [vmem:[%s1 + $0xe38] sm:$0xff]
  %v483 = vld [vmem:[%s1 + $0xe40] sm:$0xff]
  %v484 = vld [vmem:[%s1 + $0xe48] sm:$0xff]
  %v485 = vld [vmem:[%s1 + $0xe50] sm:$0xff]
  %v486 = vld [vmem:[%s1 + $0xe58] sm:$0xff]
  %v487 = vld [vmem:[%s1 + $0xe60] sm:$0xff]
  %v488 = vld [vmem:[%s1 + $0xe68] sm:$0xff]
  %v489 = vld [vmem:[%s1 + $0xe70] sm:$0xff]
  %v490 = vld [vmem:[%s1 + $0xe78] sm:$0xff]
  %v491 = vld [vmem:[%s1 + $0xe80] sm:$0xff]
  %v492 = vld [vmem:[%s1 + $0xe88] sm:$0xff]
  %v493 = vld [vmem:[%s1 + $0xe90] sm:$0xff]
  %v494 = vld [vmem:[%s1 + $0xe98] sm:$0xff]
  %v495 = vld [vmem:[%s1 + $0xea0] sm:$0xff]
  %v496 = vld [vmem:[%s1 + $0xea8] sm:$0xff]
  %v497 = vld [vmem:[%s1 + $0xeb0] sm:$0xff]
  %v498 = vld [vmem:[%s1 + $0xeb8] sm:$0xff]
  %v499 = vld [vmem:[%s1 + $0xec0] sm:$0xff]
  %v500 = vld [vmem:[%s1 + $0xec8] sm:$0xff]
  %v501 = vld [vmem:[%s1 + $0xed0] sm:$0xff]
  %v502 = vld [vmem:[%s1 + $0xed8] sm:$0xff]
  %v503 = vld [vmem:[%s1 + $0xee0] sm:$0xff]
  %v504 = vld [vmem:[%s1 + $0xee8] sm:$0xff]
  %v505 = vld [vmem:[%s1 + $0xef0] sm:$0xff]
  %v506 = vld [vmem:[%s1 + $0xef8] sm:$0xff]
  %v507 = vld [vmem:[%s1 + $0xf00] sm:$0xff]
  %v508 = vld [vmem:[%s1 + $0xf08] sm:$0xff]
  %v509 = vld [vmem:[%s1 + $0xf10] sm:$0xff]
  %v510 = vld [vmem:[%s1 + $0xf18] sm:$0xff]
  %v511 = vld [vmem:[%s1 + $0xf20] sm:$0xff]
  %v512 = vld [vmem:[%s1 + $0xf28] sm:$0xff]
  %v513 = vld [vmem:[%s1 + $0xf30] sm:$0xff]
  %v514 = vld [vmem:[%s1 + $0xf38] sm:$0xff]
  %v515 = vld [vmem:[%s1 + $0xf40] sm:$0xff]
  %v516 = vld [vmem:[%s1 + $0xf48] sm:$0xff]
  %v517 = vld [vmem:[%s1 + $0xf50] sm:$0xff]
  %v518 = vld [vmem:[%s1 + $0xf58] sm:$0xff]
  %v519 = vld [vmem:[%s1 + $0xf60] sm:$0xff]
  %v520 = vld [vmem:[%s1 + $0xf68] sm:$0xff]
  %v521 = vld [vmem:[%s1 + $0xf70] sm:$0xff]
  %v522 = vld [vmem:[%s1 + $0xf78] sm:$0xff]
  %v523 = vld [vmem:[%s1 + $0xf80] sm:$0xff]
  %v524 = vld [vmem:[%s1 + $0xf88] sm:$0xff]
  %v525 = vld [vmem:[%s1 + $0xf90] sm:$0xff]
  %v526 = vld [vmem:[%s1 + $0xf98] sm:$0xff]
  %v527 = vld [vmem:[%s1 + $0xfa0] sm:$0xff]
  %v528 = vld [vmem:[%s1 + $0xfa8] sm:$0xff]
  %v529 = vld [vmem:[%s1 + $0xfb0] sm:$0xff]
  %v530 = vld [vmem:[%s1 + $0xfb8] sm:$0xff]
  %v531 = vld [vmem:[%s1 + $0xfc0] sm:$0xff]
  %v532 = vld [vmem:[%s1 + $0xfc8] sm:$0xff]
  %v533 = vld [vmem:[%s1 + $0xfd0] sm:$0xff]
  %v534 = vld [vmem:[%s1 + $0xfd8] sm:$0xff]
  %v535 = vld [vmem:[%s1 + $0xfe0] sm:$0xff]
  %v536 = vld [vmem:[%s1 + $0xfe8] sm:$0xff]
  %v537 = vld [vmem:[%s1 + $0xff0] sm:$0xff]
  %v538 = vld [vmem:[%s1 + $0xff8] sm:$0xff]
  %v539 = vld [vmem:[%s1 + $0x1000] sm:$0xff]
  %v540 = vld [vmem:[%s1 + $0x1008] sm:$0xff]
  %v541 = vld [vmem:[%s1 + $0x1010] sm:$0xff]
  %v542 = vld [vmem:[%s1 + $0x1018] sm:$0xff]
  %v543 = vld [vmem:[%s1 + $0x1020] sm:$0xff]
  %v544 = vld [vmem:[%s1 + $0x1028] sm:$0xff]
  %v545 = vld [vmem:[%s1 + $0x1030] sm:$0xff]
  %v546 = vld [vmem:[%s1 + $0x1038] sm:$0xff]
  %v547 = vld [vmem:[%s1 + $0x1040] sm:$0xff]
  %v548 = vld [vmem:[%s1 + $0x1048] sm:$0xff]
  %v549 = vld [vmem:[%s1 + $0x1050] sm:$0xff]
  %v550 = vld [vmem:[%s1 + $0x1058] sm:$0xff]
  %v551 = vld [vmem:[%s1 + $0x1060] sm:$0xff]
  %v552 = vld [vmem:[%s1 + $0x1068] sm:$0xff]
  %v553 = vld [vmem:[%s1 + $0x1070] sm:$0xff]
  %v554 = vld [vmem:[%s1 + $0x1078] sm:$0xff]
  %v555 = vld [vmem:[%s1 + $0x1080] sm:$0xff]
  %v556 = vld [vmem:[%s1 + $0x1088] sm:$0xff]
  %v557 = vld [vmem:[%s1 + $0x1090] sm:$0xff]
  %v558 = vld [vmem:[%s1 + $0x1098] sm:$0xff]
  %v559 = vld [vmem:[%s1 + $0x10a0] sm:$0xff]
  %v560 = vld [vmem:[%s1 + $0x10a8] sm:$0xff]
  %v561 = vld [vmem:[%s1 + $0x10b0] sm:$0xff]
  %v562 = vld [vmem:[%s1 + $0x10b8] sm:$0xff]
  %v563 = vld [vmem:[%s1 + $0x10c0] sm:$0xff]
  %v564 = vld [vmem:[%s1 + $0x10c8] sm:$0xff]
  %v565 = vld [vmem:[%s1 + $0x10d0] sm:$0xff]
  %v566 = vld [vmem:[%s1 + $0x10d8] sm:$0xff]
  %v567 = vld [vmem:[%s1 + $0x10e0] sm:$0xff]
  %v568 = vld [vmem:[%s1 + $0x10e8] sm:$0xff]
  %v569 = vld [vmem:[%s1 + $0x10f0] sm:$0xff]
  %v570 = vld [vmem:[%s1 + $0x10f8] sm:$0xff]
  %v571 = vld [vmem:[%s1 + $0x1100] sm:$0xff]
  %v572 = vld [vmem:[%s1 + $0x1108] sm:$0xff]
  %v573 = vld [vmem:[%s1 + $0x1110] sm:$0xff]
  %v574 = vld [vmem:[%s1 + $0x1118] sm:$0xff]
  %v575 = vld [vmem:[%s1 + $0x1120] sm:$0xff]
  %v576 = vld [vmem:[%s1 + $0x1128] sm:$0xff]
  %v577 = vld [vmem:[%s1 + $0x1130] sm:$0xff]
  %v578 = vld [vmem:[%s1 + $0x1138] sm:$0xff]
  %v579 = vld [vmem:[%s1 + $0x1140] sm:$0xff]
  %v580 = vld [vmem:[%s1 + $0x1148] sm:$0xff]
  %v581 = vld [vmem:[%s1 + $0x1150] sm:$0xff]
  %v582 = vld [vmem:[%s1 + $0x1158] sm:$0xff]
  %v583 = vld [vmem:[%s1 + $0x1160] sm:$0xff]
  %v584 = vld [vmem:[%s1 + $0x1168] sm:$0xff]
  %v585 = vld [vmem:[%s1 + $0x1170] sm:$0xff]
  %v586 = vld [vmem:[%s1 + $0x1178] sm:$0xff]
  %v587 = vld [vmem:[%s1 + $0x1180] sm:$0xff]
  %v588 = vld [vmem:[%s1 + $0x1188] sm:$0xff]
  %v589 = vld [vmem:[%s1 + $0x1190] sm:$0xff]
  %v590 = vld [vmem:[%s1 + $0x1198] sm:$0xff]
  %v591 = vld [vmem:[%s1 + $0x11a0] sm:$0xff]
  %v592 = vld [vmem:[%s1 + $0x11a8] sm:$0xff]
  %v593 = vld [vmem:[%s1 + $0x11b0] sm:$0xff]
  %v594 = vld [vmem:[%s1 + $0x11b8] sm:$0xff]
  %v595 = vld [vmem:[%s1 + $0x11c0] sm:$0xff]
  %v596 = vld [vmem:[%s1 + $0x11c8] sm:$0xff]
  %v597 = vld [vmem:[%s1 + $0x11d0] sm:$0xff]
  %v598 = vld [vmem:[%s1 + $0x11d8] sm:$0xff]
  %v599 = vld [vmem:[%s1 + $0x11e0] sm:$0xff]
  %v600 = vld [vmem:[%s1 + $0x11e8] sm:$0xff]
  %v601 = vld [vmem:[%s1 + $0x11f0] sm:$0xff]
  %v602 = vld [vmem:[%s1 + $0x11f8] sm:$0xff]
  %v603 = vld [vmem:[%s0] sm:$0xff]
  %v604 = vld [vmem:[%s0 + $0x8] sm:$0xff]
  %v605 = vld [vmem:[%s0 + $0x10] sm:$0xff]
  %v606 = vld [vmem:[%s0 + $0x18] sm:$0xff]
  %v607 = vld [vmem:[%s0 + $0x20] sm:$0xff]
  %v608 = vld [vmem:[%s0 + $0x28] sm:$0xff]
  %v609 = vld [vmem:[%s0 + $0x30] sm:$0xff]
  %v610 = vld [vmem:[%s0 + $0x38] sm:$0xff]
  %v611 = vld [vmem:[%s0 + $0x40] sm:$0xff]
  %v612 = vld [vmem:[%s0 + $0x48] sm:$0xff]
  %v613 = vld [vmem:[%s0 + $0x50] sm:$0xff]
  %v614 = vld [vmem:[%s0 + $0x58] sm:$0xff]
  %v615 = vld [vmem:[%s0 + $0x60] sm:$0xff]
  %v616 = vld [vmem:[%s0 + $0x68] sm:$0xff]
  %v617 = vld [vmem:[%s0 + $0x70] sm:$0xff]
  %v618 = vld [vmem:[%s0 + $0x78] sm:$0xff]
  %v619 = vld [vmem:[%s0 + $0x80] sm:$0xff]
  %v620 = vld [vmem:[%s0 + $0x88] sm:$0xff]
  %v621 = vld [vmem:[%s0 + $0x90] sm:$0xff]
  %v622 = vld [vmem:[%s0 + $0x98] sm:$0xff]
  %v623 = vld [vmem:[%s0 + $0xa0] sm:$0xff]
  %v624 = vld [vmem:[%s0 + $0xa8] sm:$0xff]
  %v625 = vld [vmem:[%s0 + $0xb0] sm:$0xff]
  %v626 = vld [vmem:[%s0 + $0xb8] sm:$0xff]
  %v627 = vld [vmem:[%s0 + $0xc0] sm:$0x77]
  %v1204 = vunpack.c.l.b16 %v27
  %v1205 = vunpack.c.h.b16 %v27
  %v1206 = vunpack.c.l.b16 %v28
  %v1207 = vunpack.c.h.b16 %v28
  %v1208 = vunpack.c.l.b16 %v29
  %v1209 = vunpack.c.h.b16 %v29
  %v1210 = vunpack.c.l.b16 %v30
  %v1211 = vunpack.c.h.b16 %v30
  %v1212 = vunpack.c.l.b16 %v31
  %v1213 = vunpack.c.h.b16 %v31
  %v1214 = vunpack.c.l.b16 %v32
  %v1215 = vunpack.c.h.b16 %v32
  %v1216 = vunpack.c.l.b16 %v33
  %v1217 = vunpack.c.h.b16 %v33
  %v1218 = vunpack.c.l.b16 %v34
  %v1219 = vunpack.c.h.b16 %v34
  %v1220 = vunpack.c.l.b16 %v35
  %v1221 = vunpack.c.h.b16 %v35
  %v1222 = vunpack.c.l.b16 %v36
  %v1223 = vunpack.c.h.b16 %v36
  %v1224 = vunpack.c.l.b16 %v37
  %v1225 = vunpack.c.h.b16 %v37
  %v1226 = vunpack.c.l.b16 %v38
  %v1227 = vunpack.c.h.b16 %v38
  %v1228 = vunpack.c.l.b16 %v39
  %v1229 = vunpack.c.h.b16 %v39
  %v1230 = vunpack.c.l.b16 %v40
  %v1231 = vunpack.c.h.b16 %v40
  %v1232 = vunpack.c.l.b16 %v41
  %v1233 = vunpack.c.h.b16 %v41
  %v1234 = vunpack.c.l.b16 %v42
  %v1235 = vunpack.c.h.b16 %v42
  %v1236 = vunpack.c.l.b16 %v43
  %v1237 = vunpack.c.h.b16 %v43
  %v1238 = vunpack.c.l.b16 %v44
  %v1239 = vunpack.c.h.b16 %v44
  %v1240 = vunpack.c.l.b16 %v45
  %v1241 = vunpack.c.h.b16 %v45
  %v1242 = vunpack.c.l.b16 %v46
  %v1243 = vunpack.c.h.b16 %v46
  %v1244 = vunpack.c.l.b16 %v47
  %v1245 = vunpack.c.h.b16 %v47
  %v1246 = vunpack.c.l.b16 %v48
  %v1247 = vunpack.c.h.b16 %v48
  %v1248 = vunpack.c.l.b16 %v49
  %v1249 = vunpack.c.h.b16 %v49
  %v1250 = vunpack.c.l.b16 %v50
  %v1251 = vunpack.c.h.b16 %v50
  %v1252 = vunpack.c.l.b16 %v51
  %v1253 = vunpack.c.h.b16 %v51
  %v1254 = vunpack.c.l.b16 %v52
  %v1255 = vunpack.c.h.b16 %v52
  %v1256 = vunpack.c.l.b16 %v53
  %v1257 = vunpack.c.h.b16 %v53
  %v1258 = vunpack.c.l.b16 %v54
  %v1259 = vunpack.c.h.b16 %v54
  %v1260 = vunpack.c.l.b16 %v55
  %v1261 = vunpack.c.h.b16 %v55
  %v1262 = vunpack.c.l.b16 %v56
  %v1263 = vunpack.c.h.b16 %v56
  %v1264 = vunpack.c.l.b16 %v57
  %v1265 = vunpack.c.h.b16 %v57
  %v1266 = vunpack.c.l.b16 %v58
  %v1267 = vunpack.c.h.b16 %v58
  %v1268 = vunpack.c.l.b16 %v59
  %v1269 = vunpack.c.h.b16 %v59
  %v1270 = vunpack.c.l.b16 %v60
  %v1271 = vunpack.c.h.b16 %v60
  %v1272 = vunpack.c.l.b16 %v61
  %v1273 = vunpack.c.h.b16 %v61
  %v1274 = vunpack.c.l.b16 %v62
  %v1275 = vunpack.c.h.b16 %v62
  %v1276 = vunpack.c.l.b16 %v63
  %v1277 = vunpack.c.h.b16 %v63
  %v1278 = vunpack.c.l.b16 %v64
  %v1279 = vunpack.c.h.b16 %v64
  %v1280 = vunpack.c.l.b16 %v65
  %v1281 = vunpack.c.h.b16 %v65
  %v1282 = vunpack.c.l.b16 %v66
  %v1283 = vunpack.c.h.b16 %v66
  %v1284 = vunpack.c.l.b16 %v67
  %v1285 = vunpack.c.h.b16 %v67
  %v1286 = vunpack.c.l.b16 %v68
  %v1287 = vunpack.c.h.b16 %v68
  %v1288 = vunpack.c.l.b16 %v69
  %v1289 = vunpack.c.h.b16 %v69
  %v1290 = vunpack.c.l.b16 %v70
  %v1291 = vunpack.c.h.b16 %v70
  %v1292 = vunpack.c.l.b16 %v71
  %v1293 = vunpack.c.h.b16 %v71
  %v1294 = vunpack.c.l.b16 %v72
  %v1295 = vunpack.c.h.b16 %v72
  %v1296 = vunpack.c.l.b16 %v73
  %v1297 = vunpack.c.h.b16 %v73
  %v1298 = vunpack.c.l.b16 %v74
  %v1299 = vunpack.c.h.b16 %v74
  %v1300 = vunpack.c.l.b16 %v75
  %v1301 = vunpack.c.h.b16 %v75
  %v1302 = vunpack.c.l.b16 %v76
  %v1303 = vunpack.c.h.b16 %v76
  %v1304 = vunpack.c.l.b16 %v77
  %v1305 = vunpack.c.h.b16 %v77
  %v1306 = vunpack.c.l.b16 %v78
  %v1307 = vunpack.c.h.b16 %v78
  %v1308 = vunpack.c.l.b16 %v79
  %v1309 = vunpack.c.h.b16 %v79
  %v1310 = vunpack.c.l.b16 %v80
  %v1311 = vunpack.c.h.b16 %v80
  %v1312 = vunpack.c.l.b16 %v81
  %v1313 = vunpack.c.h.b16 %v81
  %v1314 = vunpack.c.l.b16 %v82
  %v1315 = vunpack.c.h.b16 %v82
  %v1316 = vunpack.c.l.b16 %v83
  %v1317 = vunpack.c.h.b16 %v83
  %v1318 = vunpack.c.l.b16 %v84
  %v1319 = vunpack.c.h.b16 %v84
  %v1320 = vunpack.c.l.b16 %v85
  %v1321 = vunpack.c.h.b16 %v85
  %v1322 = vunpack.c.l.b16 %v86
  %v1323 = vunpack.c.h.b16 %v86
  %v1324 = vunpack.c.l.b16 %v87
  %v1325 = vunpack.c.h.b16 %v87
  %v1326 = vunpack.c.l.b16 %v88
  %v1327 = vunpack.c.h.b16 %v88
  %v1328 = vunpack.c.l.b16 %v89
  %v1329 = vunpack.c.h.b16 %v89
  %v1330 = vunpack.c.l.b16 %v90
  %v1331 = vunpack.c.h.b16 %v90
  %v1332 = vunpack.c.l.b16 %v91
  %v1333 = vunpack.c.h.b16 %v91
  %v1334 = vunpack.c.l.b16 %v92
  %v1335 = vunpack.c.h.b16 %v92
  %v1336 = vunpack.c.l.b16 %v93
  %v1337 = vunpack.c.h.b16 %v93
  %v1338 = vunpack.c.l.b16 %v94
  %v1339 = vunpack.c.h.b16 %v94
  %v1340 = vunpack.c.l.b16 %v95
  %v1341 = vunpack.c.h.b16 %v95
  %v1342 = vunpack.c.l.b16 %v96
  %v1343 = vunpack.c.h.b16 %v96
  %v1344 = vunpack.c.l.b16 %v97
  %v1345 = vunpack.c.h.b16 %v97
  %v1346 = vunpack.c.l.b16 %v98
  %v1347 = vunpack.c.h.b16 %v98
  %v1348 = vunpack.c.l.b16 %v99
  %v1349 = vunpack.c.h.b16 %v99
  %v1350 = vunpack.c.l.b16 %v100
  %v1351 = vunpack.c.h.b16 %v100
  %v1352 = vunpack.c.l.b16 %v101
  %v1353 = vunpack.c.h.b16 %v101
  %v1354 = vunpack.c.l.b16 %v102
  %v1355 = vunpack.c.h.b16 %v102
  %v1356 = vunpack.c.l.b16 %v103
  %v1357 = vunpack.c.h.b16 %v103
  %v1358 = vunpack.c.l.b16 %v104
  %v1359 = vunpack.c.h.b16 %v104
  %v1360 = vunpack.c.l.b16 %v105
  %v1361 = vunpack.c.h.b16 %v105
  %v1362 = vunpack.c.l.b16 %v106
  %v1363 = vunpack.c.h.b16 %v106
  %v1364 = vunpack.c.l.b16 %v107
  %v1365 = vunpack.c.h.b16 %v107
  %v1366 = vunpack.c.l.b16 %v108
  %v1367 = vunpack.c.h.b16 %v108
  %v1368 = vunpack.c.l.b16 %v109
  %v1369 = vunpack.c.h.b16 %v109
  %v1370 = vunpack.c.l.b16 %v110
  %v1371 = vunpack.c.h.b16 %v110
  %v1372 = vunpack.c.l.b16 %v111
  %v1373 = vunpack.c.h.b16 %v111
  %v1374 = vunpack.c.l.b16 %v112
  %v1375 = vunpack.c.h.b16 %v112
  %v1376 = vunpack.c.l.b16 %v113
  %v1377 = vunpack.c.h.b16 %v113
  %v1378 = vunpack.c.l.b16 %v114
  %v1379 = vunpack.c.h.b16 %v114
  %v1380 = vunpack.c.l.b16 %v115
  %v1381 = vunpack.c.h.b16 %v115
  %v1382 = vunpack.c.l.b16 %v116
  %v1383 = vunpack.c.h.b16 %v116
  %v1384 = vunpack.c.l.b16 %v117
  %v1385 = vunpack.c.h.b16 %v117
  %v1386 = vunpack.c.l.b16 %v118
  %v1387 = vunpack.c.h.b16 %v118
  %v1388 = vunpack.c.l.b16 %v119
  %v1389 = vunpack.c.h.b16 %v119
  %v1390 = vunpack.c.l.b16 %v120
  %v1391 = vunpack.c.h.b16 %v120
  %v1392 = vunpack.c.l.b16 %v121
  %v1393 = vunpack.c.h.b16 %v121
  %v1394 = vunpack.c.l.b16 %v122
  %v1395 = vunpack.c.h.b16 %v122
  %v1396 = vunpack.c.l.b16 %v123
  %v1397 = vunpack.c.h.b16 %v123
  %v1398 = vunpack.c.l.b16 %v124
  %v1399 = vunpack.c.h.b16 %v124
  %v1400 = vunpack.c.l.b16 %v125
  %v1401 = vunpack.c.h.b16 %v125
  %v1402 = vunpack.c.l.b16 %v126
  %v1403 = vunpack.c.h.b16 %v126
  %v1404 = vunpack.c.l.b16 %v127
  %v1405 = vunpack.c.h.b16 %v127
  %v1406 = vunpack.c.l.b16 %v128
  %v1407 = vunpack.c.h.b16 %v128
  %v1408 = vunpack.c.l.b16 %v129
  %v1409 = vunpack.c.h.b16 %v129
  %v1410 = vunpack.c.l.b16 %v130
  %v1411 = vunpack.c.h.b16 %v130
  %v1412 = vunpack.c.l.b16 %v131
  %v1413 = vunpack.c.h.b16 %v131
  %v1414 = vunpack.c.l.b16 %v132
  %v1415 = vunpack.c.h.b16 %v132
  %v1416 = vunpack.c.l.b16 %v133
  %v1417 = vunpack.c.h.b16 %v133
  %v1418 = vunpack.c.l.b16 %v134
  %v1419 = vunpack.c.h.b16 %v134
  %v1420 = vunpack.c.l.b16 %v135
  %v1421 = vunpack.c.h.b16 %v135
  %v1422 = vunpack.c.l.b16 %v136
  %v1423 = vunpack.c.h.b16 %v136
  %v1424 = vunpack.c.l.b16 %v137
  %v1425 = vunpack.c.h.b16 %v137
  %v1426 = vunpack.c.l.b16 %v138
  %v1427 = vunpack.c.h.b16 %v138
  %v1428 = vunpack.c.l.b16 %v139
  %v1429 = vunpack.c.h.b16 %v139
  %v1430 = vunpack.c.l.b16 %v140
  %v1431 = vunpack.c.h.b16 %v140
  %v1432 = vunpack.c.l.b16 %v141
  %v1433 = vunpack.c.h.b16 %v141
  %v1434 = vunpack.c.l.b16 %v142
  %v1435 = vunpack.c.h.b16 %v142
  %v1436 = vunpack.c.l.b16 %v143
  %v1437 = vunpack.c.h.b16 %v143
  %v1438 = vunpack.c.l.b16 %v144
  %v1439 = vunpack.c.h.b16 %v144
  %v1440 = vunpack.c.l.b16 %v145
  %v1441 = vunpack.c.h.b16 %v145
  %v1442 = vunpack.c.l.b16 %v146
  %v1443 = vunpack.c.h.b16 %v146
  %v1444 = vunpack.c.l.b16 %v147
  %v1445 = vunpack.c.h.b16 %v147
  %v1446 = vunpack.c.l.b16 %v148
  %v1447 = vunpack.c.h.b16 %v148
  %v1448 = vunpack.c.l.b16 %v149
  %v1449 = vunpack.c.h.b16 %v149
  %v1450 = vunpack.c.l.b16 %v150
  %v1451 = vunpack.c.h.b16 %v150
  %v1452 = vunpack.c.l.b16 %v151
  %v1453 = vunpack.c.h.b16 %v151
  %v1454 = vunpack.c.l.b16 %v152
  %v1455 = vunpack.c.h.b16 %v152
  %v1456 = vunpack.c.l.b16 %v153
  %v1457 = vunpack.c.h.b16 %v153
  %v1458 = vunpack.c.l.b16 %v154
  %v1459 = vunpack.c.h.b16 %v154
  %v1460 = vunpack.c.l.b16 %v155
  %v1461 = vunpack.c.h.b16 %v155
  %v1462 = vunpack.c.l.b16 %v156
  %v1463 = vunpack.c.h.b16 %v156
  %v1464 = vunpack.c.l.b16 %v157
  %v1465 = vunpack.c.h.b16 %v157
  %v1466 = vunpack.c.l.b16 %v158
  %v1467 = vunpack.c.h.b16 %v158
  %v1468 = vunpack.c.l.b16 %v159
  %v1469 = vunpack.c.h.b16 %v159
  %v1470 = vunpack.c.l.b16 %v160
  %v1471 = vunpack.c.h.b16 %v160
  %v1472 = vunpack.c.l.b16 %v161
  %v1473 = vunpack.c.h.b16 %v161
  %v1474 = vunpack.c.l.b16 %v162
  %v1475 = vunpack.c.h.b16 %v162
  %v1476 = vunpack.c.l.b16 %v163
  %v1477 = vunpack.c.h.b16 %v163
  %v1478 = vunpack.c.l.b16 %v164
  %v1479 = vunpack.c.h.b16 %v164
  %v1480 = vunpack.c.l.b16 %v165
  %v1481 = vunpack.c.h.b16 %v165
  %v1482 = vunpack.c.l.b16 %v166
  %v1483 = vunpack.c.h.b16 %v166
  %v1484 = vunpack.c.l.b16 %v167
  %v1485 = vunpack.c.h.b16 %v167
  %v1486 = vunpack.c.l.b16 %v168
  %v1487 = vunpack.c.h.b16 %v168
  %v1488 = vunpack.c.l.b16 %v169
  %v1489 = vunpack.c.h.b16 %v169
  %v1490 = vunpack.c.l.b16 %v170
  %v1491 = vunpack.c.h.b16 %v170
  %v1492 = vunpack.c.l.b16 %v171
  %v1493 = vunpack.c.h.b16 %v171
  %v1494 = vunpack.c.l.b16 %v172
  %v1495 = vunpack.c.h.b16 %v172
  %v1496 = vunpack.c.l.b16 %v173
  %v1497 = vunpack.c.h.b16 %v173
  %v1498 = vunpack.c.l.b16 %v174
  %v1499 = vunpack.c.h.b16 %v174
  %v1500 = vunpack.c.l.b16 %v175
  %v1501 = vunpack.c.h.b16 %v175
  %v1502 = vunpack.c.l.b16 %v176
  %v1503 = vunpack.c.h.b16 %v176
  %v1504 = vunpack.c.l.b16 %v177
  %v1505 = vunpack.c.h.b16 %v177
  %v1506 = vunpack.c.l.b16 %v178
  %v1507 = vunpack.c.h.b16 %v178
  %v1508 = vunpack.c.l.b16 %v179
  %v1509 = vunpack.c.h.b16 %v179
  %v1510 = vunpack.c.l.b16 %v180
  %v1511 = vunpack.c.h.b16 %v180
  %v1512 = vunpack.c.l.b16 %v181
  %v1513 = vunpack.c.h.b16 %v181
  %v1514 = vunpack.c.l.b16 %v182
  %v1515 = vunpack.c.h.b16 %v182
  %v1516 = vunpack.c.l.b16 %v183
  %v1517 = vunpack.c.h.b16 %v183
  %v1518 = vunpack.c.l.b16 %v184
  %v1519 = vunpack.c.h.b16 %v184
  %v1520 = vunpack.c.l.b16 %v185
  %v1521 = vunpack.c.h.b16 %v185
  %v1522 = vunpack.c.l.b16 %v186
  %v1523 = vunpack.c.h.b16 %v186
  %v1524 = vunpack.c.l.b16 %v187
  %v1525 = vunpack.c.h.b16 %v187
  %v1526 = vunpack.c.l.b16 %v188
  %v1527 = vunpack.c.h.b16 %v188
  %v1528 = vunpack.c.l.b16 %v189
  %v1529 = vunpack.c.h.b16 %v189
  %v1530 = vunpack.c.l.b16 %v190
  %v1531 = vunpack.c.h.b16 %v190
  %v1532 = vunpack.c.l.b16 %v191
  %v1533 = vunpack.c.h.b16 %v191
  %v1534 = vunpack.c.l.b16 %v192
  %v1535 = vunpack.c.h.b16 %v192
  %v1536 = vunpack.c.l.b16 %v193
  %v1537 = vunpack.c.h.b16 %v193
  %v1538 = vunpack.c.l.b16 %v194
  %v1539 = vunpack.c.h.b16 %v194
  %v1540 = vunpack.c.l.b16 %v195
  %v1541 = vunpack.c.h.b16 %v195
  %v1542 = vunpack.c.l.b16 %v196
  %v1543 = vunpack.c.h.b16 %v196
  %v1544 = vunpack.c.l.b16 %v197
  %v1545 = vunpack.c.h.b16 %v197
  %v1546 = vunpack.c.l.b16 %v198
  %v1547 = vunpack.c.h.b16 %v198
  %v1548 = vunpack.c.l.b16 %v199
  %v1549 = vunpack.c.h.b16 %v199
  %v1550 = vunpack.c.l.b16 %v200
  %v1551 = vunpack.c.h.b16 %v200
  %v1552 = vunpack.c.l.b16 %v201
  %v1553 = vunpack.c.h.b16 %v201
  %v1554 = vunpack.c.l.b16 %v202
  %v1555 = vunpack.c.h.b16 %v202
  %v1556 = vunpack.c.l.b16 %v203
  %v1557 = vunpack.c.h.b16 %v203
  %v1558 = vunpack.c.l.b16 %v204
  %v1559 = vunpack.c.h.b16 %v204
  %v1560 = vunpack.c.l.b16 %v205
  %v1561 = vunpack.c.h.b16 %v205
  %v1562 = vunpack.c.l.b16 %v206
  %v1563 = vunpack.c.h.b16 %v206
  %v1564 = vunpack.c.l.b16 %v207
  %v1565 = vunpack.c.h.b16 %v207
  %v1566 = vunpack.c.l.b16 %v208
  %v1567 = vunpack.c.h.b16 %v208
  %v1568 = vunpack.c.l.b16 %v209
  %v1569 = vunpack.c.h.b16 %v209
  %v1570 = vunpack.c.l.b16 %v210
  %v1571 = vunpack.c.h.b16 %v210
  %v1572 = vunpack.c.l.b16 %v211
  %v1573 = vunpack.c.h.b16 %v211
  %v1574 = vunpack.c.l.b16 %v212
  %v1575 = vunpack.c.h.b16 %v212
  %v1576 = vunpack.c.l.b16 %v213
  %v1577 = vunpack.c.h.b16 %v213
  %v1578 = vunpack.c.l.b16 %v214
  %v1579 = vunpack.c.h.b16 %v214
  %v1580 = vunpack.c.l.b16 %v215
  %v1581 = vunpack.c.h.b16 %v215
  %v1582 = vunpack.c.l.b16 %v216
  %v1583 = vunpack.c.h.b16 %v216
  %v1584 = vunpack.c.l.b16 %v217
  %v1585 = vunpack.c.h.b16 %v217
  %v1586 = vunpack.c.l.b16 %v218
  %v1587 = vunpack.c.h.b16 %v218
  %v1588 = vunpack.c.l.b16 %v219
  %v1589 = vunpack.c.h.b16 %v219
  %v1590 = vunpack.c.l.b16 %v220
  %v1591 = vunpack.c.h.b16 %v220
  %v1592 = vunpack.c.l.b16 %v221
  %v1593 = vunpack.c.h.b16 %v221
  %v1594 = vunpack.c.l.b16 %v222
  %v1595 = vunpack.c.h.b16 %v222
  %v1596 = vunpack.c.l.b16 %v223
  %v1597 = vunpack.c.h.b16 %v223
  %v1598 = vunpack.c.l.b16 %v224
  %v1599 = vunpack.c.h.b16 %v224
  %v1600 = vunpack.c.l.b16 %v225
  %v1601 = vunpack.c.h.b16 %v225
  %v1602 = vunpack.c.l.b16 %v226
  %v1603 = vunpack.c.h.b16 %v226
  %v1604 = vunpack.c.l.b16 %v227
  %v1605 = vunpack.c.h.b16 %v227
  %v1606 = vunpack.c.l.b16 %v228
  %v1607 = vunpack.c.h.b16 %v228
  %v1608 = vunpack.c.l.b16 %v229
  %v1609 = vunpack.c.h.b16 %v229
  %v1610 = vunpack.c.l.b16 %v230
  %v1611 = vunpack.c.h.b16 %v230
  %v1612 = vunpack.c.l.b16 %v231
  %v1613 = vunpack.c.h.b16 %v231
  %v1614 = vunpack.c.l.b16 %v232
  %v1615 = vunpack.c.h.b16 %v232
  %v1616 = vunpack.c.l.b16 %v233
  %v1617 = vunpack.c.h.b16 %v233
  %v1618 = vunpack.c.l.b16 %v234
  %v1619 = vunpack.c.h.b16 %v234
  %v1620 = vunpack.c.l.b16 %v235
  %v1621 = vunpack.c.h.b16 %v235
  %v1622 = vunpack.c.l.b16 %v236
  %v1623 = vunpack.c.h.b16 %v236
  %v1624 = vunpack.c.l.b16 %v237
  %v1625 = vunpack.c.h.b16 %v237
  %v1626 = vunpack.c.l.b16 %v238
  %v1627 = vunpack.c.h.b16 %v238
  %v1628 = vunpack.c.l.b16 %v239
  %v1629 = vunpack.c.h.b16 %v239
  %v1630 = vunpack.c.l.b16 %v240
  %v1631 = vunpack.c.h.b16 %v240
  %v1632 = vunpack.c.l.b16 %v241
  %v1633 = vunpack.c.h.b16 %v241
  %v1634 = vunpack.c.l.b16 %v242
  %v1635 = vunpack.c.h.b16 %v242
  %v1636 = vunpack.c.l.b16 %v243
  %v1637 = vunpack.c.h.b16 %v243
  %v1638 = vunpack.c.l.b16 %v244
  %v1639 = vunpack.c.h.b16 %v244
  %v1640 = vunpack.c.l.b16 %v245
  %v1641 = vunpack.c.h.b16 %v245
  %v1642 = vunpack.c.l.b16 %v246
  %v1643 = vunpack.c.h.b16 %v246
  %v1644 = vunpack.c.l.b16 %v247
  %v1645 = vunpack.c.h.b16 %v247
  %v1646 = vunpack.c.l.b16 %v248
  %v1647 = vunpack.c.h.b16 %v248
  %v1648 = vunpack.c.l.b16 %v249
  %v1649 = vunpack.c.h.b16 %v249
  %v1650 = vunpack.c.l.b16 %v250
  %v1651 = vunpack.c.h.b16 %v250
  %v1652 = vunpack.c.l.b16 %v251
  %v1653 = vunpack.c.h.b16 %v251
  %v1654 = vunpack.c.l.b16 %v252
  %v1655 = vunpack.c.h.b16 %v252
  %v1656 = vunpack.c.l.b16 %v253
  %v1657 = vunpack.c.h.b16 %v253
  %v1658 = vunpack.c.l.b16 %v254
  %v1659 = vunpack.c.h.b16 %v254
  %v1660 = vunpack.c.l.b16 %v255
  %v1661 = vunpack.c.h.b16 %v255
  %v1662 = vunpack.c.l.b16 %v256
  %v1663 = vunpack.c.h.b16 %v256
  %v1664 = vunpack.c.l.b16 %v257
  %v1665 = vunpack.c.h.b16 %v257
  %v1666 = vunpack.c.l.b16 %v258
  %v1667 = vunpack.c.h.b16 %v258
  %v1668 = vunpack.c.l.b16 %v259
  %v1669 = vunpack.c.h.b16 %v259
  %v1670 = vunpack.c.l.b16 %v260
  %v1671 = vunpack.c.h.b16 %v260
  %v1672 = vunpack.c.l.b16 %v261
  %v1673 = vunpack.c.h.b16 %v261
  %v1674 = vunpack.c.l.b16 %v262
  %v1675 = vunpack.c.h.b16 %v262
  %v1676 = vunpack.c.l.b16 %v263
  %v1677 = vunpack.c.h.b16 %v263
  %v1678 = vunpack.c.l.b16 %v264
  %v1679 = vunpack.c.h.b16 %v264
  %v1680 = vunpack.c.l.b16 %v265
  %v1681 = vunpack.c.h.b16 %v265
  %v1682 = vunpack.c.l.b16 %v266
  %v1683 = vunpack.c.h.b16 %v266
  %v1684 = vunpack.c.l.b16 %v267
  %v1685 = vunpack.c.h.b16 %v267
  %v1686 = vunpack.c.l.b16 %v268
  %v1687 = vunpack.c.h.b16 %v268
  %v1688 = vunpack.c.l.b16 %v269
  %v1689 = vunpack.c.h.b16 %v269
  %v1690 = vunpack.c.l.b16 %v270
  %v1691 = vunpack.c.h.b16 %v270
  %v1692 = vunpack.c.l.b16 %v271
  %v1693 = vunpack.c.h.b16 %v271
  %v1694 = vunpack.c.l.b16 %v272
  %v1695 = vunpack.c.h.b16 %v272
  %v1696 = vunpack.c.l.b16 %v273
  %v1697 = vunpack.c.h.b16 %v273
  %v1698 = vunpack.c.l.b16 %v274
  %v1699 = vunpack.c.h.b16 %v274
  %v1700 = vunpack.c.l.b16 %v275
  %v1701 = vunpack.c.h.b16 %v275
  %v1702 = vunpack.c.l.b16 %v276
  %v1703 = vunpack.c.h.b16 %v276
  %v1704 = vunpack.c.l.b16 %v277
  %v1705 = vunpack.c.h.b16 %v277
  %v1706 = vunpack.c.l.b16 %v278
  %v1707 = vunpack.c.h.b16 %v278
  %v1708 = vunpack.c.l.b16 %v279
  %v1709 = vunpack.c.h.b16 %v279
  %v1710 = vunpack.c.l.b16 %v280
  %v1711 = vunpack.c.h.b16 %v280
  %v1712 = vunpack.c.l.b16 %v281
  %v1713 = vunpack.c.h.b16 %v281
  %v1714 = vunpack.c.l.b16 %v282
  %v1715 = vunpack.c.h.b16 %v282
  %v1716 = vunpack.c.l.b16 %v283
  %v1717 = vunpack.c.h.b16 %v283
  %v1718 = vunpack.c.l.b16 %v284
  %v1719 = vunpack.c.h.b16 %v284
  %v1720 = vunpack.c.l.b16 %v285
  %v1721 = vunpack.c.h.b16 %v285
  %v1722 = vunpack.c.l.b16 %v286
  %v1723 = vunpack.c.h.b16 %v286
  %v1724 = vunpack.c.l.b16 %v287
  %v1725 = vunpack.c.h.b16 %v287
  %v1726 = vunpack.c.l.b16 %v288
  %v1727 = vunpack.c.h.b16 %v288
  %v1728 = vunpack.c.l.b16 %v289
  %v1729 = vunpack.c.h.b16 %v289
  %v1730 = vunpack.c.l.b16 %v290
  %v1731 = vunpack.c.h.b16 %v290
  %v1732 = vunpack.c.l.b16 %v291
  %v1733 = vunpack.c.h.b16 %v291
  %v1734 = vunpack.c.l.b16 %v292
  %v1735 = vunpack.c.h.b16 %v292
  %v1736 = vunpack.c.l.b16 %v293
  %v1737 = vunpack.c.h.b16 %v293
  %v1738 = vunpack.c.l.b16 %v294
  %v1739 = vunpack.c.h.b16 %v294
  %v1740 = vunpack.c.l.b16 %v295
  %v1741 = vunpack.c.h.b16 %v295
  %v1742 = vunpack.c.l.b16 %v296
  %v1743 = vunpack.c.h.b16 %v296
  %v1744 = vunpack.c.l.b16 %v297
  %v1745 = vunpack.c.h.b16 %v297
  %v1746 = vunpack.c.l.b16 %v298
  %v1747 = vunpack.c.h.b16 %v298
  %v1748 = vunpack.c.l.b16 %v299
  %v1749 = vunpack.c.h.b16 %v299
  %v1750 = vunpack.c.l.b16 %v300
  %v1751 = vunpack.c.h.b16 %v300
  %v1752 = vunpack.c.l.b16 %v301
  %v1753 = vunpack.c.h.b16 %v301
  %v1754 = vunpack.c.l.b16 %v302
  %v1755 = vunpack.c.h.b16 %v302
  %v1756 = vunpack.c.l.b16 %v303
  %v1757 = vunpack.c.h.b16 %v303
  %v1758 = vunpack.c.l.b16 %v304
  %v1759 = vunpack.c.h.b16 %v304
  %v1760 = vunpack.c.l.b16 %v305
  %v1761 = vunpack.c.h.b16 %v305
  %v1762 = vunpack.c.l.b16 %v306
  %v1763 = vunpack.c.h.b16 %v306
  %v1764 = vunpack.c.l.b16 %v307
  %v1765 = vunpack.c.h.b16 %v307
  %v1766 = vunpack.c.l.b16 %v308
  %v1767 = vunpack.c.h.b16 %v308
  %v1768 = vunpack.c.l.b16 %v309
  %v1769 = vunpack.c.h.b16 %v309
  %v1770 = vunpack.c.l.b16 %v310
  %v1771 = vunpack.c.h.b16 %v310
  %v1772 = vunpack.c.l.b16 %v311
  %v1773 = vunpack.c.h.b16 %v311
  %v1774 = vunpack.c.l.b16 %v312
  %v1775 = vunpack.c.h.b16 %v312
  %v1776 = vunpack.c.l.b16 %v313
  %v1777 = vunpack.c.h.b16 %v313
  %v1778 = vunpack.c.l.b16 %v314
  %v1779 = vunpack.c.h.b16 %v314
  %v1780 = vunpack.c.l.b16 %v315
  %v1781 = vunpack.c.h.b16 %v315
  %v1782 = vunpack.c.l.b16 %v316
  %v1783 = vunpack.c.h.b16 %v316
  %v1784 = vunpack.c.l.b16 %v317
  %v1785 = vunpack.c.h.b16 %v317
  %v1786 = vunpack.c.l.b16 %v318
  %v1787 = vunpack.c.h.b16 %v318
  %v1788 = vunpack.c.l.b16 %v319
  %v1789 = vunpack.c.h.b16 %v319
  %v1790 = vunpack.c.l.b16 %v320
  %v1791 = vunpack.c.h.b16 %v320
  %v1792 = vunpack.c.l.b16 %v321
  %v1793 = vunpack.c.h.b16 %v321
  %v1794 = vunpack.c.l.b16 %v322
  %v1795 = vunpack.c.h.b16 %v322
  %v1796 = vunpack.c.l.b16 %v323
  %v1797 = vunpack.c.h.b16 %v323
  %v1798 = vunpack.c.l.b16 %v324
  %v1799 = vunpack.c.h.b16 %v324
  %v1800 = vunpack.c.l.b16 %v325
  %v1801 = vunpack.c.h.b16 %v325
  %v1802 = vunpack.c.l.b16 %v326
  %v1803 = vunpack.c.h.b16 %v326
  %v1804 = vunpack.c.l.b16 %v327
  %v1805 = vunpack.c.h.b16 %v327
  %v1806 = vunpack.c.l.b16 %v328
  %v1807 = vunpack.c.h.b16 %v328
  %v1808 = vunpack.c.l.b16 %v329
  %v1809 = vunpack.c.h.b16 %v329
  %v1810 = vunpack.c.l.b16 %v330
  %v1811 = vunpack.c.h.b16 %v330
  %v1812 = vunpack.c.l.b16 %v331
  %v1813 = vunpack.c.h.b16 %v331
  %v1814 = vunpack.c.l.b16 %v332
  %v1815 = vunpack.c.h.b16 %v332
  %v1816 = vunpack.c.l.b16 %v333
  %v1817 = vunpack.c.h.b16 %v333
  %v1818 = vunpack.c.l.b16 %v334
  %v1819 = vunpack.c.h.b16 %v334
  %v1820 = vunpack.c.l.b16 %v335
  %v1821 = vunpack.c.h.b16 %v335
  %v1822 = vunpack.c.l.b16 %v336
  %v1823 = vunpack.c.h.b16 %v336
  %v1824 = vunpack.c.l.b16 %v337
  %v1825 = vunpack.c.h.b16 %v337
  %v1826 = vunpack.c.l.b16 %v338
  %v1827 = vunpack.c.h.b16 %v338
  %v1828 = vunpack.c.l.b16 %v339
  %v1829 = vunpack.c.h.b16 %v339
  %v1830 = vunpack.c.l.b16 %v340
  %v1831 = vunpack.c.h.b16 %v340
  %v1832 = vunpack.c.l.b16 %v341
  %v1833 = vunpack.c.h.b16 %v341
  %v1834 = vunpack.c.l.b16 %v342
  %v1835 = vunpack.c.h.b16 %v342
  %v1836 = vunpack.c.l.b16 %v343
  %v1837 = vunpack.c.h.b16 %v343
  %v1838 = vunpack.c.l.b16 %v344
  %v1839 = vunpack.c.h.b16 %v344
  %v1840 = vunpack.c.l.b16 %v345
  %v1841 = vunpack.c.h.b16 %v345
  %v1842 = vunpack.c.l.b16 %v346
  %v1843 = vunpack.c.h.b16 %v346
  %v1844 = vunpack.c.l.b16 %v347
  %v1845 = vunpack.c.h.b16 %v347
  %v1846 = vunpack.c.l.b16 %v348
  %v1847 = vunpack.c.h.b16 %v348
  %v1848 = vunpack.c.l.b16 %v349
  %v1849 = vunpack.c.h.b16 %v349
  %v1850 = vunpack.c.l.b16 %v350
  %v1851 = vunpack.c.h.b16 %v350
  %v1852 = vunpack.c.l.b16 %v351
  %v1853 = vunpack.c.h.b16 %v351
  %v1854 = vunpack.c.l.b16 %v352
  %v1855 = vunpack.c.h.b16 %v352
  %v1856 = vunpack.c.l.b16 %v353
  %v1857 = vunpack.c.h.b16 %v353
  %v1858 = vunpack.c.l.b16 %v354
  %v1859 = vunpack.c.h.b16 %v354
  %v1860 = vunpack.c.l.b16 %v355
  %v1861 = vunpack.c.h.b16 %v355
  %v1862 = vunpack.c.l.b16 %v356
  %v1863 = vunpack.c.h.b16 %v356
  %v1864 = vunpack.c.l.b16 %v357
  %v1865 = vunpack.c.h.b16 %v357
  %v1866 = vunpack.c.l.b16 %v358
  %v1867 = vunpack.c.h.b16 %v358
  %v1868 = vunpack.c.l.b16 %v359
  %v1869 = vunpack.c.h.b16 %v359
  %v1870 = vunpack.c.l.b16 %v360
  %v1871 = vunpack.c.h.b16 %v360
  %v1872 = vunpack.c.l.b16 %v361
  %v1873 = vunpack.c.h.b16 %v361
  %v1874 = vunpack.c.l.b16 %v362
  %v1875 = vunpack.c.h.b16 %v362
  %v1876 = vunpack.c.l.b16 %v363
  %v1877 = vunpack.c.h.b16 %v363
  %v1878 = vunpack.c.l.b16 %v364
  %v1879 = vunpack.c.h.b16 %v364
  %v1880 = vunpack.c.l.b16 %v365
  %v1881 = vunpack.c.h.b16 %v365
  %v1882 = vunpack.c.l.b16 %v366
  %v1883 = vunpack.c.h.b16 %v366
  %v1884 = vunpack.c.l.b16 %v367
  %v1885 = vunpack.c.h.b16 %v367
  %v1886 = vunpack.c.l.b16 %v368
  %v1887 = vunpack.c.h.b16 %v368
  %v1888 = vunpack.c.l.b16 %v369
  %v1889 = vunpack.c.h.b16 %v369
  %v1890 = vunpack.c.l.b16 %v370
  %v1891 = vunpack.c.h.b16 %v370
  %v1892 = vunpack.c.l.b16 %v371
  %v1893 = vunpack.c.h.b16 %v371
  %v1894 = vunpack.c.l.b16 %v372
  %v1895 = vunpack.c.h.b16 %v372
  %v1896 = vunpack.c.l.b16 %v373
  %v1897 = vunpack.c.h.b16 %v373
  %v1898 = vunpack.c.l.b16 %v374
  %v1899 = vunpack.c.h.b16 %v374
  %v1900 = vunpack.c.l.b16 %v375
  %v1901 = vunpack.c.h.b16 %v375
  %v1902 = vunpack.c.l.b16 %v376
  %v1903 = vunpack.c.h.b16 %v376
  %v1904 = vunpack.c.l.b16 %v377
  %v1905 = vunpack.c.h.b16 %v377
  %v1906 = vunpack.c.l.b16 %v378
  %v1907 = vunpack.c.h.b16 %v378
  %v1908 = vunpack.c.l.b16 %v379
  %v1909 = vunpack.c.h.b16 %v379
  %v1910 = vunpack.c.l.b16 %v380
  %v1911 = vunpack.c.h.b16 %v380
  %v1912 = vunpack.c.l.b16 %v381
  %v1913 = vunpack.c.h.b16 %v381
  %v1914 = vunpack.c.l.b16 %v382
  %v1915 = vunpack.c.h.b16 %v382
  %v1916 = vunpack.c.l.b16 %v383
  %v1917 = vunpack.c.h.b16 %v383
  %v1918 = vunpack.c.l.b16 %v384
  %v1919 = vunpack.c.h.b16 %v384
  %v1920 = vunpack.c.l.b16 %v385
  %v1921 = vunpack.c.h.b16 %v385
  %v1922 = vunpack.c.l.b16 %v386
  %v1923 = vunpack.c.h.b16 %v386
  %v1924 = vunpack.c.l.b16 %v387
  %v1925 = vunpack.c.h.b16 %v387
  %v1926 = vunpack.c.l.b16 %v388
  %v1927 = vunpack.c.h.b16 %v388
  %v1928 = vunpack.c.l.b16 %v389
  %v1929 = vunpack.c.h.b16 %v389
  %v1930 = vunpack.c.l.b16 %v390
  %v1931 = vunpack.c.h.b16 %v390
  %v1932 = vunpack.c.l.b16 %v391
  %v1933 = vunpack.c.h.b16 %v391
  %v1934 = vunpack.c.l.b16 %v392
  %v1935 = vunpack.c.h.b16 %v392
  %v1936 = vunpack.c.l.b16 %v393
  %v1937 = vunpack.c.h.b16 %v393
  %v1938 = vunpack.c.l.b16 %v394
  %v1939 = vunpack.c.h.b16 %v394
  %v1940 = vunpack.c.l.b16 %v395
  %v1941 = vunpack.c.h.b16 %v395
  %v1942 = vunpack.c.l.b16 %v396
  %v1943 = vunpack.c.h.b16 %v396
  %v1944 = vunpack.c.l.b16 %v397
  %v1945 = vunpack.c.h.b16 %v397
  %v1946 = vunpack.c.l.b16 %v398
  %v1947 = vunpack.c.h.b16 %v398
  %v1948 = vunpack.c.l.b16 %v399
  %v1949 = vunpack.c.h.b16 %v399
  %v1950 = vunpack.c.l.b16 %v400
  %v1951 = vunpack.c.h.b16 %v400
  %v1952 = vunpack.c.l.b16 %v401
  %v1953 = vunpack.c.h.b16 %v401
  %v1954 = vunpack.c.l.b16 %v402
  %v1955 = vunpack.c.h.b16 %v402
  %v1956 = vunpack.c.l.b16 %v403
  %v1957 = vunpack.c.h.b16 %v403
  %v1958 = vunpack.c.l.b16 %v404
  %v1959 = vunpack.c.h.b16 %v404
  %v1960 = vunpack.c.l.b16 %v405
  %v1961 = vunpack.c.h.b16 %v405
  %v1962 = vunpack.c.l.b16 %v406
  %v1963 = vunpack.c.h.b16 %v406
  %v1964 = vunpack.c.l.b16 %v407
  %v1965 = vunpack.c.h.b16 %v407
  %v1966 = vunpack.c.l.b16 %v408
  %v1967 = vunpack.c.h.b16 %v408
  %v1968 = vunpack.c.l.b16 %v409
  %v1969 = vunpack.c.h.b16 %v409
  %v1970 = vunpack.c.l.b16 %v410
  %v1971 = vunpack.c.h.b16 %v410
  %v1972 = vunpack.c.l.b16 %v411
  %v1973 = vunpack.c.h.b16 %v411
  %v1974 = vunpack.c.l.b16 %v412
  %v1975 = vunpack.c.h.b16 %v412
  %v1976 = vunpack.c.l.b16 %v413
  %v1977 = vunpack.c.h.b16 %v413
  %v1978 = vunpack.c.l.b16 %v414
  %v1979 = vunpack.c.h.b16 %v414
  %v1980 = vunpack.c.l.b16 %v415
  %v1981 = vunpack.c.h.b16 %v415
  %v1982 = vunpack.c.l.b16 %v416
  %v1983 = vunpack.c.h.b16 %v416
  %v1984 = vunpack.c.l.b16 %v417
  %v1985 = vunpack.c.h.b16 %v417
  %v1986 = vunpack.c.l.b16 %v418
  %v1987 = vunpack.c.h.b16 %v418
  %v1988 = vunpack.c.l.b16 %v419
  %v1989 = vunpack.c.h.b16 %v419
  %v1990 = vunpack.c.l.b16 %v420
  %v1991 = vunpack.c.h.b16 %v420
  %v1992 = vunpack.c.l.b16 %v421
  %v1993 = vunpack.c.h.b16 %v421
  %v1994 = vunpack.c.l.b16 %v422
  %v1995 = vunpack.c.h.b16 %v422
  %v1996 = vunpack.c.l.b16 %v423
  %v1997 = vunpack.c.h.b16 %v423
  %v1998 = vunpack.c.l.b16 %v424
  %v1999 = vunpack.c.h.b16 %v424
  %v2000 = vunpack.c.l.b16 %v425
  %v2001 = vunpack.c.h.b16 %v425
  %v2002 = vunpack.c.l.b16 %v426
  %v2003 = vunpack.c.h.b16 %v426
  %v2004 = vunpack.c.l.b16 %v427
  %v2005 = vunpack.c.h.b16 %v427
  %v2006 = vunpack.c.l.b16 %v428
  %v2007 = vunpack.c.h.b16 %v428
  %v2008 = vunpack.c.l.b16 %v429
  %v2009 = vunpack.c.h.b16 %v429
  %v2010 = vunpack.c.l.b16 %v430
  %v2011 = vunpack.c.h.b16 %v430
  %v2012 = vunpack.c.l.b16 %v431
  %v2013 = vunpack.c.h.b16 %v431
  %v2014 = vunpack.c.l.b16 %v432
  %v2015 = vunpack.c.h.b16 %v432
  %v2016 = vunpack.c.l.b16 %v433
  %v2017 = vunpack.c.h.b16 %v433
  %v2018 = vunpack.c.l.b16 %v434
  %v2019 = vunpack.c.h.b16 %v434
  %v2020 = vunpack.c.l.b16 %v435
  %v2021 = vunpack.c.h.b16 %v435
  %v2022 = vunpack.c.l.b16 %v436
  %v2023 = vunpack.c.h.b16 %v436
  %v2024 = vunpack.c.l.b16 %v437
  %v2025 = vunpack.c.h.b16 %v437
  %v2026 = vunpack.c.l.b16 %v438
  %v2027 = vunpack.c.h.b16 %v438
  %v2028 = vunpack.c.l.b16 %v439
  %v2029 = vunpack.c.h.b16 %v439
  %v2030 = vunpack.c.l.b16 %v440
  %v2031 = vunpack.c.h.b16 %v440
  %v2032 = vunpack.c.l.b16 %v441
  %v2033 = vunpack.c.h.b16 %v441
  %v2034 = vunpack.c.l.b16 %v442
  %v2035 = vunpack.c.h.b16 %v442
  %v2036 = vunpack.c.l.b16 %v443
  %v2037 = vunpack.c.h.b16 %v443
  %v2038 = vunpack.c.l.b16 %v444
  %v2039 = vunpack.c.h.b16 %v444
  %v2040 = vunpack.c.l.b16 %v445
  %v2041 = vunpack.c.h.b16 %v445
  %v2042 = vunpack.c.l.b16 %v446
  %v2043 = vunpack.c.h.b16 %v446
  %v2044 = vunpack.c.l.b16 %v447
  %v2045 = vunpack.c.h.b16 %v447
  %v2046 = vunpack.c.l.b16 %v448
  %v2047 = vunpack.c.h.b16 %v448
  %v2048 = vunpack.c.l.b16 %v449
  %v2049 = vunpack.c.h.b16 %v449
  %v2050 = vunpack.c.l.b16 %v450
  %v2051 = vunpack.c.h.b16 %v450
  %v2052 = vunpack.c.l.b16 %v451
  %v2053 = vunpack.c.h.b16 %v451
  %v2054 = vunpack.c.l.b16 %v452
  %v2055 = vunpack.c.h.b16 %v452
  %v2056 = vunpack.c.l.b16 %v453
  %v2057 = vunpack.c.h.b16 %v453
  %v2058 = vunpack.c.l.b16 %v454
  %v2059 = vunpack.c.h.b16 %v454
  %v2060 = vunpack.c.l.b16 %v455
  %v2061 = vunpack.c.h.b16 %v455
  %v2062 = vunpack.c.l.b16 %v456
  %v2063 = vunpack.c.h.b16 %v456
  %v2064 = vunpack.c.l.b16 %v457
  %v2065 = vunpack.c.h.b16 %v457
  %v2066 = vunpack.c.l.b16 %v458
  %v2067 = vunpack.c.h.b16 %v458
  %v2068 = vunpack.c.l.b16 %v459
  %v2069 = vunpack.c.h.b16 %v459
  %v2070 = vunpack.c.l.b16 %v460
  %v2071 = vunpack.c.h.b16 %v460
  %v2072 = vunpack.c.l.b16 %v461
  %v2073 = vunpack.c.h.b16 %v461
  %v2074 = vunpack.c.l.b16 %v462
  %v2075 = vunpack.c.h.b16 %v462
  %v2076 = vunpack.c.l.b16 %v463
  %v2077 = vunpack.c.h.b16 %v463
  %v2078 = vunpack.c.l.b16 %v464
  %v2079 = vunpack.c.h.b16 %v464
  %v2080 = vunpack.c.l.b16 %v465
  %v2081 = vunpack.c.h.b16 %v465
  %v2082 = vunpack.c.l.b16 %v466
  %v2083 = vunpack.c.h.b16 %v466
  %v2084 = vunpack.c.l.b16 %v467
  %v2085 = vunpack.c.h.b16 %v467
  %v2086 = vunpack.c.l.b16 %v468
  %v2087 = vunpack.c.h.b16 %v468
  %v2088 = vunpack.c.l.b16 %v469
  %v2089 = vunpack.c.h.b16 %v469
  %v2090 = vunpack.c.l.b16 %v470
  %v2091 = vunpack.c.h.b16 %v470
  %v2092 = vunpack.c.l.b16 %v471
  %v2093 = vunpack.c.h.b16 %v471
  %v2094 = vunpack.c.l.b16 %v472
  %v2095 = vunpack.c.h.b16 %v472
  %v2096 = vunpack.c.l.b16 %v473
  %v2097 = vunpack.c.h.b16 %v473
  %v2098 = vunpack.c.l.b16 %v474
  %v2099 = vunpack.c.h.b16 %v474
  %v2100 = vunpack.c.l.b16 %v475
  %v2101 = vunpack.c.h.b16 %v475
  %v2102 = vunpack.c.l.b16 %v476
  %v2103 = vunpack.c.h.b16 %v476
  %v2104 = vunpack.c.l.b16 %v477
  %v2105 = vunpack.c.h.b16 %v477
  %v2106 = vunpack.c.l.b16 %v478
  %v2107 = vunpack.c.h.b16 %v478
  %v2108 = vunpack.c.l.b16 %v479
  %v2109 = vunpack.c.h.b16 %v479
  %v2110 = vunpack.c.l.b16 %v480
  %v2111 = vunpack.c.h.b16 %v480
  %v2112 = vunpack.c.l.b16 %v481
  %v2113 = vunpack.c.h.b16 %v481
  %v2114 = vunpack.c.l.b16 %v482
  %v2115 = vunpack.c.h.b16 %v482
  %v2116 = vunpack.c.l.b16 %v483
  %v2117 = vunpack.c.h.b16 %v483
  %v2118 = vunpack.c.l.b16 %v484
  %v2119 = vunpack.c.h.b16 %v484
  %v2120 = vunpack.c.l.b16 %v485
  %v2121 = vunpack.c.h.b16 %v485
  %v2122 = vunpack.c.l.b16 %v486
  %v2123 = vunpack.c.h.b16 %v486
  %v2124 = vunpack.c.l.b16 %v487
  %v2125 = vunpack.c.h.b16 %v487
  %v2126 = vunpack.c.l.b16 %v488
  %v2127 = vunpack.c.h.b16 %v488
  %v2128 = vunpack.c.l.b16 %v489
  %v2129 = vunpack.c.h.b16 %v489
  %v2130 = vunpack.c.l.b16 %v490
  %v2131 = vunpack.c.h.b16 %v490
  %v2132 = vunpack.c.l.b16 %v491
  %v2133 = vunpack.c.h.b16 %v491
  %v2134 = vunpack.c.l.b16 %v492
  %v2135 = vunpack.c.h.b16 %v492
  %v2136 = vunpack.c.l.b16 %v493
  %v2137 = vunpack.c.h.b16 %v493
  %v2138 = vunpack.c.l.b16 %v494
  %v2139 = vunpack.c.h.b16 %v494
  %v2140 = vunpack.c.l.b16 %v495
  %v2141 = vunpack.c.h.b16 %v495
  %v2142 = vunpack.c.l.b16 %v496
  %v2143 = vunpack.c.h.b16 %v496
  %v2144 = vunpack.c.l.b16 %v497
  %v2145 = vunpack.c.h.b16 %v497
  %v2146 = vunpack.c.l.b16 %v498
  %v2147 = vunpack.c.h.b16 %v498
  %v2148 = vunpack.c.l.b16 %v499
  %v2149 = vunpack.c.h.b16 %v499
  %v2150 = vunpack.c.l.b16 %v500
  %v2151 = vunpack.c.h.b16 %v500
  %v2152 = vunpack.c.l.b16 %v501
  %v2153 = vunpack.c.h.b16 %v501
  %v2154 = vunpack.c.l.b16 %v502
  %v2155 = vunpack.c.h.b16 %v502
  %v2156 = vunpack.c.l.b16 %v503
  %v2157 = vunpack.c.h.b16 %v503
  %v2158 = vunpack.c.l.b16 %v504
  %v2159 = vunpack.c.h.b16 %v504
  %v2160 = vunpack.c.l.b16 %v505
  %v2161 = vunpack.c.h.b16 %v505
  %v2162 = vunpack.c.l.b16 %v506
  %v2163 = vunpack.c.h.b16 %v506
  %v2164 = vunpack.c.l.b16 %v507
  %v2165 = vunpack.c.h.b16 %v507
  %v2166 = vunpack.c.l.b16 %v508
  %v2167 = vunpack.c.h.b16 %v508
  %v2168 = vunpack.c.l.b16 %v509
  %v2169 = vunpack.c.h.b16 %v509
  %v2170 = vunpack.c.l.b16 %v510
  %v2171 = vunpack.c.h.b16 %v510
  %v2172 = vunpack.c.l.b16 %v511
  %v2173 = vunpack.c.h.b16 %v511
  %v2174 = vunpack.c.l.b16 %v512
  %v2175 = vunpack.c.h.b16 %v512
  %v2176 = vunpack.c.l.b16 %v513
  %v2177 = vunpack.c.h.b16 %v513
  %v2178 = vunpack.c.l.b16 %v514
  %v2179 = vunpack.c.h.b16 %v514
  %v2180 = vunpack.c.l.b16 %v515
  %v2181 = vunpack.c.h.b16 %v515
  %v2182 = vunpack.c.l.b16 %v516
  %v2183 = vunpack.c.h.b16 %v516
  %v2184 = vunpack.c.l.b16 %v517
  %v2185 = vunpack.c.h.b16 %v517
  %v2186 = vunpack.c.l.b16 %v518
  %v2187 = vunpack.c.h.b16 %v518
  %v2188 = vunpack.c.l.b16 %v519
  %v2189 = vunpack.c.h.b16 %v519
  %v2190 = vunpack.c.l.b16 %v520
  %v2191 = vunpack.c.h.b16 %v520
  %v2192 = vunpack.c.l.b16 %v521
  %v2193 = vunpack.c.h.b16 %v521
  %v2194 = vunpack.c.l.b16 %v522
  %v2195 = vunpack.c.h.b16 %v522
  %v2196 = vunpack.c.l.b16 %v523
  %v2197 = vunpack.c.h.b16 %v523
  %v2198 = vunpack.c.l.b16 %v524
  %v2199 = vunpack.c.h.b16 %v524
  %v2200 = vunpack.c.l.b16 %v525
  %v2201 = vunpack.c.h.b16 %v525
  %v2202 = vunpack.c.l.b16 %v526
  %v2203 = vunpack.c.h.b16 %v526
  %v2204 = vunpack.c.l.b16 %v527
  %v2205 = vunpack.c.h.b16 %v527
  %v2206 = vunpack.c.l.b16 %v528
  %v2207 = vunpack.c.h.b16 %v528
  %v2208 = vunpack.c.l.b16 %v529
  %v2209 = vunpack.c.h.b16 %v529
  %v2210 = vunpack.c.l.b16 %v530
  %v2211 = vunpack.c.h.b16 %v530
  %v2212 = vunpack.c.l.b16 %v531
  %v2213 = vunpack.c.h.b16 %v531
  %v2214 = vunpack.c.l.b16 %v532
  %v2215 = vunpack.c.h.b16 %v532
  %v2216 = vunpack.c.l.b16 %v533
  %v2217 = vunpack.c.h.b16 %v533
  %v2218 = vunpack.c.l.b16 %v534
  %v2219 = vunpack.c.h.b16 %v534
  %v2220 = vunpack.c.l.b16 %v535
  %v2221 = vunpack.c.h.b16 %v535
  %v2222 = vunpack.c.l.b16 %v536
  %v2223 = vunpack.c.h.b16 %v536
  %v2224 = vunpack.c.l.b16 %v537
  %v2225 = vunpack.c.h.b16 %v537
  %v2226 = vunpack.c.l.b16 %v538
  %v2227 = vunpack.c.h.b16 %v538
  %v2228 = vunpack.c.l.b16 %v539
  %v2229 = vunpack.c.h.b16 %v539
  %v2230 = vunpack.c.l.b16 %v540
  %v2231 = vunpack.c.h.b16 %v540
  %v2232 = vunpack.c.l.b16 %v541
  %v2233 = vunpack.c.h.b16 %v541
  %v2234 = vunpack.c.l.b16 %v542
  %v2235 = vunpack.c.h.b16 %v542
  %v2236 = vunpack.c.l.b16 %v543
  %v2237 = vunpack.c.h.b16 %v543
  %v2238 = vunpack.c.l.b16 %v544
  %v2239 = vunpack.c.h.b16 %v544
  %v2240 = vunpack.c.l.b16 %v545
  %v2241 = vunpack.c.h.b16 %v545
  %v2242 = vunpack.c.l.b16 %v546
  %v2243 = vunpack.c.h.b16 %v546
  %v2244 = vunpack.c.l.b16 %v547
  %v2245 = vunpack.c.h.b16 %v547
  %v2246 = vunpack.c.l.b16 %v548
  %v2247 = vunpack.c.h.b16 %v548
  %v2248 = vunpack.c.l.b16 %v549
  %v2249 = vunpack.c.h.b16 %v549
  %v2250 = vunpack.c.l.b16 %v550
  %v2251 = vunpack.c.h.b16 %v550
  %v2252 = vunpack.c.l.b16 %v551
  %v2253 = vunpack.c.h.b16 %v551
  %v2254 = vunpack.c.l.b16 %v552
  %v2255 = vunpack.c.h.b16 %v552
  %v2256 = vunpack.c.l.b16 %v553
  %v2257 = vunpack.c.h.b16 %v553
  %v2258 = vunpack.c.l.b16 %v554
  %v2259 = vunpack.c.h.b16 %v554
  %v2260 = vunpack.c.l.b16 %v555
  %v2261 = vunpack.c.h.b16 %v555
  %v2262 = vunpack.c.l.b16 %v556
  %v2263 = vunpack.c.h.b16 %v556
  %v2264 = vunpack.c.l.b16 %v557
  %v2265 = vunpack.c.h.b16 %v557
  %v2266 = vunpack.c.l.b16 %v558
  %v2267 = vunpack.c.h.b16 %v558
  %v2268 = vunpack.c.l.b16 %v559
  %v2269 = vunpack.c.h.b16 %v559
  %v2270 = vunpack.c.l.b16 %v560
  %v2271 = vunpack.c.h.b16 %v560
  %v2272 = vunpack.c.l.b16 %v561
  %v2273 = vunpack.c.h.b16 %v561
  %v2274 = vunpack.c.l.b16 %v562
  %v2275 = vunpack.c.h.b16 %v562
  %v2276 = vunpack.c.l.b16 %v563
  %v2277 = vunpack.c.h.b16 %v563
  %v2278 = vunpack.c.l.b16 %v564
  %v2279 = vunpack.c.h.b16 %v564
  %v2280 = vunpack.c.l.b16 %v565
  %v2281 = vunpack.c.h.b16 %v565
  %v2282 = vunpack.c.l.b16 %v566
  %v2283 = vunpack.c.h.b16 %v566
  %v2284 = vunpack.c.l.b16 %v567
  %v2285 = vunpack.c.h.b16 %v567
  %v2286 = vunpack.c.l.b16 %v568
  %v2287 = vunpack.c.h.b16 %v568
  %v2288 = vunpack.c.l.b16 %v569
  %v2289 = vunpack.c.h.b16 %v569
  %v2290 = vunpack.c.l.b16 %v570
  %v2291 = vunpack.c.h.b16 %v570
  %v2292 = vunpack.c.l.b16 %v571
  %v2293 = vunpack.c.h.b16 %v571
  %v2294 = vunpack.c.l.b16 %v572
  %v2295 = vunpack.c.h.b16 %v572
  %v2296 = vunpack.c.l.b16 %v573
  %v2297 = vunpack.c.h.b16 %v573
  %v2298 = vunpack.c.l.b16 %v574
  %v2299 = vunpack.c.h.b16 %v574
  %v2300 = vunpack.c.l.b16 %v575
  %v2301 = vunpack.c.h.b16 %v575
  %v2302 = vunpack.c.l.b16 %v576
  %v2303 = vunpack.c.h.b16 %v576
  %v2304 = vunpack.c.l.b16 %v577
  %v2305 = vunpack.c.h.b16 %v577
  %v2306 = vunpack.c.l.b16 %v578
  %v2307 = vunpack.c.h.b16 %v578
  %v2308 = vunpack.c.l.b16 %v579
  %v2309 = vunpack.c.h.b16 %v579
  %v2310 = vunpack.c.l.b16 %v580
  %v2311 = vunpack.c.h.b16 %v580
  %v2312 = vunpack.c.l.b16 %v581
  %v2313 = vunpack.c.h.b16 %v581
  %v2314 = vunpack.c.l.b16 %v582
  %v2315 = vunpack.c.h.b16 %v582
  %v2316 = vunpack.c.l.b16 %v583
  %v2317 = vunpack.c.h.b16 %v583
  %v2318 = vunpack.c.l.b16 %v584
  %v2319 = vunpack.c.h.b16 %v584
  %v2320 = vunpack.c.l.b16 %v585
  %v2321 = vunpack.c.h.b16 %v585
  %v2322 = vunpack.c.l.b16 %v586
  %v2323 = vunpack.c.h.b16 %v586
  %v2324 = vunpack.c.l.b16 %v587
  %v2325 = vunpack.c.h.b16 %v587
  %v2326 = vunpack.c.l.b16 %v588
  %v2327 = vunpack.c.h.b16 %v588
  %v2328 = vunpack.c.l.b16 %v589
  %v2329 = vunpack.c.h.b16 %v589
  %v2330 = vunpack.c.l.b16 %v590
  %v2331 = vunpack.c.h.b16 %v590
  %v2332 = vunpack.c.l.b16 %v591
  %v2333 = vunpack.c.h.b16 %v591
  %v2334 = vunpack.c.l.b16 %v592
  %v2335 = vunpack.c.h.b16 %v592
  %v2336 = vunpack.c.l.b16 %v593
  %v2337 = vunpack.c.h.b16 %v593
  %v2338 = vunpack.c.l.b16 %v594
  %v2339 = vunpack.c.h.b16 %v594
  %v2340 = vunpack.c.l.b16 %v595
  %v2341 = vunpack.c.h.b16 %v595
  %v2342 = vunpack.c.l.b16 %v596
  %v2343 = vunpack.c.h.b16 %v596
  %v2344 = vunpack.c.l.b16 %v597
  %v2345 = vunpack.c.h.b16 %v597
  %v2346 = vunpack.c.l.b16 %v598
  %v2347 = vunpack.c.h.b16 %v598
  %v2348 = vunpack.c.l.b16 %v599
  %v2349 = vunpack.c.h.b16 %v599
  %v2350 = vunpack.c.l.b16 %v600
  %v2351 = vunpack.c.h.b16 %v600
  %v2352 = vunpack.c.l.b16 %v601
  %v2353 = vunpack.c.h.b16 %v601
  %v2354 = vunpack.c.l.b16 %v602
  %v2355 = vunpack.c.h.b16 %v602
  %v2356 = vpack.c.b16 %v1206, %v1204
  %v2357 = vpack.c.b16 %v1207, %v1205
  %v2358 = vpack.c.b16 %v1210, %v1208
  %v2359 = vpack.c.b16 %v1211, %v1209
  %v2360 = vpack.c.b16 %v1214, %v1212
  %v2361 = vpack.c.b16 %v1215, %v1213
  %v2362 = vpack.c.b16 %v1218, %v1216
  %v2363 = vpack.c.b16 %v1219, %v1217
  %v2364 = vpack.c.b16 %v1222, %v1220
  %v2365 = vpack.c.b16 %v1223, %v1221
  %v2366 = vpack.c.b16 %v1226, %v1224
  %v2367 = vpack.c.b16 %v1227, %v1225
  %v2368 = vpack.c.b16 %v1230, %v1228
  %v2369 = vpack.c.b16 %v1231, %v1229
  %v2370 = vpack.c.b16 %v1234, %v1232
  %v2371 = vpack.c.b16 %v1235, %v1233
  %v2372 = vpack.c.b16 %v1238, %v1236
  %v2373 = vpack.c.b16 %v1239, %v1237
  %v2374 = vpack.c.b16 %v1242, %v1240
  %v2375 = vpack.c.b16 %v1243, %v1241
  %v2376 = vpack.c.b16 %v1246, %v1244
  %v2377 = vpack.c.b16 %v1247, %v1245
  %v2378 = vpack.c.b16 %v1250, %v1248
  %v2379 = vpack.c.b16 %v1251, %v1249
  %v2380 = vpack.c.b16 %v1254, %v1252
  %v2381 = vpack.c.b16 %v1255, %v1253
  %v2382 = vpack.c.b16 %v1258, %v1256
  %v2383 = vpack.c.b16 %v1259, %v1257
  %v2384 = vpack.c.b16 %v1262, %v1260
  %v2385 = vpack.c.b16 %v1263, %v1261
  %v2386 = vpack.c.b16 %v1266, %v1264
  %v2387 = vpack.c.b16 %v1267, %v1265
  %v2388 = vpack.c.b16 %v1270, %v1268
  %v2389 = vpack.c.b16 %v1271, %v1269
  %v2390 = vpack.c.b16 %v1274, %v1272
  %v2391 = vpack.c.b16 %v1275, %v1273
  %v2392 = vpack.c.b16 %v1278, %v1276
  %v2393 = vpack.c.b16 %v1279, %v1277
  %v2394 = vpack.c.b16 %v1282, %v1280
  %v2395 = vpack.c.b16 %v1283, %v1281
  %v2396 = vpack.c.b16 %v1286, %v1284
  %v2397 = vpack.c.b16 %v1287, %v1285
  %v2398 = vpack.c.b16 %v1290, %v1288
  %v2399 = vpack.c.b16 %v1291, %v1289
  %v2400 = vpack.c.b16 %v1294, %v1292
  %v2401 = vpack.c.b16 %v1295, %v1293
  %v2402 = vpack.c.b16 %v1298, %v1296
  %v2403 = vpack.c.b16 %v1299, %v1297
  %v2404 = vpack.c.b16 %v1302, %v1300
  %v2405 = vpack.c.b16 %v1303, %v1301
  %v2406 = vpack.c.b16 %v1306, %v1304
  %v2407 = vpack.c.b16 %v1307, %v1305
  %v2408 = vpack.c.b16 %v1310, %v1308
  %v2409 = vpack.c.b16 %v1311, %v1309
  %v2410 = vpack.c.b16 %v1314, %v1312
  %v2411 = vpack.c.b16 %v1315, %v1313
  %v2412 = vpack.c.b16 %v1318, %v1316
  %v2413 = vpack.c.b16 %v1319, %v1317
  %v2414 = vpack.c.b16 %v1322, %v1320
  %v2415 = vpack.c.b16 %v1323, %v1321
  %v2416 = vpack.c.b16 %v1326, %v1324
  %v2417 = vpack.c.b16 %v1327, %v1325
  %v2418 = vpack.c.b16 %v1330, %v1328
  %v2419 = vpack.c.b16 %v1331, %v1329
  %v2420 = vpack.c.b16 %v1334, %v1332
  %v2421 = vpack.c.b16 %v1335, %v1333
  %v2422 = vpack.c.b16 %v1338, %v1336
  %v2423 = vpack.c.b16 %v1339, %v1337
  %v2424 = vpack.c.b16 %v1342, %v1340
  %v2425 = vpack.c.b16 %v1343, %v1341
  %v2426 = vpack.c.b16 %v1346, %v1344
  %v2427 = vpack.c.b16 %v1347, %v1345
  %v2428 = vpack.c.b16 %v1350, %v1348
  %v2429 = vpack.c.b16 %v1351, %v1349
  %v2430 = vpack.c.b16 %v1354, %v1352
  %v2431 = vpack.c.b16 %v1355, %v1353
  %v2432 = vpack.c.b16 %v1358, %v1356
  %v2433 = vpack.c.b16 %v1359, %v1357
  %v2434 = vpack.c.b16 %v1362, %v1360
  %v2435 = vpack.c.b16 %v1363, %v1361
  %v2436 = vpack.c.b16 %v1366, %v1364
  %v2437 = vpack.c.b16 %v1367, %v1365
  %v2438 = vpack.c.b16 %v1370, %v1368
  %v2439 = vpack.c.b16 %v1371, %v1369
  %v2440 = vpack.c.b16 %v1374, %v1372
  %v2441 = vpack.c.b16 %v1375, %v1373
  %v2442 = vpack.c.b16 %v1378, %v1376
  %v2443 = vpack.c.b16 %v1379, %v1377
  %v2444 = vpack.c.b16 %v1382, %v1380
  %v2445 = vpack.c.b16 %v1383, %v1381
  %v2446 = vpack.c.b16 %v1386, %v1384
  %v2447 = vpack.c.b16 %v1387, %v1385
  %v2448 = vpack.c.b16 %v1390, %v1388
  %v2449 = vpack.c.b16 %v1391, %v1389
  %v2450 = vpack.c.b16 %v1394, %v1392
  %v2451 = vpack.c.b16 %v1395, %v1393
  %v2452 = vpack.c.b16 %v1398, %v1396
  %v2453 = vpack.c.b16 %v1399, %v1397
  %v2454 = vpack.c.b16 %v1402, %v1400
  %v2455 = vpack.c.b16 %v1403, %v1401
  %v2456 = vpack.c.b16 %v1406, %v1404
  %v2457 = vpack.c.b16 %v1407, %v1405
  %v2458 = vpack.c.b16 %v1410, %v1408
  %v2459 = vpack.c.b16 %v1411, %v1409
  %v2460 = vpack.c.b16 %v1414, %v1412
  %v2461 = vpack.c.b16 %v1415, %v1413
  %v2462 = vpack.c.b16 %v1418, %v1416
  %v2463 = vpack.c.b16 %v1419, %v1417
  %v2464 = vpack.c.b16 %v1422, %v1420
  %v2465 = vpack.c.b16 %v1423, %v1421
  %v2466 = vpack.c.b16 %v1426, %v1424
  %v2467 = vpack.c.b16 %v1427, %v1425
  %v2468 = vpack.c.b16 %v1430, %v1428
  %v2469 = vpack.c.b16 %v1431, %v1429
  %v2470 = vpack.c.b16 %v1434, %v1432
  %v2471 = vpack.c.b16 %v1435, %v1433
  %v2472 = vpack.c.b16 %v1438, %v1436
  %v2473 = vpack.c.b16 %v1439, %v1437
  %v2474 = vpack.c.b16 %v1442, %v1440
  %v2475 = vpack.c.b16 %v1443, %v1441
  %v2476 = vpack.c.b16 %v1446, %v1444
  %v2477 = vpack.c.b16 %v1447, %v1445
  %v2478 = vpack.c.b16 %v1450, %v1448
  %v2479 = vpack.c.b16 %v1451, %v1449
  %v2480 = vpack.c.b16 %v1454, %v1452
  %v2481 = vpack.c.b16 %v1455, %v1453
  %v2482 = vpack.c.b16 %v1458, %v1456
  %v2483 = vpack.c.b16 %v1459, %v1457
  %v2484 = vpack.c.b16 %v1462, %v1460
  %v2485 = vpack.c.b16 %v1463, %v1461
  %v2486 = vpack.c.b16 %v1466, %v1464
  %v2487 = vpack.c.b16 %v1467, %v1465
  %v2488 = vpack.c.b16 %v1470, %v1468
  %v2489 = vpack.c.b16 %v1471, %v1469
  %v2490 = vpack.c.b16 %v1474, %v1472
  %v2491 = vpack.c.b16 %v1475, %v1473
  %v2492 = vpack.c.b16 %v1478, %v1476
  %v2493 = vpack.c.b16 %v1479, %v1477
  %v2494 = vpack.c.b16 %v1482, %v1480
  %v2495 = vpack.c.b16 %v1483, %v1481
  %v2496 = vpack.c.b16 %v1486, %v1484
  %v2497 = vpack.c.b16 %v1487, %v1485
  %v2498 = vpack.c.b16 %v1490, %v1488
  %v2499 = vpack.c.b16 %v1491, %v1489
  %v2500 = vpack.c.b16 %v1494, %v1492
  %v2501 = vpack.c.b16 %v1495, %v1493
  %v2502 = vpack.c.b16 %v1498, %v1496
  %v2503 = vpack.c.b16 %v1499, %v1497
  %v2504 = vpack.c.b16 %v1502, %v1500
  %v2505 = vpack.c.b16 %v1503, %v1501
  %v2506 = vpack.c.b16 %v1506, %v1504
  %v2507 = vpack.c.b16 %v1507, %v1505
  %v2508 = vpack.c.b16 %v1510, %v1508
  %v2509 = vpack.c.b16 %v1511, %v1509
  %v2510 = vpack.c.b16 %v1514, %v1512
  %v2511 = vpack.c.b16 %v1515, %v1513
  %v2512 = vpack.c.b16 %v1518, %v1516
  %v2513 = vpack.c.b16 %v1519, %v1517
  %v2514 = vpack.c.b16 %v1522, %v1520
  %v2515 = vpack.c.b16 %v1523, %v1521
  %v2516 = vpack.c.b16 %v1526, %v1524
  %v2517 = vpack.c.b16 %v1527, %v1525
  %v2518 = vpack.c.b16 %v1530, %v1528
  %v2519 = vpack.c.b16 %v1531, %v1529
  %v2520 = vpack.c.b16 %v1534, %v1532
  %v2521 = vpack.c.b16 %v1535, %v1533
  %v2522 = vpack.c.b16 %v1538, %v1536
  %v2523 = vpack.c.b16 %v1539, %v1537
  %v2524 = vpack.c.b16 %v1542, %v1540
  %v2525 = vpack.c.b16 %v1543, %v1541
  %v2526 = vpack.c.b16 %v1546, %v1544
  %v2527 = vpack.c.b16 %v1547, %v1545
  %v2528 = vpack.c.b16 %v1550, %v1548
  %v2529 = vpack.c.b16 %v1551, %v1549
  %v2530 = vpack.c.b16 %v1554, %v1552
  %v2531 = vpack.c.b16 %v1555, %v1553
  %v2532 = vpack.c.b16 %v1558, %v1556
  %v2533 = vpack.c.b16 %v1559, %v1557
  %v2534 = vpack.c.b16 %v1562, %v1560
  %v2535 = vpack.c.b16 %v1563, %v1561
  %v2536 = vpack.c.b16 %v1566, %v1564
  %v2537 = vpack.c.b16 %v1567, %v1565
  %v2538 = vpack.c.b16 %v1570, %v1568
  %v2539 = vpack.c.b16 %v1571, %v1569
  %v2540 = vpack.c.b16 %v1574, %v1572
  %v2541 = vpack.c.b16 %v1575, %v1573
  %v2542 = vpack.c.b16 %v1578, %v1576
  %v2543 = vpack.c.b16 %v1579, %v1577
  %v2544 = vpack.c.b16 %v1582, %v1580
  %v2545 = vpack.c.b16 %v1583, %v1581
  %v2546 = vpack.c.b16 %v1586, %v1584
  %v2547 = vpack.c.b16 %v1587, %v1585
  %v2548 = vpack.c.b16 %v1590, %v1588
  %v2549 = vpack.c.b16 %v1591, %v1589
  %v2550 = vpack.c.b16 %v1594, %v1592
  %v2551 = vpack.c.b16 %v1595, %v1593
  %v2552 = vpack.c.b16 %v1598, %v1596
  %v2553 = vpack.c.b16 %v1599, %v1597
  %v2554 = vpack.c.b16 %v1602, %v1600
  %v2555 = vpack.c.b16 %v1603, %v1601
  %v2556 = vpack.c.b16 %v1606, %v1604
  %v2557 = vpack.c.b16 %v1607, %v1605
  %v2558 = vpack.c.b16 %v1610, %v1608
  %v2559 = vpack.c.b16 %v1611, %v1609
  %v2560 = vpack.c.b16 %v1614, %v1612
  %v2561 = vpack.c.b16 %v1615, %v1613
  %v2562 = vpack.c.b16 %v1618, %v1616
  %v2563 = vpack.c.b16 %v1619, %v1617
  %v2564 = vpack.c.b16 %v1622, %v1620
  %v2565 = vpack.c.b16 %v1623, %v1621
  %v2566 = vpack.c.b16 %v1626, %v1624
  %v2567 = vpack.c.b16 %v1627, %v1625
  %v2568 = vpack.c.b16 %v1630, %v1628
  %v2569 = vpack.c.b16 %v1631, %v1629
  %v2570 = vpack.c.b16 %v1634, %v1632
  %v2571 = vpack.c.b16 %v1635, %v1633
  %v2572 = vpack.c.b16 %v1638, %v1636
  %v2573 = vpack.c.b16 %v1639, %v1637
  %v2574 = vpack.c.b16 %v1642, %v1640
  %v2575 = vpack.c.b16 %v1643, %v1641
  %v2576 = vpack.c.b16 %v1646, %v1644
  %v2577 = vpack.c.b16 %v1647, %v1645
  %v2578 = vpack.c.b16 %v1650, %v1648
  %v2579 = vpack.c.b16 %v1651, %v1649
  %v2580 = vpack.c.b16 %v1654, %v1652
  %v2581 = vpack.c.b16 %v1655, %v1653
  %v2582 = vpack.c.b16 %v1658, %v1656
  %v2583 = vpack.c.b16 %v1659, %v1657
  %v2584 = vpack.c.b16 %v1662, %v1660
  %v2585 = vpack.c.b16 %v1663, %v1661
  %v2586 = vpack.c.b16 %v1666, %v1664
  %v2587 = vpack.c.b16 %v1667, %v1665
  %v2588 = vpack.c.b16 %v1670, %v1668
  %v2589 = vpack.c.b16 %v1671, %v1669
  %v2590 = vpack.c.b16 %v1674, %v1672
  %v2591 = vpack.c.b16 %v1675, %v1673
  %v2592 = vpack.c.b16 %v1678, %v1676
  %v2593 = vpack.c.b16 %v1679, %v1677
  %v2594 = vpack.c.b16 %v1682, %v1680
  %v2595 = vpack.c.b16 %v1683, %v1681
  %v2596 = vpack.c.b16 %v1686, %v1684
  %v2597 = vpack.c.b16 %v1687, %v1685
  %v2598 = vpack.c.b16 %v1690, %v1688
  %v2599 = vpack.c.b16 %v1691, %v1689
  %v2600 = vpack.c.b16 %v1694, %v1692
  %v2601 = vpack.c.b16 %v1695, %v1693
  %v2602 = vpack.c.b16 %v1698, %v1696
  %v2603 = vpack.c.b16 %v1699, %v1697
  %v2604 = vpack.c.b16 %v1702, %v1700
  %v2605 = vpack.c.b16 %v1703, %v1701
  %v2606 = vpack.c.b16 %v1706, %v1704
  %v2607 = vpack.c.b16 %v1707, %v1705
  %v2608 = vpack.c.b16 %v1710, %v1708
  %v2609 = vpack.c.b16 %v1711, %v1709
  %v2610 = vpack.c.b16 %v1714, %v1712
  %v2611 = vpack.c.b16 %v1715, %v1713
  %v2612 = vpack.c.b16 %v1718, %v1716
  %v2613 = vpack.c.b16 %v1719, %v1717
  %v2614 = vpack.c.b16 %v1722, %v1720
  %v2615 = vpack.c.b16 %v1723, %v1721
  %v2616 = vpack.c.b16 %v1726, %v1724
  %v2617 = vpack.c.b16 %v1727, %v1725
  %v2618 = vpack.c.b16 %v1730, %v1728
  %v2619 = vpack.c.b16 %v1731, %v1729
  %v2620 = vpack.c.b16 %v1734, %v1732
  %v2621 = vpack.c.b16 %v1735, %v1733
  %v2622 = vpack.c.b16 %v1738, %v1736
  %v2623 = vpack.c.b16 %v1739, %v1737
  %v2624 = vpack.c.b16 %v1742, %v1740
  %v2625 = vpack.c.b16 %v1743, %v1741
  %v2626 = vpack.c.b16 %v1746, %v1744
  %v2627 = vpack.c.b16 %v1747, %v1745
  %v2628 = vpack.c.b16 %v1750, %v1748
  %v2629 = vpack.c.b16 %v1751, %v1749
  %v2630 = vpack.c.b16 %v1754, %v1752
  %v2631 = vpack.c.b16 %v1755, %v1753
  %v2632 = vpack.c.b16 %v1758, %v1756
  %v2633 = vpack.c.b16 %v1759, %v1757
  %v2634 = vpack.c.b16 %v1762, %v1760
  %v2635 = vpack.c.b16 %v1763, %v1761
  %v2636 = vpack.c.b16 %v1766, %v1764
  %v2637 = vpack.c.b16 %v1767, %v1765
  %v2638 = vpack.c.b16 %v1770, %v1768
  %v2639 = vpack.c.b16 %v1771, %v1769
  %v2640 = vpack.c.b16 %v1774, %v1772
  %v2641 = vpack.c.b16 %v1775, %v1773
  %v2642 = vpack.c.b16 %v1778, %v1776
  %v2643 = vpack.c.b16 %v1779, %v1777
  %v2644 = vpack.c.b16 %v1782, %v1780
  %v2645 = vpack.c.b16 %v1783, %v1781
  %v2646 = vpack.c.b16 %v1786, %v1784
  %v2647 = vpack.c.b16 %v1787, %v1785
  %v2648 = vpack.c.b16 %v1790, %v1788
  %v2649 = vpack.c.b16 %v1791, %v1789
  %v2650 = vpack.c.b16 %v1794, %v1792
  %v2651 = vpack.c.b16 %v1795, %v1793
  %v2652 = vpack.c.b16 %v1798, %v1796
  %v2653 = vpack.c.b16 %v1799, %v1797
  %v2654 = vpack.c.b16 %v1802, %v1800
  %v2655 = vpack.c.b16 %v1803, %v1801
  %v2656 = vpack.c.b16 %v1806, %v1804
  %v2657 = vpack.c.b16 %v1807, %v1805
  %v2658 = vpack.c.b16 %v1810, %v1808
  %v2659 = vpack.c.b16 %v1811, %v1809
  %v2660 = vpack.c.b16 %v1814, %v1812
  %v2661 = vpack.c.b16 %v1815, %v1813
  %v2662 = vpack.c.b16 %v1818, %v1816
  %v2663 = vpack.c.b16 %v1819, %v1817
  %v2664 = vpack.c.b16 %v1822, %v1820
  %v2665 = vpack.c.b16 %v1823, %v1821
  %v2666 = vpack.c.b16 %v1826, %v1824
  %v2667 = vpack.c.b16 %v1827, %v1825
  %v2668 = vpack.c.b16 %v1830, %v1828
  %v2669 = vpack.c.b16 %v1831, %v1829
  %v2670 = vpack.c.b16 %v1834, %v1832
  %v2671 = vpack.c.b16 %v1835, %v1833
  %v2672 = vpack.c.b16 %v1838, %v1836
  %v2673 = vpack.c.b16 %v1839, %v1837
  %v2674 = vpack.c.b16 %v1842, %v1840
  %v2675 = vpack.c.b16 %v1843, %v1841
  %v2676 = vpack.c.b16 %v1846, %v1844
  %v2677 = vpack.c.b16 %v1847, %v1845
  %v2678 = vpack.c.b16 %v1850, %v1848
  %v2679 = vpack.c.b16 %v1851, %v1849
  %v2680 = vpack.c.b16 %v1854, %v1852
  %v2681 = vpack.c.b16 %v1855, %v1853
  %v2682 = vpack.c.b16 %v1858, %v1856
  %v2683 = vpack.c.b16 %v1859, %v1857
  %v2684 = vpack.c.b16 %v1862, %v1860
  %v2685 = vpack.c.b16 %v1863, %v1861
  %v2686 = vpack.c.b16 %v1866, %v1864
  %v2687 = vpack.c.b16 %v1867, %v1865
  %v2688 = vpack.c.b16 %v1870, %v1868
  %v2689 = vpack.c.b16 %v1871, %v1869
  %v2690 = vpack.c.b16 %v1874, %v1872
  %v2691 = vpack.c.b16 %v1875, %v1873
  %v2692 = vpack.c.b16 %v1878, %v1876
  %v2693 = vpack.c.b16 %v1879, %v1877
  %v2694 = vpack.c.b16 %v1882, %v1880
  %v2695 = vpack.c.b16 %v1883, %v1881
  %v2696 = vpack.c.b16 %v1886, %v1884
  %v2697 = vpack.c.b16 %v1887, %v1885
  %v2698 = vpack.c.b16 %v1890, %v1888
  %v2699 = vpack.c.b16 %v1891, %v1889
  %v2700 = vpack.c.b16 %v1894, %v1892
  %v2701 = vpack.c.b16 %v1895, %v1893
  %v2702 = vpack.c.b16 %v1898, %v1896
  %v2703 = vpack.c.b16 %v1899, %v1897
  %v2704 = vpack.c.b16 %v1902, %v1900
  %v2705 = vpack.c.b16 %v1903, %v1901
  %v2706 = vpack.c.b16 %v1906, %v1904
  %v2707 = vpack.c.b16 %v1907, %v1905
  %v2708 = vpack.c.b16 %v1910, %v1908
  %v2709 = vpack.c.b16 %v1911, %v1909
  %v2710 = vpack.c.b16 %v1914, %v1912
  %v2711 = vpack.c.b16 %v1915, %v1913
  %v2712 = vpack.c.b16 %v1918, %v1916
  %v2713 = vpack.c.b16 %v1919, %v1917
  %v2714 = vpack.c.b16 %v1922, %v1920
  %v2715 = vpack.c.b16 %v1923, %v1921
  %v2716 = vpack.c.b16 %v1926, %v1924
  %v2717 = vpack.c.b16 %v1927, %v1925
  %v2718 = vpack.c.b16 %v1930, %v1928
  %v2719 = vpack.c.b16 %v1931, %v1929
  %v2720 = vpack.c.b16 %v1934, %v1932
  %v2721 = vpack.c.b16 %v1935, %v1933
  %v2722 = vpack.c.b16 %v1938, %v1936
  %v2723 = vpack.c.b16 %v1939, %v1937
  %v2724 = vpack.c.b16 %v1942, %v1940
  %v2725 = vpack.c.b16 %v1943, %v1941
  %v2726 = vpack.c.b16 %v1946, %v1944
  %v2727 = vpack.c.b16 %v1947, %v1945
  %v2728 = vpack.c.b16 %v1950, %v1948
  %v2729 = vpack.c.b16 %v1951, %v1949
  %v2730 = vpack.c.b16 %v1954, %v1952
  %v2731 = vpack.c.b16 %v1955, %v1953
  %v2732 = vpack.c.b16 %v1958, %v1956
  %v2733 = vpack.c.b16 %v1959, %v1957
  %v2734 = vpack.c.b16 %v1962, %v1960
  %v2735 = vpack.c.b16 %v1963, %v1961
  %v2736 = vpack.c.b16 %v1966, %v1964
  %v2737 = vpack.c.b16 %v1967, %v1965
  %v2738 = vpack.c.b16 %v1970, %v1968
  %v2739 = vpack.c.b16 %v1971, %v1969
  %v2740 = vpack.c.b16 %v1974, %v1972
  %v2741 = vpack.c.b16 %v1975, %v1973
  %v2742 = vpack.c.b16 %v1978, %v1976
  %v2743 = vpack.c.b16 %v1979, %v1977
  %v2744 = vpack.c.b16 %v1982, %v1980
  %v2745 = vpack.c.b16 %v1983, %v1981
  %v2746 = vpack.c.b16 %v1986, %v1984
  %v2747 = vpack.c.b16 %v1987, %v1985
  %v2748 = vpack.c.b16 %v1990, %v1988
  %v2749 = vpack.c.b16 %v1991, %v1989
  %v2750 = vpack.c.b16 %v1994, %v1992
  %v2751 = vpack.c.b16 %v1995, %v1993
  %v2752 = vpack.c.b16 %v1998, %v1996
  %v2753 = vpack.c.b16 %v1999, %v1997
  %v2754 = vpack.c.b16 %v2002, %v2000
  %v2755 = vpack.c.b16 %v2003, %v2001
  %v2756 = vpack.c.b16 %v2006, %v2004
  %v2757 = vpack.c.b16 %v2007, %v2005
  %v2758 = vpack.c.b16 %v2010, %v2008
  %v2759 = vpack.c.b16 %v2011, %v2009
  %v2760 = vpack.c.b16 %v2014, %v2012
  %v2761 = vpack.c.b16 %v2015, %v2013
  %v2762 = vpack.c.b16 %v2018, %v2016
  %v2763 = vpack.c.b16 %v2019, %v2017
  %v2764 = vpack.c.b16 %v2022, %v2020
  %v2765 = vpack.c.b16 %v2023, %v2021
  %v2766 = vpack.c.b16 %v2026, %v2024
  %v2767 = vpack.c.b16 %v2027, %v2025
  %v2768 = vpack.c.b16 %v2030, %v2028
  %v2769 = vpack.c.b16 %v2031, %v2029
  %v2770 = vpack.c.b16 %v2034, %v2032
  %v2771 = vpack.c.b16 %v2035, %v2033
  %v2772 = vpack.c.b16 %v2038, %v2036
  %v2773 = vpack.c.b16 %v2039, %v2037
  %v2774 = vpack.c.b16 %v2042, %v2040
  %v2775 = vpack.c.b16 %v2043, %v2041
  %v2776 = vpack.c.b16 %v2046, %v2044
  %v2777 = vpack.c.b16 %v2047, %v2045
  %v2778 = vpack.c.b16 %v2050, %v2048
  %v2779 = vpack.c.b16 %v2051, %v2049
  %v2780 = vpack.c.b16 %v2054, %v2052
  %v2781 = vpack.c.b16 %v2055, %v2053
  %v2782 = vpack.c.b16 %v2058, %v2056
  %v2783 = vpack.c.b16 %v2059, %v2057
  %v2784 = vpack.c.b16 %v2062, %v2060
  %v2785 = vpack.c.b16 %v2063, %v2061
  %v2786 = vpack.c.b16 %v2066, %v2064
  %v2787 = vpack.c.b16 %v2067, %v2065
  %v2788 = vpack.c.b16 %v2070, %v2068
  %v2789 = vpack.c.b16 %v2071, %v2069
  %v2790 = vpack.c.b16 %v2074, %v2072
  %v2791 = vpack.c.b16 %v2075, %v2073
  %v2792 = vpack.c.b16 %v2078, %v2076
  %v2793 = vpack.c.b16 %v2079, %v2077
  %v2794 = vpack.c.b16 %v2082, %v2080
  %v2795 = vpack.c.b16 %v2083, %v2081
  %v2796 = vpack.c.b16 %v2086, %v2084
  %v2797 = vpack.c.b16 %v2087, %v2085
  %v2798 = vpack.c.b16 %v2090, %v2088
  %v2799 = vpack.c.b16 %v2091, %v2089
  %v2800 = vpack.c.b16 %v2094, %v2092
  %v2801 = vpack.c.b16 %v2095, %v2093
  %v2802 = vpack.c.b16 %v2098, %v2096
  %v2803 = vpack.c.b16 %v2099, %v2097
  %v2804 = vpack.c.b16 %v2102, %v2100
  %v2805 = vpack.c.b16 %v2103, %v2101
  %v2806 = vpack.c.b16 %v2106, %v2104
  %v2807 = vpack.c.b16 %v2107, %v2105
  %v2808 = vpack.c.b16 %v2110, %v2108
  %v2809 = vpack.c.b16 %v2111, %v2109
  %v2810 = vpack.c.b16 %v2114, %v2112
  %v2811 = vpack.c.b16 %v2115, %v2113
  %v2812 = vpack.c.b16 %v2118, %v2116
  %v2813 = vpack.c.b16 %v2119, %v2117
  %v2814 = vpack.c.b16 %v2122, %v2120
  %v2815 = vpack.c.b16 %v2123, %v2121
  %v2816 = vpack.c.b16 %v2126, %v2124
  %v2817 = vpack.c.b16 %v2127, %v2125
  %v2818 = vpack.c.b16 %v2130, %v2128
  %v2819 = vpack.c.b16 %v2131, %v2129
  %v2820 = vpack.c.b16 %v2134, %v2132
  %v2821 = vpack.c.b16 %v2135, %v2133
  %v2822 = vpack.c.b16 %v2138, %v2136
  %v2823 = vpack.c.b16 %v2139, %v2137
  %v2824 = vpack.c.b16 %v2142, %v2140
  %v2825 = vpack.c.b16 %v2143, %v2141
  %v2826 = vpack.c.b16 %v2146, %v2144
  %v2827 = vpack.c.b16 %v2147, %v2145
  %v2828 = vpack.c.b16 %v2150, %v2148
  %v2829 = vpack.c.b16 %v2151, %v2149
  %v2830 = vpack.c.b16 %v2154, %v2152
  %v2831 = vpack.c.b16 %v2155, %v2153
  %v2832 = vpack.c.b16 %v2158, %v2156
  %v2833 = vpack.c.b16 %v2159, %v2157
  %v2834 = vpack.c.b16 %v2162, %v2160
  %v2835 = vpack.c.b16 %v2163, %v2161
  %v2836 = vpack.c.b16 %v2166, %v2164
  %v2837 = vpack.c.b16 %v2167, %v2165
  %v2838 = vpack.c.b16 %v2170, %v2168
  %v2839 = vpack.c.b16 %v2171, %v2169
  %v2840 = vpack.c.b16 %v2174, %v2172
  %v2841 = vpack.c.b16 %v2175, %v2173
  %v2842 = vpack.c.b16 %v2178, %v2176
  %v2843 = vpack.c.b16 %v2179, %v2177
  %v2844 = vpack.c.b16 %v2182, %v2180
  %v2845 = vpack.c.b16 %v2183, %v2181
  %v2846 = vpack.c.b16 %v2186, %v2184
  %v2847 = vpack.c.b16 %v2187, %v2185
  %v2848 = vpack.c.b16 %v2190, %v2188
  %v2849 = vpack.c.b16 %v2191, %v2189
  %v2850 = vpack.c.b16 %v2194, %v2192
  %v2851 = vpack.c.b16 %v2195, %v2193
  %v2852 = vpack.c.b16 %v2198, %v2196
  %v2853 = vpack.c.b16 %v2199, %v2197
  %v2854 = vpack.c.b16 %v2202, %v2200
  %v2855 = vpack.c.b16 %v2203, %v2201
  %v2856 = vpack.c.b16 %v2206, %v2204
  %v2857 = vpack.c.b16 %v2207, %v2205
  %v2858 = vpack.c.b16 %v2210, %v2208
  %v2859 = vpack.c.b16 %v2211, %v2209
  %v2860 = vpack.c.b16 %v2214, %v2212
  %v2861 = vpack.c.b16 %v2215, %v2213
  %v2862 = vpack.c.b16 %v2218, %v2216
  %v2863 = vpack.c.b16 %v2219, %v2217
  %v2864 = vpack.c.b16 %v2222, %v2220
  %v2865 = vpack.c.b16 %v2223, %v2221
  %v2866 = vpack.c.b16 %v2226, %v2224
  %v2867 = vpack.c.b16 %v2227, %v2225
  %v2868 = vpack.c.b16 %v2230, %v2228
  %v2869 = vpack.c.b16 %v2231, %v2229
  %v2870 = vpack.c.b16 %v2234, %v2232
  %v2871 = vpack.c.b16 %v2235, %v2233
  %v2872 = vpack.c.b16 %v2238, %v2236
  %v2873 = vpack.c.b16 %v2239, %v2237
  %v2874 = vpack.c.b16 %v2242, %v2240
  %v2875 = vpack.c.b16 %v2243, %v2241
  %v2876 = vpack.c.b16 %v2246, %v2244
  %v2877 = vpack.c.b16 %v2247, %v2245
  %v2878 = vpack.c.b16 %v2250, %v2248
  %v2879 = vpack.c.b16 %v2251, %v2249
  %v2880 = vpack.c.b16 %v2254, %v2252
  %v2881 = vpack.c.b16 %v2255, %v2253
  %v2882 = vpack.c.b16 %v2258, %v2256
  %v2883 = vpack.c.b16 %v2259, %v2257
  %v2884 = vpack.c.b16 %v2262, %v2260
  %v2885 = vpack.c.b16 %v2263, %v2261
  %v2886 = vpack.c.b16 %v2266, %v2264
  %v2887 = vpack.c.b16 %v2267, %v2265
  %v2888 = vpack.c.b16 %v2270, %v2268
  %v2889 = vpack.c.b16 %v2271, %v2269
  %v2890 = vpack.c.b16 %v2274, %v2272
  %v2891 = vpack.c.b16 %v2275, %v2273
  %v2892 = vpack.c.b16 %v2278, %v2276
  %v2893 = vpack.c.b16 %v2279, %v2277
  %v2894 = vpack.c.b16 %v2282, %v2280
  %v2895 = vpack.c.b16 %v2283, %v2281
  %v2896 = vpack.c.b16 %v2286, %v2284
  %v2897 = vpack.c.b16 %v2287, %v2285
  %v2898 = vpack.c.b16 %v2290, %v2288
  %v2899 = vpack.c.b16 %v2291, %v2289
  %v2900 = vpack.c.b16 %v2294, %v2292
  %v2901 = vpack.c.b16 %v2295, %v2293
  %v2902 = vpack.c.b16 %v2298, %v2296
  %v2903 = vpack.c.b16 %v2299, %v2297
  %v2904 = vpack.c.b16 %v2302, %v2300
  %v2905 = vpack.c.b16 %v2303, %v2301
  %v2906 = vpack.c.b16 %v2306, %v2304
  %v2907 = vpack.c.b16 %v2307, %v2305
  %v2908 = vpack.c.b16 %v2310, %v2308
  %v2909 = vpack.c.b16 %v2311, %v2309
  %v2910 = vpack.c.b16 %v2314, %v2312
  %v2911 = vpack.c.b16 %v2315, %v2313
  %v2912 = vpack.c.b16 %v2318, %v2316
  %v2913 = vpack.c.b16 %v2319, %v2317
  %v2914 = vpack.c.b16 %v2322, %v2320
  %v2915 = vpack.c.b16 %v2323, %v2321
  %v2916 = vpack.c.b16 %v2326, %v2324
  %v2917 = vpack.c.b16 %v2327, %v2325
  %v2918 = vpack.c.b16 %v2330, %v2328
  %v2919 = vpack.c.b16 %v2331, %v2329
  %v2920 = vpack.c.b16 %v2334, %v2332
  %v2921 = vpack.c.b16 %v2335, %v2333
  %v2922 = vpack.c.b16 %v2338, %v2336
  %v2923 = vpack.c.b16 %v2339, %v2337
  %v2924 = vpack.c.b16 %v2342, %v2340
  %v2925 = vpack.c.b16 %v2343, %v2341
  %v2926 = vpack.c.b16 %v2346, %v2344
  %v2927 = vpack.c.b16 %v2347, %v2345
  %v2928 = vpack.c.b16 %v2350, %v2348
  %v2929 = vpack.c.b16 %v2351, %v2349
  %v2930 = vpack.c.b16 %v2354, %v2352
  %v2931 = vpack.c.b16 %v2355, %v2353
  %v3245 = vunpack.c.l.b16 %v603
  %v3246 = vunpack.c.h.b16 %v603
  %v3247 = vunpack.c.l.b16 %v604
  %v3248 = vunpack.c.h.b16 %v604
  %v3249 = vunpack.c.l.b16 %v605
  %v3250 = vunpack.c.h.b16 %v605
  %v3251 = vunpack.c.l.b16 %v606
  %v3252 = vunpack.c.h.b16 %v606
  %v3253 = vunpack.c.l.b16 %v607
  %v3254 = vunpack.c.h.b16 %v607
  %v3255 = vunpack.c.l.b16 %v608
  %v3256 = vunpack.c.h.b16 %v608
  %v3257 = vunpack.c.l.b16 %v609
  %v3258 = vunpack.c.h.b16 %v609
  %v3259 = vunpack.c.l.b16 %v610
  %v3260 = vunpack.c.h.b16 %v610
  %v3261 = vunpack.c.l.b16 %v611
  %v3262 = vunpack.c.h.b16 %v611
  %v3263 = vunpack.c.l.b16 %v612
  %v3264 = vunpack.c.h.b16 %v612
  %v3265 = vunpack.c.l.b16 %v613
  %v3266 = vunpack.c.h.b16 %v613
  %v3267 = vunpack.c.l.b16 %v614
  %v3268 = vunpack.c.h.b16 %v614
  %v3269 = vunpack.c.l.b16 %v615
  %v3270 = vunpack.c.h.b16 %v615
  %v3271 = vunpack.c.l.b16 %v616
  %v3272 = vunpack.c.h.b16 %v616
  %v3273 = vunpack.c.l.b16 %v617
  %v3274 = vunpack.c.h.b16 %v617
  %v3275 = vunpack.c.l.b16 %v618
  %v3276 = vunpack.c.h.b16 %v618
  %v3277 = vunpack.c.l.b16 %v619
  %v3278 = vunpack.c.h.b16 %v619
  %v3279 = vunpack.c.l.b16 %v620
  %v3280 = vunpack.c.h.b16 %v620
  %v3281 = vunpack.c.l.b16 %v621
  %v3282 = vunpack.c.h.b16 %v621
  %v3283 = vunpack.c.l.b16 %v622
  %v3284 = vunpack.c.h.b16 %v622
  %v3285 = vunpack.c.l.b16 %v623
  %v3286 = vunpack.c.h.b16 %v623
  %v3287 = vunpack.c.l.b16 %v624
  %v3288 = vunpack.c.h.b16 %v624
  %v3289 = vunpack.c.l.b16 %v625
  %v3290 = vunpack.c.h.b16 %v625
  %v3291 = vunpack.c.l.b16 %v626
  %v3292 = vunpack.c.h.b16 %v626
  %v3293 = vunpack.c.l.b16 %v627
  %v3294 = vunpack.c.h.b16 %v627
  %v3295 = vpack.c.b16 %v3247, %v3245
  %v3296 = vpack.c.b16 %v3248, %v3246
  %v3297 = vpack.c.b16 %v3251, %v3249
  %v3298 = vpack.c.b16 %v3252, %v3250
  %v3299 = vpack.c.b16 %v3255, %v3253
  %v3300 = vpack.c.b16 %v3256, %v3254
  %v3301 = vpack.c.b16 %v3259, %v3257
  %v3302 = vpack.c.b16 %v3260, %v3258
  %v3303 = vpack.c.b16 %v3263, %v3261
  %v3304 = vpack.c.b16 %v3264, %v3262
  %v3305 = vpack.c.b16 %v3267, %v3265
  %v3306 = vpack.c.b16 %v3268, %v3266
  %v3307 = vpack.c.b16 %v3271, %v3269
  %v3308 = vpack.c.b16 %v3272, %v3270
  %v3309 = vpack.c.b16 %v3275, %v3273
  %v3310 = vpack.c.b16 %v3276, %v3274
  %v3311 = vpack.c.b16 %v3279, %v3277
  %v3312 = vpack.c.b16 %v3280, %v3278
  %v3313 = vpack.c.b16 %v3283, %v3281
  %v3314 = vpack.c.b16 %v3284, %v3282
  %v3315 = vpack.c.b16 %v3287, %v3285
  %v3316 = vpack.c.b16 %v3288, %v3286
  %v3317 = vpack.c.b16 %v3291, %v3289
  %v3318 = vpack.c.b16 %v3292, %v3290
  %v3319 = vpack.c.b16 %v3293, %v3293
  %v3320 = vpack.c.b16 %v3294, %v3294
  %vm3345 = vcmask 564224
  %v3347 = vsel %vm3345, %v2357, 0
  %v3350 = vsel %vm3345, %v2359, 0
  %v3353 = vsel %vm3345, %v2361, 0
  %v3356 = vsel %vm3345, %v2363, 0
  %v3359 = vsel %vm3345, %v2365, 0
  %v3362 = vsel %vm3345, %v2367, 0
  %v3365 = vsel %vm3345, %v2369, 0
  %v3368 = vsel %vm3345, %v2371, 0
  %v3371 = vsel %vm3345, %v2373, 0
  %v3374 = vsel %vm3345, %v2375, 0
  %v3377 = vsel %vm3345, %v2377, 0
  %v3380 = vsel %vm3345, %v2379, 0
  %v3383 = vsel %vm3345, %v2381, 0
  %v3386 = vsel %vm3345, %v2383, 0
  %v3389 = vsel %vm3345, %v2385, 0
  %v3392 = vsel %vm3345, %v2387, 0
  %v3395 = vsel %vm3345, %v2389, 0
  %v3398 = vsel %vm3345, %v2391, 0
  %v3401 = vsel %vm3345, %v2393, 0
  %v3404 = vsel %vm3345, %v2395, 0
  %v3407 = vsel %vm3345, %v2397, 0
  %v3410 = vsel %vm3345, %v2399, 0
  %v3413 = vsel %vm3345, %v2401, 0
  %v3416 = vsel %vm3345, %v2403, 0
  %v3419 = vsel %vm3345, %v2405, 0
  %v3422 = vsel %vm3345, %v2407, 0
  %v3425 = vsel %vm3345, %v2409, 0
  %v3428 = vsel %vm3345, %v2411, 0
  %v3431 = vsel %vm3345, %v2413, 0
  %v3434 = vsel %vm3345, %v2415, 0
  %v3437 = vsel %vm3345, %v2417, 0
  %v3440 = vsel %vm3345, %v2419, 0
  %v3443 = vsel %vm3345, %v2421, 0
  %v3446 = vsel %vm3345, %v2423, 0
  %v3449 = vsel %vm3345, %v2425, 0
  %v3452 = vsel %vm3345, %v2427, 0
  %v3455 = vsel %vm3345, %v2429, 0
  %v3458 = vsel %vm3345, %v2431, 0
  %v3461 = vsel %vm3345, %v2433, 0
  %v3464 = vsel %vm3345, %v2435, 0
  %v3467 = vsel %vm3345, %v2437, 0
  %v3470 = vsel %vm3345, %v2439, 0
  %v3473 = vsel %vm3345, %v2441, 0
  %v3476 = vsel %vm3345, %v2443, 0
  %v3479 = vsel %vm3345, %v2445, 0
  %v3482 = vsel %vm3345, %v2447, 0
  %v3485 = vsel %vm3345, %v2449, 0
  %v3488 = vsel %vm3345, %v2451, 0
  %v3491 = vsel %vm3345, %v2453, 0
  %v3494 = vsel %vm3345, %v2455, 0
  %v3497 = vsel %vm3345, %v2457, 0
  %v3500 = vsel %vm3345, %v2459, 0
  %v3503 = vsel %vm3345, %v2461, 0
  %v3506 = vsel %vm3345, %v2463, 0
  %v3509 = vsel %vm3345, %v2465, 0
  %v3512 = vsel %vm3345, %v2467, 0
  %v3515 = vsel %vm3345, %v2469, 0
  %v3518 = vsel %vm3345, %v2471, 0
  %v3521 = vsel %vm3345, %v2473, 0
  %v3524 = vsel %vm3345, %v2475, 0
  %v3527 = vsel %vm3345, %v2477, 0
  %v3530 = vsel %vm3345, %v2479, 0
  %v3533 = vsel %vm3345, %v2481, 0
  %v3536 = vsel %vm3345, %v2483, 0
  %v3539 = vsel %vm3345, %v2485, 0
  %v3542 = vsel %vm3345, %v2487, 0
  %v3545 = vsel %vm3345, %v2489, 0
  %v3548 = vsel %vm3345, %v2491, 0
  %v3551 = vsel %vm3345, %v2493, 0
  %v3554 = vsel %vm3345, %v2495, 0
  %v3557 = vsel %vm3345, %v2497, 0
  %v3560 = vsel %vm3345, %v2499, 0
  %v3563 = vsel %vm3345, %v2501, 0
  %v3566 = vsel %vm3345, %v2503, 0
  %v3569 = vsel %vm3345, %v2505, 0
  %v3572 = vsel %vm3345, %v2507, 0
  %v3575 = vsel %vm3345, %v2509, 0
  %v3578 = vsel %vm3345, %v2511, 0
  %v3581 = vsel %vm3345, %v2513, 0
  %v3584 = vsel %vm3345, %v2515, 0
  %v3587 = vsel %vm3345, %v2517, 0
  %v3590 = vsel %vm3345, %v2519, 0
  %v3593 = vsel %vm3345, %v2521, 0
  %v3596 = vsel %vm3345, %v2523, 0
  %v3599 = vsel %vm3345, %v2525, 0
  %v3602 = vsel %vm3345, %v2527, 0
  %v3605 = vsel %vm3345, %v2529, 0
  %v3608 = vsel %vm3345, %v2531, 0
  %v3611 = vsel %vm3345, %v2533, 0
  %v3614 = vsel %vm3345, %v2535, 0
  %v3617 = vsel %vm3345, %v2537, 0
  %v3620 = vsel %vm3345, %v2539, 0
  %v3623 = vsel %vm3345, %v2541, 0
  %v3626 = vsel %vm3345, %v2543, 0
  %v3629 = vsel %vm3345, %v2545, 0
  %v3632 = vsel %vm3345, %v2547, 0
  %v3635 = vsel %vm3345, %v2549, 0
  %v3638 = vsel %vm3345, %v2551, 0
  %v3641 = vsel %vm3345, %v2553, 0
  %v3644 = vsel %vm3345, %v2555, 0
  %v3647 = vsel %vm3345, %v2557, 0
  %v3650 = vsel %vm3345, %v2559, 0
  %v3653 = vsel %vm3345, %v2561, 0
  %v3656 = vsel %vm3345, %v2563, 0
  %v3659 = vsel %vm3345, %v2565, 0
  %v3662 = vsel %vm3345, %v2567, 0
  %v3665 = vsel %vm3345, %v2569, 0
  %v3668 = vsel %vm3345, %v2571, 0
  %v3671 = vsel %vm3345, %v2573, 0
  %v3674 = vsel %vm3345, %v2575, 0
  %v3677 = vsel %vm3345, %v2577, 0
  %v3680 = vsel %vm3345, %v2579, 0
  %v3683 = vsel %vm3345, %v2581, 0
  %v3686 = vsel %vm3345, %v2583, 0
  %v3689 = vsel %vm3345, %v2585, 0
  %v3692 = vsel %vm3345, %v2587, 0
  %v3695 = vsel %vm3345, %v2589, 0
  %v3698 = vsel %vm3345, %v2591, 0
  %v3701 = vsel %vm3345, %v2593, 0
  %v3704 = vsel %vm3345, %v2595, 0
  %v3707 = vsel %vm3345, %v2597, 0
  %v3710 = vsel %vm3345, %v2599, 0
  %v3713 = vsel %vm3345, %v2601, 0
  %v3716 = vsel %vm3345, %v2603, 0
  %v3719 = vsel %vm3345, %v2605, 0
  %v3722 = vsel %vm3345, %v2607, 0
  %v3725 = vsel %vm3345, %v2609, 0
  %v3728 = vsel %vm3345, %v2611, 0
  %v3731 = vsel %vm3345, %v2613, 0
  %v3734 = vsel %vm3345, %v2615, 0
  %v3737 = vsel %vm3345, %v2617, 0
  %v3740 = vsel %vm3345, %v2619, 0
  %v3743 = vsel %vm3345, %v2621, 0
  %v3746 = vsel %vm3345, %v2623, 0
  %v3749 = vsel %vm3345, %v2625, 0
  %v3752 = vsel %vm3345, %v2627, 0
  %v3755 = vsel %vm3345, %v2629, 0
  %v3758 = vsel %vm3345, %v2631, 0
  %v3761 = vsel %vm3345, %v2633, 0
  %v3764 = vsel %vm3345, %v2635, 0
  %v3767 = vsel %vm3345, %v2637, 0
  %v3770 = vsel %vm3345, %v2639, 0
  %v3773 = vsel %vm3345, %v2641, 0
  %v3776 = vsel %vm3345, %v2643, 0
  %v3779 = vsel %vm3345, %v2645, 0
  %v3782 = vsel %vm3345, %v2647, 0
  %v3785 = vsel %vm3345, %v2649, 0
  %v3788 = vsel %vm3345, %v2651, 0
  %v3791 = vsel %vm3345, %v2653, 0
  %v3794 = vsel %vm3345, %v2655, 0
  %v3797 = vsel %vm3345, %v2657, 0
  %v3800 = vsel %vm3345, %v2659, 0
  %v3803 = vsel %vm3345, %v2661, 0
  %v3806 = vsel %vm3345, %v2663, 0
  %v3809 = vsel %vm3345, %v2665, 0
  %v3812 = vsel %vm3345, %v2667, 0
  %v3815 = vsel %vm3345, %v2669, 0
  %v3818 = vsel %vm3345, %v2671, 0
  %v3821 = vsel %vm3345, %v2673, 0
  %v3824 = vsel %vm3345, %v2675, 0
  %v3827 = vsel %vm3345, %v2677, 0
  %v3830 = vsel %vm3345, %v2679, 0
  %v3833 = vsel %vm3345, %v2681, 0
  %v3836 = vsel %vm3345, %v2683, 0
  %v3839 = vsel %vm3345, %v2685, 0
  %v3842 = vsel %vm3345, %v2687, 0
  %v3845 = vsel %vm3345, %v2689, 0
  %v3848 = vsel %vm3345, %v2691, 0
  %v3851 = vsel %vm3345, %v2693, 0
  %v3854 = vsel %vm3345, %v2695, 0
  %v3857 = vsel %vm3345, %v2697, 0
  %v3860 = vsel %vm3345, %v2699, 0
  %v3863 = vsel %vm3345, %v2701, 0
  %v3866 = vsel %vm3345, %v2703, 0
  %v3869 = vsel %vm3345, %v2705, 0
  %v3872 = vsel %vm3345, %v2707, 0
  %v3875 = vsel %vm3345, %v2709, 0
  %v3878 = vsel %vm3345, %v2711, 0
  %v3881 = vsel %vm3345, %v2713, 0
  %v3884 = vsel %vm3345, %v2715, 0
  %v3887 = vsel %vm3345, %v2717, 0
  %v3890 = vsel %vm3345, %v2719, 0
  %v3893 = vsel %vm3345, %v2721, 0
  %v3896 = vsel %vm3345, %v2723, 0
  %v3899 = vsel %vm3345, %v2725, 0
  %v3902 = vsel %vm3345, %v2727, 0
  %v3905 = vsel %vm3345, %v2729, 0
  %v3908 = vsel %vm3345, %v2731, 0
  %v3911 = vsel %vm3345, %v2733, 0
  %v3914 = vsel %vm3345, %v2735, 0
  %v3917 = vsel %vm3345, %v2737, 0
  %v3920 = vsel %vm3345, %v2739, 0
  %v3923 = vsel %vm3345, %v2741, 0
  %v3926 = vsel %vm3345, %v2743, 0
  %v3929 = vsel %vm3345, %v2745, 0
  %v3932 = vsel %vm3345, %v2747, 0
  %v3935 = vsel %vm3345, %v2749, 0
  %v3938 = vsel %vm3345, %v2751, 0
  %v3941 = vsel %vm3345, %v2753, 0
  %v3944 = vsel %vm3345, %v2755, 0
  %v3947 = vsel %vm3345, %v2757, 0
  %v3950 = vsel %vm3345, %v2759, 0
  %v3953 = vsel %vm3345, %v2761, 0
  %v3956 = vsel %vm3345, %v2763, 0
  %v3959 = vsel %vm3345, %v2765, 0
  %v3962 = vsel %vm3345, %v2767, 0
  %v3965 = vsel %vm3345, %v2769, 0
  %v3968 = vsel %vm3345, %v2771, 0
  %v3971 = vsel %vm3345, %v2773, 0
  %v3974 = vsel %vm3345, %v2775, 0
  %v3977 = vsel %vm3345, %v2777, 0
  %v3980 = vsel %vm3345, %v2779, 0
  %v3983 = vsel %vm3345, %v2781, 0
  %v3986 = vsel %vm3345, %v2783, 0
  %v3989 = vsel %vm3345, %v2785, 0
  %v3992 = vsel %vm3345, %v2787, 0
  %v3995 = vsel %vm3345, %v2789, 0
  %v3998 = vsel %vm3345, %v2791, 0
  %v4001 = vsel %vm3345, %v2793, 0
  %v4004 = vsel %vm3345, %v2795, 0
  %v4007 = vsel %vm3345, %v2797, 0
  %v4010 = vsel %vm3345, %v2799, 0
  %v4013 = vsel %vm3345, %v2801, 0
  %v4016 = vsel %vm3345, %v2803, 0
  %v4019 = vsel %vm3345, %v2805, 0
  %v4022 = vsel %vm3345, %v2807, 0
  %v4025 = vsel %vm3345, %v2809, 0
  %v4028 = vsel %vm3345, %v2811, 0
  %v4031 = vsel %vm3345, %v2813, 0
  %v4034 = vsel %vm3345, %v2815, 0
  %v4037 = vsel %vm3345, %v2817, 0
  %v4040 = vsel %vm3345, %v2819, 0
  %v4043 = vsel %vm3345, %v2821, 0
  %v4046 = vsel %vm3345, %v2823, 0
  %v4049 = vsel %vm3345, %v2825, 0
  %v4052 = vsel %vm3345, %v2827, 0
  %v4055 = vsel %vm3345, %v2829, 0
  %v4058 = vsel %vm3345, %v2831, 0
  %v4061 = vsel %vm3345, %v2833, 0
  %v4064 = vsel %vm3345, %v2835, 0
  %v4067 = vsel %vm3345, %v2837, 0
  %v4070 = vsel %vm3345, %v2839, 0
  %v4073 = vsel %vm3345, %v2841, 0
  %v4076 = vsel %vm3345, %v2843, 0
  %v4079 = vsel %vm3345, %v2845, 0
  %v4082 = vsel %vm3345, %v2847, 0
  %v4085 = vsel %vm3345, %v2849, 0
  %v4088 = vsel %vm3345, %v2851, 0
  %v4091 = vsel %vm3345, %v2853, 0
  %v4094 = vsel %vm3345, %v2855, 0
  %v4097 = vsel %vm3345, %v2857, 0
  %v4100 = vsel %vm3345, %v2859, 0
  %v4103 = vsel %vm3345, %v2861, 0
  %v4106 = vsel %vm3345, %v2863, 0
  %v4109 = vsel %vm3345, %v2865, 0
  %v4112 = vsel %vm3345, %v2867, 0
  %v4115 = vsel %vm3345, %v2869, 0
  %v4118 = vsel %vm3345, %v2871, 0
  %v4121 = vsel %vm3345, %v2873, 0
  %v4124 = vsel %vm3345, %v2875, 0
  %v4127 = vsel %vm3345, %v2877, 0
  %v4130 = vsel %vm3345, %v2879, 0
  %v4133 = vsel %vm3345, %v2881, 0
  %v4136 = vsel %vm3345, %v2883, 0
  %v4139 = vsel %vm3345, %v2885, 0
  %v4142 = vsel %vm3345, %v2887, 0
  %v4145 = vsel %vm3345, %v2889, 0
  %v4148 = vsel %vm3345, %v2891, 0
  %v4151 = vsel %vm3345, %v2893, 0
  %v4154 = vsel %vm3345, %v2895, 0
  %v4157 = vsel %vm3345, %v2897, 0
  %v4160 = vsel %vm3345, %v2899, 0
  %v4163 = vsel %vm3345, %v2901, 0
  %v4166 = vsel %vm3345, %v2903, 0
  %v4169 = vsel %vm3345, %v2905, 0
  %v4172 = vsel %vm3345, %v2907, 0
  %v4175 = vsel %vm3345, %v2909, 0
  %v4178 = vsel %vm3345, %v2911, 0
  %v4181 = vsel %vm3345, %v2913, 0
  %v4184 = vsel %vm3345, %v2915, 0
  %v4187 = vsel %vm3345, %v2917, 0
  %v4190 = vsel %vm3345, %v2919, 0
  %v4193 = vsel %vm3345, %v2921, 0
  %v4196 = vsel %vm3345, %v2923, 0
  %v4199 = vsel %vm3345, %v2925, 0
  %v4202 = vsel %vm3345, %v2927, 0
  %v4205 = vsel %vm3345, %v2929, 0
  %v4208 = vsel %vm3345, %v2931, 0
  %vm4210 = vcmask 1041408
  %vm4211 = vcmask 1042432
  %v4212 = vsel %vm4210, 4294967295, 65535
  %v4213 = vsel %vm4211, %v4212, 0
  %v4215 = vand.u32 %v3319, %v4213
  %v4218 = vand.u32 %v3320, %v4213
  %4220 = vmatprep.subr.bf16.mxu0 %v3296
  %4221 = vmatpush1.bf16.msra.mxu0 %v3295
  %4222 = vmatprep.subr.bf16.mxu0 %v3298
  %4223 = vmatpush1.bf16.msra.mxu0 %v3297
  %4224 = vmatprep.subr.bf16.mxu0 %v3300
  %4225 = vmatpush1.bf16.msra.mxu0 %v3299
  %4226 = vmatprep.subr.bf16.mxu0 %v3302
  %4227 = vmatpush1.bf16.msra.mxu0 %v3301
  %4228 = vmatprep.subr.bf16.mxu0 %v3304
  %4229 = vmatpush1.bf16.msra.mxu0 %v3303
  %4230 = vmatprep.subr.bf16.mxu0 %v3306
  %4231 = vmatpush1.bf16.msra.mxu0 %v3305
  %4232 = vmatprep.subr.bf16.mxu0 %v3308
  %4233 = vmatpush1.bf16.msra.mxu0 %v3307
  %4234 = vmatprep.subr.bf16.mxu0 %v3310
  %4235 = vmatpush1.bf16.msra.mxu0 %v3309
  %4236 = vmatprep.subr.bf16.mxu0 %v3312
  %4237 = vmatpush1.bf16.msra.mxu0 %v3311
  %4238 = vmatprep.subr.bf16.mxu0 %v3314
  %4239 = vmatpush1.bf16.msra.mxu0 %v3313
  %4240 = vmatprep.subr.bf16.mxu0 %v3316
  %4241 = vmatpush1.bf16.msra.mxu0 %v3315
  %4242 = vmatprep.subr.bf16.mxu0 %v3318
  %4243 = vmatpush1.bf16.msra.mxu0 %v3317
  %4244 = vmatprep.subr.bf16.mxu0 %v4218
  %4245 = vmatpush1.bf16.msra.mxu0 %v4215
  %4246 = vmatprep.subr.bf16.mxu0 0
  %4247 = vmatpush1.bf16.msra.mxu0 0
  %4248 = vmatprep.subr.bf16.mxu0 0
  %4249 = vmatpush1.bf16.msra.mxu0 0
  %4250 = vmatprep.subr.bf16.mxu0 0
  %4251 = vmatpush1.bf16.msra.mxu0 0
  %4252 = vmatprep.mubr.bf16.mxu0 %v3347
  %4253 = vmatmul.mubr.bf16.gmra.mrb[0].mxu0 %v2356
  %v4254 = vpop.f32.mrb[0].mxu0
  %v4255 = vadd.f32 0.0, %v4254
  %v4256 = vpop.f32.mrb[0].mxu0
  %v4257 = vadd.f32 0.0, %v4256
  %v4258 = vpop.f32.mrb[0].mxu0
  %v4259 = vadd.f32 0.0, %v4258
  %v4260 = vpop.f32.mrb[0].mxu0
  %v4261 = vadd.f32 0.0, %v4260
  %4262 = vmatprep.mubr.bf16.mxu0 %v3350
  %4263 = vmatmul.mubr.bf16.gmra.mrb[0].mxu0 %v2358
  %v4264 = vpop.f32.mrb[0].mxu0
  %v4265 = vadd.f32 0.0, %v4264
  %v4266 = vpop.f32.mrb[0].mxu0
  %v4267 = vadd.f32 0.0, %v4266
  %v4268 = vpop.f32.mrb[0].mxu0
  %v4269 = vadd.f32 0.0, %v4268
  %v4270 = vpop.f32.mrb[0].mxu0
  %v4271 = vadd.f32 0.0, %v4270
  %4272 = vmatprep.mubr.bf16.mxu0 %v3353
  %4273 = vmatmul.mubr.bf16.gmra.mrb[0].mxu0 %v2360
  %v4274 = vpop.f32.mrb[0].mxu0
  %v4275 = vadd.f32 0.0, %v4274
  %v4276 = vpop.f32.mrb[0].mxu0
  %v4277 = vadd.f32 0.0, %v4276
  %v4278 = vpop.f32.mrb[0].mxu0
  %v4279 = vadd.f32 0.0, %v4278
  %v4280 = vpop.f32.mrb[0].mxu0
  %v4281 = vadd.f32 0.0, %v4280
  %4282 = vmatprep.mubr.bf16.mxu0 %v3356
  %4283 = vmatmul.mubr.bf16.gmra.mrb[0].mxu0 %v2362
  %v4284 = vpop.f32.mrb[0].mxu0
  %v4285 = vadd.f32 0.0, %v4284
  %v4286 = vpop.f32.mrb[0].mxu0
  %v4287 = vadd.f32 0.0, %v4286
  %v4288 = vpop.f32.mrb[0].mxu0
  %v4289 = vadd.f32 0.0, %v4288
  %v4290 = vpop.f32.mrb[0].mxu0
  %v4291 = vadd.f32 0.0, %v4290
  %4292 = vmatprep.mubr.bf16.mxu0 %v3359
  %4293 = vmatmul.mubr.bf16.gmra.mrb[0].mxu0 %v2364
  %v4294 = vpop.f32.mrb[0].mxu0
  %v4295 = vadd.f32 0.0, %v4294
  %v4296 = vpop.f32.mrb[0].mxu0
  %v4297 = vadd.f32 0.0, %v4296
  %v4298 = vpop.f32.mrb[0].mxu0
  %v4299 = vadd.f32 0.0, %v4298
  %v4300 = vpop.f32.mrb[0].mxu0
  %v4301 = vadd.f32 0.0, %v4300
  %4302 = vmatprep.mubr.bf16.mxu0 %v3362
  %4303 = vmatmul.mubr.bf16.gmra.mrb[0].mxu0 %v2366
  %v4304 = vpop.f32.mrb[0].mxu0
  %v4305 = vadd.f32 0.0, %v4304
  %v4306 = vpop.f32.mrb[0].mxu0
  %v4307 = vadd.f32 0.0, %v4306
  %v4308 = vpop.f32.mrb[0].mxu0
  %v4309 = vadd.f32 0.0, %v4308
  %v4310 = vpop.f32.mrb[0].mxu0
  %v4311 = vadd.f32 0.0, %v4310
  %4312 = vmatprep.mubr.bf16.mxu0 %v3365
  %4313 = vmatmul.mubr.bf16.gmra.mrb[0].mxu0 %v2368
  %v4314 = vpop.f32.mrb[0].mxu0
  %v4315 = vadd.f32 0.0, %v4314
  %v4316 = vpop.f32.mrb[0].mxu0
  %v4317 = vadd.f32 0.0, %v4316
  %v4318 = vpop.f32.mrb[0].mxu0
  %v4319 = vadd.f32 0.0, %v4318
  %v4320 = vpop.f32.mrb[0].mxu0
  %v4321 = vadd.f32 0.0, %v4320
  %4322 = vmatprep.mubr.bf16.mxu0 %v3368
  %4323 = vmatmul.mubr.bf16.gmra.mrb[0].mxu0 %v2370
  %v4324 = vpop.f32.mrb[0].mxu0
  %v4325 = vadd.f32 0.0, %v4324
  %v4326 = vpop.f32.mrb[0].mxu0
  %v4327 = vadd.f32 0.0, %v4326
  %v4328 = vpop.f32.mrb[0].mxu0
  %v4329 = vadd.f32 0.0, %v4328
  %v4330 = vpop.f32.mrb[0].mxu0
  %v4331 = vadd.f32 0.0, %v4330
  %4332 = vmatprep.mubr.bf16.mxu0 %v3371
  %4333 = vmatmul.mubr.bf16.gmra.mrb[0].mxu0 %v2372
  %v4334 = vpop.f32.mrb[0].mxu0
  %v4335 = vadd.f32 0.0, %v4334
  %v4336 = vpop.f32.mrb[0].mxu0
  %v4337 = vadd.f32 0.0, %v4336
  %v4338 = vpop.f32.mrb[0].mxu0
  %v4339 = vadd.f32 0.0, %v4338
  %v4340 = vpop.f32.mrb[0].mxu0
  %v4341 = vadd.f32 0.0, %v4340
  %4342 = vmatprep.mubr.bf16.mxu0 %v3374
  %4343 = vmatmul.mubr.bf16.gmra.mrb[0].mxu0 %v2374
  %v4344 = vpop.f32.mrb[0].mxu0
  %v4345 = vadd.f32 0.0, %v4344
  %v4346 = vpop.f32.mrb[0].mxu0
  %v4347 = vadd.f32 0.0, %v4346
  %v4348 = vpop.f32.mrb[0].mxu0
  %v4349 = vadd.f32 0.0, %v4348
  %v4350 = vpop.f32.mrb[0].mxu0
  %v4351 = vadd.f32 0.0, %v4350
  %4352 = vmatprep.mubr.bf16.mxu0 %v3377
  %4353 = vmatmul.mubr.bf16.gmra.mrb[0].mxu0 %v2376
  %v4354 = vpop.f32.mrb[0].mxu0
  %v4355 = vadd.f32 0.0, %v4354
  %v4356 = vpop.f32.mrb[0].mxu0
  %v4357 = vadd.f32 0.0, %v4356
  %v4358 = vpop.f32.mrb[0].mxu0
  %v4359 = vadd.f32 0.0, %v4358
  %v4360 = vpop.f32.mrb[0].mxu0
  %v4361 = vadd.f32 0.0, %v4360
  %4362 = vmatprep.mubr.bf16.mxu0 %v3380
  %4363 = vmatmul.mubr.bf16.gmra.mrb[0].mxu0 %v2378
  %v4364 = vpop.f32.mrb[0].mxu0
  %v4365 = vadd.f32 0.0, %v4364
  %v4366 = vpop.f32.mrb[0].mxu0
  %v4367 = vadd.f32 0.0, %v4366
  %v4368 = vpop.f32.mrb[0].mxu0
  %v4369 = vadd.f32 0.0, %v4368
  %v4370 = vpop.f32.mrb[0].mxu0
  %v4371 = vadd.f32 0.0, %v4370
  %4372 = vmatprep.mubr.bf16.mxu0 %v3383
  %4373 = vmatmul.mubr.bf16.gmra.mrb[0].mxu0 %v2380
  %v4374 = vpop.f32.mrb[0].mxu0
  %v4375 = vadd.f32 0.0, %v4374
  %v4376 = vpop.f32.mrb[0].mxu0
  %v4377 = vadd.f32 0.0, %v4376
  %v4378 = vpop.f32.mrb[0].mxu0
  %v4379 = vadd.f32 0.0, %v4378
  %v4380 = vpop.f32.mrb[0].mxu0
  %v4381 = vadd.f32 0.0, %v4380
  %4382 = vmatprep.mubr.bf16.mxu0 %v3386
  %4383 = vmatmul.mubr.bf16.gmra.mrb[0].mxu0 %v2382
  %v4384 = vpop.f32.mrb[0].mxu0
  %v4385 = vadd.f32 0.0, %v4384
  %v4386 = vpop.f32.mrb[0].mxu0
  %v4387 = vadd.f32 0.0, %v4386
  %v4388 = vpop.f32.mrb[0].mxu0
  %v4389 = vadd.f32 0.0, %v4388
  %v4390 = vpop.f32.mrb[0].mxu0
  %v4391 = vadd.f32 0.0, %v4390
  %4392 = vmatprep.mubr.bf16.mxu0 %v3389
  %4393 = vmatmul.mubr.bf16.gmra.mrb[0].mxu0 %v2384
  %v4394 = vpop.f32.mrb[0].mxu0
  %v4395 = vadd.f32 0.0, %v4394
  %v4396 = vpop.f32.mrb[0].mxu0
  %v4397 = vadd.f32 0.0, %v4396
  %v4398 = vpop.f32.mrb[0].mxu0
  %v4399 = vadd.f32 0.0, %v4398
  %v4400 = vpop.f32.mrb[0].mxu0
  %v4401 = vadd.f32 0.0, %v4400
  %4402 = vmatprep.mubr.bf16.mxu0 %v3392
  %4403 = vmatmul.mubr.bf16.gmra.mrb[0].mxu0 %v2386
  %v4404 = vpop.f32.mrb[0].mxu0
  %v4405 = vadd.f32 0.0, %v4404
  %v4406 = vpop.f32.mrb[0].mxu0
  %v4407 = vadd.f32 0.0, %v4406
  %v4408 = vpop.f32.mrb[0].mxu0
  %v4409 = vadd.f32 0.0, %v4408
  %v4410 = vpop.f32.mrb[0].mxu0
  %v4411 = vadd.f32 0.0, %v4410
  %4412 = vmatprep.mubr.bf16.mxu0 %v3395
  %4413 = vmatmul.mubr.bf16.gmra.mrb[0].mxu0 %v2388
  %v4414 = vpop.f32.mrb[0].mxu0
  %v4415 = vadd.f32 0.0, %v4414
  %v4416 = vpop.f32.mrb[0].mxu0
  %v4417 = vadd.f32 0.0, %v4416
  %v4418 = vpop.f32.mrb[0].mxu0
  %v4419 = vadd.f32 0.0, %v4418
  %v4420 = vpop.f32.mrb[0].mxu0
  %v4421 = vadd.f32 0.0, %v4420
  %4422 = vmatprep.mubr.bf16.mxu0 %v3398
  %4423 = vmatmul.mubr.bf16.gmra.mrb[0].mxu0 %v2390
  %v4424 = vpop.f32.mrb[0].mxu0
  %v4425 = vadd.f32 0.0, %v4424
  %v4426 = vpop.f32.mrb[0].mxu0
  %v4427 = vadd.f32 0.0, %v4426
  %v4428 = vpop.f32.mrb[0].mxu0
  %v4429 = vadd.f32 0.0, %v4428
  %v4430 = vpop.f32.mrb[0].mxu0
  %v4431 = vadd.f32 0.0, %v4430
  %4432 = vmatprep.mubr.bf16.mxu0 %v3401
  %4433 = vmatmul.mubr.bf16.gmra.mrb[0].mxu0 %v2392
  %v4434 = vpop.f32.mrb[0].mxu0
  %v4435 = vadd.f32 0.0, %v4434
  %v4436 = vpop.f32.mrb[0].mxu0
  %v4437 = vadd.f32 0.0, %v4436
  %v4438 = vpop.f32.mrb[0].mxu0
  %v4439 = vadd.f32 0.0, %v4438
  %v4440 = vpop.f32.mrb[0].mxu0
  %v4441 = vadd.f32 0.0, %v4440
  %4442 = vmatprep.mubr.bf16.mxu0 %v3404
  %4443 = vmatmul.mubr.bf16.gmra.mrb[0].mxu0 %v2394
  %v4444 = vpop.f32.mrb[0].mxu0
  %v4445 = vadd.f32 0.0, %v4444
  %v4446 = vpop.f32.mrb[0].mxu0
  %v4447 = vadd.f32 0.0, %v4446
  %v4448 = vpop.f32.mrb[0].mxu0
  %v4449 = vadd.f32 0.0, %v4448
  %v4450 = vpop.f32.mrb[0].mxu0
  %v4451 = vadd.f32 0.0, %v4450
  %4452 = vmatprep.mubr.bf16.mxu0 %v3407
  %4453 = vmatmul.mubr.bf16.gmra.mrb[0].mxu0 %v2396
  %v4454 = vpop.f32.mrb[0].mxu0
  %v4455 = vadd.f32 0.0, %v4454
  %v4456 = vpop.f32.mrb[0].mxu0
  %v4457 = vadd.f32 0.0, %v4456
  %v4458 = vpop.f32.mrb[0].mxu0
  %v4459 = vadd.f32 0.0, %v4458
  %v4460 = vpop.f32.mrb[0].mxu0
  %v4461 = vadd.f32 0.0, %v4460
  %4462 = vmatprep.mubr.bf16.mxu0 %v3410
  %4463 = vmatmul.mubr.bf16.gmra.mrb[0].mxu0 %v2398
  %v4464 = vpop.f32.mrb[0].mxu0
  %v4465 = vadd.f32 0.0, %v4464
  %v4466 = vpop.f32.mrb[0].mxu0
  %v4467 = vadd.f32 0.0, %v4466
  %v4468 = vpop.f32.mrb[0].mxu0
  %v4469 = vadd.f32 0.0, %v4468
  %v4470 = vpop.f32.mrb[0].mxu0
  %v4471 = vadd.f32 0.0, %v4470
  %4472 = vmatprep.mubr.bf16.mxu0 %v3413
  %4473 = vmatmul.mubr.bf16.gmra.mrb[0].mxu0 %v2400
  %v4474 = vpop.f32.mrb[0].mxu0
  %v4475 = vadd.f32 0.0, %v4474
  %v4476 = vpop.f32.mrb[0].mxu0
  %v4477 = vadd.f32 0.0, %v4476
  %v4478 = vpop.f32.mrb[0].mxu0
  %v4479 = vadd.f32 0.0, %v4478
  %v4480 = vpop.f32.mrb[0].mxu0
  %v4481 = vadd.f32 0.0, %v4480
  %4482 = vmatprep.mubr.bf16.mxu0 %v3416
  %4483 = vmatmul.mubr.bf16.gmra.mrb[0].mxu0 %v2402
  %v4484 = vpop.f32.mrb[0].mxu0
  %v4485 = vadd.f32 0.0, %v4484
  %v4486 = vpop.f32.mrb[0].mxu0
  %v4487 = vadd.f32 0.0, %v4486
  %v4488 = vpop.f32.mrb[0].mxu0
  %v4489 = vadd.f32 0.0, %v4488
  %v4490 = vpop.f32.mrb[0].mxu0
  %v4491 = vadd.f32 0.0, %v4490
  %4492 = vmatprep.mubr.bf16.mxu0 %v3419
  %4493 = vmatmul.mubr.bf16.gmra.mrb[0].mxu0 %v2404
  %v4494 = vpop.f32.mrb[0].mxu0
  %v4495 = vadd.f32 0.0, %v4494
  %v4496 = vpop.f32.mrb[0].mxu0
  %v4497 = vadd.f32 0.0, %v4496
  %v4498 = vpop.f32.mrb[0].mxu0
  %v4499 = vadd.f32 0.0, %v4498
  %v4500 = vpop.f32.mrb[0].mxu0
  %v4501 = vadd.f32 0.0, %v4500
  %4502 = vmatprep.mubr.bf16.mxu0 %v3422
  %4503 = vmatmul.mubr.bf16.gmra.mrb[0].mxu0 %v2406
  %v4504 = vpop.f32.mrb[0].mxu0
  %v4505 = vadd.f32 0.0, %v4504
  %v4506 = vpop.f32.mrb[0].mxu0
  %v4507 = vadd.f32 0.0, %v4506
  %v4508 = vpop.f32.mrb[0].mxu0
  %v4509 = vadd.f32 0.0, %v4508
  %v4510 = vpop.f32.mrb[0].mxu0
  %v4511 = vadd.f32 0.0, %v4510
  %4512 = vmatprep.mubr.bf16.mxu0 %v3425
  %4513 = vmatmul.mubr.bf16.gmra.mrb[0].mxu0 %v2408
  %v4514 = vpop.f32.mrb[0].mxu0
  %v4515 = vadd.f32 0.0, %v4514
  %v4516 = vpop.f32.mrb[0].mxu0
  %v4517 = vadd.f32 0.0, %v4516
  %v4518 = vpop.f32.mrb[0].mxu0
  %v4519 = vadd.f32 0.0, %v4518
  %v4520 = vpop.f32.mrb[0].mxu0
  %v4521 = vadd.f32 0.0, %v4520
  %4522 = vmatprep.mubr.bf16.mxu0 %v3428
  %4523 = vmatmul.mubr.bf16.gmra.mrb[0].mxu0 %v2410
  %v4524 = vpop.f32.mrb[0].mxu0
  %v4525 = vadd.f32 0.0, %v4524
  %v4526 = vpop.f32.mrb[0].mxu0
  %v4527 = vadd.f32 0.0, %v4526
  %v4528 = vpop.f32.mrb[0].mxu0
  %v4529 = vadd.f32 0.0, %v4528
  %v4530 = vpop.f32.mrb[0].mxu0
  %v4531 = vadd.f32 0.0, %v4530
  %4532 = vmatprep.mubr.bf16.mxu0 %v3431
  %4533 = vmatmul.mubr.bf16.gmra.mrb[0].mxu0 %v2412
  %v4534 = vpop.f32.mrb[0].mxu0
  %v4535 = vadd.f32 0.0, %v4534
  %v4536 = vpop.f32.mrb[0].mxu0
  %v4537 = vadd.f32 0.0, %v4536
  %v4538 = vpop.f32.mrb[0].mxu0
  %v4539 = vadd.f32 0.0, %v4538
  %v4540 = vpop.f32.mrb[0].mxu0
  %v4541 = vadd.f32 0.0, %v4540
  %4542 = vmatprep.mubr.bf16.mxu0 %v3434
  %4543 = vmatmul.mubr.bf16.gmra.mrb[0].mxu0 %v2414
  %v4544 = vpop.f32.mrb[0].mxu0
  %v4545 = vadd.f32 0.0, %v4544
  %v4546 = vpop.f32.mrb[0].mxu0
  %v4547 = vadd.f32 0.0, %v4546
  %v4548 = vpop.f32.mrb[0].mxu0
  %v4549 = vadd.f32 0.0, %v4548
  %v4550 = vpop.f32.mrb[0].mxu0
  %v4551 = vadd.f32 0.0, %v4550
  %4552 = vmatprep.mubr.bf16.mxu0 %v3437
  %4553 = vmatmul.mubr.bf16.gmra.mrb[0].mxu0 %v2416
  %v4554 = vpop.f32.mrb[0].mxu0
  %v4555 = vadd.f32 0.0, %v4554
  %v4556 = vpop.f32.mrb[0].mxu0
  %v4557 = vadd.f32 0.0, %v4556
  %v4558 = vpop.f32.mrb[0].mxu0
  %v4559 = vadd.f32 0.0, %v4558
  %v4560 = vpop.f32.mrb[0].mxu0
  %v4561 = vadd.f32 0.0, %v4560
  %4562 = vmatprep.mubr.bf16.mxu0 %v3440
  %4563 = vmatmul.mubr.bf16.gmra.mrb[0].mxu0 %v2418
  %v4564 = vpop.f32.mrb[0].mxu0
  %v4565 = vadd.f32 0.0, %v4564
  %v4566 = vpop.f32.mrb[0].mxu0
  %v4567 = vadd.f32 0.0, %v4566
  %v4568 = vpop.f32.mrb[0].mxu0
  %v4569 = vadd.f32 0.0, %v4568
  %v4570 = vpop.f32.mrb[0].mxu0
  %v4571 = vadd.f32 0.0, %v4570
  %4572 = vmatprep.mubr.bf16.mxu0 %v3443
  %4573 = vmatmul.mubr.bf16.gmra.mrb[0].mxu0 %v2420
  %v4574 = vpop.f32.mrb[0].mxu0
  %v4575 = vadd.f32 0.0, %v4574
  %v4576 = vpop.f32.mrb[0].mxu0
  %v4577 = vadd.f32 0.0, %v4576
  %v4578 = vpop.f32.mrb[0].mxu0
  %v4579 = vadd.f32 0.0, %v4578
  %v4580 = vpop.f32.mrb[0].mxu0
  %v4581 = vadd.f32 0.0, %v4580
  %4582 = vmatprep.mubr.bf16.mxu0 %v3446
  %4583 = vmatmul.mubr.bf16.gmra.mrb[0].mxu0 %v2422
  %v4584 = vpop.f32.mrb[0].mxu0
  %v4585 = vadd.f32 0.0, %v4584
  %v4586 = vpop.f32.mrb[0].mxu0
  %v4587 = vadd.f32 0.0, %v4586
  %v4588 = vpop.f32.mrb[0].mxu0
  %v4589 = vadd.f32 0.0, %v4588
  %v4590 = vpop.f32.mrb[0].mxu0
  %v4591 = vadd.f32 0.0, %v4590
  %4592 = vmatprep.mubr.bf16.mxu0 %v3449
  %4593 = vmatmul.mubr.bf16.gmra.mrb[0].mxu0 %v2424
  %v4594 = vpop.f32.mrb[0].mxu0
  %v4595 = vadd.f32 0.0, %v4594
  %v4596 = vpop.f32.mrb[0].mxu0
  %v4597 = vadd.f32 0.0, %v4596
  %v4598 = vpop.f32.mrb[0].mxu0
  %v4599 = vadd.f32 0.0, %v4598
  %v4600 = vpop.f32.mrb[0].mxu0
  %v4601 = vadd.f32 0.0, %v4600
  %4602 = vmatprep.mubr.bf16.mxu0 %v3452
  %4603 = vmatmul.mubr.bf16.gmra.mrb[0].mxu0 %v2426
  %v4604 = vpop.f32.mrb[0].mxu0
  %v4605 = vadd.f32 0.0, %v4604
  %v4606 = vpop.f32.mrb[0].mxu0
  %v4607 = vadd.f32 0.0, %v4606
  %v4608 = vpop.f32.mrb[0].mxu0
  %v4609 = vadd.f32 0.0, %v4608
  %v4610 = vpop.f32.mrb[0].mxu0
  %v4611 = vadd.f32 0.0, %v4610
  %4612 = vmatprep.mubr.bf16.mxu0 %v3455
  %4613 = vmatmul.mubr.bf16.gmra.mrb[0].mxu0 %v2428
  %v4614 = vpop.f32.mrb[0].mxu0
  %v4615 = vadd.f32 0.0, %v4614
  %v4616 = vpop.f32.mrb[0].mxu0
  %v4617 = vadd.f32 0.0, %v4616
  %v4618 = vpop.f32.mrb[0].mxu0
  %v4619 = vadd.f32 0.0, %v4618
  %v4620 = vpop.f32.mrb[0].mxu0
  %v4621 = vadd.f32 0.0, %v4620
  %4622 = vmatprep.mubr.bf16.mxu0 %v3458
  %4623 = vmatmul.mubr.bf16.gmra.mrb[0].mxu0 %v2430
  %v4624 = vpop.f32.mrb[0].mxu0
  %v4625 = vadd.f32 0.0, %v4624
  %v4626 = vpop.f32.mrb[0].mxu0
  %v4627 = vadd.f32 0.0, %v4626
  %v4628 = vpop.f32.mrb[0].mxu0
  %v4629 = vadd.f32 0.0, %v4628
  %v4630 = vpop.f32.mrb[0].mxu0
  %v4631 = vadd.f32 0.0, %v4630
  %4632 = vmatprep.mubr.bf16.mxu0 %v3461
  %4633 = vmatmul.mubr.bf16.gmra.mrb[0].mxu0 %v2432
  %v4634 = vpop.f32.mrb[0].mxu0
  %v4635 = vadd.f32 0.0, %v4634
  %v4636 = vpop.f32.mrb[0].mxu0
  %v4637 = vadd.f32 0.0, %v4636
  %v4638 = vpop.f32.mrb[0].mxu0
  %v4639 = vadd.f32 0.0, %v4638
  %v4640 = vpop.f32.mrb[0].mxu0
  %v4641 = vadd.f32 0.0, %v4640
  %4642 = vmatprep.mubr.bf16.mxu0 %v3464
  %4643 = vmatmul.mubr.bf16.gmra.mrb[0].mxu0 %v2434
  %v4644 = vpop.f32.mrb[0].mxu0
  %v4645 = vadd.f32 0.0, %v4644
  %v4646 = vpop.f32.mrb[0].mxu0
  %v4647 = vadd.f32 0.0, %v4646
  %v4648 = vpop.f32.mrb[0].mxu0
  %v4649 = vadd.f32 0.0, %v4648
  %v4650 = vpop.f32.mrb[0].mxu0
  %v4651 = vadd.f32 0.0, %v4650
  %4652 = vmatprep.mubr.bf16.mxu0 %v3467
  %4653 = vmatmul.mubr.bf16.gmra.mrb[0].mxu0 %v2436
  %v4654 = vpop.f32.mrb[0].mxu0
  %v4655 = vadd.f32 0.0, %v4654
  %v4656 = vpop.f32.mrb[0].mxu0
  %v4657 = vadd.f32 0.0, %v4656
  %v4658 = vpop.f32.mrb[0].mxu0
  %v4659 = vadd.f32 0.0, %v4658
  %v4660 = vpop.f32.mrb[0].mxu0
  %v4661 = vadd.f32 0.0, %v4660
  %4662 = vmatprep.mubr.bf16.mxu0 %v3470
  %4663 = vmatmul.mubr.bf16.gmra.mrb[0].mxu0 %v2438
  %v4664 = vpop.f32.mrb[0].mxu0
  %v4665 = vadd.f32 0.0, %v4664
  %v4666 = vpop.f32.mrb[0].mxu0
  %v4667 = vadd.f32 0.0, %v4666
  %v4668 = vpop.f32.mrb[0].mxu0
  %v4669 = vadd.f32 0.0, %v4668
  %v4670 = vpop.f32.mrb[0].mxu0
  %v4671 = vadd.f32 0.0, %v4670
  %4672 = vmatprep.mubr.bf16.mxu0 %v3473
  %4673 = vmatmul.mubr.bf16.gmra.mrb[0].mxu0 %v2440
  %v4674 = vpop.f32.mrb[0].mxu0
  %v4675 = vadd.f32 0.0, %v4674
  %v4676 = vpop.f32.mrb[0].mxu0
  %v4677 = vadd.f32 0.0, %v4676
  %v4678 = vpop.f32.mrb[0].mxu0
  %v4679 = vadd.f32 0.0, %v4678
  %v4680 = vpop.f32.mrb[0].mxu0
  %v4681 = vadd.f32 0.0, %v4680
  %4682 = vmatprep.mubr.bf16.mxu0 %v3476
  %4683 = vmatmul.mubr.bf16.gmra.mrb[0].mxu0 %v2442
  %v4684 = vpop.f32.mrb[0].mxu0
  %v4685 = vadd.f32 0.0, %v4684
  %v4686 = vpop.f32.mrb[0].mxu0
  %v4687 = vadd.f32 0.0, %v4686
  %v4688 = vpop.f32.mrb[0].mxu0
  %v4689 = vadd.f32 0.0, %v4688
  %v4690 = vpop.f32.mrb[0].mxu0
  %v4691 = vadd.f32 0.0, %v4690
  %4692 = vmatprep.mubr.bf16.mxu0 %v3479
  %4693 = vmatmul.mubr.bf16.gmra.mrb[0].mxu0 %v2444
  %v4694 = vpop.f32.mrb[0].mxu0
  %v4695 = vadd.f32 0.0, %v4694
  %v4696 = vpop.f32.mrb[0].mxu0
  %v4697 = vadd.f32 0.0, %v4696
  %v4698 = vpop.f32.mrb[0].mxu0
  %v4699 = vadd.f32 0.0, %v4698
  %v4700 = vpop.f32.mrb[0].mxu0
  %v4701 = vadd.f32 0.0, %v4700
  %4702 = vmatprep.mubr.bf16.mxu0 %v3482
  %4703 = vmatmul.mubr.bf16.gmra.mrb[0].mxu0 %v2446
  %v4704 = vpop.f32.mrb[0].mxu0
  %v4705 = vadd.f32 0.0, %v4704
  %v4706 = vpop.f32.mrb[0].mxu0
  %v4707 = vadd.f32 0.0, %v4706
  %v4708 = vpop.f32.mrb[0].mxu0
  %v4709 = vadd.f32 0.0, %v4708
  %v4710 = vpop.f32.mrb[0].mxu0
  %v4711 = vadd.f32 0.0, %v4710
  %4712 = vmatprep.mubr.bf16.mxu0 %v3485
  %4713 = vmatmul.mubr.bf16.gmra.mrb[0].mxu0 %v2448
  %v4714 = vpop.f32.mrb[0].mxu0
  %v4715 = vadd.f32 0.0, %v4714
  %v4716 = vpop.f32.mrb[0].mxu0
  %v4717 = vadd.f32 0.0, %v4716
  %v4718 = vpop.f32.mrb[0].mxu0
  %v4719 = vadd.f32 0.0, %v4718
  %v4720 = vpop.f32.mrb[0].mxu0
  %v4721 = vadd.f32 0.0, %v4720
  %4722 = vmatprep.mubr.bf16.mxu0 %v3488
  %4723 = vmatmul.mubr.bf16.gmra.mrb[0].mxu0 %v2450
  %v4724 = vpop.f32.mrb[0].mxu0
  %v4725 = vadd.f32 0.0, %v4724
  %v4726 = vpop.f32.mrb[0].mxu0
  %v4727 = vadd.f32 0.0, %v4726
  %v4728 = vpop.f32.mrb[0].mxu0
  %v4729 = vadd.f32 0.0, %v4728
  %v4730 = vpop.f32.mrb[0].mxu0
  %v4731 = vadd.f32 0.0, %v4730
  %4732 = vmatprep.mubr.bf16.mxu0 %v3491
  %4733 = vmatmul.mubr.bf16.gmra.mrb[0].mxu0 %v2452
  %v4734 = vpop.f32.mrb[0].mxu0
  %v4735 = vadd.f32 0.0, %v4734
  %v4736 = vpop.f32.mrb[0].mxu0
  %v4737 = vadd.f32 0.0, %v4736
  %v4738 = vpop.f32.mrb[0].mxu0
  %v4739 = vadd.f32 0.0, %v4738
  %v4740 = vpop.f32.mrb[0].mxu0
  %v4741 = vadd.f32 0.0, %v4740
  %4742 = vmatprep.mubr.bf16.mxu0 %v3494
  %4743 = vmatmul.mubr.bf16.gmra.mrb[0].mxu0 %v2454
  %v4744 = vpop.f32.mrb[0].mxu0
  %v4745 = vadd.f32 0.0, %v4744
  %v4746 = vpop.f32.mrb[0].mxu0
  %v4747 = vadd.f32 0.0, %v4746
  %v4748 = vpop.f32.mrb[0].mxu0
  %v4749 = vadd.f32 0.0, %v4748
  %v4750 = vpop.f32.mrb[0].mxu0
  %v4751 = vadd.f32 0.0, %v4750
  %4752 = vmatprep.mubr.bf16.mxu0 %v3497
  %4753 = vmatmul.mubr.bf16.gmra.mrb[0].mxu0 %v2456
  %v4754 = vpop.f32.mrb[0].mxu0
  %v4755 = vadd.f32 0.0, %v4754
  %v4756 = vpop.f32.mrb[0].mxu0
  %v4757 = vadd.f32 0.0, %v4756
  %v4758 = vpop.f32.mrb[0].mxu0
  %v4759 = vadd.f32 0.0, %v4758
  %v4760 = vpop.f32.mrb[0].mxu0
  %v4761 = vadd.f32 0.0, %v4760
  %4762 = vmatprep.mubr.bf16.mxu0 %v3500
  %4763 = vmatmul.mubr.bf16.gmra.mrb[0].mxu0 %v2458
  %v4764 = vpop.f32.mrb[0].mxu0
  %v4765 = vadd.f32 0.0, %v4764
  %v4766 = vpop.f32.mrb[0].mxu0
  %v4767 = vadd.f32 0.0, %v4766
  %v4768 = vpop.f32.mrb[0].mxu0
  %v4769 = vadd.f32 0.0, %v4768
  %v4770 = vpop.f32.mrb[0].mxu0
  %v4771 = vadd.f32 0.0, %v4770
  %4772 = vmatprep.mubr.bf16.mxu0 %v3503
  %4773 = vmatmul.mubr.bf16.gmra.mrb[0].mxu0 %v2460
  %v4774 = vpop.f32.mrb[0].mxu0
  %v4775 = vadd.f32 0.0, %v4774
  %v4776 = vpop.f32.mrb[0].mxu0
  %v4777 = vadd.f32 0.0, %v4776
  %v4778 = vpop.f32.mrb[0].mxu0
  %v4779 = vadd.f32 0.0, %v4778
  %v4780 = vpop.f32.mrb[0].mxu0
  %v4781 = vadd.f32 0.0, %v4780
  %4782 = vmatprep.mubr.bf16.mxu0 %v3506
  %4783 = vmatmul.mubr.bf16.gmra.mrb[0].mxu0 %v2462
  %v4784 = vpop.f32.mrb[0].mxu0
  %v4785 = vadd.f32 0.0, %v4784
  %v4786 = vpop.f32.mrb[0].mxu0
  %v4787 = vadd.f32 0.0, %v4786
  %v4788 = vpop.f32.mrb[0].mxu0
  %v4789 = vadd.f32 0.0, %v4788
  %v4790 = vpop.f32.mrb[0].mxu0
  %v4791 = vadd.f32 0.0, %v4790
  %4792 = vmatprep.mubr.bf16.mxu0 %v3509
  %4793 = vmatmul.mubr.bf16.gmra.mrb[0].mxu0 %v2464
  %v4794 = vpop.f32.mrb[0].mxu0
  %v4795 = vadd.f32 0.0, %v4794
  %v4796 = vpop.f32.mrb[0].mxu0
  %v4797 = vadd.f32 0.0, %v4796
  %v4798 = vpop.f32.mrb[0].mxu0
  %v4799 = vadd.f32 0.0, %v4798
  %v4800 = vpop.f32.mrb[0].mxu0
  %v4801 = vadd.f32 0.0, %v4800
  %4802 = vmatprep.mubr.bf16.mxu0 %v3512
  %4803 = vmatmul.mubr.bf16.gmra.mrb[0].mxu0 %v2466
  %v4804 = vpop.f32.mrb[0].mxu0
  %v4805 = vadd.f32 0.0, %v4804
  %v4806 = vpop.f32.mrb[0].mxu0
  %v4807 = vadd.f32 0.0, %v4806
  %v4808 = vpop.f32.mrb[0].mxu0
  %v4809 = vadd.f32 0.0, %v4808
  %v4810 = vpop.f32.mrb[0].mxu0
  %v4811 = vadd.f32 0.0, %v4810
  %4812 = vmatprep.mubr.bf16.mxu0 %v3515
  %4813 = vmatmul.mubr.bf16.gmra.mrb[0].mxu0 %v2468
  %v4814 = vpop.f32.mrb[0].mxu0
  %v4815 = vadd.f32 0.0, %v4814
  %v4816 = vpop.f32.mrb[0].mxu0
  %v4817 = vadd.f32 0.0, %v4816
  %v4818 = vpop.f32.mrb[0].mxu0
  %v4819 = vadd.f32 0.0, %v4818
  %v4820 = vpop.f32.mrb[0].mxu0
  %v4821 = vadd.f32 0.0, %v4820
  %4822 = vmatprep.mubr.bf16.mxu0 %v3518
  %4823 = vmatmul.mubr.bf16.gmra.mrb[0].mxu0 %v2470
  %v4824 = vpop.f32.mrb[0].mxu0
  %v4825 = vadd.f32 0.0, %v4824
  %v4826 = vpop.f32.mrb[0].mxu0
  %v4827 = vadd.f32 0.0, %v4826
  %v4828 = vpop.f32.mrb[0].mxu0
  %v4829 = vadd.f32 0.0, %v4828
  %v4830 = vpop.f32.mrb[0].mxu0
  %v4831 = vadd.f32 0.0, %v4830
  %4832 = vmatprep.mubr.bf16.mxu0 %v3521
  %4833 = vmatmul.mubr.bf16.gmra.mrb[0].mxu0 %v2472
  %v4834 = vpop.f32.mrb[0].mxu0
  %v4835 = vadd.f32 0.0, %v4834
  %v4836 = vpop.f32.mrb[0].mxu0
  %v4837 = vadd.f32 0.0, %v4836
  %v4838 = vpop.f32.mrb[0].mxu0
  %v4839 = vadd.f32 0.0, %v4838
  %v4840 = vpop.f32.mrb[0].mxu0
  %v4841 = vadd.f32 0.0, %v4840
  %4842 = vmatprep.mubr.bf16.mxu0 %v3524
  %4843 = vmatmul.mubr.bf16.gmra.mrb[0].mxu0 %v2474
  %v4844 = vpop.f32.mrb[0].mxu0
  %v4845 = vadd.f32 0.0, %v4844
  %v4846 = vpop.f32.mrb[0].mxu0
  %v4847 = vadd.f32 0.0, %v4846
  %v4848 = vpop.f32.mrb[0].mxu0
  %v4849 = vadd.f32 0.0, %v4848
  %v4850 = vpop.f32.mrb[0].mxu0
  %v4851 = vadd.f32 0.0, %v4850
  %4852 = vmatprep.mubr.bf16.mxu0 %v3527
  %4853 = vmatmul.mubr.bf16.gmra.mrb[0].mxu0 %v2476
  %v4854 = vpop.f32.mrb[0].mxu0
  %v4855 = vadd.f32 0.0, %v4854
  %v4856 = vpop.f32.mrb[0].mxu0
  %v4857 = vadd.f32 0.0, %v4856
  %v4858 = vpop.f32.mrb[0].mxu0
  %v4859 = vadd.f32 0.0, %v4858
  %v4860 = vpop.f32.mrb[0].mxu0
  %v4861 = vadd.f32 0.0, %v4860
  %4862 = vmatprep.mubr.bf16.mxu0 %v3530
  %4863 = vmatmul.mubr.bf16.gmra.mrb[0].mxu0 %v2478
  %v4864 = vpop.f32.mrb[0].mxu0
  %v4865 = vadd.f32 0.0, %v4864
  %v4866 = vpop.f32.mrb[0].mxu0
  %v4867 = vadd.f32 0.0, %v4866
  %v4868 = vpop.f32.mrb[0].mxu0
  %v4869 = vadd.f32 0.0, %v4868
  %v4870 = vpop.f32.mrb[0].mxu0
  %v4871 = vadd.f32 0.0, %v4870
  %4872 = vmatprep.mubr.bf16.mxu0 %v3533
  %4873 = vmatmul.mubr.bf16.gmra.mrb[0].mxu0 %v2480
  %v4874 = vpop.f32.mrb[0].mxu0
  %v4875 = vadd.f32 0.0, %v4874
  %v4876 = vpop.f32.mrb[0].mxu0
  %v4877 = vadd.f32 0.0, %v4876
  %v4878 = vpop.f32.mrb[0].mxu0
  %v4879 = vadd.f32 0.0, %v4878
  %v4880 = vpop.f32.mrb[0].mxu0
  %v4881 = vadd.f32 0.0, %v4880
  %4882 = vmatprep.mubr.bf16.mxu0 %v3536
  %4883 = vmatmul.mubr.bf16.gmra.mrb[0].mxu0 %v2482
  %v4884 = vpop.f32.mrb[0].mxu0
  %v4885 = vadd.f32 0.0, %v4884
  %v4886 = vpop.f32.mrb[0].mxu0
  %v4887 = vadd.f32 0.0, %v4886
  %v4888 = vpop.f32.mrb[0].mxu0
  %v4889 = vadd.f32 0.0, %v4888
  %v4890 = vpop.f32.mrb[0].mxu0
  %v4891 = vadd.f32 0.0, %v4890
  %4892 = vmatprep.mubr.bf16.mxu0 %v3539
  %4893 = vmatmul.mubr.bf16.gmra.mrb[0].mxu0 %v2484
  %v4894 = vpop.f32.mrb[0].mxu0
  %v4895 = vadd.f32 0.0, %v4894
  %v4896 = vpop.f32.mrb[0].mxu0
  %v4897 = vadd.f32 0.0, %v4896
  %v4898 = vpop.f32.mrb[0].mxu0
  %v4899 = vadd.f32 0.0, %v4898
  %v4900 = vpop.f32.mrb[0].mxu0
  %v4901 = vadd.f32 0.0, %v4900
  %4902 = vmatprep.mubr.bf16.mxu0 %v3542
  %4903 = vmatmul.mubr.bf16.gmra.mrb[0].mxu0 %v2486
  %v4904 = vpop.f32.mrb[0].mxu0
  %v4905 = vadd.f32 0.0, %v4904
  %v4906 = vpop.f32.mrb[0].mxu0
  %v4907 = vadd.f32 0.0, %v4906
  %v4908 = vpop.f32.mrb[0].mxu0
  %v4909 = vadd.f32 0.0, %v4908
  %v4910 = vpop.f32.mrb[0].mxu0
  %v4911 = vadd.f32 0.0, %v4910
  %4912 = vmatprep.mubr.bf16.mxu0 %v3545
  %4913 = vmatmul.mubr.bf16.gmra.mrb[0].mxu0 %v2488
  %v4914 = vpop.f32.mrb[0].mxu0
  %v4915 = vadd.f32 0.0, %v4914
  %v4916 = vpop.f32.mrb[0].mxu0
  %v4917 = vadd.f32 0.0, %v4916
  %v4918 = vpop.f32.mrb[0].mxu0
  %v4919 = vadd.f32 0.0, %v4918
  %v4920 = vpop.f32.mrb[0].mxu0
  %v4921 = vadd.f32 0.0, %v4920
  %4922 = vmatprep.mubr.bf16.mxu0 %v3548
  %4923 = vmatmul.mubr.bf16.gmra.mrb[0].mxu0 %v2490
  %v4924 = vpop.f32.mrb[0].mxu0
  %v4925 = vadd.f32 0.0, %v4924
  %v4926 = vpop.f32.mrb[0].mxu0
  %v4927 = vadd.f32 0.0, %v4926
  %v4928 = vpop.f32.mrb[0].mxu0
  %v4929 = vadd.f32 0.0, %v4928
  %v4930 = vpop.f32.mrb[0].mxu0
  %v4931 = vadd.f32 0.0, %v4930
  %4932 = vmatprep.mubr.bf16.mxu0 %v3551
  %4933 = vmatmul.mubr.bf16.gmra.mrb[0].mxu0 %v2492
  %v4934 = vpop.f32.mrb[0].mxu0
  %v4935 = vadd.f32 0.0, %v4934
  %v4936 = vpop.f32.mrb[0].mxu0
  %v4937 = vadd.f32 0.0, %v4936
  %v4938 = vpop.f32.mrb[0].mxu0
  %v4939 = vadd.f32 0.0, %v4938
  %v4940 = vpop.f32.mrb[0].mxu0
  %v4941 = vadd.f32 0.0, %v4940
  %4942 = vmatprep.mubr.bf16.mxu0 %v3554
  %4943 = vmatmul.mubr.bf16.gmra.mrb[0].mxu0 %v2494
  %v4944 = vpop.f32.mrb[0].mxu0
  %v4945 = vadd.f32 0.0, %v4944
  %v4946 = vpop.f32.mrb[0].mxu0
  %v4947 = vadd.f32 0.0, %v4946
  %v4948 = vpop.f32.mrb[0].mxu0
  %v4949 = vadd.f32 0.0, %v4948
  %v4950 = vpop.f32.mrb[0].mxu0
  %v4951 = vadd.f32 0.0, %v4950
  %4952 = vmatprep.mubr.bf16.mxu0 %v3557
  %4953 = vmatmul.mubr.bf16.gmra.mrb[0].mxu0 %v2496
  %v4954 = vpop.f32.mrb[0].mxu0
  %v4955 = vadd.f32 0.0, %v4954
  %v4956 = vpop.f32.mrb[0].mxu0
  %v4957 = vadd.f32 0.0, %v4956
  %v4958 = vpop.f32.mrb[0].mxu0
  %v4959 = vadd.f32 0.0, %v4958
  %v4960 = vpop.f32.mrb[0].mxu0
  %v4961 = vadd.f32 0.0, %v4960
  %4962 = vmatprep.mubr.bf16.mxu0 %v3560
  %4963 = vmatmul.mubr.bf16.gmra.mrb[0].mxu0 %v2498
  %v4964 = vpop.f32.mrb[0].mxu0
  %v4965 = vadd.f32 0.0, %v4964
  %v4966 = vpop.f32.mrb[0].mxu0
  %v4967 = vadd.f32 0.0, %v4966
  %v4968 = vpop.f32.mrb[0].mxu0
  %v4969 = vadd.f32 0.0, %v4968
  %v4970 = vpop.f32.mrb[0].mxu0
  %v4971 = vadd.f32 0.0, %v4970
  %4972 = vmatprep.mubr.bf16.mxu0 %v3563
  %4973 = vmatmul.mubr.bf16.gmra.mrb[0].mxu0 %v2500
  %v4974 = vpop.f32.mrb[0].mxu0
  %v4975 = vadd.f32 0.0, %v4974
  %v4976 = vpop.f32.mrb[0].mxu0
  %v4977 = vadd.f32 0.0, %v4976
  %v4978 = vpop.f32.mrb[0].mxu0
  %v4979 = vadd.f32 0.0, %v4978
  %v4980 = vpop.f32.mrb[0].mxu0
  %v4981 = vadd.f32 0.0, %v4980
  %4982 = vmatprep.mubr.bf16.mxu0 %v3566
  %4983 = vmatmul.mubr.bf16.gmra.mrb[0].mxu0 %v2502
  %v4984 = vpop.f32.mrb[0].mxu0
  %v4985 = vadd.f32 0.0, %v4984
  %v4986 = vpop.f32.mrb[0].mxu0
  %v4987 = vadd.f32 0.0, %v4986
  %v4988 = vpop.f32.mrb[0].mxu0
  %v4989 = vadd.f32 0.0, %v4988
  %v4990 = vpop.f32.mrb[0].mxu0
  %v4991 = vadd.f32 0.0, %v4990
  %4992 = vmatprep.mubr.bf16.mxu0 %v3569
  %4993 = vmatmul.mubr.bf16.gmra.mrb[0].mxu0 %v2504
  %v4994 = vpop.f32.mrb[0].mxu0
  %v4995 = vadd.f32 0.0, %v4994
  %v4996 = vpop.f32.mrb[0].mxu0
  %v4997 = vadd.f32 0.0, %v4996
  %v4998 = vpop.f32.mrb[0].mxu0
  %v4999 = vadd.f32 0.0, %v4998
  %v5000 = vpop.f32.mrb[0].mxu0
  %v5001 = vadd.f32 0.0, %v5000
  %5002 = vmatprep.mubr.bf16.mxu0 %v3572
  %5003 = vmatmul.mubr.bf16.gmra.mrb[0].mxu0 %v2506
  %v5004 = vpop.f32.mrb[0].mxu0
  %v5005 = vadd.f32 0.0, %v5004
  %v5006 = vpop.f32.mrb[0].mxu0
  %v5007 = vadd.f32 0.0, %v5006
  %v5008 = vpop.f32.mrb[0].mxu0
  %v5009 = vadd.f32 0.0, %v5008
  %v5010 = vpop.f32.mrb[0].mxu0
  %v5011 = vadd.f32 0.0, %v5010
  %5012 = vmatprep.mubr.bf16.mxu0 %v3575
  %5013 = vmatmul.mubr.bf16.gmra.mrb[0].mxu0 %v2508
  %v5014 = vpop.f32.mrb[0].mxu0
  %v5015 = vadd.f32 0.0, %v5014
  %v5016 = vpop.f32.mrb[0].mxu0
  %v5017 = vadd.f32 0.0, %v5016
  %v5018 = vpop.f32.mrb[0].mxu0
  %v5019 = vadd.f32 0.0, %v5018
  %v5020 = vpop.f32.mrb[0].mxu0
  %v5021 = vadd.f32 0.0, %v5020
  %5022 = vmatprep.mubr.bf16.mxu0 %v3578
  %5023 = vmatmul.mubr.bf16.gmra.mrb[0].mxu0 %v2510
  %v5024 = vpop.f32.mrb[0].mxu0
  %v5025 = vadd.f32 0.0, %v5024
  %v5026 = vpop.f32.mrb[0].mxu0
  %v5027 = vadd.f32 0.0, %v5026
  %v5028 = vpop.f32.mrb[0].mxu0
  %v5029 = vadd.f32 0.0, %v5028
  %v5030 = vpop.f32.mrb[0].mxu0
  %v5031 = vadd.f32 0.0, %v5030
  %5032 = vmatprep.mubr.bf16.mxu0 %v3581
  %5033 = vmatmul.mubr.bf16.gmra.mrb[0].mxu0 %v2512
  %v5034 = vpop.f32.mrb[0].mxu0
  %v5035 = vadd.f32 0.0, %v5034
  %v5036 = vpop.f32.mrb[0].mxu0
  %v5037 = vadd.f32 0.0, %v5036
  %v5038 = vpop.f32.mrb[0].mxu0
  %v5039 = vadd.f32 0.0, %v5038
  %v5040 = vpop.f32.mrb[0].mxu0
  %v5041 = vadd.f32 0.0, %v5040
  %5042 = vmatprep.mubr.bf16.mxu0 %v3584
  %5043 = vmatmul.mubr.bf16.gmra.mrb[0].mxu0 %v2514
  %v5044 = vpop.f32.mrb[0].mxu0
  %v5045 = vadd.f32 0.0, %v5044
  %v5046 = vpop.f32.mrb[0].mxu0
  %v5047 = vadd.f32 0.0, %v5046
  %v5048 = vpop.f32.mrb[0].mxu0
  %v5049 = vadd.f32 0.0, %v5048
  %v5050 = vpop.f32.mrb[0].mxu0
  %v5051 = vadd.f32 0.0, %v5050
  %5052 = vmatprep.mubr.bf16.mxu0 %v3587
  %5053 = vmatmul.mubr.bf16.gmra.mrb[0].mxu0 %v2516
  %v5054 = vpop.f32.mrb[0].mxu0
  %v5055 = vadd.f32 0.0, %v5054
  %v5056 = vpop.f32.mrb[0].mxu0
  %v5057 = vadd.f32 0.0, %v5056
  %v5058 = vpop.f32.mrb[0].mxu0
  %v5059 = vadd.f32 0.0, %v5058
  %v5060 = vpop.f32.mrb[0].mxu0
  %v5061 = vadd.f32 0.0, %v5060
  %5062 = vmatprep.mubr.bf16.mxu0 %v3590
  %5063 = vmatmul.mubr.bf16.gmra.mrb[0].mxu0 %v2518
  %v5064 = vpop.f32.mrb[0].mxu0
  %v5065 = vadd.f32 0.0, %v5064
  %v5066 = vpop.f32.mrb[0].mxu0
  %v5067 = vadd.f32 0.0, %v5066
  %v5068 = vpop.f32.mrb[0].mxu0
  %v5069 = vadd.f32 0.0, %v5068
  %v5070 = vpop.f32.mrb[0].mxu0
  %v5071 = vadd.f32 0.0, %v5070
  %5072 = vmatprep.mubr.bf16.mxu0 %v3593
  %5073 = vmatmul.mubr.bf16.gmra.mrb[0].mxu0 %v2520
  %v5074 = vpop.f32.mrb[0].mxu0
  %v5075 = vadd.f32 0.0, %v5074
  %v5076 = vpop.f32.mrb[0].mxu0
  %v5077 = vadd.f32 0.0, %v5076
  %v5078 = vpop.f32.mrb[0].mxu0
  %v5079 = vadd.f32 0.0, %v5078
  %v5080 = vpop.f32.mrb[0].mxu0
  %v5081 = vadd.f32 0.0, %v5080
  %5082 = vmatprep.mubr.bf16.mxu0 %v3596
  %5083 = vmatmul.mubr.bf16.gmra.mrb[0].mxu0 %v2522
  %v5084 = vpop.f32.mrb[0].mxu0
  %v5085 = vadd.f32 0.0, %v5084
  %v5086 = vpop.f32.mrb[0].mxu0
  %v5087 = vadd.f32 0.0, %v5086
  %v5088 = vpop.f32.mrb[0].mxu0
  %v5089 = vadd.f32 0.0, %v5088
  %v5090 = vpop.f32.mrb[0].mxu0
  %v5091 = vadd.f32 0.0, %v5090
  %5092 = vmatprep.mubr.bf16.mxu0 %v3599
  %5093 = vmatmul.mubr.bf16.gmra.mrb[0].mxu0 %v2524
  %v5094 = vpop.f32.mrb[0].mxu0
  %v5095 = vadd.f32 0.0, %v5094
  %v5096 = vpop.f32.mrb[0].mxu0
  %v5097 = vadd.f32 0.0, %v5096
  %v5098 = vpop.f32.mrb[0].mxu0
  %v5099 = vadd.f32 0.0, %v5098
  %v5100 = vpop.f32.mrb[0].mxu0
  %v5101 = vadd.f32 0.0, %v5100
  %5102 = vmatprep.mubr.bf16.mxu0 %v3602
  %5103 = vmatmul.mubr.bf16.gmra.mrb[0].mxu0 %v2526
  %v5104 = vpop.f32.mrb[0].mxu0
  %v5105 = vadd.f32 0.0, %v5104
  %v5106 = vpop.f32.mrb[0].mxu0
  %v5107 = vadd.f32 0.0, %v5106
  %v5108 = vpop.f32.mrb[0].mxu0
  %v5109 = vadd.f32 0.0, %v5108
  %v5110 = vpop.f32.mrb[0].mxu0
  %v5111 = vadd.f32 0.0, %v5110
  %5112 = vmatprep.mubr.bf16.mxu0 %v3605
  %5113 = vmatmul.mubr.bf16.gmra.mrb[0].mxu0 %v2528
  %v5114 = vpop.f32.mrb[0].mxu0
  %v5115 = vadd.f32 0.0, %v5114
  %v5116 = vpop.f32.mrb[0].mxu0
  %v5117 = vadd.f32 0.0, %v5116
  %v5118 = vpop.f32.mrb[0].mxu0
  %v5119 = vadd.f32 0.0, %v5118
  %v5120 = vpop.f32.mrb[0].mxu0
  %v5121 = vadd.f32 0.0, %v5120
  %5122 = vmatprep.mubr.bf16.mxu0 %v3608
  %5123 = vmatmul.mubr.bf16.gmra.mrb[0].mxu0 %v2530
  %v5124 = vpop.f32.mrb[0].mxu0
  %v5125 = vadd.f32 0.0, %v5124
  %v5126 = vpop.f32.mrb[0].mxu0
  %v5127 = vadd.f32 0.0, %v5126
  %v5128 = vpop.f32.mrb[0].mxu0
  %v5129 = vadd.f32 0.0, %v5128
  %v5130 = vpop.f32.mrb[0].mxu0
  %v5131 = vadd.f32 0.0, %v5130
  %5132 = vmatprep.mubr.bf16.mxu0 %v3611
  %5133 = vmatmul.mubr.bf16.gmra.mrb[0].mxu0 %v2532
  %v5134 = vpop.f32.mrb[0].mxu0
  %v5135 = vadd.f32 0.0, %v5134
  %v5136 = vpop.f32.mrb[0].mxu0
  %v5137 = vadd.f32 0.0, %v5136
  %v5138 = vpop.f32.mrb[0].mxu0
  %v5139 = vadd.f32 0.0, %v5138
  %v5140 = vpop.f32.mrb[0].mxu0
  %v5141 = vadd.f32 0.0, %v5140
  %5142 = vmatprep.mubr.bf16.mxu0 %v3614
  %5143 = vmatmul.mubr.bf16.gmra.mrb[0].mxu0 %v2534
  %v5144 = vpop.f32.mrb[0].mxu0
  %v5145 = vadd.f32 0.0, %v5144
  %v5146 = vpop.f32.mrb[0].mxu0
  %v5147 = vadd.f32 0.0, %v5146
  %v5148 = vpop.f32.mrb[0].mxu0
  %v5149 = vadd.f32 0.0, %v5148
  %v5150 = vpop.f32.mrb[0].mxu0
  %v5151 = vadd.f32 0.0, %v5150
  %5152 = vmatprep.mubr.bf16.mxu0 %v3617
  %5153 = vmatmul.mubr.bf16.gmra.mrb[0].mxu0 %v2536
  %v5154 = vpop.f32.mrb[0].mxu0
  %v5155 = vadd.f32 0.0, %v5154
  %v5156 = vpop.f32.mrb[0].mxu0
  %v5157 = vadd.f32 0.0, %v5156
  %v5158 = vpop.f32.mrb[0].mxu0
  %v5159 = vadd.f32 0.0, %v5158
  %v5160 = vpop.f32.mrb[0].mxu0
  %v5161 = vadd.f32 0.0, %v5160
  %5162 = vmatprep.mubr.bf16.mxu0 %v3620
  %5163 = vmatmul.mubr.bf16.gmra.mrb[0].mxu0 %v2538
  %v5164 = vpop.f32.mrb[0].mxu0
  %v5165 = vadd.f32 0.0, %v5164
  %v5166 = vpop.f32.mrb[0].mxu0
  %v5167 = vadd.f32 0.0, %v5166
  %v5168 = vpop.f32.mrb[0].mxu0
  %v5169 = vadd.f32 0.0, %v5168
  %v5170 = vpop.f32.mrb[0].mxu0
  %v5171 = vadd.f32 0.0, %v5170
  %5172 = vmatprep.mubr.bf16.mxu0 %v3623
  %5173 = vmatmul.mubr.bf16.gmra.mrb[0].mxu0 %v2540
  %v5174 = vpop.f32.mrb[0].mxu0
  %v5175 = vadd.f32 0.0, %v5174
  %v5176 = vpop.f32.mrb[0].mxu0
  %v5177 = vadd.f32 0.0, %v5176
  %v5178 = vpop.f32.mrb[0].mxu0
  %v5179 = vadd.f32 0.0, %v5178
  %v5180 = vpop.f32.mrb[0].mxu0
  %v5181 = vadd.f32 0.0, %v5180
  %5182 = vmatprep.mubr.bf16.mxu0 %v3626
  %5183 = vmatmul.mubr.bf16.gmra.mrb[0].mxu0 %v2542
  %v5184 = vpop.f32.mrb[0].mxu0
  %v5185 = vadd.f32 0.0, %v5184
  %v5186 = vpop.f32.mrb[0].mxu0
  %v5187 = vadd.f32 0.0, %v5186
  %v5188 = vpop.f32.mrb[0].mxu0
  %v5189 = vadd.f32 0.0, %v5188
  %v5190 = vpop.f32.mrb[0].mxu0
  %v5191 = vadd.f32 0.0, %v5190
  %5192 = vmatprep.mubr.bf16.mxu0 %v3629
  %5193 = vmatmul.mubr.bf16.gmra.mrb[0].mxu0 %v2544
  %v5194 = vpop.f32.mrb[0].mxu0
  %v5195 = vadd.f32 0.0, %v5194
  %v5196 = vpop.f32.mrb[0].mxu0
  %v5197 = vadd.f32 0.0, %v5196
  %v5198 = vpop.f32.mrb[0].mxu0
  %v5199 = vadd.f32 0.0, %v5198
  %v5200 = vpop.f32.mrb[0].mxu0
  %v5201 = vadd.f32 0.0, %v5200
  %5202 = vmatprep.mubr.bf16.mxu0 %v3632
  %5203 = vmatmul.mubr.bf16.gmra.mrb[0].mxu0 %v2546
  %v5204 = vpop.f32.mrb[0].mxu0
  %v5205 = vadd.f32 0.0, %v5204
  %v5206 = vpop.f32.mrb[0].mxu0
  %v5207 = vadd.f32 0.0, %v5206
  %v5208 = vpop.f32.mrb[0].mxu0
  %v5209 = vadd.f32 0.0, %v5208
  %v5210 = vpop.f32.mrb[0].mxu0
  %v5211 = vadd.f32 0.0, %v5210
  %5212 = vmatprep.mubr.bf16.mxu0 %v3635
  %5213 = vmatmul.mubr.bf16.gmra.mrb[0].mxu0 %v2548
  %v5214 = vpop.f32.mrb[0].mxu0
  %v5215 = vadd.f32 0.0, %v5214
  %v5216 = vpop.f32.mrb[0].mxu0
  %v5217 = vadd.f32 0.0, %v5216
  %v5218 = vpop.f32.mrb[0].mxu0
  %v5219 = vadd.f32 0.0, %v5218
  %v5220 = vpop.f32.mrb[0].mxu0
  %v5221 = vadd.f32 0.0, %v5220
  %5222 = vmatprep.mubr.bf16.mxu0 %v3638
  %5223 = vmatmul.mubr.bf16.gmra.mrb[0].mxu0 %v2550
  %v5224 = vpop.f32.mrb[0].mxu0
  %v5225 = vadd.f32 0.0, %v5224
  %v5226 = vpop.f32.mrb[0].mxu0
  %v5227 = vadd.f32 0.0, %v5226
  %v5228 = vpop.f32.mrb[0].mxu0
  %v5229 = vadd.f32 0.0, %v5228
  %v5230 = vpop.f32.mrb[0].mxu0
  %v5231 = vadd.f32 0.0, %v5230
  %5232 = vmatprep.mubr.bf16.mxu0 %v3641
  %5233 = vmatmul.mubr.bf16.gmra.mrb[0].mxu0 %v2552
  %v5234 = vpop.f32.mrb[0].mxu0
  %v5235 = vadd.f32 0.0, %v5234
  %v5236 = vpop.f32.mrb[0].mxu0
  %v5237 = vadd.f32 0.0, %v5236
  %v5238 = vpop.f32.mrb[0].mxu0
  %v5239 = vadd.f32 0.0, %v5238
  %v5240 = vpop.f32.mrb[0].mxu0
  %v5241 = vadd.f32 0.0, %v5240
  %5242 = vmatprep.mubr.bf16.mxu0 %v3644
  %5243 = vmatmul.mubr.bf16.gmra.mrb[0].mxu0 %v2554
  %v5244 = vpop.f32.mrb[0].mxu0
  %v5245 = vadd.f32 0.0, %v5244
  %v5246 = vpop.f32.mrb[0].mxu0
  %v5247 = vadd.f32 0.0, %v5246
  %v5248 = vpop.f32.mrb[0].mxu0
  %v5249 = vadd.f32 0.0, %v5248
  %v5250 = vpop.f32.mrb[0].mxu0
  %v5251 = vadd.f32 0.0, %v5250
  %5252 = vmatprep.mubr.bf16.mxu0 %v3647
  %5253 = vmatmul.mubr.bf16.gmra.mrb[0].mxu0 %v2556
  %v5254 = vpop.f32.mrb[0].mxu0
  %v5255 = vadd.f32 0.0, %v5254
  %v5256 = vpop.f32.mrb[0].mxu0
  %v5257 = vadd.f32 0.0, %v5256
  %v5258 = vpop.f32.mrb[0].mxu0
  %v5259 = vadd.f32 0.0, %v5258
  %v5260 = vpop.f32.mrb[0].mxu0
  %v5261 = vadd.f32 0.0, %v5260
  %5262 = vmatprep.mubr.bf16.mxu0 %v3650
  %5263 = vmatmul.mubr.bf16.gmra.mrb[0].mxu0 %v2558
  %v5264 = vpop.f32.mrb[0].mxu0
  %v5265 = vadd.f32 0.0, %v5264
  %v5266 = vpop.f32.mrb[0].mxu0
  %v5267 = vadd.f32 0.0, %v5266
  %v5268 = vpop.f32.mrb[0].mxu0
  %v5269 = vadd.f32 0.0, %v5268
  %v5270 = vpop.f32.mrb[0].mxu0
  %v5271 = vadd.f32 0.0, %v5270
  %5272 = vmatprep.mubr.bf16.mxu0 %v3653
  %5273 = vmatmul.mubr.bf16.gmra.mrb[0].mxu0 %v2560
  %v5274 = vpop.f32.mrb[0].mxu0
  %v5275 = vadd.f32 0.0, %v5274
  %v5276 = vpop.f32.mrb[0].mxu0
  %v5277 = vadd.f32 0.0, %v5276
  %v5278 = vpop.f32.mrb[0].mxu0
  %v5279 = vadd.f32 0.0, %v5278
  %v5280 = vpop.f32.mrb[0].mxu0
  %v5281 = vadd.f32 0.0, %v5280
  %5282 = vmatprep.mubr.bf16.mxu0 %v3656
  %5283 = vmatmul.mubr.bf16.gmra.mrb[0].mxu0 %v2562
  %v5284 = vpop.f32.mrb[0].mxu0
  %v5285 = vadd.f32 0.0, %v5284
  %v5286 = vpop.f32.mrb[0].mxu0
  %v5287 = vadd.f32 0.0, %v5286
  %v5288 = vpop.f32.mrb[0].mxu0
  %v5289 = vadd.f32 0.0, %v5288
  %v5290 = vpop.f32.mrb[0].mxu0
  %v5291 = vadd.f32 0.0, %v5290
  %5292 = vmatprep.mubr.bf16.mxu0 %v3659
  %5293 = vmatmul.mubr.bf16.gmra.mrb[0].mxu0 %v2564
  %v5294 = vpop.f32.mrb[0].mxu0
  %v5295 = vadd.f32 0.0, %v5294
  %v5296 = vpop.f32.mrb[0].mxu0
  %v5297 = vadd.f32 0.0, %v5296
  %v5298 = vpop.f32.mrb[0].mxu0
  %v5299 = vadd.f32 0.0, %v5298
  %v5300 = vpop.f32.mrb[0].mxu0
  %v5301 = vadd.f32 0.0, %v5300
  %5302 = vmatprep.mubr.bf16.mxu0 %v3662
  %5303 = vmatmul.mubr.bf16.gmra.mrb[0].mxu0 %v2566
  %v5304 = vpop.f32.mrb[0].mxu0
  %v5305 = vadd.f32 0.0, %v5304
  %v5306 = vpop.f32.mrb[0].mxu0
  %v5307 = vadd.f32 0.0, %v5306
  %v5308 = vpop.f32.mrb[0].mxu0
  %v5309 = vadd.f32 0.0, %v5308
  %v5310 = vpop.f32.mrb[0].mxu0
  %v5311 = vadd.f32 0.0, %v5310
  %5312 = vmatprep.mubr.bf16.mxu0 %v3665
  %5313 = vmatmul.mubr.bf16.gmra.mrb[0].mxu0 %v2568
  %v5314 = vpop.f32.mrb[0].mxu0
  %v5315 = vadd.f32 0.0, %v5314
  %v5316 = vpop.f32.mrb[0].mxu0
  %v5317 = vadd.f32 0.0, %v5316
  %v5318 = vpop.f32.mrb[0].mxu0
  %v5319 = vadd.f32 0.0, %v5318
  %v5320 = vpop.f32.mrb[0].mxu0
  %v5321 = vadd.f32 0.0, %v5320
  %5322 = vmatprep.mubr.bf16.mxu0 %v3668
  %5323 = vmatmul.mubr.bf16.gmra.mrb[0].mxu0 %v2570
  %v5324 = vpop.f32.mrb[0].mxu0
  %v5325 = vadd.f32 0.0, %v5324
  %v5326 = vpop.f32.mrb[0].mxu0
  %v5327 = vadd.f32 0.0, %v5326
  %v5328 = vpop.f32.mrb[0].mxu0
  %v5329 = vadd.f32 0.0, %v5328
  %v5330 = vpop.f32.mrb[0].mxu0
  %v5331 = vadd.f32 0.0, %v5330
  %5332 = vmatprep.mubr.bf16.mxu0 %v3671
  %5333 = vmatmul.mubr.bf16.gmra.mrb[0].mxu0 %v2572
  %v5334 = vpop.f32.mrb[0].mxu0
  %v5335 = vadd.f32 0.0, %v5334
  %v5336 = vpop.f32.mrb[0].mxu0
  %v5337 = vadd.f32 0.0, %v5336
  %v5338 = vpop.f32.mrb[0].mxu0
  %v5339 = vadd.f32 0.0, %v5338
  %v5340 = vpop.f32.mrb[0].mxu0
  %v5341 = vadd.f32 0.0, %v5340
  %5342 = vmatprep.mubr.bf16.mxu0 %v3674
  %5343 = vmatmul.mubr.bf16.gmra.mrb[0].mxu0 %v2574
  %v5344 = vpop.f32.mrb[0].mxu0
  %v5345 = vadd.f32 0.0, %v5344
  %v5346 = vpop.f32.mrb[0].mxu0
  %v5347 = vadd.f32 0.0, %v5346
  %v5348 = vpop.f32.mrb[0].mxu0
  %v5349 = vadd.f32 0.0, %v5348
  %v5350 = vpop.f32.mrb[0].mxu0
  %v5351 = vadd.f32 0.0, %v5350
  %5352 = vmatprep.mubr.bf16.mxu0 %v3677
  %5353 = vmatmul.mubr.bf16.gmra.mrb[0].mxu0 %v2576
  %v5354 = vpop.f32.mrb[0].mxu0
  %v5355 = vadd.f32 0.0, %v5354
  %v5356 = vpop.f32.mrb[0].mxu0
  %v5357 = vadd.f32 0.0, %v5356
  %v5358 = vpop.f32.mrb[0].mxu0
  %v5359 = vadd.f32 0.0, %v5358
  %v5360 = vpop.f32.mrb[0].mxu0
  %v5361 = vadd.f32 0.0, %v5360
  %5362 = vmatprep.mubr.bf16.mxu0 %v3680
  %5363 = vmatmul.mubr.bf16.gmra.mrb[0].mxu0 %v2578
  %v5364 = vpop.f32.mrb[0].mxu0
  %v5365 = vadd.f32 0.0, %v5364
  %v5366 = vpop.f32.mrb[0].mxu0
  %v5367 = vadd.f32 0.0, %v5366
  %v5368 = vpop.f32.mrb[0].mxu0
  %v5369 = vadd.f32 0.0, %v5368
  %v5370 = vpop.f32.mrb[0].mxu0
  %v5371 = vadd.f32 0.0, %v5370
  %5372 = vmatprep.mubr.bf16.mxu0 %v3683
  %5373 = vmatmul.mubr.bf16.gmra.mrb[0].mxu0 %v2580
  %v5374 = vpop.f32.mrb[0].mxu0
  %v5375 = vadd.f32 0.0, %v5374
  %v5376 = vpop.f32.mrb[0].mxu0
  %v5377 = vadd.f32 0.0, %v5376
  %v5378 = vpop.f32.mrb[0].mxu0
  %v5379 = vadd.f32 0.0, %v5378
  %v5380 = vpop.f32.mrb[0].mxu0
  %v5381 = vadd.f32 0.0, %v5380
  %5382 = vmatprep.mubr.bf16.mxu0 %v3686
  %5383 = vmatmul.mubr.bf16.gmra.mrb[0].mxu0 %v2582
  %v5384 = vpop.f32.mrb[0].mxu0
  %v5385 = vadd.f32 0.0, %v5384
  %v5386 = vpop.f32.mrb[0].mxu0
  %v5387 = vadd.f32 0.0, %v5386
  %v5388 = vpop.f32.mrb[0].mxu0
  %v5389 = vadd.f32 0.0, %v5388
  %v5390 = vpop.f32.mrb[0].mxu0
  %v5391 = vadd.f32 0.0, %v5390
  %5392 = vmatprep.mubr.bf16.mxu0 %v3689
  %5393 = vmatmul.mubr.bf16.gmra.mrb[0].mxu0 %v2584
  %v5394 = vpop.f32.mrb[0].mxu0
  %v5395 = vadd.f32 0.0, %v5394
  %v5396 = vpop.f32.mrb[0].mxu0
  %v5397 = vadd.f32 0.0, %v5396
  %v5398 = vpop.f32.mrb[0].mxu0
  %v5399 = vadd.f32 0.0, %v5398
  %v5400 = vpop.f32.mrb[0].mxu0
  %v5401 = vadd.f32 0.0, %v5400
  %5402 = vmatprep.mubr.bf16.mxu0 %v3692
  %5403 = vmatmul.mubr.bf16.gmra.mrb[0].mxu0 %v2586
  %v5404 = vpop.f32.mrb[0].mxu0
  %v5405 = vadd.f32 0.0, %v5404
  %v5406 = vpop.f32.mrb[0].mxu0
  %v5407 = vadd.f32 0.0, %v5406
  %v5408 = vpop.f32.mrb[0].mxu0
  %v5409 = vadd.f32 0.0, %v5408
  %v5410 = vpop.f32.mrb[0].mxu0
  %v5411 = vadd.f32 0.0, %v5410
  %5412 = vmatprep.mubr.bf16.mxu0 %v3695
  %5413 = vmatmul.mubr.bf16.gmra.mrb[0].mxu0 %v2588
  %v5414 = vpop.f32.mrb[0].mxu0
  %v5415 = vadd.f32 0.0, %v5414
  %v5416 = vpop.f32.mrb[0].mxu0
  %v5417 = vadd.f32 0.0, %v5416
  %v5418 = vpop.f32.mrb[0].mxu0
  %v5419 = vadd.f32 0.0, %v5418
  %v5420 = vpop.f32.mrb[0].mxu0
  %v5421 = vadd.f32 0.0, %v5420
  %5422 = vmatprep.mubr.bf16.mxu0 %v3698
  %5423 = vmatmul.mubr.bf16.gmra.mrb[0].mxu0 %v2590
  %v5424 = vpop.f32.mrb[0].mxu0
  %v5425 = vadd.f32 0.0, %v5424
  %v5426 = vpop.f32.mrb[0].mxu0
  %v5427 = vadd.f32 0.0, %v5426
  %v5428 = vpop.f32.mrb[0].mxu0
  %v5429 = vadd.f32 0.0, %v5428
  %v5430 = vpop.f32.mrb[0].mxu0
  %v5431 = vadd.f32 0.0, %v5430
  %5432 = vmatprep.mubr.bf16.mxu0 %v3701
  %5433 = vmatmul.mubr.bf16.gmra.mrb[0].mxu0 %v2592
  %v5434 = vpop.f32.mrb[0].mxu0
  %v5435 = vadd.f32 0.0, %v5434
  %v5436 = vpop.f32.mrb[0].mxu0
  %v5437 = vadd.f32 0.0, %v5436
  %v5438 = vpop.f32.mrb[0].mxu0
  %v5439 = vadd.f32 0.0, %v5438
  %v5440 = vpop.f32.mrb[0].mxu0
  %v5441 = vadd.f32 0.0, %v5440
  %5442 = vmatprep.mubr.bf16.mxu0 %v3704
  %5443 = vmatmul.mubr.bf16.gmra.mrb[0].mxu0 %v2594
  %v5444 = vpop.f32.mrb[0].mxu0
  %v5445 = vadd.f32 0.0, %v5444
  %v5446 = vpop.f32.mrb[0].mxu0
  %v5447 = vadd.f32 0.0, %v5446
  %v5448 = vpop.f32.mrb[0].mxu0
  %v5449 = vadd.f32 0.0, %v5448
  %v5450 = vpop.f32.mrb[0].mxu0
  %v5451 = vadd.f32 0.0, %v5450
  %5452 = vmatprep.mubr.bf16.mxu0 %v3707
  %5453 = vmatmul.mubr.bf16.gmra.mrb[0].mxu0 %v2596
  %v5454 = vpop.f32.mrb[0].mxu0
  %v5455 = vadd.f32 0.0, %v5454
  %v5456 = vpop.f32.mrb[0].mxu0
  %v5457 = vadd.f32 0.0, %v5456
  %v5458 = vpop.f32.mrb[0].mxu0
  %v5459 = vadd.f32 0.0, %v5458
  %v5460 = vpop.f32.mrb[0].mxu0
  %v5461 = vadd.f32 0.0, %v5460
  %5462 = vmatprep.mubr.bf16.mxu0 %v3710
  %5463 = vmatmul.mubr.bf16.gmra.mrb[0].mxu0 %v2598
  %v5464 = vpop.f32.mrb[0].mxu0
  %v5465 = vadd.f32 0.0, %v5464
  %v5466 = vpop.f32.mrb[0].mxu0
  %v5467 = vadd.f32 0.0, %v5466
  %v5468 = vpop.f32.mrb[0].mxu0
  %v5469 = vadd.f32 0.0, %v5468
  %v5470 = vpop.f32.mrb[0].mxu0
  %v5471 = vadd.f32 0.0, %v5470
  %5472 = vmatprep.mubr.bf16.mxu0 %v3713
  %5473 = vmatmul.mubr.bf16.gmra.mrb[0].mxu0 %v2600
  %v5474 = vpop.f32.mrb[0].mxu0
  %v5475 = vadd.f32 0.0, %v5474
  %v5476 = vpop.f32.mrb[0].mxu0
  %v5477 = vadd.f32 0.0, %v5476
  %v5478 = vpop.f32.mrb[0].mxu0
  %v5479 = vadd.f32 0.0, %v5478
  %v5480 = vpop.f32.mrb[0].mxu0
  %v5481 = vadd.f32 0.0, %v5480
  %5482 = vmatprep.mubr.bf16.mxu0 %v3716
  %5483 = vmatmul.mubr.bf16.gmra.mrb[0].mxu0 %v2602
  %v5484 = vpop.f32.mrb[0].mxu0
  %v5485 = vadd.f32 0.0, %v5484
  %v5486 = vpop.f32.mrb[0].mxu0
  %v5487 = vadd.f32 0.0, %v5486
  %v5488 = vpop.f32.mrb[0].mxu0
  %v5489 = vadd.f32 0.0, %v5488
  %v5490 = vpop.f32.mrb[0].mxu0
  %v5491 = vadd.f32 0.0, %v5490
  %5492 = vmatprep.mubr.bf16.mxu0 %v3719
  %5493 = vmatmul.mubr.bf16.gmra.mrb[0].mxu0 %v2604
  %v5494 = vpop.f32.mrb[0].mxu0
  %v5495 = vadd.f32 0.0, %v5494
  %v5496 = vpop.f32.mrb[0].mxu0
  %v5497 = vadd.f32 0.0, %v5496
  %v5498 = vpop.f32.mrb[0].mxu0
  %v5499 = vadd.f32 0.0, %v5498
  %v5500 = vpop.f32.mrb[0].mxu0
  %v5501 = vadd.f32 0.0, %v5500
  %5502 = vmatprep.mubr.bf16.mxu0 %v3722
  %5503 = vmatmul.mubr.bf16.gmra.mrb[0].mxu0 %v2606
  %v5504 = vpop.f32.mrb[0].mxu0
  %v5505 = vadd.f32 0.0, %v5504
  %v5506 = vpop.f32.mrb[0].mxu0
  %v5507 = vadd.f32 0.0, %v5506
  %v5508 = vpop.f32.mrb[0].mxu0
  %v5509 = vadd.f32 0.0, %v5508
  %v5510 = vpop.f32.mrb[0].mxu0
  %v5511 = vadd.f32 0.0, %v5510
  %5512 = vmatprep.mubr.bf16.mxu0 %v3725
  %5513 = vmatmul.mubr.bf16.gmra.mrb[0].mxu0 %v2608
  %v5514 = vpop.f32.mrb[0].mxu0
  %v5515 = vadd.f32 0.0, %v5514
  %v5516 = vpop.f32.mrb[0].mxu0
  %v5517 = vadd.f32 0.0, %v5516
  %v5518 = vpop.f32.mrb[0].mxu0
  %v5519 = vadd.f32 0.0, %v5518
  %v5520 = vpop.f32.mrb[0].mxu0
  %v5521 = vadd.f32 0.0, %v5520
  %5522 = vmatprep.mubr.bf16.mxu0 %v3728
  %5523 = vmatmul.mubr.bf16.gmra.mrb[0].mxu0 %v2610
  %v5524 = vpop.f32.mrb[0].mxu0
  %v5525 = vadd.f32 0.0, %v5524
  %v5526 = vpop.f32.mrb[0].mxu0
  %v5527 = vadd.f32 0.0, %v5526
  %v5528 = vpop.f32.mrb[0].mxu0
  %v5529 = vadd.f32 0.0, %v5528
  %v5530 = vpop.f32.mrb[0].mxu0
  %v5531 = vadd.f32 0.0, %v5530
  %5532 = vmatprep.mubr.bf16.mxu0 %v3731
  %5533 = vmatmul.mubr.bf16.gmra.mrb[0].mxu0 %v2612
  %v5534 = vpop.f32.mrb[0].mxu0
  %v5535 = vadd.f32 0.0, %v5534
  %v5536 = vpop.f32.mrb[0].mxu0
  %v5537 = vadd.f32 0.0, %v5536
  %v5538 = vpop.f32.mrb[0].mxu0
  %v5539 = vadd.f32 0.0, %v5538
  %v5540 = vpop.f32.mrb[0].mxu0
  %v5541 = vadd.f32 0.0, %v5540
  %5542 = vmatprep.mubr.bf16.mxu0 %v3734
  %5543 = vmatmul.mubr.bf16.gmra.mrb[0].mxu0 %v2614
  %v5544 = vpop.f32.mrb[0].mxu0
  %v5545 = vadd.f32 0.0, %v5544
  %v5546 = vpop.f32.mrb[0].mxu0
  %v5547 = vadd.f32 0.0, %v5546
  %v5548 = vpop.f32.mrb[0].mxu0
  %v5549 = vadd.f32 0.0, %v5548
  %v5550 = vpop.f32.mrb[0].mxu0
  %v5551 = vadd.f32 0.0, %v5550
  %5552 = vmatprep.mubr.bf16.mxu0 %v3737
  %5553 = vmatmul.mubr.bf16.gmra.mrb[0].mxu0 %v2616
  %v5554 = vpop.f32.mrb[0].mxu0
  %v5555 = vadd.f32 0.0, %v5554
  %v5556 = vpop.f32.mrb[0].mxu0
  %v5557 = vadd.f32 0.0, %v5556
  %v5558 = vpop.f32.mrb[0].mxu0
  %v5559 = vadd.f32 0.0, %v5558
  %v5560 = vpop.f32.mrb[0].mxu0
  %v5561 = vadd.f32 0.0, %v5560
  %5562 = vmatprep.mubr.bf16.mxu0 %v3740
  %5563 = vmatmul.mubr.bf16.gmra.mrb[0].mxu0 %v2618
  %v5564 = vpop.f32.mrb[0].mxu0
  %v5565 = vadd.f32 0.0, %v5564
  %v5566 = vpop.f32.mrb[0].mxu0
  %v5567 = vadd.f32 0.0, %v5566
  %v5568 = vpop.f32.mrb[0].mxu0
  %v5569 = vadd.f32 0.0, %v5568
  %v5570 = vpop.f32.mrb[0].mxu0
  %v5571 = vadd.f32 0.0, %v5570
  %5572 = vmatprep.mubr.bf16.mxu0 %v3743
  %5573 = vmatmul.mubr.bf16.gmra.mrb[0].mxu0 %v2620
  %v5574 = vpop.f32.mrb[0].mxu0
  %v5575 = vadd.f32 0.0, %v5574
  %v5576 = vpop.f32.mrb[0].mxu0
  %v5577 = vadd.f32 0.0, %v5576
  %v5578 = vpop.f32.mrb[0].mxu0
  %v5579 = vadd.f32 0.0, %v5578
  %v5580 = vpop.f32.mrb[0].mxu0
  %v5581 = vadd.f32 0.0, %v5580
  %5582 = vmatprep.mubr.bf16.mxu0 %v3746
  %5583 = vmatmul.mubr.bf16.gmra.mrb[0].mxu0 %v2622
  %v5584 = vpop.f32.mrb[0].mxu0
  %v5585 = vadd.f32 0.0, %v5584
  %v5586 = vpop.f32.mrb[0].mxu0
  %v5587 = vadd.f32 0.0, %v5586
  %v5588 = vpop.f32.mrb[0].mxu0
  %v5589 = vadd.f32 0.0, %v5588
  %v5590 = vpop.f32.mrb[0].mxu0
  %v5591 = vadd.f32 0.0, %v5590
  %5592 = vmatprep.mubr.bf16.mxu0 %v3749
  %5593 = vmatmul.mubr.bf16.gmra.mrb[0].mxu0 %v2624
  %v5594 = vpop.f32.mrb[0].mxu0
  %v5595 = vadd.f32 0.0, %v5594
  %v5596 = vpop.f32.mrb[0].mxu0
  %v5597 = vadd.f32 0.0, %v5596
  %v5598 = vpop.f32.mrb[0].mxu0
  %v5599 = vadd.f32 0.0, %v5598
  %v5600 = vpop.f32.mrb[0].mxu0
  %v5601 = vadd.f32 0.0, %v5600
  %5602 = vmatprep.mubr.bf16.mxu0 %v3752
  %5603 = vmatmul.mubr.bf16.gmra.mrb[0].mxu0 %v2626
  %v5604 = vpop.f32.mrb[0].mxu0
  %v5605 = vadd.f32 0.0, %v5604
  %v5606 = vpop.f32.mrb[0].mxu0
  %v5607 = vadd.f32 0.0, %v5606
  %v5608 = vpop.f32.mrb[0].mxu0
  %v5609 = vadd.f32 0.0, %v5608
  %v5610 = vpop.f32.mrb[0].mxu0
  %v5611 = vadd.f32 0.0, %v5610
  %5612 = vmatprep.mubr.bf16.mxu0 %v3755
  %5613 = vmatmul.mubr.bf16.gmra.mrb[0].mxu0 %v2628
  %v5614 = vpop.f32.mrb[0].mxu0
  %v5615 = vadd.f32 0.0, %v5614
  %v5616 = vpop.f32.mrb[0].mxu0
  %v5617 = vadd.f32 0.0, %v5616
  %v5618 = vpop.f32.mrb[0].mxu0
  %v5619 = vadd.f32 0.0, %v5618
  %v5620 = vpop.f32.mrb[0].mxu0
  %v5621 = vadd.f32 0.0, %v5620
  %5622 = vmatprep.mubr.bf16.mxu0 %v3758
  %5623 = vmatmul.mubr.bf16.gmra.mrb[0].mxu0 %v2630
  %v5624 = vpop.f32.mrb[0].mxu0
  %v5625 = vadd.f32 0.0, %v5624
  %v5626 = vpop.f32.mrb[0].mxu0
  %v5627 = vadd.f32 0.0, %v5626
  %v5628 = vpop.f32.mrb[0].mxu0
  %v5629 = vadd.f32 0.0, %v5628
  %v5630 = vpop.f32.mrb[0].mxu0
  %v5631 = vadd.f32 0.0, %v5630
  %5632 = vmatprep.mubr.bf16.mxu0 %v3761
  %5633 = vmatmul.mubr.bf16.gmra.mrb[0].mxu0 %v2632
  %v5634 = vpop.f32.mrb[0].mxu0
  %v5635 = vadd.f32 0.0, %v5634
  %v5636 = vpop.f32.mrb[0].mxu0
  %v5637 = vadd.f32 0.0, %v5636
  %v5638 = vpop.f32.mrb[0].mxu0
  %v5639 = vadd.f32 0.0, %v5638
  %v5640 = vpop.f32.mrb[0].mxu0
  %v5641 = vadd.f32 0.0, %v5640
  %5642 = vmatprep.mubr.bf16.mxu0 %v3764
  %5643 = vmatmul.mubr.bf16.gmra.mrb[0].mxu0 %v2634
  %v5644 = vpop.f32.mrb[0].mxu0
  %v5645 = vadd.f32 0.0, %v5644
  %v5646 = vpop.f32.mrb[0].mxu0
  %v5647 = vadd.f32 0.0, %v5646
  %v5648 = vpop.f32.mrb[0].mxu0
  %v5649 = vadd.f32 0.0, %v5648
  %v5650 = vpop.f32.mrb[0].mxu0
  %v5651 = vadd.f32 0.0, %v5650
  %5652 = vmatprep.mubr.bf16.mxu0 %v3767
  %5653 = vmatmul.mubr.bf16.gmra.mrb[0].mxu0 %v2636
  %v5654 = vpop.f32.mrb[0].mxu0
  %v5655 = vadd.f32 0.0, %v5654
  %v5656 = vpop.f32.mrb[0].mxu0
  %v5657 = vadd.f32 0.0, %v5656
  %v5658 = vpop.f32.mrb[0].mxu0
  %v5659 = vadd.f32 0.0, %v5658
  %v5660 = vpop.f32.mrb[0].mxu0
  %v5661 = vadd.f32 0.0, %v5660
  %5662 = vmatprep.mubr.bf16.mxu0 %v3770
  %5663 = vmatmul.mubr.bf16.gmra.mrb[0].mxu0 %v2638
  %v5664 = vpop.f32.mrb[0].mxu0
  %v5665 = vadd.f32 0.0, %v5664
  %v5666 = vpop.f32.mrb[0].mxu0
  %v5667 = vadd.f32 0.0, %v5666
  %v5668 = vpop.f32.mrb[0].mxu0
  %v5669 = vadd.f32 0.0, %v5668
  %v5670 = vpop.f32.mrb[0].mxu0
  %v5671 = vadd.f32 0.0, %v5670
  %5672 = vmatprep.mubr.bf16.mxu0 %v3773
  %5673 = vmatmul.mubr.bf16.gmra.mrb[0].mxu0 %v2640
  %v5674 = vpop.f32.mrb[0].mxu0
  %v5675 = vadd.f32 0.0, %v5674
  %v5676 = vpop.f32.mrb[0].mxu0
  %v5677 = vadd.f32 0.0, %v5676
  %v5678 = vpop.f32.mrb[0].mxu0
  %v5679 = vadd.f32 0.0, %v5678
  %v5680 = vpop.f32.mrb[0].mxu0
  %v5681 = vadd.f32 0.0, %v5680
  %5682 = vmatprep.mubr.bf16.mxu0 %v3776
  %5683 = vmatmul.mubr.bf16.gmra.mrb[0].mxu0 %v2642
  %v5684 = vpop.f32.mrb[0].mxu0
  %v5685 = vadd.f32 0.0, %v5684
  %v5686 = vpop.f32.mrb[0].mxu0
  %v5687 = vadd.f32 0.0, %v5686
  %v5688 = vpop.f32.mrb[0].mxu0
  %v5689 = vadd.f32 0.0, %v5688
  %v5690 = vpop.f32.mrb[0].mxu0
  %v5691 = vadd.f32 0.0, %v5690
  %5692 = vmatprep.mubr.bf16.mxu0 %v3779
  %5693 = vmatmul.mubr.bf16.gmra.mrb[0].mxu0 %v2644
  %v5694 = vpop.f32.mrb[0].mxu0
  %v5695 = vadd.f32 0.0, %v5694
  %v5696 = vpop.f32.mrb[0].mxu0
  %v5697 = vadd.f32 0.0, %v5696
  %v5698 = vpop.f32.mrb[0].mxu0
  %v5699 = vadd.f32 0.0, %v5698
  %v5700 = vpop.f32.mrb[0].mxu0
  %v5701 = vadd.f32 0.0, %v5700
  %5702 = vmatprep.mubr.bf16.mxu0 %v3782
  %5703 = vmatmul.mubr.bf16.gmra.mrb[0].mxu0 %v2646
  %v5704 = vpop.f32.mrb[0].mxu0
  %v5705 = vadd.f32 0.0, %v5704
  %v5706 = vpop.f32.mrb[0].mxu0
  %v5707 = vadd.f32 0.0, %v5706
  %v5708 = vpop.f32.mrb[0].mxu0
  %v5709 = vadd.f32 0.0, %v5708
  %v5710 = vpop.f32.mrb[0].mxu0
  %v5711 = vadd.f32 0.0, %v5710
  %5712 = vmatprep.mubr.bf16.mxu0 %v3785
  %5713 = vmatmul.mubr.bf16.gmra.mrb[0].mxu0 %v2648
  %v5714 = vpop.f32.mrb[0].mxu0
  %v5715 = vadd.f32 0.0, %v5714
  %v5716 = vpop.f32.mrb[0].mxu0
  %v5717 = vadd.f32 0.0, %v5716
  %v5718 = vpop.f32.mrb[0].mxu0
  %v5719 = vadd.f32 0.0, %v5718
  %v5720 = vpop.f32.mrb[0].mxu0
  %v5721 = vadd.f32 0.0, %v5720
  %5722 = vmatprep.mubr.bf16.mxu0 %v3788
  %5723 = vmatmul.mubr.bf16.gmra.mrb[0].mxu0 %v2650
  %v5724 = vpop.f32.mrb[0].mxu0
  %v5725 = vadd.f32 0.0, %v5724
  %v5726 = vpop.f32.mrb[0].mxu0
  %v5727 = vadd.f32 0.0, %v5726
  %v5728 = vpop.f32.mrb[0].mxu0
  %v5729 = vadd.f32 0.0, %v5728
  %v5730 = vpop.f32.mrb[0].mxu0
  %v5731 = vadd.f32 0.0, %v5730
  %5732 = vmatprep.mubr.bf16.mxu0 %v3791
  %5733 = vmatmul.mubr.bf16.gmra.mrb[0].mxu0 %v2652
  %v5734 = vpop.f32.mrb[0].mxu0
  %v5735 = vadd.f32 0.0, %v5734
  %v5736 = vpop.f32.mrb[0].mxu0
  %v5737 = vadd.f32 0.0, %v5736
  %v5738 = vpop.f32.mrb[0].mxu0
  %v5739 = vadd.f32 0.0, %v5738
  %v5740 = vpop.f32.mrb[0].mxu0
  %v5741 = vadd.f32 0.0, %v5740
  %5742 = vmatprep.mubr.bf16.mxu0 %v3794
  %5743 = vmatmul.mubr.bf16.gmra.mrb[0].mxu0 %v2654
  %v5744 = vpop.f32.mrb[0].mxu0
  %v5745 = vadd.f32 0.0, %v5744
  %v5746 = vpop.f32.mrb[0].mxu0
  %v5747 = vadd.f32 0.0, %v5746
  %v5748 = vpop.f32.mrb[0].mxu0
  %v5749 = vadd.f32 0.0, %v5748
  %v5750 = vpop.f32.mrb[0].mxu0
  %v5751 = vadd.f32 0.0, %v5750
  %5752 = vmatprep.mubr.bf16.mxu0 %v3797
  %5753 = vmatmul.mubr.bf16.gmra.mrb[0].mxu0 %v2656
  %v5754 = vpop.f32.mrb[0].mxu0
  %v5755 = vadd.f32 0.0, %v5754
  %v5756 = vpop.f32.mrb[0].mxu0
  %v5757 = vadd.f32 0.0, %v5756
  %v5758 = vpop.f32.mrb[0].mxu0
  %v5759 = vadd.f32 0.0, %v5758
  %v5760 = vpop.f32.mrb[0].mxu0
  %v5761 = vadd.f32 0.0, %v5760
  %5762 = vmatprep.mubr.bf16.mxu0 %v3800
  %5763 = vmatmul.mubr.bf16.gmra.mrb[0].mxu0 %v2658
  %v5764 = vpop.f32.mrb[0].mxu0
  %v5765 = vadd.f32 0.0, %v5764
  %v5766 = vpop.f32.mrb[0].mxu0
  %v5767 = vadd.f32 0.0, %v5766
  %v5768 = vpop.f32.mrb[0].mxu0
  %v5769 = vadd.f32 0.0, %v5768
  %v5770 = vpop.f32.mrb[0].mxu0
  %v5771 = vadd.f32 0.0, %v5770
  %5772 = vmatprep.mubr.bf16.mxu0 %v3803
  %5773 = vmatmul.mubr.bf16.gmra.mrb[0].mxu0 %v2660
  %v5774 = vpop.f32.mrb[0].mxu0
  %v5775 = vadd.f32 0.0, %v5774
  %v5776 = vpop.f32.mrb[0].mxu0
  %v5777 = vadd.f32 0.0, %v5776
  %v5778 = vpop.f32.mrb[0].mxu0
  %v5779 = vadd.f32 0.0, %v5778
  %v5780 = vpop.f32.mrb[0].mxu0
  %v5781 = vadd.f32 0.0, %v5780
  %5782 = vmatprep.mubr.bf16.mxu0 %v3806
  %5783 = vmatmul.mubr.bf16.gmra.mrb[0].mxu0 %v2662
  %v5784 = vpop.f32.mrb[0].mxu0
  %v5785 = vadd.f32 0.0, %v5784
  %v5786 = vpop.f32.mrb[0].mxu0
  %v5787 = vadd.f32 0.0, %v5786
  %v5788 = vpop.f32.mrb[0].mxu0
  %v5789 = vadd.f32 0.0, %v5788
  %v5790 = vpop.f32.mrb[0].mxu0
  %v5791 = vadd.f32 0.0, %v5790
  %5792 = vmatprep.mubr.bf16.mxu0 %v3809
  %5793 = vmatmul.mubr.bf16.gmra.mrb[0].mxu0 %v2664
  %v5794 = vpop.f32.mrb[0].mxu0
  %v5795 = vadd.f32 0.0, %v5794
  %v5796 = vpop.f32.mrb[0].mxu0
  %v5797 = vadd.f32 0.0, %v5796
  %v5798 = vpop.f32.mrb[0].mxu0
  %v5799 = vadd.f32 0.0, %v5798
  %v5800 = vpop.f32.mrb[0].mxu0
  %v5801 = vadd.f32 0.0, %v5800
  %5802 = vmatprep.mubr.bf16.mxu0 %v3812
  %5803 = vmatmul.mubr.bf16.gmra.mrb[0].mxu0 %v2666
  %v5804 = vpop.f32.mrb[0].mxu0
  %v5805 = vadd.f32 0.0, %v5804
  %v5806 = vpop.f32.mrb[0].mxu0
  %v5807 = vadd.f32 0.0, %v5806
  %v5808 = vpop.f32.mrb[0].mxu0
  %v5809 = vadd.f32 0.0, %v5808
  %v5810 = vpop.f32.mrb[0].mxu0
  %v5811 = vadd.f32 0.0, %v5810
  %5812 = vmatprep.mubr.bf16.mxu0 %v3815
  %5813 = vmatmul.mubr.bf16.gmra.mrb[0].mxu0 %v2668
  %v5814 = vpop.f32.mrb[0].mxu0
  %v5815 = vadd.f32 0.0, %v5814
  %v5816 = vpop.f32.mrb[0].mxu0
  %v5817 = vadd.f32 0.0, %v5816
  %v5818 = vpop.f32.mrb[0].mxu0
  %v5819 = vadd.f32 0.0, %v5818
  %v5820 = vpop.f32.mrb[0].mxu0
  %v5821 = vadd.f32 0.0, %v5820
  %5822 = vmatprep.mubr.bf16.mxu0 %v3818
  %5823 = vmatmul.mubr.bf16.gmra.mrb[0].mxu0 %v2670
  %v5824 = vpop.f32.mrb[0].mxu0
  %v5825 = vadd.f32 0.0, %v5824
  %v5826 = vpop.f32.mrb[0].mxu0
  %v5827 = vadd.f32 0.0, %v5826
  %v5828 = vpop.f32.mrb[0].mxu0
  %v5829 = vadd.f32 0.0, %v5828
  %v5830 = vpop.f32.mrb[0].mxu0
  %v5831 = vadd.f32 0.0, %v5830
  %5832 = vmatprep.mubr.bf16.mxu0 %v3821
  %5833 = vmatmul.mubr.bf16.gmra.mrb[0].mxu0 %v2672
  %v5834 = vpop.f32.mrb[0].mxu0
  %v5835 = vadd.f32 0.0, %v5834
  %v5836 = vpop.f32.mrb[0].mxu0
  %v5837 = vadd.f32 0.0, %v5836
  %v5838 = vpop.f32.mrb[0].mxu0
  %v5839 = vadd.f32 0.0, %v5838
  %v5840 = vpop.f32.mrb[0].mxu0
  %v5841 = vadd.f32 0.0, %v5840
  %5842 = vmatprep.mubr.bf16.mxu0 %v3824
  %5843 = vmatmul.mubr.bf16.gmra.mrb[0].mxu0 %v2674
  %v5844 = vpop.f32.mrb[0].mxu0
  %v5845 = vadd.f32 0.0, %v5844
  %v5846 = vpop.f32.mrb[0].mxu0
  %v5847 = vadd.f32 0.0, %v5846
  %v5848 = vpop.f32.mrb[0].mxu0
  %v5849 = vadd.f32 0.0, %v5848
  %v5850 = vpop.f32.mrb[0].mxu0
  %v5851 = vadd.f32 0.0, %v5850
  %5852 = vmatprep.mubr.bf16.mxu0 %v3827
  %5853 = vmatmul.mubr.bf16.gmra.mrb[0].mxu0 %v2676
  %v5854 = vpop.f32.mrb[0].mxu0
  %v5855 = vadd.f32 0.0, %v5854
  %v5856 = vpop.f32.mrb[0].mxu0
  %v5857 = vadd.f32 0.0, %v5856
  %v5858 = vpop.f32.mrb[0].mxu0
  %v5859 = vadd.f32 0.0, %v5858
  %v5860 = vpop.f32.mrb[0].mxu0
  %v5861 = vadd.f32 0.0, %v5860
  %5862 = vmatprep.mubr.bf16.mxu0 %v3830
  %5863 = vmatmul.mubr.bf16.gmra.mrb[0].mxu0 %v2678
  %v5864 = vpop.f32.mrb[0].mxu0
  %v5865 = vadd.f32 0.0, %v5864
  %v5866 = vpop.f32.mrb[0].mxu0
  %v5867 = vadd.f32 0.0, %v5866
  %v5868 = vpop.f32.mrb[0].mxu0
  %v5869 = vadd.f32 0.0, %v5868
  %v5870 = vpop.f32.mrb[0].mxu0
  %v5871 = vadd.f32 0.0, %v5870
  %5872 = vmatprep.mubr.bf16.mxu0 %v3833
  %5873 = vmatmul.mubr.bf16.gmra.mrb[0].mxu0 %v2680
  %v5874 = vpop.f32.mrb[0].mxu0
  %v5875 = vadd.f32 0.0, %v5874
  %v5876 = vpop.f32.mrb[0].mxu0
  %v5877 = vadd.f32 0.0, %v5876
  %v5878 = vpop.f32.mrb[0].mxu0
  %v5879 = vadd.f32 0.0, %v5878
  %v5880 = vpop.f32.mrb[0].mxu0
  %v5881 = vadd.f32 0.0, %v5880
  %5882 = vmatprep.mubr.bf16.mxu0 %v3836
  %5883 = vmatmul.mubr.bf16.gmra.mrb[0].mxu0 %v2682
  %v5884 = vpop.f32.mrb[0].mxu0
  %v5885 = vadd.f32 0.0, %v5884
  %v5886 = vpop.f32.mrb[0].mxu0
  %v5887 = vadd.f32 0.0, %v5886
  %v5888 = vpop.f32.mrb[0].mxu0
  %v5889 = vadd.f32 0.0, %v5888
  %v5890 = vpop.f32.mrb[0].mxu0
  %v5891 = vadd.f32 0.0, %v5890
  %5892 = vmatprep.mubr.bf16.mxu0 %v3839
  %5893 = vmatmul.mubr.bf16.gmra.mrb[0].mxu0 %v2684
  %v5894 = vpop.f32.mrb[0].mxu0
  %v5895 = vadd.f32 0.0, %v5894
  %v5896 = vpop.f32.mrb[0].mxu0
  %v5897 = vadd.f32 0.0, %v5896
  %v5898 = vpop.f32.mrb[0].mxu0
  %v5899 = vadd.f32 0.0, %v5898
  %v5900 = vpop.f32.mrb[0].mxu0
  %v5901 = vadd.f32 0.0, %v5900
  %5902 = vmatprep.mubr.bf16.mxu0 %v3842
  %5903 = vmatmul.mubr.bf16.gmra.mrb[0].mxu0 %v2686
  %v5904 = vpop.f32.mrb[0].mxu0
  %v5905 = vadd.f32 0.0, %v5904
  %v5906 = vpop.f32.mrb[0].mxu0
  %v5907 = vadd.f32 0.0, %v5906
  %v5908 = vpop.f32.mrb[0].mxu0
  %v5909 = vadd.f32 0.0, %v5908
  %v5910 = vpop.f32.mrb[0].mxu0
  %v5911 = vadd.f32 0.0, %v5910
  %5912 = vmatprep.mubr.bf16.mxu0 %v3845
  %5913 = vmatmul.mubr.bf16.gmra.mrb[0].mxu0 %v2688
  %v5914 = vpop.f32.mrb[0].mxu0
  %v5915 = vadd.f32 0.0, %v5914
  %v5916 = vpop.f32.mrb[0].mxu0
  %v5917 = vadd.f32 0.0, %v5916
  %v5918 = vpop.f32.mrb[0].mxu0
  %v5919 = vadd.f32 0.0, %v5918
  %v5920 = vpop.f32.mrb[0].mxu0
  %v5921 = vadd.f32 0.0, %v5920
  %5922 = vmatprep.mubr.bf16.mxu0 %v3848
  %5923 = vmatmul.mubr.bf16.gmra.mrb[0].mxu0 %v2690
  %v5924 = vpop.f32.mrb[0].mxu0
  %v5925 = vadd.f32 0.0, %v5924
  %v5926 = vpop.f32.mrb[0].mxu0
  %v5927 = vadd.f32 0.0, %v5926
  %v5928 = vpop.f32.mrb[0].mxu0
  %v5929 = vadd.f32 0.0, %v5928
  %v5930 = vpop.f32.mrb[0].mxu0
  %v5931 = vadd.f32 0.0, %v5930
  %5932 = vmatprep.mubr.bf16.mxu0 %v3851
  %5933 = vmatmul.mubr.bf16.gmra.mrb[0].mxu0 %v2692
  %v5934 = vpop.f32.mrb[0].mxu0
  %v5935 = vadd.f32 0.0, %v5934
  %v5936 = vpop.f32.mrb[0].mxu0
  %v5937 = vadd.f32 0.0, %v5936
  %v5938 = vpop.f32.mrb[0].mxu0
  %v5939 = vadd.f32 0.0, %v5938
  %v5940 = vpop.f32.mrb[0].mxu0
  %v5941 = vadd.f32 0.0, %v5940
  %5942 = vmatprep.mubr.bf16.mxu0 %v3854
  %5943 = vmatmul.mubr.bf16.gmra.mrb[0].mxu0 %v2694
  %v5944 = vpop.f32.mrb[0].mxu0
  %v5945 = vadd.f32 0.0, %v5944
  %v5946 = vpop.f32.mrb[0].mxu0
  %v5947 = vadd.f32 0.0, %v5946
  %v5948 = vpop.f32.mrb[0].mxu0
  %v5949 = vadd.f32 0.0, %v5948
  %v5950 = vpop.f32.mrb[0].mxu0
  %v5951 = vadd.f32 0.0, %v5950
  %5952 = vmatprep.mubr.bf16.mxu0 %v3857
  %5953 = vmatmul.mubr.bf16.gmra.mrb[0].mxu0 %v2696
  %v5954 = vpop.f32.mrb[0].mxu0
  %v5955 = vadd.f32 0.0, %v5954
  %v5956 = vpop.f32.mrb[0].mxu0
  %v5957 = vadd.f32 0.0, %v5956
  %v5958 = vpop.f32.mrb[0].mxu0
  %v5959 = vadd.f32 0.0, %v5958
  %v5960 = vpop.f32.mrb[0].mxu0
  %v5961 = vadd.f32 0.0, %v5960
  %5962 = vmatprep.mubr.bf16.mxu0 %v3860
  %5963 = vmatmul.mubr.bf16.gmra.mrb[0].mxu0 %v2698
  %v5964 = vpop.f32.mrb[0].mxu0
  %v5965 = vadd.f32 0.0, %v5964
  %v5966 = vpop.f32.mrb[0].mxu0
  %v5967 = vadd.f32 0.0, %v5966
  %v5968 = vpop.f32.mrb[0].mxu0
  %v5969 = vadd.f32 0.0, %v5968
  %v5970 = vpop.f32.mrb[0].mxu0
  %v5971 = vadd.f32 0.0, %v5970
  %5972 = vmatprep.mubr.bf16.mxu0 %v3863
  %5973 = vmatmul.mubr.bf16.gmra.mrb[0].mxu0 %v2700
  %v5974 = vpop.f32.mrb[0].mxu0
  %v5975 = vadd.f32 0.0, %v5974
  %v5976 = vpop.f32.mrb[0].mxu0
  %v5977 = vadd.f32 0.0, %v5976
  %v5978 = vpop.f32.mrb[0].mxu0
  %v5979 = vadd.f32 0.0, %v5978
  %v5980 = vpop.f32.mrb[0].mxu0
  %v5981 = vadd.f32 0.0, %v5980
  %5982 = vmatprep.mubr.bf16.mxu0 %v3866
  %5983 = vmatmul.mubr.bf16.gmra.mrb[0].mxu0 %v2702
  %v5984 = vpop.f32.mrb[0].mxu0
  %v5985 = vadd.f32 0.0, %v5984
  %v5986 = vpop.f32.mrb[0].mxu0
  %v5987 = vadd.f32 0.0, %v5986
  %v5988 = vpop.f32.mrb[0].mxu0
  %v5989 = vadd.f32 0.0, %v5988
  %v5990 = vpop.f32.mrb[0].mxu0
  %v5991 = vadd.f32 0.0, %v5990
  %5992 = vmatprep.mubr.bf16.mxu0 %v3869
  %5993 = vmatmul.mubr.bf16.gmra.mrb[0].mxu0 %v2704
  %v5994 = vpop.f32.mrb[0].mxu0
  %v5995 = vadd.f32 0.0, %v5994
  %v5996 = vpop.f32.mrb[0].mxu0
  %v5997 = vadd.f32 0.0, %v5996
  %v5998 = vpop.f32.mrb[0].mxu0
  %v5999 = vadd.f32 0.0, %v5998
  %v6000 = vpop.f32.mrb[0].mxu0
  %v6001 = vadd.f32 0.0, %v6000
  %6002 = vmatprep.mubr.bf16.mxu0 %v3872
  %6003 = vmatmul.mubr.bf16.gmra.mrb[0].mxu0 %v2706
  %v6004 = vpop.f32.mrb[0].mxu0
  %v6005 = vadd.f32 0.0, %v6004
  %v6006 = vpop.f32.mrb[0].mxu0
  %v6007 = vadd.f32 0.0, %v6006
  %v6008 = vpop.f32.mrb[0].mxu0
  %v6009 = vadd.f32 0.0, %v6008
  %v6010 = vpop.f32.mrb[0].mxu0
  %v6011 = vadd.f32 0.0, %v6010
  %6012 = vmatprep.mubr.bf16.mxu0 %v3875
  %6013 = vmatmul.mubr.bf16.gmra.mrb[0].mxu0 %v2708
  %v6014 = vpop.f32.mrb[0].mxu0
  %v6015 = vadd.f32 0.0, %v6014
  %v6016 = vpop.f32.mrb[0].mxu0
  %v6017 = vadd.f32 0.0, %v6016
  %v6018 = vpop.f32.mrb[0].mxu0
  %v6019 = vadd.f32 0.0, %v6018
  %v6020 = vpop.f32.mrb[0].mxu0
  %v6021 = vadd.f32 0.0, %v6020
  %6022 = vmatprep.mubr.bf16.mxu0 %v3878
  %6023 = vmatmul.mubr.bf16.gmra.mrb[0].mxu0 %v2710
  %v6024 = vpop.f32.mrb[0].mxu0
  %v6025 = vadd.f32 0.0, %v6024
  %v6026 = vpop.f32.mrb[0].mxu0
  %v6027 = vadd.f32 0.0, %v6026
  %v6028 = vpop.f32.mrb[0].mxu0
  %v6029 = vadd.f32 0.0, %v6028
  %v6030 = vpop.f32.mrb[0].mxu0
  %v6031 = vadd.f32 0.0, %v6030
  %6032 = vmatprep.mubr.bf16.mxu0 %v3881
  %6033 = vmatmul.mubr.bf16.gmra.mrb[0].mxu0 %v2712
  %v6034 = vpop.f32.mrb[0].mxu0
  %v6035 = vadd.f32 0.0, %v6034
  %v6036 = vpop.f32.mrb[0].mxu0
  %v6037 = vadd.f32 0.0, %v6036
  %v6038 = vpop.f32.mrb[0].mxu0
  %v6039 = vadd.f32 0.0, %v6038
  %v6040 = vpop.f32.mrb[0].mxu0
  %v6041 = vadd.f32 0.0, %v6040
  %6042 = vmatprep.mubr.bf16.mxu0 %v3884
  %6043 = vmatmul.mubr.bf16.gmra.mrb[0].mxu0 %v2714
  %v6044 = vpop.f32.mrb[0].mxu0
  %v6045 = vadd.f32 0.0, %v6044
  %v6046 = vpop.f32.mrb[0].mxu0
  %v6047 = vadd.f32 0.0, %v6046
  %v6048 = vpop.f32.mrb[0].mxu0
  %v6049 = vadd.f32 0.0, %v6048
  %v6050 = vpop.f32.mrb[0].mxu0
  %v6051 = vadd.f32 0.0, %v6050
  %6052 = vmatprep.mubr.bf16.mxu0 %v3887
  %6053 = vmatmul.mubr.bf16.gmra.mrb[0].mxu0 %v2716
  %v6054 = vpop.f32.mrb[0].mxu0
  %v6055 = vadd.f32 0.0, %v6054
  %v6056 = vpop.f32.mrb[0].mxu0
  %v6057 = vadd.f32 0.0, %v6056
  %v6058 = vpop.f32.mrb[0].mxu0
  %v6059 = vadd.f32 0.0, %v6058
  %v6060 = vpop.f32.mrb[0].mxu0
  %v6061 = vadd.f32 0.0, %v6060
  %6062 = vmatprep.mubr.bf16.mxu0 %v3890
  %6063 = vmatmul.mubr.bf16.gmra.mrb[0].mxu0 %v2718
  %v6064 = vpop.f32.mrb[0].mxu0
  %v6065 = vadd.f32 0.0, %v6064
  %v6066 = vpop.f32.mrb[0].mxu0
  %v6067 = vadd.f32 0.0, %v6066
  %v6068 = vpop.f32.mrb[0].mxu0
  %v6069 = vadd.f32 0.0, %v6068
  %v6070 = vpop.f32.mrb[0].mxu0
  %v6071 = vadd.f32 0.0, %v6070
  %6072 = vmatprep.mubr.bf16.mxu0 %v3893
  %6073 = vmatmul.mubr.bf16.gmra.mrb[0].mxu0 %v2720
  %v6074 = vpop.f32.mrb[0].mxu0
  %v6075 = vadd.f32 0.0, %v6074
  %v6076 = vpop.f32.mrb[0].mxu0
  %v6077 = vadd.f32 0.0, %v6076
  %v6078 = vpop.f32.mrb[0].mxu0
  %v6079 = vadd.f32 0.0, %v6078
  %v6080 = vpop.f32.mrb[0].mxu0
  %v6081 = vadd.f32 0.0, %v6080
  %6082 = vmatprep.mubr.bf16.mxu0 %v3896
  %6083 = vmatmul.mubr.bf16.gmra.mrb[0].mxu0 %v2722
  %v6084 = vpop.f32.mrb[0].mxu0
  %v6085 = vadd.f32 0.0, %v6084
  %v6086 = vpop.f32.mrb[0].mxu0
  %v6087 = vadd.f32 0.0, %v6086
  %v6088 = vpop.f32.mrb[0].mxu0
  %v6089 = vadd.f32 0.0, %v6088
  %v6090 = vpop.f32.mrb[0].mxu0
  %v6091 = vadd.f32 0.0, %v6090
  %6092 = vmatprep.mubr.bf16.mxu0 %v3899
  %6093 = vmatmul.mubr.bf16.gmra.mrb[0].mxu0 %v2724
  %v6094 = vpop.f32.mrb[0].mxu0
  %v6095 = vadd.f32 0.0, %v6094
  %v6096 = vpop.f32.mrb[0].mxu0
  %v6097 = vadd.f32 0.0, %v6096
  %v6098 = vpop.f32.mrb[0].mxu0
  %v6099 = vadd.f32 0.0, %v6098
  %v6100 = vpop.f32.mrb[0].mxu0
  %v6101 = vadd.f32 0.0, %v6100
  %6102 = vmatprep.mubr.bf16.mxu0 %v3902
  %6103 = vmatmul.mubr.bf16.gmra.mrb[0].mxu0 %v2726
  %v6104 = vpop.f32.mrb[0].mxu0
  %v6105 = vadd.f32 0.0, %v6104
  %v6106 = vpop.f32.mrb[0].mxu0
  %v6107 = vadd.f32 0.0, %v6106
  %v6108 = vpop.f32.mrb[0].mxu0
  %v6109 = vadd.f32 0.0, %v6108
  %v6110 = vpop.f32.mrb[0].mxu0
  %v6111 = vadd.f32 0.0, %v6110
  %6112 = vmatprep.mubr.bf16.mxu0 %v3905
  %6113 = vmatmul.mubr.bf16.gmra.mrb[0].mxu0 %v2728
  %v6114 = vpop.f32.mrb[0].mxu0
  %v6115 = vadd.f32 0.0, %v6114
  %v6116 = vpop.f32.mrb[0].mxu0
  %v6117 = vadd.f32 0.0, %v6116
  %v6118 = vpop.f32.mrb[0].mxu0
  %v6119 = vadd.f32 0.0, %v6118
  %v6120 = vpop.f32.mrb[0].mxu0
  %v6121 = vadd.f32 0.0, %v6120
  %6122 = vmatprep.mubr.bf16.mxu0 %v3908
  %6123 = vmatmul.mubr.bf16.gmra.mrb[0].mxu0 %v2730
  %v6124 = vpop.f32.mrb[0].mxu0
  %v6125 = vadd.f32 0.0, %v6124
  %v6126 = vpop.f32.mrb[0].mxu0
  %v6127 = vadd.f32 0.0, %v6126
  %v6128 = vpop.f32.mrb[0].mxu0
  %v6129 = vadd.f32 0.0, %v6128
  %v6130 = vpop.f32.mrb[0].mxu0
  %v6131 = vadd.f32 0.0, %v6130
  %6132 = vmatprep.mubr.bf16.mxu0 %v3911
  %6133 = vmatmul.mubr.bf16.gmra.mrb[0].mxu0 %v2732
  %v6134 = vpop.f32.mrb[0].mxu0
  %v6135 = vadd.f32 0.0, %v6134
  %v6136 = vpop.f32.mrb[0].mxu0
  %v6137 = vadd.f32 0.0, %v6136
  %v6138 = vpop.f32.mrb[0].mxu0
  %v6139 = vadd.f32 0.0, %v6138
  %v6140 = vpop.f32.mrb[0].mxu0
  %v6141 = vadd.f32 0.0, %v6140
  %6142 = vmatprep.mubr.bf16.mxu0 %v3914
  %6143 = vmatmul.mubr.bf16.gmra.mrb[0].mxu0 %v2734
  %v6144 = vpop.f32.mrb[0].mxu0
  %v6145 = vadd.f32 0.0, %v6144
  %v6146 = vpop.f32.mrb[0].mxu0
  %v6147 = vadd.f32 0.0, %v6146
  %v6148 = vpop.f32.mrb[0].mxu0
  %v6149 = vadd.f32 0.0, %v6148
  %v6150 = vpop.f32.mrb[0].mxu0
  %v6151 = vadd.f32 0.0, %v6150
  %6152 = vmatprep.mubr.bf16.mxu0 %v3917
  %6153 = vmatmul.mubr.bf16.gmra.mrb[0].mxu0 %v2736
  %v6154 = vpop.f32.mrb[0].mxu0
  %v6155 = vadd.f32 0.0, %v6154
  %v6156 = vpop.f32.mrb[0].mxu0
  %v6157 = vadd.f32 0.0, %v6156
  %v6158 = vpop.f32.mrb[0].mxu0
  %v6159 = vadd.f32 0.0, %v6158
  %v6160 = vpop.f32.mrb[0].mxu0
  %v6161 = vadd.f32 0.0, %v6160
  %6162 = vmatprep.mubr.bf16.mxu0 %v3920
  %6163 = vmatmul.mubr.bf16.gmra.mrb[0].mxu0 %v2738
  %v6164 = vpop.f32.mrb[0].mxu0
  %v6165 = vadd.f32 0.0, %v6164
  %v6166 = vpop.f32.mrb[0].mxu0
  %v6167 = vadd.f32 0.0, %v6166
  %v6168 = vpop.f32.mrb[0].mxu0
  %v6169 = vadd.f32 0.0, %v6168
  %v6170 = vpop.f32.mrb[0].mxu0
  %v6171 = vadd.f32 0.0, %v6170
  %6172 = vmatprep.mubr.bf16.mxu0 %v3923
  %6173 = vmatmul.mubr.bf16.gmra.mrb[0].mxu0 %v2740
  %v6174 = vpop.f32.mrb[0].mxu0
  %v6175 = vadd.f32 0.0, %v6174
  %v6176 = vpop.f32.mrb[0].mxu0
  %v6177 = vadd.f32 0.0, %v6176
  %v6178 = vpop.f32.mrb[0].mxu0
  %v6179 = vadd.f32 0.0, %v6178
  %v6180 = vpop.f32.mrb[0].mxu0
  %v6181 = vadd.f32 0.0, %v6180
  %6182 = vmatprep.mubr.bf16.mxu0 %v3926
  %6183 = vmatmul.mubr.bf16.gmra.mrb[0].mxu0 %v2742
  %v6184 = vpop.f32.mrb[0].mxu0
  %v6185 = vadd.f32 0.0, %v6184
  %v6186 = vpop.f32.mrb[0].mxu0
  %v6187 = vadd.f32 0.0, %v6186
  %v6188 = vpop.f32.mrb[0].mxu0
  %v6189 = vadd.f32 0.0, %v6188
  %v6190 = vpop.f32.mrb[0].mxu0
  %v6191 = vadd.f32 0.0, %v6190
  %6192 = vmatprep.mubr.bf16.mxu0 %v3929
  %6193 = vmatmul.mubr.bf16.gmra.mrb[0].mxu0 %v2744
  %v6194 = vpop.f32.mrb[0].mxu0
  %v6195 = vadd.f32 0.0, %v6194
  %v6196 = vpop.f32.mrb[0].mxu0
  %v6197 = vadd.f32 0.0, %v6196
  %v6198 = vpop.f32.mrb[0].mxu0
  %v6199 = vadd.f32 0.0, %v6198
  %v6200 = vpop.f32.mrb[0].mxu0
  %v6201 = vadd.f32 0.0, %v6200
  %6202 = vmatprep.mubr.bf16.mxu0 %v3932
  %6203 = vmatmul.mubr.bf16.gmra.mrb[0].mxu0 %v2746
  %v6204 = vpop.f32.mrb[0].mxu0
  %v6205 = vadd.f32 0.0, %v6204
  %v6206 = vpop.f32.mrb[0].mxu0
  %v6207 = vadd.f32 0.0, %v6206
  %v6208 = vpop.f32.mrb[0].mxu0
  %v6209 = vadd.f32 0.0, %v6208
  %v6210 = vpop.f32.mrb[0].mxu0
  %v6211 = vadd.f32 0.0, %v6210
  %6212 = vmatprep.mubr.bf16.mxu0 %v3935
  %6213 = vmatmul.mubr.bf16.gmra.mrb[0].mxu0 %v2748
  %v6214 = vpop.f32.mrb[0].mxu0
  %v6215 = vadd.f32 0.0, %v6214
  %v6216 = vpop.f32.mrb[0].mxu0
  %v6217 = vadd.f32 0.0, %v6216
  %v6218 = vpop.f32.mrb[0].mxu0
  %v6219 = vadd.f32 0.0, %v6218
  %v6220 = vpop.f32.mrb[0].mxu0
  %v6221 = vadd.f32 0.0, %v6220
  %6222 = vmatprep.mubr.bf16.mxu0 %v3938
  %6223 = vmatmul.mubr.bf16.gmra.mrb[0].mxu0 %v2750
  %v6224 = vpop.f32.mrb[0].mxu0
  %v6225 = vadd.f32 0.0, %v6224
  %v6226 = vpop.f32.mrb[0].mxu0
  %v6227 = vadd.f32 0.0, %v6226
  %v6228 = vpop.f32.mrb[0].mxu0
  %v6229 = vadd.f32 0.0, %v6228
  %v6230 = vpop.f32.mrb[0].mxu0
  %v6231 = vadd.f32 0.0, %v6230
  %6232 = vmatprep.mubr.bf16.mxu0 %v3941
  %6233 = vmatmul.mubr.bf16.gmra.mrb[0].mxu0 %v2752
  %v6234 = vpop.f32.mrb[0].mxu0
  %v6235 = vadd.f32 0.0, %v6234
  %v6236 = vpop.f32.mrb[0].mxu0
  %v6237 = vadd.f32 0.0, %v6236
  %v6238 = vpop.f32.mrb[0].mxu0
  %v6239 = vadd.f32 0.0, %v6238
  %v6240 = vpop.f32.mrb[0].mxu0
  %v6241 = vadd.f32 0.0, %v6240
  %6242 = vmatprep.mubr.bf16.mxu0 %v3944
  %6243 = vmatmul.mubr.bf16.gmra.mrb[0].mxu0 %v2754
  %v6244 = vpop.f32.mrb[0].mxu0
  %v6245 = vadd.f32 0.0, %v6244
  %v6246 = vpop.f32.mrb[0].mxu0
  %v6247 = vadd.f32 0.0, %v6246
  %v6248 = vpop.f32.mrb[0].mxu0
  %v6249 = vadd.f32 0.0, %v6248
  %v6250 = vpop.f32.mrb[0].mxu0
  %v6251 = vadd.f32 0.0, %v6250
  %6252 = vmatprep.mubr.bf16.mxu0 %v3947
  %6253 = vmatmul.mubr.bf16.gmra.mrb[0].mxu0 %v2756
  %v6254 = vpop.f32.mrb[0].mxu0
  %v6255 = vadd.f32 0.0, %v6254
  %v6256 = vpop.f32.mrb[0].mxu0
  %v6257 = vadd.f32 0.0, %v6256
  %v6258 = vpop.f32.mrb[0].mxu0
  %v6259 = vadd.f32 0.0, %v6258
  %v6260 = vpop.f32.mrb[0].mxu0
  %v6261 = vadd.f32 0.0, %v6260
  %6262 = vmatprep.mubr.bf16.mxu0 %v3950
  %6263 = vmatmul.mubr.bf16.gmra.mrb[0].mxu0 %v2758
  %v6264 = vpop.f32.mrb[0].mxu0
  %v6265 = vadd.f32 0.0, %v6264
  %v6266 = vpop.f32.mrb[0].mxu0
  %v6267 = vadd.f32 0.0, %v6266
  %v6268 = vpop.f32.mrb[0].mxu0
  %v6269 = vadd.f32 0.0, %v6268
  %v6270 = vpop.f32.mrb[0].mxu0
  %v6271 = vadd.f32 0.0, %v6270
  %6272 = vmatprep.mubr.bf16.mxu0 %v3953
  %6273 = vmatmul.mubr.bf16.gmra.mrb[0].mxu0 %v2760
  %v6274 = vpop.f32.mrb[0].mxu0
  %v6275 = vadd.f32 0.0, %v6274
  %v6276 = vpop.f32.mrb[0].mxu0
  %v6277 = vadd.f32 0.0, %v6276
  %v6278 = vpop.f32.mrb[0].mxu0
  %v6279 = vadd.f32 0.0, %v6278
  %v6280 = vpop.f32.mrb[0].mxu0
  %v6281 = vadd.f32 0.0, %v6280
  %6282 = vmatprep.mubr.bf16.mxu0 %v3956
  %6283 = vmatmul.mubr.bf16.gmra.mrb[0].mxu0 %v2762
  %v6284 = vpop.f32.mrb[0].mxu0
  %v6285 = vadd.f32 0.0, %v6284
  %v6286 = vpop.f32.mrb[0].mxu0
  %v6287 = vadd.f32 0.0, %v6286
  %v6288 = vpop.f32.mrb[0].mxu0
  %v6289 = vadd.f32 0.0, %v6288
  %v6290 = vpop.f32.mrb[0].mxu0
  %v6291 = vadd.f32 0.0, %v6290
  %6292 = vmatprep.mubr.bf16.mxu0 %v3959
  %6293 = vmatmul.mubr.bf16.gmra.mrb[0].mxu0 %v2764
  %v6294 = vpop.f32.mrb[0].mxu0
  %v6295 = vadd.f32 0.0, %v6294
  %v6296 = vpop.f32.mrb[0].mxu0
  %v6297 = vadd.f32 0.0, %v6296
  %v6298 = vpop.f32.mrb[0].mxu0
  %v6299 = vadd.f32 0.0, %v6298
  %v6300 = vpop.f32.mrb[0].mxu0
  %v6301 = vadd.f32 0.0, %v6300
  %6302 = vmatprep.mubr.bf16.mxu0 %v3962
  %6303 = vmatmul.mubr.bf16.gmra.mrb[0].mxu0 %v2766
  %v6304 = vpop.f32.mrb[0].mxu0
  %v6305 = vadd.f32 0.0, %v6304
  %v6306 = vpop.f32.mrb[0].mxu0
  %v6307 = vadd.f32 0.0, %v6306
  %v6308 = vpop.f32.mrb[0].mxu0
  %v6309 = vadd.f32 0.0, %v6308
  %v6310 = vpop.f32.mrb[0].mxu0
  %v6311 = vadd.f32 0.0, %v6310
  %6312 = vmatprep.mubr.bf16.mxu0 %v3965
  %6313 = vmatmul.mubr.bf16.gmra.mrb[0].mxu0 %v2768
  %v6314 = vpop.f32.mrb[0].mxu0
  %v6315 = vadd.f32 0.0, %v6314
  %v6316 = vpop.f32.mrb[0].mxu0
  %v6317 = vadd.f32 0.0, %v6316
  %v6318 = vpop.f32.mrb[0].mxu0
  %v6319 = vadd.f32 0.0, %v6318
  %v6320 = vpop.f32.mrb[0].mxu0
  %v6321 = vadd.f32 0.0, %v6320
  %6322 = vmatprep.mubr.bf16.mxu0 %v3968
  %6323 = vmatmul.mubr.bf16.gmra.mrb[0].mxu0 %v2770
  %v6324 = vpop.f32.mrb[0].mxu0
  %v6325 = vadd.f32 0.0, %v6324
  %v6326 = vpop.f32.mrb[0].mxu0
  %v6327 = vadd.f32 0.0, %v6326
  %v6328 = vpop.f32.mrb[0].mxu0
  %v6329 = vadd.f32 0.0, %v6328
  %v6330 = vpop.f32.mrb[0].mxu0
  %v6331 = vadd.f32 0.0, %v6330
  %6332 = vmatprep.mubr.bf16.mxu0 %v3971
  %6333 = vmatmul.mubr.bf16.gmra.mrb[0].mxu0 %v2772
  %v6334 = vpop.f32.mrb[0].mxu0
  %v6335 = vadd.f32 0.0, %v6334
  %v6336 = vpop.f32.mrb[0].mxu0
  %v6337 = vadd.f32 0.0, %v6336
  %v6338 = vpop.f32.mrb[0].mxu0
  %v6339 = vadd.f32 0.0, %v6338
  %v6340 = vpop.f32.mrb[0].mxu0
  %v6341 = vadd.f32 0.0, %v6340
  %6342 = vmatprep.mubr.bf16.mxu0 %v3974
  %6343 = vmatmul.mubr.bf16.gmra.mrb[0].mxu0 %v2774
  %v6344 = vpop.f32.mrb[0].mxu0
  %v6345 = vadd.f32 0.0, %v6344
  %v6346 = vpop.f32.mrb[0].mxu0
  %v6347 = vadd.f32 0.0, %v6346
  %v6348 = vpop.f32.mrb[0].mxu0
  %v6349 = vadd.f32 0.0, %v6348
  %v6350 = vpop.f32.mrb[0].mxu0
  %v6351 = vadd.f32 0.0, %v6350
  %6352 = vmatprep.mubr.bf16.mxu0 %v3977
  %6353 = vmatmul.mubr.bf16.gmra.mrb[0].mxu0 %v2776
  %v6354 = vpop.f32.mrb[0].mxu0
  %v6355 = vadd.f32 0.0, %v6354
  %v6356 = vpop.f32.mrb[0].mxu0
  %v6357 = vadd.f32 0.0, %v6356
  %v6358 = vpop.f32.mrb[0].mxu0
  %v6359 = vadd.f32 0.0, %v6358
  %v6360 = vpop.f32.mrb[0].mxu0
  %v6361 = vadd.f32 0.0, %v6360
  %6362 = vmatprep.mubr.bf16.mxu0 %v3980
  %6363 = vmatmul.mubr.bf16.gmra.mrb[0].mxu0 %v2778
  %v6364 = vpop.f32.mrb[0].mxu0
  %v6365 = vadd.f32 0.0, %v6364
  %v6366 = vpop.f32.mrb[0].mxu0
  %v6367 = vadd.f32 0.0, %v6366
  %v6368 = vpop.f32.mrb[0].mxu0
  %v6369 = vadd.f32 0.0, %v6368
  %v6370 = vpop.f32.mrb[0].mxu0
  %v6371 = vadd.f32 0.0, %v6370
  %6372 = vmatprep.mubr.bf16.mxu0 %v3983
  %6373 = vmatmul.mubr.bf16.gmra.mrb[0].mxu0 %v2780
  %v6374 = vpop.f32.mrb[0].mxu0
  %v6375 = vadd.f32 0.0, %v6374
  %v6376 = vpop.f32.mrb[0].mxu0
  %v6377 = vadd.f32 0.0, %v6376
  %v6378 = vpop.f32.mrb[0].mxu0
  %v6379 = vadd.f32 0.0, %v6378
  %v6380 = vpop.f32.mrb[0].mxu0
  %v6381 = vadd.f32 0.0, %v6380
  %6382 = vmatprep.mubr.bf16.mxu0 %v3986
  %6383 = vmatmul.mubr.bf16.gmra.mrb[0].mxu0 %v2782
  %v6384 = vpop.f32.mrb[0].mxu0
  %v6385 = vadd.f32 0.0, %v6384
  %v6386 = vpop.f32.mrb[0].mxu0
  %v6387 = vadd.f32 0.0, %v6386
  %v6388 = vpop.f32.mrb[0].mxu0
  %v6389 = vadd.f32 0.0, %v6388
  %v6390 = vpop.f32.mrb[0].mxu0
  %v6391 = vadd.f32 0.0, %v6390
  %6392 = vmatprep.mubr.bf16.mxu0 %v3989
  %6393 = vmatmul.mubr.bf16.gmra.mrb[0].mxu0 %v2784
  %v6394 = vpop.f32.mrb[0].mxu0
  %v6395 = vadd.f32 0.0, %v6394
  %v6396 = vpop.f32.mrb[0].mxu0
  %v6397 = vadd.f32 0.0, %v6396
  %v6398 = vpop.f32.mrb[0].mxu0
  %v6399 = vadd.f32 0.0, %v6398
  %v6400 = vpop.f32.mrb[0].mxu0
  %v6401 = vadd.f32 0.0, %v6400
  %6402 = vmatprep.mubr.bf16.mxu0 %v3992
  %6403 = vmatmul.mubr.bf16.gmra.mrb[0].mxu0 %v2786
  %v6404 = vpop.f32.mrb[0].mxu0
  %v6405 = vadd.f32 0.0, %v6404
  %v6406 = vpop.f32.mrb[0].mxu0
  %v6407 = vadd.f32 0.0, %v6406
  %v6408 = vpop.f32.mrb[0].mxu0
  %v6409 = vadd.f32 0.0, %v6408
  %v6410 = vpop.f32.mrb[0].mxu0
  %v6411 = vadd.f32 0.0, %v6410
  %6412 = vmatprep.mubr.bf16.mxu0 %v3995
  %6413 = vmatmul.mubr.bf16.gmra.mrb[0].mxu0 %v2788
  %v6414 = vpop.f32.mrb[0].mxu0
  %v6415 = vadd.f32 0.0, %v6414
  %v6416 = vpop.f32.mrb[0].mxu0
  %v6417 = vadd.f32 0.0, %v6416
  %v6418 = vpop.f32.mrb[0].mxu0
  %v6419 = vadd.f32 0.0, %v6418
  %v6420 = vpop.f32.mrb[0].mxu0
  %v6421 = vadd.f32 0.0, %v6420
  %6422 = vmatprep.mubr.bf16.mxu0 %v3998
  %6423 = vmatmul.mubr.bf16.gmra.mrb[0].mxu0 %v2790
  %v6424 = vpop.f32.mrb[0].mxu0
  %v6425 = vadd.f32 0.0, %v6424
  %v6426 = vpop.f32.mrb[0].mxu0
  %v6427 = vadd.f32 0.0, %v6426
  %v6428 = vpop.f32.mrb[0].mxu0
  %v6429 = vadd.f32 0.0, %v6428
  %v6430 = vpop.f32.mrb[0].mxu0
  %v6431 = vadd.f32 0.0, %v6430
  %6432 = vmatprep.mubr.bf16.mxu0 %v4001
  %6433 = vmatmul.mubr.bf16.gmra.mrb[0].mxu0 %v2792
  %v6434 = vpop.f32.mrb[0].mxu0
  %v6435 = vadd.f32 0.0, %v6434
  %v6436 = vpop.f32.mrb[0].mxu0
  %v6437 = vadd.f32 0.0, %v6436
  %v6438 = vpop.f32.mrb[0].mxu0
  %v6439 = vadd.f32 0.0, %v6438
  %v6440 = vpop.f32.mrb[0].mxu0
  %v6441 = vadd.f32 0.0, %v6440
  %6442 = vmatprep.mubr.bf16.mxu0 %v4004
  %6443 = vmatmul.mubr.bf16.gmra.mrb[0].mxu0 %v2794
  %v6444 = vpop.f32.mrb[0].mxu0
  %v6445 = vadd.f32 0.0, %v6444
  %v6446 = vpop.f32.mrb[0].mxu0
  %v6447 = vadd.f32 0.0, %v6446
  %v6448 = vpop.f32.mrb[0].mxu0
  %v6449 = vadd.f32 0.0, %v6448
  %v6450 = vpop.f32.mrb[0].mxu0
  %v6451 = vadd.f32 0.0, %v6450
  %6452 = vmatprep.mubr.bf16.mxu0 %v4007
  %6453 = vmatmul.mubr.bf16.gmra.mrb[0].mxu0 %v2796
  %v6454 = vpop.f32.mrb[0].mxu0
  %v6455 = vadd.f32 0.0, %v6454
  %v6456 = vpop.f32.mrb[0].mxu0
  %v6457 = vadd.f32 0.0, %v6456
  %v6458 = vpop.f32.mrb[0].mxu0
  %v6459 = vadd.f32 0.0, %v6458
  %v6460 = vpop.f32.mrb[0].mxu0
  %v6461 = vadd.f32 0.0, %v6460
  %6462 = vmatprep.mubr.bf16.mxu0 %v4010
  %6463 = vmatmul.mubr.bf16.gmra.mrb[0].mxu0 %v2798
  %v6464 = vpop.f32.mrb[0].mxu0
  %v6465 = vadd.f32 0.0, %v6464
  %v6466 = vpop.f32.mrb[0].mxu0
  %v6467 = vadd.f32 0.0, %v6466
  %v6468 = vpop.f32.mrb[0].mxu0
  %v6469 = vadd.f32 0.0, %v6468
  %v6470 = vpop.f32.mrb[0].mxu0
  %v6471 = vadd.f32 0.0, %v6470
  %6472 = vmatprep.mubr.bf16.mxu0 %v4013
  %6473 = vmatmul.mubr.bf16.gmra.mrb[0].mxu0 %v2800
  %v6474 = vpop.f32.mrb[0].mxu0
  %v6475 = vadd.f32 0.0, %v6474
  %v6476 = vpop.f32.mrb[0].mxu0
  %v6477 = vadd.f32 0.0, %v6476
  %v6478 = vpop.f32.mrb[0].mxu0
  %v6479 = vadd.f32 0.0, %v6478
  %v6480 = vpop.f32.mrb[0].mxu0
  %v6481 = vadd.f32 0.0, %v6480
  %6482 = vmatprep.mubr.bf16.mxu0 %v4016
  %6483 = vmatmul.mubr.bf16.gmra.mrb[0].mxu0 %v2802
  %v6484 = vpop.f32.mrb[0].mxu0
  %v6485 = vadd.f32 0.0, %v6484
  %v6486 = vpop.f32.mrb[0].mxu0
  %v6487 = vadd.f32 0.0, %v6486
  %v6488 = vpop.f32.mrb[0].mxu0
  %v6489 = vadd.f32 0.0, %v6488
  %v6490 = vpop.f32.mrb[0].mxu0
  %v6491 = vadd.f32 0.0, %v6490
  %6492 = vmatprep.mubr.bf16.mxu0 %v4019
  %6493 = vmatmul.mubr.bf16.gmra.mrb[0].mxu0 %v2804
  %v6494 = vpop.f32.mrb[0].mxu0
  %v6495 = vadd.f32 0.0, %v6494
  %v6496 = vpop.f32.mrb[0].mxu0
  %v6497 = vadd.f32 0.0, %v6496
  %v6498 = vpop.f32.mrb[0].mxu0
  %v6499 = vadd.f32 0.0, %v6498
  %v6500 = vpop.f32.mrb[0].mxu0
  %v6501 = vadd.f32 0.0, %v6500
  %6502 = vmatprep.mubr.bf16.mxu0 %v4022
  %6503 = vmatmul.mubr.bf16.gmra.mrb[0].mxu0 %v2806
  %v6504 = vpop.f32.mrb[0].mxu0
  %v6505 = vadd.f32 0.0, %v6504
  %v6506 = vpop.f32.mrb[0].mxu0
  %v6507 = vadd.f32 0.0, %v6506
  %v6508 = vpop.f32.mrb[0].mxu0
  %v6509 = vadd.f32 0.0, %v6508
  %v6510 = vpop.f32.mrb[0].mxu0
  %v6511 = vadd.f32 0.0, %v6510
  %6512 = vmatprep.mubr.bf16.mxu0 %v4025
  %6513 = vmatmul.mubr.bf16.gmra.mrb[0].mxu0 %v2808
  %v6514 = vpop.f32.mrb[0].mxu0
  %v6515 = vadd.f32 0.0, %v6514
  %v6516 = vpop.f32.mrb[0].mxu0
  %v6517 = vadd.f32 0.0, %v6516
  %v6518 = vpop.f32.mrb[0].mxu0
  %v6519 = vadd.f32 0.0, %v6518
  %v6520 = vpop.f32.mrb[0].mxu0
  %v6521 = vadd.f32 0.0, %v6520
  %6522 = vmatprep.mubr.bf16.mxu0 %v4028
  %6523 = vmatmul.mubr.bf16.gmra.mrb[0].mxu0 %v2810
  %v6524 = vpop.f32.mrb[0].mxu0
  %v6525 = vadd.f32 0.0, %v6524
  %v6526 = vpop.f32.mrb[0].mxu0
  %v6527 = vadd.f32 0.0, %v6526
  %v6528 = vpop.f32.mrb[0].mxu0
  %v6529 = vadd.f32 0.0, %v6528
  %v6530 = vpop.f32.mrb[0].mxu0
  %v6531 = vadd.f32 0.0, %v6530
  %6532 = vmatprep.mubr.bf16.mxu0 %v4031
  %6533 = vmatmul.mubr.bf16.gmra.mrb[0].mxu0 %v2812
  %v6534 = vpop.f32.mrb[0].mxu0
  %v6535 = vadd.f32 0.0, %v6534
  %v6536 = vpop.f32.mrb[0].mxu0
  %v6537 = vadd.f32 0.0, %v6536
  %v6538 = vpop.f32.mrb[0].mxu0
  %v6539 = vadd.f32 0.0, %v6538
  %v6540 = vpop.f32.mrb[0].mxu0
  %v6541 = vadd.f32 0.0, %v6540
  %6542 = vmatprep.mubr.bf16.mxu0 %v4034
  %6543 = vmatmul.mubr.bf16.gmra.mrb[0].mxu0 %v2814
  %v6544 = vpop.f32.mrb[0].mxu0
  %v6545 = vadd.f32 0.0, %v6544
  %v6546 = vpop.f32.mrb[0].mxu0
  %v6547 = vadd.f32 0.0, %v6546
  %v6548 = vpop.f32.mrb[0].mxu0
  %v6549 = vadd.f32 0.0, %v6548
  %v6550 = vpop.f32.mrb[0].mxu0
  %v6551 = vadd.f32 0.0, %v6550
  %6552 = vmatprep.mubr.bf16.mxu0 %v4037
  %6553 = vmatmul.mubr.bf16.gmra.mrb[0].mxu0 %v2816
  %v6554 = vpop.f32.mrb[0].mxu0
  %v6555 = vadd.f32 0.0, %v6554
  %v6556 = vpop.f32.mrb[0].mxu0
  %v6557 = vadd.f32 0.0, %v6556
  %v6558 = vpop.f32.mrb[0].mxu0
  %v6559 = vadd.f32 0.0, %v6558
  %v6560 = vpop.f32.mrb[0].mxu0
  %v6561 = vadd.f32 0.0, %v6560
  %6562 = vmatprep.mubr.bf16.mxu0 %v4040
  %6563 = vmatmul.mubr.bf16.gmra.mrb[0].mxu0 %v2818
  %v6564 = vpop.f32.mrb[0].mxu0
  %v6565 = vadd.f32 0.0, %v6564
  %v6566 = vpop.f32.mrb[0].mxu0
  %v6567 = vadd.f32 0.0, %v6566
  %v6568 = vpop.f32.mrb[0].mxu0
  %v6569 = vadd.f32 0.0, %v6568
  %v6570 = vpop.f32.mrb[0].mxu0
  %v6571 = vadd.f32 0.0, %v6570
  %6572 = vmatprep.mubr.bf16.mxu0 %v4043
  %6573 = vmatmul.mubr.bf16.gmra.mrb[0].mxu0 %v2820
  %v6574 = vpop.f32.mrb[0].mxu0
  %v6575 = vadd.f32 0.0, %v6574
  %v6576 = vpop.f32.mrb[0].mxu0
  %v6577 = vadd.f32 0.0, %v6576
  %v6578 = vpop.f32.mrb[0].mxu0
  %v6579 = vadd.f32 0.0, %v6578
  %v6580 = vpop.f32.mrb[0].mxu0
  %v6581 = vadd.f32 0.0, %v6580
  %6582 = vmatprep.mubr.bf16.mxu0 %v4046
  %6583 = vmatmul.mubr.bf16.gmra.mrb[0].mxu0 %v2822
  %v6584 = vpop.f32.mrb[0].mxu0
  %v6585 = vadd.f32 0.0, %v6584
  %v6586 = vpop.f32.mrb[0].mxu0
  %v6587 = vadd.f32 0.0, %v6586
  %v6588 = vpop.f32.mrb[0].mxu0
  %v6589 = vadd.f32 0.0, %v6588
  %v6590 = vpop.f32.mrb[0].mxu0
  %v6591 = vadd.f32 0.0, %v6590
  %6592 = vmatprep.mubr.bf16.mxu0 %v4049
  %6593 = vmatmul.mubr.bf16.gmra.mrb[0].mxu0 %v2824
  %v6594 = vpop.f32.mrb[0].mxu0
  %v6595 = vadd.f32 0.0, %v6594
  %v6596 = vpop.f32.mrb[0].mxu0
  %v6597 = vadd.f32 0.0, %v6596
  %v6598 = vpop.f32.mrb[0].mxu0
  %v6599 = vadd.f32 0.0, %v6598
  %v6600 = vpop.f32.mrb[0].mxu0
  %v6601 = vadd.f32 0.0, %v6600
  %6602 = vmatprep.mubr.bf16.mxu0 %v4052
  %6603 = vmatmul.mubr.bf16.gmra.mrb[0].mxu0 %v2826
  %v6604 = vpop.f32.mrb[0].mxu0
  %v6605 = vadd.f32 0.0, %v6604
  %v6606 = vpop.f32.mrb[0].mxu0
  %v6607 = vadd.f32 0.0, %v6606
  %v6608 = vpop.f32.mrb[0].mxu0
  %v6609 = vadd.f32 0.0, %v6608
  %v6610 = vpop.f32.mrb[0].mxu0
  %v6611 = vadd.f32 0.0, %v6610
  %6612 = vmatprep.mubr.bf16.mxu0 %v4055
  %6613 = vmatmul.mubr.bf16.gmra.mrb[0].mxu0 %v2828
  %v6614 = vpop.f32.mrb[0].mxu0
  %v6615 = vadd.f32 0.0, %v6614
  %v6616 = vpop.f32.mrb[0].mxu0
  %v6617 = vadd.f32 0.0, %v6616
  %v6618 = vpop.f32.mrb[0].mxu0
  %v6619 = vadd.f32 0.0, %v6618
  %v6620 = vpop.f32.mrb[0].mxu0
  %v6621 = vadd.f32 0.0, %v6620
  %6622 = vmatprep.mubr.bf16.mxu0 %v4058
  %6623 = vmatmul.mubr.bf16.gmra.mrb[0].mxu0 %v2830
  %v6624 = vpop.f32.mrb[0].mxu0
  %v6625 = vadd.f32 0.0, %v6624
  %v6626 = vpop.f32.mrb[0].mxu0
  %v6627 = vadd.f32 0.0, %v6626
  %v6628 = vpop.f32.mrb[0].mxu0
  %v6629 = vadd.f32 0.0, %v6628
  %v6630 = vpop.f32.mrb[0].mxu0
  %v6631 = vadd.f32 0.0, %v6630
  %6632 = vmatprep.mubr.bf16.mxu0 %v4061
  %6633 = vmatmul.mubr.bf16.gmra.mrb[0].mxu0 %v2832
  %v6634 = vpop.f32.mrb[0].mxu0
  %v6635 = vadd.f32 0.0, %v6634
  %v6636 = vpop.f32.mrb[0].mxu0
  %v6637 = vadd.f32 0.0, %v6636
  %v6638 = vpop.f32.mrb[0].mxu0
  %v6639 = vadd.f32 0.0, %v6638
  %v6640 = vpop.f32.mrb[0].mxu0
  %v6641 = vadd.f32 0.0, %v6640
  %6642 = vmatprep.mubr.bf16.mxu0 %v4064
  %6643 = vmatmul.mubr.bf16.gmra.mrb[0].mxu0 %v2834
  %v6644 = vpop.f32.mrb[0].mxu0
  %v6645 = vadd.f32 0.0, %v6644
  %v6646 = vpop.f32.mrb[0].mxu0
  %v6647 = vadd.f32 0.0, %v6646
  %v6648 = vpop.f32.mrb[0].mxu0
  %v6649 = vadd.f32 0.0, %v6648
  %v6650 = vpop.f32.mrb[0].mxu0
  %v6651 = vadd.f32 0.0, %v6650
  %6652 = vmatprep.mubr.bf16.mxu0 %v4067
  %6653 = vmatmul.mubr.bf16.gmra.mrb[0].mxu0 %v2836
  %v6654 = vpop.f32.mrb[0].mxu0
  %v6655 = vadd.f32 0.0, %v6654
  %v6656 = vpop.f32.mrb[0].mxu0
  %v6657 = vadd.f32 0.0, %v6656
  %v6658 = vpop.f32.mrb[0].mxu0
  %v6659 = vadd.f32 0.0, %v6658
  %v6660 = vpop.f32.mrb[0].mxu0
  %v6661 = vadd.f32 0.0, %v6660
  %6662 = vmatprep.mubr.bf16.mxu0 %v4070
  %6663 = vmatmul.mubr.bf16.gmra.mrb[0].mxu0 %v2838
  %v6664 = vpop.f32.mrb[0].mxu0
  %v6665 = vadd.f32 0.0, %v6664
  %v6666 = vpop.f32.mrb[0].mxu0
  %v6667 = vadd.f32 0.0, %v6666
  %v6668 = vpop.f32.mrb[0].mxu0
  %v6669 = vadd.f32 0.0, %v6668
  %v6670 = vpop.f32.mrb[0].mxu0
  %v6671 = vadd.f32 0.0, %v6670
  %6672 = vmatprep.mubr.bf16.mxu0 %v4073
  %6673 = vmatmul.mubr.bf16.gmra.mrb[0].mxu0 %v2840
  %v6674 = vpop.f32.mrb[0].mxu0
  %v6675 = vadd.f32 0.0, %v6674
  %v6676 = vpop.f32.mrb[0].mxu0
  %v6677 = vadd.f32 0.0, %v6676
  %v6678 = vpop.f32.mrb[0].mxu0
  %v6679 = vadd.f32 0.0, %v6678
  %v6680 = vpop.f32.mrb[0].mxu0
  %v6681 = vadd.f32 0.0, %v6680
  %6682 = vmatprep.mubr.bf16.mxu0 %v4076
  %6683 = vmatmul.mubr.bf16.gmra.mrb[0].mxu0 %v2842
  %v6684 = vpop.f32.mrb[0].mxu0
  %v6685 = vadd.f32 0.0, %v6684
  %v6686 = vpop.f32.mrb[0].mxu0
  %v6687 = vadd.f32 0.0, %v6686
  %v6688 = vpop.f32.mrb[0].mxu0
  %v6689 = vadd.f32 0.0, %v6688
  %v6690 = vpop.f32.mrb[0].mxu0
  %v6691 = vadd.f32 0.0, %v6690
  %6692 = vmatprep.mubr.bf16.mxu0 %v4079
  %6693 = vmatmul.mubr.bf16.gmra.mrb[0].mxu0 %v2844
  %v6694 = vpop.f32.mrb[0].mxu0
  %v6695 = vadd.f32 0.0, %v6694
  %v6696 = vpop.f32.mrb[0].mxu0
  %v6697 = vadd.f32 0.0, %v6696
  %v6698 = vpop.f32.mrb[0].mxu0
  %v6699 = vadd.f32 0.0, %v6698
  %v6700 = vpop.f32.mrb[0].mxu0
  %v6701 = vadd.f32 0.0, %v6700
  %6702 = vmatprep.mubr.bf16.mxu0 %v4082
  %6703 = vmatmul.mubr.bf16.gmra.mrb[0].mxu0 %v2846
  %v6704 = vpop.f32.mrb[0].mxu0
  %v6705 = vadd.f32 0.0, %v6704
  %v6706 = vpop.f32.mrb[0].mxu0
  %v6707 = vadd.f32 0.0, %v6706
  %v6708 = vpop.f32.mrb[0].mxu0
  %v6709 = vadd.f32 0.0, %v6708
  %v6710 = vpop.f32.mrb[0].mxu0
  %v6711 = vadd.f32 0.0, %v6710
  %6712 = vmatprep.mubr.bf16.mxu0 %v4085
  %6713 = vmatmul.mubr.bf16.gmra.mrb[0].mxu0 %v2848
  %v6714 = vpop.f32.mrb[0].mxu0
  %v6715 = vadd.f32 0.0, %v6714
  %v6716 = vpop.f32.mrb[0].mxu0
  %v6717 = vadd.f32 0.0, %v6716
  %v6718 = vpop.f32.mrb[0].mxu0
  %v6719 = vadd.f32 0.0, %v6718
  %v6720 = vpop.f32.mrb[0].mxu0
  %v6721 = vadd.f32 0.0, %v6720
  %6722 = vmatprep.mubr.bf16.mxu0 %v4088
  %6723 = vmatmul.mubr.bf16.gmra.mrb[0].mxu0 %v2850
  %v6724 = vpop.f32.mrb[0].mxu0
  %v6725 = vadd.f32 0.0, %v6724
  %v6726 = vpop.f32.mrb[0].mxu0
  %v6727 = vadd.f32 0.0, %v6726
  %v6728 = vpop.f32.mrb[0].mxu0
  %v6729 = vadd.f32 0.0, %v6728
  %v6730 = vpop.f32.mrb[0].mxu0
  %v6731 = vadd.f32 0.0, %v6730
  %6732 = vmatprep.mubr.bf16.mxu0 %v4091
  %6733 = vmatmul.mubr.bf16.gmra.mrb[0].mxu0 %v2852
  %v6734 = vpop.f32.mrb[0].mxu0
  %v6735 = vadd.f32 0.0, %v6734
  %v6736 = vpop.f32.mrb[0].mxu0
  %v6737 = vadd.f32 0.0, %v6736
  %v6738 = vpop.f32.mrb[0].mxu0
  %v6739 = vadd.f32 0.0, %v6738
  %v6740 = vpop.f32.mrb[0].mxu0
  %v6741 = vadd.f32 0.0, %v6740
  %6742 = vmatprep.mubr.bf16.mxu0 %v4094
  %6743 = vmatmul.mubr.bf16.gmra.mrb[0].mxu0 %v2854
  %v6744 = vpop.f32.mrb[0].mxu0
  %v6745 = vadd.f32 0.0, %v6744
  %v6746 = vpop.f32.mrb[0].mxu0
  %v6747 = vadd.f32 0.0, %v6746
  %v6748 = vpop.f32.mrb[0].mxu0
  %v6749 = vadd.f32 0.0, %v6748
  %v6750 = vpop.f32.mrb[0].mxu0
  %v6751 = vadd.f32 0.0, %v6750
  %6752 = vmatprep.mubr.bf16.mxu0 %v4097
  %6753 = vmatmul.mubr.bf16.gmra.mrb[0].mxu0 %v2856
  %v6754 = vpop.f32.mrb[0].mxu0
  %v6755 = vadd.f32 0.0, %v6754
  %v6756 = vpop.f32.mrb[0].mxu0
  %v6757 = vadd.f32 0.0, %v6756
  %v6758 = vpop.f32.mrb[0].mxu0
  %v6759 = vadd.f32 0.0, %v6758
  %v6760 = vpop.f32.mrb[0].mxu0
  %v6761 = vadd.f32 0.0, %v6760
  %6762 = vmatprep.mubr.bf16.mxu0 %v4100
  %6763 = vmatmul.mubr.bf16.gmra.mrb[0].mxu0 %v2858
  %v6764 = vpop.f32.mrb[0].mxu0
  %v6765 = vadd.f32 0.0, %v6764
  %v6766 = vpop.f32.mrb[0].mxu0
  %v6767 = vadd.f32 0.0, %v6766
  %v6768 = vpop.f32.mrb[0].mxu0
  %v6769 = vadd.f32 0.0, %v6768
  %v6770 = vpop.f32.mrb[0].mxu0
  %v6771 = vadd.f32 0.0, %v6770
  %6772 = vmatprep.mubr.bf16.mxu0 %v4103
  %6773 = vmatmul.mubr.bf16.gmra.mrb[0].mxu0 %v2860
  %v6774 = vpop.f32.mrb[0].mxu0
  %v6775 = vadd.f32 0.0, %v6774
  %v6776 = vpop.f32.mrb[0].mxu0
  %v6777 = vadd.f32 0.0, %v6776
  %v6778 = vpop.f32.mrb[0].mxu0
  %v6779 = vadd.f32 0.0, %v6778
  %v6780 = vpop.f32.mrb[0].mxu0
  %v6781 = vadd.f32 0.0, %v6780
  %6782 = vmatprep.mubr.bf16.mxu0 %v4106
  %6783 = vmatmul.mubr.bf16.gmra.mrb[0].mxu0 %v2862
  %v6784 = vpop.f32.mrb[0].mxu0
  %v6785 = vadd.f32 0.0, %v6784
  %v6786 = vpop.f32.mrb[0].mxu0
  %v6787 = vadd.f32 0.0, %v6786
  %v6788 = vpop.f32.mrb[0].mxu0
  %v6789 = vadd.f32 0.0, %v6788
  %v6790 = vpop.f32.mrb[0].mxu0
  %v6791 = vadd.f32 0.0, %v6790
  %6792 = vmatprep.mubr.bf16.mxu0 %v4109
  %6793 = vmatmul.mubr.bf16.gmra.mrb[0].mxu0 %v2864
  %v6794 = vpop.f32.mrb[0].mxu0
  %v6795 = vadd.f32 0.0, %v6794
  %v6796 = vpop.f32.mrb[0].mxu0
  %v6797 = vadd.f32 0.0, %v6796
  %v6798 = vpop.f32.mrb[0].mxu0
  %v6799 = vadd.f32 0.0, %v6798
  %v6800 = vpop.f32.mrb[0].mxu0
  %v6801 = vadd.f32 0.0, %v6800
  %6802 = vmatprep.mubr.bf16.mxu0 %v4112
  %6803 = vmatmul.mubr.bf16.gmra.mrb[0].mxu0 %v2866
  %v6804 = vpop.f32.mrb[0].mxu0
  %v6805 = vadd.f32 0.0, %v6804
  %v6806 = vpop.f32.mrb[0].mxu0
  %v6807 = vadd.f32 0.0, %v6806
  %v6808 = vpop.f32.mrb[0].mxu0
  %v6809 = vadd.f32 0.0, %v6808
  %v6810 = vpop.f32.mrb[0].mxu0
  %v6811 = vadd.f32 0.0, %v6810
  %6812 = vmatprep.mubr.bf16.mxu0 %v4115
  %6813 = vmatmul.mubr.bf16.gmra.mrb[0].mxu0 %v2868
  %v6814 = vpop.f32.mrb[0].mxu0
  %v6815 = vadd.f32 0.0, %v6814
  %v6816 = vpop.f32.mrb[0].mxu0
  %v6817 = vadd.f32 0.0, %v6816
  %v6818 = vpop.f32.mrb[0].mxu0
  %v6819 = vadd.f32 0.0, %v6818
  %v6820 = vpop.f32.mrb[0].mxu0
  %v6821 = vadd.f32 0.0, %v6820
  %6822 = vmatprep.mubr.bf16.mxu0 %v4118
  %6823 = vmatmul.mubr.bf16.gmra.mrb[0].mxu0 %v2870
  %v6824 = vpop.f32.mrb[0].mxu0
  %v6825 = vadd.f32 0.0, %v6824
  %v6826 = vpop.f32.mrb[0].mxu0
  %v6827 = vadd.f32 0.0, %v6826
  %v6828 = vpop.f32.mrb[0].mxu0
  %v6829 = vadd.f32 0.0, %v6828
  %v6830 = vpop.f32.mrb[0].mxu0
  %v6831 = vadd.f32 0.0, %v6830
  %6832 = vmatprep.mubr.bf16.mxu0 %v4121
  %6833 = vmatmul.mubr.bf16.gmra.mrb[0].mxu0 %v2872
  %v6834 = vpop.f32.mrb[0].mxu0
  %v6835 = vadd.f32 0.0, %v6834
  %v6836 = vpop.f32.mrb[0].mxu0
  %v6837 = vadd.f32 0.0, %v6836
  %v6838 = vpop.f32.mrb[0].mxu0
  %v6839 = vadd.f32 0.0, %v6838
  %v6840 = vpop.f32.mrb[0].mxu0
  %v6841 = vadd.f32 0.0, %v6840
  %6842 = vmatprep.mubr.bf16.mxu0 %v4124
  %6843 = vmatmul.mubr.bf16.gmra.mrb[0].mxu0 %v2874
  %v6844 = vpop.f32.mrb[0].mxu0
  %v6845 = vadd.f32 0.0, %v6844
  %v6846 = vpop.f32.mrb[0].mxu0
  %v6847 = vadd.f32 0.0, %v6846
  %v6848 = vpop.f32.mrb[0].mxu0
  %v6849 = vadd.f32 0.0, %v6848
  %v6850 = vpop.f32.mrb[0].mxu0
  %v6851 = vadd.f32 0.0, %v6850
  %6852 = vmatprep.mubr.bf16.mxu0 %v4127
  %6853 = vmatmul.mubr.bf16.gmra.mrb[0].mxu0 %v2876
  %v6854 = vpop.f32.mrb[0].mxu0
  %v6855 = vadd.f32 0.0, %v6854
  %v6856 = vpop.f32.mrb[0].mxu0
  %v6857 = vadd.f32 0.0, %v6856
  %v6858 = vpop.f32.mrb[0].mxu0
  %v6859 = vadd.f32 0.0, %v6858
  %v6860 = vpop.f32.mrb[0].mxu0
  %v6861 = vadd.f32 0.0, %v6860
  %6862 = vmatprep.mubr.bf16.mxu0 %v4130
  %6863 = vmatmul.mubr.bf16.gmra.mrb[0].mxu0 %v2878
  %v6864 = vpop.f32.mrb[0].mxu0
  %v6865 = vadd.f32 0.0, %v6864
  %v6866 = vpop.f32.mrb[0].mxu0
  %v6867 = vadd.f32 0.0, %v6866
  %v6868 = vpop.f32.mrb[0].mxu0
  %v6869 = vadd.f32 0.0, %v6868
  %v6870 = vpop.f32.mrb[0].mxu0
  %v6871 = vadd.f32 0.0, %v6870
  %6872 = vmatprep.mubr.bf16.mxu0 %v4133
  %6873 = vmatmul.mubr.bf16.gmra.mrb[0].mxu0 %v2880
  %v6874 = vpop.f32.mrb[0].mxu0
  %v6875 = vadd.f32 0.0, %v6874
  %v6876 = vpop.f32.mrb[0].mxu0
  %v6877 = vadd.f32 0.0, %v6876
  %v6878 = vpop.f32.mrb[0].mxu0
  %v6879 = vadd.f32 0.0, %v6878
  %v6880 = vpop.f32.mrb[0].mxu0
  %v6881 = vadd.f32 0.0, %v6880
  %6882 = vmatprep.mubr.bf16.mxu0 %v4136
  %6883 = vmatmul.mubr.bf16.gmra.mrb[0].mxu0 %v2882
  %v6884 = vpop.f32.mrb[0].mxu0
  %v6885 = vadd.f32 0.0, %v6884
  %v6886 = vpop.f32.mrb[0].mxu0
  %v6887 = vadd.f32 0.0, %v6886
  %v6888 = vpop.f32.mrb[0].mxu0
  %v6889 = vadd.f32 0.0, %v6888
  %v6890 = vpop.f32.mrb[0].mxu0
  %v6891 = vadd.f32 0.0, %v6890
  %6892 = vmatprep.mubr.bf16.mxu0 %v4139
  %6893 = vmatmul.mubr.bf16.gmra.mrb[0].mxu0 %v2884
  %v6894 = vpop.f32.mrb[0].mxu0
  %v6895 = vadd.f32 0.0, %v6894
  %v6896 = vpop.f32.mrb[0].mxu0
  %v6897 = vadd.f32 0.0, %v6896
  %v6898 = vpop.f32.mrb[0].mxu0
  %v6899 = vadd.f32 0.0, %v6898
  %v6900 = vpop.f32.mrb[0].mxu0
  %v6901 = vadd.f32 0.0, %v6900
  %6902 = vmatprep.mubr.bf16.mxu0 %v4142
  %6903 = vmatmul.mubr.bf16.gmra.mrb[0].mxu0 %v2886
  %v6904 = vpop.f32.mrb[0].mxu0
  %v6905 = vadd.f32 0.0, %v6904
  %v6906 = vpop.f32.mrb[0].mxu0
  %v6907 = vadd.f32 0.0, %v6906
  %v6908 = vpop.f32.mrb[0].mxu0
  %v6909 = vadd.f32 0.0, %v6908
  %v6910 = vpop.f32.mrb[0].mxu0
  %v6911 = vadd.f32 0.0, %v6910
  %6912 = vmatprep.mubr.bf16.mxu0 %v4145
  %6913 = vmatmul.mubr.bf16.gmra.mrb[0].mxu0 %v2888
  %v6914 = vpop.f32.mrb[0].mxu0
  %v6915 = vadd.f32 0.0, %v6914
  %v6916 = vpop.f32.mrb[0].mxu0
  %v6917 = vadd.f32 0.0, %v6916
  %v6918 = vpop.f32.mrb[0].mxu0
  %v6919 = vadd.f32 0.0, %v6918
  %v6920 = vpop.f32.mrb[0].mxu0
  %v6921 = vadd.f32 0.0, %v6920
  %6922 = vmatprep.mubr.bf16.mxu0 %v4148
  %6923 = vmatmul.mubr.bf16.gmra.mrb[0].mxu0 %v2890
  %v6924 = vpop.f32.mrb[0].mxu0
  %v6925 = vadd.f32 0.0, %v6924
  %v6926 = vpop.f32.mrb[0].mxu0
  %v6927 = vadd.f32 0.0, %v6926
  %v6928 = vpop.f32.mrb[0].mxu0
  %v6929 = vadd.f32 0.0, %v6928
  %v6930 = vpop.f32.mrb[0].mxu0
  %v6931 = vadd.f32 0.0, %v6930
  %6932 = vmatprep.mubr.bf16.mxu0 %v4151
  %6933 = vmatmul.mubr.bf16.gmra.mrb[0].mxu0 %v2892
  %v6934 = vpop.f32.mrb[0].mxu0
  %v6935 = vadd.f32 0.0, %v6934
  %v6936 = vpop.f32.mrb[0].mxu0
  %v6937 = vadd.f32 0.0, %v6936
  %v6938 = vpop.f32.mrb[0].mxu0
  %v6939 = vadd.f32 0.0, %v6938
  %v6940 = vpop.f32.mrb[0].mxu0
  %v6941 = vadd.f32 0.0, %v6940
  %6942 = vmatprep.mubr.bf16.mxu0 %v4154
  %6943 = vmatmul.mubr.bf16.gmra.mrb[0].mxu0 %v2894
  %v6944 = vpop.f32.mrb[0].mxu0
  %v6945 = vadd.f32 0.0, %v6944
  %v6946 = vpop.f32.mrb[0].mxu0
  %v6947 = vadd.f32 0.0, %v6946
  %v6948 = vpop.f32.mrb[0].mxu0
  %v6949 = vadd.f32 0.0, %v6948
  %v6950 = vpop.f32.mrb[0].mxu0
  %v6951 = vadd.f32 0.0, %v6950
  %6952 = vmatprep.mubr.bf16.mxu0 %v4157
  %6953 = vmatmul.mubr.bf16.gmra.mrb[0].mxu0 %v2896
  %v6954 = vpop.f32.mrb[0].mxu0
  %v6955 = vadd.f32 0.0, %v6954
  %v6956 = vpop.f32.mrb[0].mxu0
  %v6957 = vadd.f32 0.0, %v6956
  %v6958 = vpop.f32.mrb[0].mxu0
  %v6959 = vadd.f32 0.0, %v6958
  %v6960 = vpop.f32.mrb[0].mxu0
  %v6961 = vadd.f32 0.0, %v6960
  %6962 = vmatprep.mubr.bf16.mxu0 %v4160
  %6963 = vmatmul.mubr.bf16.gmra.mrb[0].mxu0 %v2898
  %v6964 = vpop.f32.mrb[0].mxu0
  %v6965 = vadd.f32 0.0, %v6964
  %v6966 = vpop.f32.mrb[0].mxu0
  %v6967 = vadd.f32 0.0, %v6966
  %v6968 = vpop.f32.mrb[0].mxu0
  %v6969 = vadd.f32 0.0, %v6968
  %v6970 = vpop.f32.mrb[0].mxu0
  %v6971 = vadd.f32 0.0, %v6970
  %6972 = vmatprep.mubr.bf16.mxu0 %v4163
  %6973 = vmatmul.mubr.bf16.gmra.mrb[0].mxu0 %v2900
  %v6974 = vpop.f32.mrb[0].mxu0
  %v6975 = vadd.f32 0.0, %v6974
  %v6976 = vpop.f32.mrb[0].mxu0
  %v6977 = vadd.f32 0.0, %v6976
  %v6978 = vpop.f32.mrb[0].mxu0
  %v6979 = vadd.f32 0.0, %v6978
  %v6980 = vpop.f32.mrb[0].mxu0
  %v6981 = vadd.f32 0.0, %v6980
  %6982 = vmatprep.mubr.bf16.mxu0 %v4166
  %6983 = vmatmul.mubr.bf16.gmra.mrb[0].mxu0 %v2902
  %v6984 = vpop.f32.mrb[0].mxu0
  %v6985 = vadd.f32 0.0, %v6984
  %v6986 = vpop.f32.mrb[0].mxu0
  %v6987 = vadd.f32 0.0, %v6986
  %v6988 = vpop.f32.mrb[0].mxu0
  %v6989 = vadd.f32 0.0, %v6988
  %v6990 = vpop.f32.mrb[0].mxu0
  %v6991 = vadd.f32 0.0, %v6990
  %6992 = vmatprep.mubr.bf16.mxu0 %v4169
  %6993 = vmatmul.mubr.bf16.gmra.mrb[0].mxu0 %v2904
  %v6994 = vpop.f32.mrb[0].mxu0
  %v6995 = vadd.f32 0.0, %v6994
  %v6996 = vpop.f32.mrb[0].mxu0
  %v6997 = vadd.f32 0.0, %v6996
  %v6998 = vpop.f32.mrb[0].mxu0
  %v6999 = vadd.f32 0.0, %v6998
  %v7000 = vpop.f32.mrb[0].mxu0
  %v7001 = vadd.f32 0.0, %v7000
  %7002 = vmatprep.mubr.bf16.mxu0 %v4172
  %7003 = vmatmul.mubr.bf16.gmra.mrb[0].mxu0 %v2906
  %v7004 = vpop.f32.mrb[0].mxu0
  %v7005 = vadd.f32 0.0, %v7004
  %v7006 = vpop.f32.mrb[0].mxu0
  %v7007 = vadd.f32 0.0, %v7006
  %v7008 = vpop.f32.mrb[0].mxu0
  %v7009 = vadd.f32 0.0, %v7008
  %v7010 = vpop.f32.mrb[0].mxu0
  %v7011 = vadd.f32 0.0, %v7010
  %7012 = vmatprep.mubr.bf16.mxu0 %v4175
  %7013 = vmatmul.mubr.bf16.gmra.mrb[0].mxu0 %v2908
  %v7014 = vpop.f32.mrb[0].mxu0
  %v7015 = vadd.f32 0.0, %v7014
  %v7016 = vpop.f32.mrb[0].mxu0
  %v7017 = vadd.f32 0.0, %v7016
  %v7018 = vpop.f32.mrb[0].mxu0
  %v7019 = vadd.f32 0.0, %v7018
  %v7020 = vpop.f32.mrb[0].mxu0
  %v7021 = vadd.f32 0.0, %v7020
  %7022 = vmatprep.mubr.bf16.mxu0 %v4178
  %7023 = vmatmul.mubr.bf16.gmra.mrb[0].mxu0 %v2910
  %v7024 = vpop.f32.mrb[0].mxu0
  %v7025 = vadd.f32 0.0, %v7024
  %v7026 = vpop.f32.mrb[0].mxu0
  %v7027 = vadd.f32 0.0, %v7026
  %v7028 = vpop.f32.mrb[0].mxu0
  %v7029 = vadd.f32 0.0, %v7028
  %v7030 = vpop.f32.mrb[0].mxu0
  %v7031 = vadd.f32 0.0, %v7030
  %7032 = vmatprep.mubr.bf16.mxu0 %v4181
  %7033 = vmatmul.mubr.bf16.gmra.mrb[0].mxu0 %v2912
  %v7034 = vpop.f32.mrb[0].mxu0
  %v7035 = vadd.f32 0.0, %v7034
  %v7036 = vpop.f32.mrb[0].mxu0
  %v7037 = vadd.f32 0.0, %v7036
  %v7038 = vpop.f32.mrb[0].mxu0
  %v7039 = vadd.f32 0.0, %v7038
  %v7040 = vpop.f32.mrb[0].mxu0
  %v7041 = vadd.f32 0.0, %v7040
  %7042 = vmatprep.mubr.bf16.mxu0 %v4184
  %7043 = vmatmul.mubr.bf16.gmra.mrb[0].mxu0 %v2914
  %v7044 = vpop.f32.mrb[0].mxu0
  %v7045 = vadd.f32 0.0, %v7044
  %v7046 = vpop.f32.mrb[0].mxu0
  %v7047 = vadd.f32 0.0, %v7046
  %v7048 = vpop.f32.mrb[0].mxu0
  %v7049 = vadd.f32 0.0, %v7048
  %v7050 = vpop.f32.mrb[0].mxu0
  %v7051 = vadd.f32 0.0, %v7050
  %7052 = vmatprep.mubr.bf16.mxu0 %v4187
  %7053 = vmatmul.mubr.bf16.gmra.mrb[0].mxu0 %v2916
  %v7054 = vpop.f32.mrb[0].mxu0
  %v7055 = vadd.f32 0.0, %v7054
  %v7056 = vpop.f32.mrb[0].mxu0
  %v7057 = vadd.f32 0.0, %v7056
  %v7058 = vpop.f32.mrb[0].mxu0
  %v7059 = vadd.f32 0.0, %v7058
  %v7060 = vpop.f32.mrb[0].mxu0
  %v7061 = vadd.f32 0.0, %v7060
  %7062 = vmatprep.mubr.bf16.mxu0 %v4190
  %7063 = vmatmul.mubr.bf16.gmra.mrb[0].mxu0 %v2918
  %v7064 = vpop.f32.mrb[0].mxu0
  %v7065 = vadd.f32 0.0, %v7064
  %v7066 = vpop.f32.mrb[0].mxu0
  %v7067 = vadd.f32 0.0, %v7066
  %v7068 = vpop.f32.mrb[0].mxu0
  %v7069 = vadd.f32 0.0, %v7068
  %v7070 = vpop.f32.mrb[0].mxu0
  %v7071 = vadd.f32 0.0, %v7070
  %7072 = vmatprep.mubr.bf16.mxu0 %v4193
  %7073 = vmatmul.mubr.bf16.gmra.mrb[0].mxu0 %v2920
  %v7074 = vpop.f32.mrb[0].mxu0
  %v7075 = vadd.f32 0.0, %v7074
  %v7076 = vpop.f32.mrb[0].mxu0
  %v7077 = vadd.f32 0.0, %v7076
  %v7078 = vpop.f32.mrb[0].mxu0
  %v7079 = vadd.f32 0.0, %v7078
  %v7080 = vpop.f32.mrb[0].mxu0
  %v7081 = vadd.f32 0.0, %v7080
  %7082 = vmatprep.mubr.bf16.mxu0 %v4196
  %7083 = vmatmul.mubr.bf16.gmra.mrb[0].mxu0 %v2922
  %v7084 = vpop.f32.mrb[0].mxu0
  %v7085 = vadd.f32 0.0, %v7084
  %v7086 = vpop.f32.mrb[0].mxu0
  %v7087 = vadd.f32 0.0, %v7086
  %v7088 = vpop.f32.mrb[0].mxu0
  %v7089 = vadd.f32 0.0, %v7088
  %v7090 = vpop.f32.mrb[0].mxu0
  %v7091 = vadd.f32 0.0, %v7090
  %7092 = vmatprep.mubr.bf16.mxu0 %v4199
  %7093 = vmatmul.mubr.bf16.gmra.mrb[0].mxu0 %v2924
  %v7094 = vpop.f32.mrb[0].mxu0
  %v7095 = vadd.f32 0.0, %v7094
  %v7096 = vpop.f32.mrb[0].mxu0
  %v7097 = vadd.f32 0.0, %v7096
  %v7098 = vpop.f32.mrb[0].mxu0
  %v7099 = vadd.f32 0.0, %v7098
  %v7100 = vpop.f32.mrb[0].mxu0
  %v7101 = vadd.f32 0.0, %v7100
  %7102 = vmatprep.mubr.bf16.mxu0 %v4202
  %7103 = vmatmul.mubr.bf16.gmra.mrb[0].mxu0 %v2926
  %v7104 = vpop.f32.mrb[0].mxu0
  %v7105 = vadd.f32 0.0, %v7104
  %v7106 = vpop.f32.mrb[0].mxu0
  %v7107 = vadd.f32 0.0, %v7106
  %v7108 = vpop.f32.mrb[0].mxu0
  %v7109 = vadd.f32 0.0, %v7108
  %v7110 = vpop.f32.mrb[0].mxu0
  %v7111 = vadd.f32 0.0, %v7110
  %7112 = vmatprep.mubr.bf16.mxu0 %v4205
  %7113 = vmatmul.mubr.bf16.gmra.mrb[0].mxu0 %v2928
  %v7114 = vpop.f32.mrb[0].mxu0
  %v7115 = vadd.f32 0.0, %v7114
  %v7116 = vpop.f32.mrb[0].mxu0
  %v7117 = vadd.f32 0.0, %v7116
  %v7118 = vpop.f32.mrb[0].mxu0
  %v7119 = vadd.f32 0.0, %v7118
  %v7120 = vpop.f32.mrb[0].mxu0
  %v7121 = vadd.f32 0.0, %v7120
  %7122 = vmatprep.mubr.bf16.mxu0 %v4208
  %7123 = vmatmul.mubr.bf16.gmra.mrb[0].mxu0 %v2930
  %v7124 = vpop.f32.mrb[0].mxu0
  %v7125 = vadd.f32 0.0, %v7124
  %v7126 = vpop.f32.mrb[0].mxu0
  %v7127 = vadd.f32 0.0, %v7126
  %v7128 = vpop.f32.mrb[0].mxu0
  %v7129 = vadd.f32 0.0, %v7128
  %v7130 = vpop.f32.mrb[0].mxu0
  %v7131 = vadd.f32 0.0, %v7130
  %7132 = vdwg.mxu0
  %v7133 = vmax.f32 %v4255, %v4495
  %v7134 = vmax.f32 %v4257, %v4497
  %v7135 = vmax.f32 %v4259, %v4499
  %v7136 = vmax.f32 %v4261, %v4501
  %v7137 = vmax.f32 %v4265, %v4505
  %v7138 = vmax.f32 %v4267, %v4507
  %v7139 = vmax.f32 %v4269, %v4509
  %v7140 = vmax.f32 %v4271, %v4511
  %v7141 = vmax.f32 %v4275, %v4515
  %v7142 = vmax.f32 %v4277, %v4517
  %v7143 = vmax.f32 %v4279, %v4519
  %v7144 = vmax.f32 %v4281, %v4521
  %v7145 = vmax.f32 %v4285, %v4525
  %v7146 = vmax.f32 %v4287, %v4527
  %v7147 = vmax.f32 %v4289, %v4529
  %v7148 = vmax.f32 %v4291, %v4531
  %v7149 = vmax.f32 %v4295, %v4535
  %v7150 = vmax.f32 %v4297, %v4537
  %v7151 = vmax.f32 %v4299, %v4539
  %v7152 = vmax.f32 %v4301, %v4541
  %v7153 = vmax.f32 %v4305, %v4545
  %v7154 = vmax.f32 %v4307, %v4547
  %v7155 = vmax.f32 %v4309, %v4549
  %v7156 = vmax.f32 %v4311, %v4551
  %v7157 = vmax.f32 %v4315, %v4555
  %v7158 = vmax.f32 %v4317, %v4557
  %v7159 = vmax.f32 %v4319, %v4559
  %v7160 = vmax.f32 %v4321, %v4561
  %v7161 = vmax.f32 %v4325, %v4565
  %v7162 = vmax.f32 %v4327, %v4567
  %v7163 = vmax.f32 %v4329, %v4569
  %v7164 = vmax.f32 %v4331, %v4571
  %v7165 = vmax.f32 %v4335, %v4575
  %v7166 = vmax.f32 %v4337, %v4577
  %v7167 = vmax.f32 %v4339, %v4579
  %v7168 = vmax.f32 %v4341, %v4581
  %v7169 = vmax.f32 %v4345, %v4585
  %v7170 = vmax.f32 %v4347, %v4587
  %v7171 = vmax.f32 %v4349, %v4589
  %v7172 = vmax.f32 %v4351, %v4591
  %v7173 = vmax.f32 %v4355, %v4595
  %v7174 = vmax.f32 %v4357, %v4597
  %v7175 = vmax.f32 %v4359, %v4599
  %v7176 = vmax.f32 %v4361, %v4601
  %v7177 = vmax.f32 %v4365, %v4605
  %v7178 = vmax.f32 %v4367, %v4607
  %v7179 = vmax.f32 %v4369, %v4609
  %v7180 = vmax.f32 %v4371, %v4611
  %v7181 = vmax.f32 %v4375, %v4615
  %v7182 = vmax.f32 %v4377, %v4617
  %v7183 = vmax.f32 %v4379, %v4619
  %v7184 = vmax.f32 %v4381, %v4621
  %v7185 = vmax.f32 %v4385, %v4625
  %v7186 = vmax.f32 %v4387, %v4627
  %v7187 = vmax.f32 %v4389, %v4629
  %v7188 = vmax.f32 %v4391, %v4631
  %v7189 = vmax.f32 %v4395, %v4635
  %v7190 = vmax.f32 %v4397, %v4637
  %v7191 = vmax.f32 %v4399, %v4639
  %v7192 = vmax.f32 %v4401, %v4641
  %v7193 = vmax.f32 %v4405, %v4645
  %v7194 = vmax.f32 %v4407, %v4647
  %v7195 = vmax.f32 %v4409, %v4649
  %v7196 = vmax.f32 %v4411, %v4651
  %v7197 = vmax.f32 %v4415, %v4655
  %v7198 = vmax.f32 %v4417, %v4657
  %v7199 = vmax.f32 %v4419, %v4659
  %v7200 = vmax.f32 %v4421, %v4661
  %v7201 = vmax.f32 %v4425, %v4665
  %v7202 = vmax.f32 %v4427, %v4667
  %v7203 = vmax.f32 %v4429, %v4669
  %v7204 = vmax.f32 %v4431, %v4671
  %v7205 = vmax.f32 %v4435, %v4675
  %v7206 = vmax.f32 %v4437, %v4677
  %v7207 = vmax.f32 %v4439, %v4679
  %v7208 = vmax.f32 %v4441, %v4681
  %v7209 = vmax.f32 %v4445, %v4685
  %v7210 = vmax.f32 %v4447, %v4687
  %v7211 = vmax.f32 %v4449, %v4689
  %v7212 = vmax.f32 %v4451, %v4691
  %v7213 = vmax.f32 %v4455, %v4695
  %v7214 = vmax.f32 %v4457, %v4697
  %v7215 = vmax.f32 %v4459, %v4699
  %v7216 = vmax.f32 %v4461, %v4701
  %v7217 = vmax.f32 %v4465, %v4705
  %v7218 = vmax.f32 %v4467, %v4707
  %v7219 = vmax.f32 %v4469, %v4709
  %v7220 = vmax.f32 %v4471, %v4711
  %v7221 = vmax.f32 %v4475, %v4715
  %v7222 = vmax.f32 %v4477, %v4717
  %v7223 = vmax.f32 %v4479, %v4719
  %v7224 = vmax.f32 %v4481, %v4721
  %v7225 = vmax.f32 %v4485, %v4725
  %v7226 = vmax.f32 %v4487, %v4727
  %v7227 = vmax.f32 %v4489, %v4729
  %v7228 = vmax.f32 %v4491, %v4731
  %v7229 = vmax.f32 %v7133, %v7181
  %v7230 = vmax.f32 %v7134, %v7182
  %v7231 = vmax.f32 %v7135, %v7183
  %v7232 = vmax.f32 %v7136, %v7184
  %v7233 = vmax.f32 %v7137, %v7185
  %v7234 = vmax.f32 %v7138, %v7186
  %v7235 = vmax.f32 %v7139, %v7187
  %v7236 = vmax.f32 %v7140, %v7188
  %v7237 = vmax.f32 %v7141, %v7189
  %v7238 = vmax.f32 %v7142, %v7190
  %v7239 = vmax.f32 %v7143, %v7191
  %v7240 = vmax.f32 %v7144, %v7192
  %v7241 = vmax.f32 %v7145, %v7193
  %v7242 = vmax.f32 %v7146, %v7194
  %v7243 = vmax.f32 %v7147, %v7195
  %v7244 = vmax.f32 %v7148, %v7196
  %v7245 = vmax.f32 %v7149, %v7197
  %v7246 = vmax.f32 %v7150, %v7198
  %v7247 = vmax.f32 %v7151, %v7199
  %v7248 = vmax.f32 %v7152, %v7200
  %v7249 = vmax.f32 %v7153, %v7201
  %v7250 = vmax.f32 %v7154, %v7202
  %v7251 = vmax.f32 %v7155, %v7203
  %v7252 = vmax.f32 %v7156, %v7204
  %v7253 = vmax.f32 %v7157, %v7205
  %v7254 = vmax.f32 %v7158, %v7206
  %v7255 = vmax.f32 %v7159, %v7207
  %v7256 = vmax.f32 %v7160, %v7208
  %v7257 = vmax.f32 %v7161, %v7209
  %v7258 = vmax.f32 %v7162, %v7210
  %v7259 = vmax.f32 %v7163, %v7211
  %v7260 = vmax.f32 %v7164, %v7212
  %v7261 = vmax.f32 %v7165, %v7213
  %v7262 = vmax.f32 %v7166, %v7214
  %v7263 = vmax.f32 %v7167, %v7215
  %v7264 = vmax.f32 %v7168, %v7216
  %v7265 = vmax.f32 %v7169, %v7217
  %v7266 = vmax.f32 %v7170, %v7218
  %v7267 = vmax.f32 %v7171, %v7219
  %v7268 = vmax.f32 %v7172, %v7220
  %v7269 = vmax.f32 %v7173, %v7221
  %v7270 = vmax.f32 %v7174, %v7222
  %v7271 = vmax.f32 %v7175, %v7223
  %v7272 = vmax.f32 %v7176, %v7224
  %v7273 = vmax.f32 %v7177, %v7225
  %v7274 = vmax.f32 %v7178, %v7226
  %v7275 = vmax.f32 %v7179, %v7227
  %v7276 = vmax.f32 %v7180, %v7228
  %v7277 = vmax.f32 %v7229, 0.0
  %v7278 = vmax.f32 %v7230, 0.0
  %v7279 = vmax.f32 %v7231, 0.0
  %v7280 = vmax.f32 %v7232, 0.0
  %v7281 = vmax.f32 %v7233, 0.0
  %v7282 = vmax.f32 %v7234, 0.0
  %v7283 = vmax.f32 %v7235, 0.0
  %v7284 = vmax.f32 %v7236, 0.0
  %v7285 = vmax.f32 %v7237, 0.0
  %v7286 = vmax.f32 %v7238, 0.0
  %v7287 = vmax.f32 %v7239, 0.0
  %v7288 = vmax.f32 %v7240, 0.0
  %v7289 = vmax.f32 %v7241, 0.0
  %v7290 = vmax.f32 %v7242, 0.0
  %v7291 = vmax.f32 %v7243, 0.0
  %v7292 = vmax.f32 %v7244, 0.0
  %v7293 = vmax.f32 %v7245, 0.0
  %v7294 = vmax.f32 %v7246, 0.0
  %v7295 = vmax.f32 %v7247, 0.0
  %v7296 = vmax.f32 %v7248, 0.0
  %v7297 = vmax.f32 %v7249, 0.0
  %v7298 = vmax.f32 %v7250, 0.0
  %v7299 = vmax.f32 %v7251, 0.0
  %v7300 = vmax.f32 %v7252, 0.0
  %v7301 = vmax.f32 %v7253, 0.0
  %v7302 = vmax.f32 %v7254, 0.0
  %v7303 = vmax.f32 %v7255, 0.0
  %v7304 = vmax.f32 %v7256, 0.0
  %v7305 = vmax.f32 %v7257, 0.0
  %v7306 = vmax.f32 %v7258, 0.0
  %v7307 = vmax.f32 %v7259, 0.0
  %v7308 = vmax.f32 %v7260, 0.0
  %v7309 = vmax.f32 %v7261, 0.0
  %v7310 = vmax.f32 %v7262, 0.0
  %v7311 = vmax.f32 %v7263, 0.0
  %v7312 = vmax.f32 %v7264, 0.0
  %v7313 = vmax.f32 %v7265, 0.0
  %v7314 = vmax.f32 %v7266, 0.0
  %v7315 = vmax.f32 %v7267, 0.0
  %v7316 = vmax.f32 %v7268, 0.0
  %v7317 = vmax.f32 %v7269, 0.0
  %v7318 = vmax.f32 %v7270, 0.0
  %v7319 = vmax.f32 %v7271, 0.0
  %v7320 = vmax.f32 %v7272, 0.0
  %v7321 = vmax.f32 %v7273, 0.0
  %v7322 = vmax.f32 %v7274, 0.0
  %v7323 = vmax.f32 %v7275, 0.0
  %v7324 = vmax.f32 %v7276, 0.0
  %v7325 = vmax.f32 %v4735, %v4975
  %v7326 = vmax.f32 %v4737, %v4977
  %v7327 = vmax.f32 %v4739, %v4979
  %v7328 = vmax.f32 %v4741, %v4981
  %v7329 = vmax.f32 %v4745, %v4985
  %v7330 = vmax.f32 %v4747, %v4987
  %v7331 = vmax.f32 %v4749, %v4989
  %v7332 = vmax.f32 %v4751, %v4991
  %v7333 = vmax.f32 %v4755, %v4995
  %v7334 = vmax.f32 %v4757, %v4997
  %v7335 = vmax.f32 %v4759, %v4999
  %v7336 = vmax.f32 %v4761, %v5001
  %v7337 = vmax.f32 %v4765, %v5005
  %v7338 = vmax.f32 %v4767, %v5007
  %v7339 = vmax.f32 %v4769, %v5009
  %v7340 = vmax.f32 %v4771, %v5011
  %v7341 = vmax.f32 %v4775, %v5015
  %v7342 = vmax.f32 %v4777, %v5017
  %v7343 = vmax.f32 %v4779, %v5019
  %v7344 = vmax.f32 %v4781, %v5021
  %v7345 = vmax.f32 %v4785, %v5025
  %v7346 = vmax.f32 %v4787, %v5027
  %v7347 = vmax.f32 %v4789, %v5029
  %v7348 = vmax.f32 %v4791, %v5031
  %v7349 = vmax.f32 %v4795, %v5035
  %v7350 = vmax.f32 %v4797, %v5037
  %v7351 = vmax.f32 %v4799, %v5039
  %v7352 = vmax.f32 %v4801, %v5041
  %v7353 = vmax.f32 %v4805, %v5045
  %v7354 = vmax.f32 %v4807, %v5047
  %v7355 = vmax.f32 %v4809, %v5049
  %v7356 = vmax.f32 %v4811, %v5051
  %v7357 = vmax.f32 %v4815, %v5055
  %v7358 = vmax.f32 %v4817, %v5057
  %v7359 = vmax.f32 %v4819, %v5059
  %v7360 = vmax.f32 %v4821, %v5061
  %v7361 = vmax.f32 %v4825, %v5065
  %v7362 = vmax.f32 %v4827, %v5067
  %v7363 = vmax.f32 %v4829, %v5069
  %v7364 = vmax.f32 %v4831, %v5071
  %v7365 = vmax.f32 %v4835, %v5075
  %v7366 = vmax.f32 %v4837, %v5077
  %v7367 = vmax.f32 %v4839, %v5079
  %v7368 = vmax.f32 %v4841, %v5081
  %v7369 = vmax.f32 %v4845, %v5085
  %v7370 = vmax.f32 %v4847, %v5087
  %v7371 = vmax.f32 %v4849, %v5089
  %v7372 = vmax.f32 %v4851, %v5091
  %v7373 = vmax.f32 %v4855, %v5095
  %v7374 = vmax.f32 %v4857, %v5097
  %v7375 = vmax.f32 %v4859, %v5099
  %v7376 = vmax.f32 %v4861, %v5101
  %v7377 = vmax.f32 %v4865, %v5105
  %v7378 = vmax.f32 %v4867, %v5107
  %v7379 = vmax.f32 %v4869, %v5109
  %v7380 = vmax.f32 %v4871, %v5111
  %v7381 = vmax.f32 %v4875, %v5115
  %v7382 = vmax.f32 %v4877, %v5117
  %v7383 = vmax.f32 %v4879, %v5119
  %v7384 = vmax.f32 %v4881, %v5121
  %v7385 = vmax.f32 %v4885, %v5125
  %v7386 = vmax.f32 %v4887, %v5127
  %v7387 = vmax.f32 %v4889, %v5129
  %v7388 = vmax.f32 %v4891, %v5131
  %v7389 = vmax.f32 %v4895, %v5135
  %v7390 = vmax.f32 %v4897, %v5137
  %v7391 = vmax.f32 %v4899, %v5139
  %v7392 = vmax.f32 %v4901, %v5141
  %v7393 = vmax.f32 %v4905, %v5145
  %v7394 = vmax.f32 %v4907, %v5147
  %v7395 = vmax.f32 %v4909, %v5149
  %v7396 = vmax.f32 %v4911, %v5151
  %v7397 = vmax.f32 %v4915, %v5155
  %v7398 = vmax.f32 %v4917, %v5157
  %v7399 = vmax.f32 %v4919, %v5159
  %v7400 = vmax.f32 %v4921, %v5161
  %v7401 = vmax.f32 %v4925, %v5165
  %v7402 = vmax.f32 %v4927, %v5167
  %v7403 = vmax.f32 %v4929, %v5169
  %v7404 = vmax.f32 %v4931, %v5171
  %v7405 = vmax.f32 %v4935, %v5175
  %v7406 = vmax.f32 %v4937, %v5177
  %v7407 = vmax.f32 %v4939, %v5179
  %v7408 = vmax.f32 %v4941, %v5181
  %v7409 = vmax.f32 %v4945, %v5185
  %v7410 = vmax.f32 %v4947, %v5187
  %v7411 = vmax.f32 %v4949, %v5189
  %v7412 = vmax.f32 %v4951, %v5191
  %v7413 = vmax.f32 %v4955, %v5195
  %v7414 = vmax.f32 %v4957, %v5197
  %v7415 = vmax.f32 %v4959, %v5199
  %v7416 = vmax.f32 %v4961, %v5201
  %v7417 = vmax.f32 %v4965, %v5205
  %v7418 = vmax.f32 %v4967, %v5207
  %v7419 = vmax.f32 %v4969, %v5209
  %v7420 = vmax.f32 %v4971, %v5211
  %v7421 = vmax.f32 %v7325, %v7373
  %v7422 = vmax.f32 %v7326, %v7374
  %v7423 = vmax.f32 %v7327, %v7375
  %v7424 = vmax.f32 %v7328, %v7376
  %v7425 = vmax.f32 %v7329, %v7377
  %v7426 = vmax.f32 %v7330, %v7378
  %v7427 = vmax.f32 %v7331, %v7379
  %v7428 = vmax.f32 %v7332, %v7380
  %v7429 = vmax.f32 %v7333, %v7381
  %v7430 = vmax.f32 %v7334, %v7382
  %v7431 = vmax.f32 %v7335, %v7383
  %v7432 = vmax.f32 %v7336, %v7384
  %v7433 = vmax.f32 %v7337, %v7385
  %v7434 = vmax.f32 %v7338, %v7386
  %v7435 = vmax.f32 %v7339, %v7387
  %v7436 = vmax.f32 %v7340, %v7388
  %v7437 = vmax.f32 %v7341, %v7389
  %v7438 = vmax.f32 %v7342, %v7390
  %v7439 = vmax.f32 %v7343, %v7391
  %v7440 = vmax.f32 %v7344, %v7392
  %v7441 = vmax.f32 %v7345, %v7393
  %v7442 = vmax.f32 %v7346, %v7394
  %v7443 = vmax.f32 %v7347, %v7395
  %v7444 = vmax.f32 %v7348, %v7396
  %v7445 = vmax.f32 %v7349, %v7397
  %v7446 = vmax.f32 %v7350, %v7398
  %v7447 = vmax.f32 %v7351, %v7399
  %v7448 = vmax.f32 %v7352, %v7400
  %v7449 = vmax.f32 %v7353, %v7401
  %v7450 = vmax.f32 %v7354, %v7402
  %v7451 = vmax.f32 %v7355, %v7403
  %v7452 = vmax.f32 %v7356, %v7404
  %v7453 = vmax.f32 %v7357, %v7405
  %v7454 = vmax.f32 %v7358, %v7406
  %v7455 = vmax.f32 %v7359, %v7407
  %v7456 = vmax.f32 %v7360, %v7408
  %v7457 = vmax.f32 %v7361, %v7409
  %v7458 = vmax.f32 %v7362, %v7410
  %v7459 = vmax.f32 %v7363, %v7411
  %v7460 = vmax.f32 %v7364, %v7412
  %v7461 = vmax.f32 %v7365, %v7413
  %v7462 = vmax.f32 %v7366, %v7414
  %v7463 = vmax.f32 %v7367, %v7415
  %v7464 = vmax.f32 %v7368, %v7416
  %v7465 = vmax.f32 %v7369, %v7417
  %v7466 = vmax.f32 %v7370, %v7418
  %v7467 = vmax.f32 %v7371, %v7419
  %v7468 = vmax.f32 %v7372, %v7420
  %v7469 = vmax.f32 %v7421, 0.0
  %v7470 = vmax.f32 %v7422, 0.0
  %v7471 = vmax.f32 %v7423, 0.0
  %v7472 = vmax.f32 %v7424, 0.0
  %v7473 = vmax.f32 %v7425, 0.0
  %v7474 = vmax.f32 %v7426, 0.0
  %v7475 = vmax.f32 %v7427, 0.0
  %v7476 = vmax.f32 %v7428, 0.0
  %v7477 = vmax.f32 %v7429, 0.0
  %v7478 = vmax.f32 %v7430, 0.0
  %v7479 = vmax.f32 %v7431, 0.0
  %v7480 = vmax.f32 %v7432, 0.0
  %v7481 = vmax.f32 %v7433, 0.0
  %v7482 = vmax.f32 %v7434, 0.0
  %v7483 = vmax.f32 %v7435, 0.0
  %v7484 = vmax.f32 %v7436, 0.0
  %v7485 = vmax.f32 %v7437, 0.0
  %v7486 = vmax.f32 %v7438, 0.0
  %v7487 = vmax.f32 %v7439, 0.0
  %v7488 = vmax.f32 %v7440, 0.0
  %v7489 = vmax.f32 %v7441, 0.0
  %v7490 = vmax.f32 %v7442, 0.0
  %v7491 = vmax.f32 %v7443, 0.0
  %v7492 = vmax.f32 %v7444, 0.0
  %v7493 = vmax.f32 %v7445, 0.0
  %v7494 = vmax.f32 %v7446, 0.0
  %v7495 = vmax.f32 %v7447, 0.0
  %v7496 = vmax.f32 %v7448, 0.0
  %v7497 = vmax.f32 %v7449, 0.0
  %v7498 = vmax.f32 %v7450, 0.0
  %v7499 = vmax.f32 %v7451, 0.0
  %v7500 = vmax.f32 %v7452, 0.0
  %v7501 = vmax.f32 %v7453, 0.0
  %v7502 = vmax.f32 %v7454, 0.0
  %v7503 = vmax.f32 %v7455, 0.0
  %v7504 = vmax.f32 %v7456, 0.0
  %v7505 = vmax.f32 %v7457, 0.0
  %v7506 = vmax.f32 %v7458, 0.0
  %v7507 = vmax.f32 %v7459, 0.0
  %v7508 = vmax.f32 %v7460, 0.0
  %v7509 = vmax.f32 %v7461, 0.0
  %v7510 = vmax.f32 %v7462, 0.0
  %v7511 = vmax.f32 %v7463, 0.0
  %v7512 = vmax.f32 %v7464, 0.0
  %v7513 = vmax.f32 %v7465, 0.0
  %v7514 = vmax.f32 %v7466, 0.0
  %v7515 = vmax.f32 %v7467, 0.0
  %v7516 = vmax.f32 %v7468, 0.0
  %v7517 = vmax.f32 %v5215, %v5455
  %v7518 = vmax.f32 %v5217, %v5457
  %v7519 = vmax.f32 %v5219, %v5459
  %v7520 = vmax.f32 %v5221, %v5461
  %v7521 = vmax.f32 %v5225, %v5465
  %v7522 = vmax.f32 %v5227, %v5467
  %v7523 = vmax.f32 %v5229, %v5469
  %v7524 = vmax.f32 %v5231, %v5471
  %v7525 = vmax.f32 %v5235, %v5475
  %v7526 = vmax.f32 %v5237, %v5477
  %v7527 = vmax.f32 %v5239, %v5479
  %v7528 = vmax.f32 %v5241, %v5481
  %v7529 = vmax.f32 %v5245, %v5485
  %v7530 = vmax.f32 %v5247, %v5487
  %v7531 = vmax.f32 %v5249, %v5489
  %v7532 = vmax.f32 %v5251, %v5491
  %v7533 = vmax.f32 %v5255, %v5495
  %v7534 = vmax.f32 %v5257, %v5497
  %v7535 = vmax.f32 %v5259, %v5499
  %v7536 = vmax.f32 %v5261, %v5501
  %v7537 = vmax.f32 %v5265, %v5505
  %v7538 = vmax.f32 %v5267, %v5507
  %v7539 = vmax.f32 %v5269, %v5509
  %v7540 = vmax.f32 %v5271, %v5511
  %v7541 = vmax.f32 %v5275, %v5515
  %v7542 = vmax.f32 %v5277, %v5517
  %v7543 = vmax.f32 %v5279, %v5519
  %v7544 = vmax.f32 %v5281, %v5521
  %v7545 = vmax.f32 %v5285, %v5525
  %v7546 = vmax.f32 %v5287, %v5527
  %v7547 = vmax.f32 %v5289, %v5529
  %v7548 = vmax.f32 %v5291, %v5531
  %v7549 = vmax.f32 %v5295, %v5535
  %v7550 = vmax.f32 %v5297, %v5537
  %v7551 = vmax.f32 %v5299, %v5539
  %v7552 = vmax.f32 %v5301, %v5541
  %v7553 = vmax.f32 %v5305, %v5545
  %v7554 = vmax.f32 %v5307, %v5547
  %v7555 = vmax.f32 %v5309, %v5549
  %v7556 = vmax.f32 %v5311, %v5551
  %v7557 = vmax.f32 %v5315, %v5555
  %v7558 = vmax.f32 %v5317, %v5557
  %v7559 = vmax.f32 %v5319, %v5559
  %v7560 = vmax.f32 %v5321, %v5561
  %v7561 = vmax.f32 %v5325, %v5565
  %v7562 = vmax.f32 %v5327, %v5567
  %v7563 = vmax.f32 %v5329, %v5569
  %v7564 = vmax.f32 %v5331, %v5571
  %v7565 = vmax.f32 %v5335, %v5575
  %v7566 = vmax.f32 %v5337, %v5577
  %v7567 = vmax.f32 %v5339, %v5579
  %v7568 = vmax.f32 %v5341, %v5581
  %v7569 = vmax.f32 %v5345, %v5585
  %v7570 = vmax.f32 %v5347, %v5587
  %v7571 = vmax.f32 %v5349, %v5589
  %v7572 = vmax.f32 %v5351, %v5591
  %v7573 = vmax.f32 %v5355, %v5595
  %v7574 = vmax.f32 %v5357, %v5597
  %v7575 = vmax.f32 %v5359, %v5599
  %v7576 = vmax.f32 %v5361, %v5601
  %v7577 = vmax.f32 %v5365, %v5605
  %v7578 = vmax.f32 %v5367, %v5607
  %v7579 = vmax.f32 %v5369, %v5609
  %v7580 = vmax.f32 %v5371, %v5611
  %v7581 = vmax.f32 %v5375, %v5615
  %v7582 = vmax.f32 %v5377, %v5617
  %v7583 = vmax.f32 %v5379, %v5619
  %v7584 = vmax.f32 %v5381, %v5621
  %v7585 = vmax.f32 %v5385, %v5625
  %v7586 = vmax.f32 %v5387, %v5627
  %v7587 = vmax.f32 %v5389, %v5629
  %v7588 = vmax.f32 %v5391, %v5631
  %v7589 = vmax.f32 %v5395, %v5635
  %v7590 = vmax.f32 %v5397, %v5637
  %v7591 = vmax.f32 %v5399, %v5639
  %v7592 = vmax.f32 %v5401, %v5641
  %v7593 = vmax.f32 %v5405, %v5645
  %v7594 = vmax.f32 %v5407, %v5647
  %v7595 = vmax.f32 %v5409, %v5649
  %v7596 = vmax.f32 %v5411, %v5651
  %v7597 = vmax.f32 %v5415, %v5655
  %v7598 = vmax.f32 %v5417, %v5657
  %v7599 = vmax.f32 %v5419, %v5659
  %v7600 = vmax.f32 %v5421, %v5661
  %v7601 = vmax.f32 %v5425, %v5665
  %v7602 = vmax.f32 %v5427, %v5667
  %v7603 = vmax.f32 %v5429, %v5669
  %v7604 = vmax.f32 %v5431, %v5671
  %v7605 = vmax.f32 %v5435, %v5675
  %v7606 = vmax.f32 %v5437, %v5677
  %v7607 = vmax.f32 %v5439, %v5679
  %v7608 = vmax.f32 %v5441, %v5681
  %v7609 = vmax.f32 %v5445, %v5685
  %v7610 = vmax.f32 %v5447, %v5687
  %v7611 = vmax.f32 %v5449, %v5689
  %v7612 = vmax.f32 %v5451, %v5691
  %v7613 = vmax.f32 %v7517, %v7565
  %v7614 = vmax.f32 %v7518, %v7566
  %v7615 = vmax.f32 %v7519, %v7567
  %v7616 = vmax.f32 %v7520, %v7568
  %v7617 = vmax.f32 %v7521, %v7569
  %v7618 = vmax.f32 %v7522, %v7570
  %v7619 = vmax.f32 %v7523, %v7571
  %v7620 = vmax.f32 %v7524, %v7572
  %v7621 = vmax.f32 %v7525, %v7573
  %v7622 = vmax.f32 %v7526, %v7574
  %v7623 = vmax.f32 %v7527, %v7575
  %v7624 = vmax.f32 %v7528, %v7576
  %v7625 = vmax.f32 %v7529, %v7577
  %v7626 = vmax.f32 %v7530, %v7578
  %v7627 = vmax.f32 %v7531, %v7579
  %v7628 = vmax.f32 %v7532, %v7580
  %v7629 = vmax.f32 %v7533, %v7581
  %v7630 = vmax.f32 %v7534, %v7582
  %v7631 = vmax.f32 %v7535, %v7583
  %v7632 = vmax.f32 %v7536, %v7584
  %v7633 = vmax.f32 %v7537, %v7585
  %v7634 = vmax.f32 %v7538, %v7586
  %v7635 = vmax.f32 %v7539, %v7587
  %v7636 = vmax.f32 %v7540, %v7588
  %v7637 = vmax.f32 %v7541, %v7589
  %v7638 = vmax.f32 %v7542, %v7590
  %v7639 = vmax.f32 %v7543, %v7591
  %v7640 = vmax.f32 %v7544, %v7592
  %v7641 = vmax.f32 %v7545, %v7593
  %v7642 = vmax.f32 %v7546, %v7594
  %v7643 = vmax.f32 %v7547, %v7595
  %v7644 = vmax.f32 %v7548, %v7596
  %v7645 = vmax.f32 %v7549, %v7597
  %v7646 = vmax.f32 %v7550, %v7598
  %v7647 = vmax.f32 %v7551, %v7599
  %v7648 = vmax.f32 %v7552, %v7600
  %v7649 = vmax.f32 %v7553, %v7601
  %v7650 = vmax.f32 %v7554, %v7602
  %v7651 = vmax.f32 %v7555, %v7603
  %v7652 = vmax.f32 %v7556, %v7604
  %v7653 = vmax.f32 %v7557, %v7605
  %v7654 = vmax.f32 %v7558, %v7606
  %v7655 = vmax.f32 %v7559, %v7607
  %v7656 = vmax.f32 %v7560, %v7608
  %v7657 = vmax.f32 %v7561, %v7609
  %v7658 = vmax.f32 %v7562, %v7610
  %v7659 = vmax.f32 %v7563, %v7611
  %v7660 = vmax.f32 %v7564, %v7612
  %v7661 = vmax.f32 %v7613, 0.0
  %v7662 = vmax.f32 %v7614, 0.0
  %v7663 = vmax.f32 %v7615, 0.0
  %v7664 = vmax.f32 %v7616, 0.0
  %v7665 = vmax.f32 %v7617, 0.0
  %v7666 = vmax.f32 %v7618, 0.0
  %v7667 = vmax.f32 %v7619, 0.0
  %v7668 = vmax.f32 %v7620, 0.0
  %v7669 = vmax.f32 %v7621, 0.0
  %v7670 = vmax.f32 %v7622, 0.0
  %v7671 = vmax.f32 %v7623, 0.0
  %v7672 = vmax.f32 %v7624, 0.0
  %v7673 = vmax.f32 %v7625, 0.0
  %v7674 = vmax.f32 %v7626, 0.0
  %v7675 = vmax.f32 %v7627, 0.0
  %v7676 = vmax.f32 %v7628, 0.0
  %v7677 = vmax.f32 %v7629, 0.0
  %v7678 = vmax.f32 %v7630, 0.0
  %v7679 = vmax.f32 %v7631, 0.0
  %v7680 = vmax.f32 %v7632, 0.0
  %v7681 = vmax.f32 %v7633, 0.0
  %v7682 = vmax.f32 %v7634, 0.0
  %v7683 = vmax.f32 %v7635, 0.0
  %v7684 = vmax.f32 %v7636, 0.0
  %v7685 = vmax.f32 %v7637, 0.0
  %v7686 = vmax.f32 %v7638, 0.0
  %v7687 = vmax.f32 %v7639, 0.0
  %v7688 = vmax.f32 %v7640, 0.0
  %v7689 = vmax.f32 %v7641, 0.0
  %v7690 = vmax.f32 %v7642, 0.0
  %v7691 = vmax.f32 %v7643, 0.0
  %v7692 = vmax.f32 %v7644, 0.0
  %v7693 = vmax.f32 %v7645, 0.0
  %v7694 = vmax.f32 %v7646, 0.0
  %v7695 = vmax.f32 %v7647, 0.0
  %v7696 = vmax.f32 %v7648, 0.0
  %v7697 = vmax.f32 %v7649, 0.0
  %v7698 = vmax.f32 %v7650, 0.0
  %v7699 = vmax.f32 %v7651, 0.0
  %v7700 = vmax.f32 %v7652, 0.0
  %v7701 = vmax.f32 %v7653, 0.0
  %v7702 = vmax.f32 %v7654, 0.0
  %v7703 = vmax.f32 %v7655, 0.0
  %v7704 = vmax.f32 %v7656, 0.0
  %v7705 = vmax.f32 %v7657, 0.0
  %v7706 = vmax.f32 %v7658, 0.0
  %v7707 = vmax.f32 %v7659, 0.0
  %v7708 = vmax.f32 %v7660, 0.0
  %v7709 = vmax.f32 %v5695, %v5935
  %v7710 = vmax.f32 %v5697, %v5937
  %v7711 = vmax.f32 %v5699, %v5939
  %v7712 = vmax.f32 %v5701, %v5941
  %v7713 = vmax.f32 %v5705, %v5945
  %v7714 = vmax.f32 %v5707, %v5947
  %v7715 = vmax.f32 %v5709, %v5949
  %v7716 = vmax.f32 %v5711, %v5951
  %v7717 = vmax.f32 %v5715, %v5955
  %v7718 = vmax.f32 %v5717, %v5957
  %v7719 = vmax.f32 %v5719, %v5959
  %v7720 = vmax.f32 %v5721, %v5961
  %v7721 = vmax.f32 %v5725, %v5965
  %v7722 = vmax.f32 %v5727, %v5967
  %v7723 = vmax.f32 %v5729, %v5969
  %v7724 = vmax.f32 %v5731, %v5971
  %v7725 = vmax.f32 %v5735, %v5975
  %v7726 = vmax.f32 %v5737, %v5977
  %v7727 = vmax.f32 %v5739, %v5979
  %v7728 = vmax.f32 %v5741, %v5981
  %v7729 = vmax.f32 %v5745, %v5985
  %v7730 = vmax.f32 %v5747, %v5987
  %v7731 = vmax.f32 %v5749, %v5989
  %v7732 = vmax.f32 %v5751, %v5991
  %v7733 = vmax.f32 %v5755, %v5995
  %v7734 = vmax.f32 %v5757, %v5997
  %v7735 = vmax.f32 %v5759, %v5999
  %v7736 = vmax.f32 %v5761, %v6001
  %v7737 = vmax.f32 %v5765, %v6005
  %v7738 = vmax.f32 %v5767, %v6007
  %v7739 = vmax.f32 %v5769, %v6009
  %v7740 = vmax.f32 %v5771, %v6011
  %v7741 = vmax.f32 %v5775, %v6015
  %v7742 = vmax.f32 %v5777, %v6017
  %v7743 = vmax.f32 %v5779, %v6019
  %v7744 = vmax.f32 %v5781, %v6021
  %v7745 = vmax.f32 %v5785, %v6025
  %v7746 = vmax.f32 %v5787, %v6027
  %v7747 = vmax.f32 %v5789, %v6029
  %v7748 = vmax.f32 %v5791, %v6031
  %v7749 = vmax.f32 %v5795, %v6035
  %v7750 = vmax.f32 %v5797, %v6037
  %v7751 = vmax.f32 %v5799, %v6039
  %v7752 = vmax.f32 %v5801, %v6041
  %v7753 = vmax.f32 %v5805, %v6045
  %v7754 = vmax.f32 %v5807, %v6047
  %v7755 = vmax.f32 %v5809, %v6049
  %v7756 = vmax.f32 %v5811, %v6051
  %v7757 = vmax.f32 %v5815, %v6055
  %v7758 = vmax.f32 %v5817, %v6057
  %v7759 = vmax.f32 %v5819, %v6059
  %v7760 = vmax.f32 %v5821, %v6061
  %v7761 = vmax.f32 %v5825, %v6065
  %v7762 = vmax.f32 %v5827, %v6067
  %v7763 = vmax.f32 %v5829, %v6069
  %v7764 = vmax.f32 %v5831, %v6071
  %v7765 = vmax.f32 %v5835, %v6075
  %v7766 = vmax.f32 %v5837, %v6077
  %v7767 = vmax.f32 %v5839, %v6079
  %v7768 = vmax.f32 %v5841, %v6081
  %v7769 = vmax.f32 %v5845, %v6085
  %v7770 = vmax.f32 %v5847, %v6087
  %v7771 = vmax.f32 %v5849, %v6089
  %v7772 = vmax.f32 %v5851, %v6091
  %v7773 = vmax.f32 %v5855, %v6095
  %v7774 = vmax.f32 %v5857, %v6097
  %v7775 = vmax.f32 %v5859, %v6099
  %v7776 = vmax.f32 %v5861, %v6101
  %v7777 = vmax.f32 %v5865, %v6105
  %v7778 = vmax.f32 %v5867, %v6107
  %v7779 = vmax.f32 %v5869, %v6109
  %v7780 = vmax.f32 %v5871, %v6111
  %v7781 = vmax.f32 %v5875, %v6115
  %v7782 = vmax.f32 %v5877, %v6117
  %v7783 = vmax.f32 %v5879, %v6119
  %v7784 = vmax.f32 %v5881, %v6121
  %v7785 = vmax.f32 %v5885, %v6125
  %v7786 = vmax.f32 %v5887, %v6127
  %v7787 = vmax.f32 %v5889, %v6129
  %v7788 = vmax.f32 %v5891, %v6131
  %v7789 = vmax.f32 %v5895, %v6135
  %v7790 = vmax.f32 %v5897, %v6137
  %v7791 = vmax.f32 %v5899, %v6139
  %v7792 = vmax.f32 %v5901, %v6141
  %v7793 = vmax.f32 %v5905, %v6145
  %v7794 = vmax.f32 %v5907, %v6147
  %v7795 = vmax.f32 %v5909, %v6149
  %v7796 = vmax.f32 %v5911, %v6151
  %v7797 = vmax.f32 %v5915, %v6155
  %v7798 = vmax.f32 %v5917, %v6157
  %v7799 = vmax.f32 %v5919, %v6159
  %v7800 = vmax.f32 %v5921, %v6161
  %v7801 = vmax.f32 %v5925, %v6165
  %v7802 = vmax.f32 %v5927, %v6167
  %v7803 = vmax.f32 %v5929, %v6169
  %v7804 = vmax.f32 %v5931, %v6171
  %v7805 = vmax.f32 %v7709, %v7757
  %v7806 = vmax.f32 %v7710, %v7758
  %v7807 = vmax.f32 %v7711, %v7759
  %v7808 = vmax.f32 %v7712, %v7760
  %v7809 = vmax.f32 %v7713, %v7761
  %v7810 = vmax.f32 %v7714, %v7762
  %v7811 = vmax.f32 %v7715, %v7763
  %v7812 = vmax.f32 %v7716, %v7764
  %v7813 = vmax.f32 %v7717, %v7765
  %v7814 = vmax.f32 %v7718, %v7766
  %v7815 = vmax.f32 %v7719, %v7767
  %v7816 = vmax.f32 %v7720, %v7768
  %v7817 = vmax.f32 %v7721, %v7769
  %v7818 = vmax.f32 %v7722, %v7770
  %v7819 = vmax.f32 %v7723, %v7771
  %v7820 = vmax.f32 %v7724, %v7772
  %v7821 = vmax.f32 %v7725, %v7773
  %v7822 = vmax.f32 %v7726, %v7774
  %v7823 = vmax.f32 %v7727, %v7775
  %v7824 = vmax.f32 %v7728, %v7776
  %v7825 = vmax.f32 %v7729, %v7777
  %v7826 = vmax.f32 %v7730, %v7778
  %v7827 = vmax.f32 %v7731, %v7779
  %v7828 = vmax.f32 %v7732, %v7780
  %v7829 = vmax.f32 %v7733, %v7781
  %v7830 = vmax.f32 %v7734, %v7782
  %v7831 = vmax.f32 %v7735, %v7783
  %v7832 = vmax.f32 %v7736, %v7784
  %v7833 = vmax.f32 %v7737, %v7785
  %v7834 = vmax.f32 %v7738, %v7786
  %v7835 = vmax.f32 %v7739, %v7787
  %v7836 = vmax.f32 %v7740, %v7788
  %v7837 = vmax.f32 %v7741, %v7789
  %v7838 = vmax.f32 %v7742, %v7790
  %v7839 = vmax.f32 %v7743, %v7791
  %v7840 = vmax.f32 %v7744, %v7792
  %v7841 = vmax.f32 %v7745, %v7793
  %v7842 = vmax.f32 %v7746, %v7794
  %v7843 = vmax.f32 %v7747, %v7795
  %v7844 = vmax.f32 %v7748, %v7796
  %v7845 = vmax.f32 %v7749, %v7797
  %v7846 = vmax.f32 %v7750, %v7798
  %v7847 = vmax.f32 %v7751, %v7799
  %v7848 = vmax.f32 %v7752, %v7800
  %v7849 = vmax.f32 %v7753, %v7801
  %v7850 = vmax.f32 %v7754, %v7802
  %v7851 = vmax.f32 %v7755, %v7803
  %v7852 = vmax.f32 %v7756, %v7804
  %v7853 = vmax.f32 %v7805, 0.0
  %v7854 = vmax.f32 %v7806, 0.0
  %v7855 = vmax.f32 %v7807, 0.0
  %v7856 = vmax.f32 %v7808, 0.0
  %v7857 = vmax.f32 %v7809, 0.0
  %v7858 = vmax.f32 %v7810, 0.0
  %v7859 = vmax.f32 %v7811, 0.0
  %v7860 = vmax.f32 %v7812, 0.0
  %v7861 = vmax.f32 %v7813, 0.0
  %v7862 = vmax.f32 %v7814, 0.0
  %v7863 = vmax.f32 %v7815, 0.0
  %v7864 = vmax.f32 %v7816, 0.0
  %v7865 = vmax.f32 %v7817, 0.0
  %v7866 = vmax.f32 %v7818, 0.0
  %v7867 = vmax.f32 %v7819, 0.0
  %v7868 = vmax.f32 %v7820, 0.0
  %v7869 = vmax.f32 %v7821, 0.0
  %v7870 = vmax.f32 %v7822, 0.0
  %v7871 = vmax.f32 %v7823, 0.0
  %v7872 = vmax.f32 %v7824, 0.0
  %v7873 = vmax.f32 %v7825, 0.0
  %v7874 = vmax.f32 %v7826, 0.0
  %v7875 = vmax.f32 %v7827, 0.0
  %v7876 = vmax.f32 %v7828, 0.0
  %v7877 = vmax.f32 %v7829, 0.0
  %v7878 = vmax.f32 %v7830, 0.0
  %v7879 = vmax.f32 %v7831, 0.0
  %v7880 = vmax.f32 %v7832, 0.0
  %v7881 = vmax.f32 %v7833, 0.0
  %v7882 = vmax.f32 %v7834, 0.0
  %v7883 = vmax.f32 %v7835, 0.0
  %v7884 = vmax.f32 %v7836, 0.0
  %v7885 = vmax.f32 %v7837, 0.0
  %v7886 = vmax.f32 %v7838, 0.0
  %v7887 = vmax.f32 %v7839, 0.0
  %v7888 = vmax.f32 %v7840, 0.0
  %v7889 = vmax.f32 %v7841, 0.0
  %v7890 = vmax.f32 %v7842, 0.0
  %v7891 = vmax.f32 %v7843, 0.0
  %v7892 = vmax.f32 %v7844, 0.0
  %v7893 = vmax.f32 %v7845, 0.0
  %v7894 = vmax.f32 %v7846, 0.0
  %v7895 = vmax.f32 %v7847, 0.0
  %v7896 = vmax.f32 %v7848, 0.0
  %v7897 = vmax.f32 %v7849, 0.0
  %v7898 = vmax.f32 %v7850, 0.0
  %v7899 = vmax.f32 %v7851, 0.0
  %v7900 = vmax.f32 %v7852, 0.0
  %v7901 = vmax.f32 %v6175, %v6415
  %v7902 = vmax.f32 %v6177, %v6417
  %v7903 = vmax.f32 %v6179, %v6419
  %v7904 = vmax.f32 %v6181, %v6421
  %v7905 = vmax.f32 %v6185, %v6425
  %v7906 = vmax.f32 %v6187, %v6427
  %v7907 = vmax.f32 %v6189, %v6429
  %v7908 = vmax.f32 %v6191, %v6431
  %v7909 = vmax.f32 %v6195, %v6435
  %v7910 = vmax.f32 %v6197, %v6437
  %v7911 = vmax.f32 %v6199, %v6439
  %v7912 = vmax.f32 %v6201, %v6441
  %v7913 = vmax.f32 %v6205, %v6445
  %v7914 = vmax.f32 %v6207, %v6447
  %v7915 = vmax.f32 %v6209, %v6449
  %v7916 = vmax.f32 %v6211, %v6451
  %v7917 = vmax.f32 %v6215, %v6455
  %v7918 = vmax.f32 %v6217, %v6457
  %v7919 = vmax.f32 %v6219, %v6459
  %v7920 = vmax.f32 %v6221, %v6461
  %v7921 = vmax.f32 %v6225, %v6465
  %v7922 = vmax.f32 %v6227, %v6467
  %v7923 = vmax.f32 %v6229, %v6469
  %v7924 = vmax.f32 %v6231, %v6471
  %v7925 = vmax.f32 %v6235, %v6475
  %v7926 = vmax.f32 %v6237, %v6477
  %v7927 = vmax.f32 %v6239, %v6479
  %v7928 = vmax.f32 %v6241, %v6481
  %v7929 = vmax.f32 %v6245, %v6485
  %v7930 = vmax.f32 %v6247, %v6487
  %v7931 = vmax.f32 %v6249, %v6489
  %v7932 = vmax.f32 %v6251, %v6491
  %v7933 = vmax.f32 %v6255, %v6495
  %v7934 = vmax.f32 %v6257, %v6497
  %v7935 = vmax.f32 %v6259, %v6499
  %v7936 = vmax.f32 %v6261, %v6501
  %v7937 = vmax.f32 %v6265, %v6505
  %v7938 = vmax.f32 %v6267, %v6507
  %v7939 = vmax.f32 %v6269, %v6509
  %v7940 = vmax.f32 %v6271, %v6511
  %v7941 = vmax.f32 %v6275, %v6515
  %v7942 = vmax.f32 %v6277, %v6517
  %v7943 = vmax.f32 %v6279, %v6519
  %v7944 = vmax.f32 %v6281, %v6521
  %v7945 = vmax.f32 %v6285, %v6525
  %v7946 = vmax.f32 %v6287, %v6527
  %v7947 = vmax.f32 %v6289, %v6529
  %v7948 = vmax.f32 %v6291, %v6531
  %v7949 = vmax.f32 %v6295, %v6535
  %v7950 = vmax.f32 %v6297, %v6537
  %v7951 = vmax.f32 %v6299, %v6539
  %v7952 = vmax.f32 %v6301, %v6541
  %v7953 = vmax.f32 %v6305, %v6545
  %v7954 = vmax.f32 %v6307, %v6547
  %v7955 = vmax.f32 %v6309, %v6549
  %v7956 = vmax.f32 %v6311, %v6551
  %v7957 = vmax.f32 %v6315, %v6555
  %v7958 = vmax.f32 %v6317, %v6557
  %v7959 = vmax.f32 %v6319, %v6559
  %v7960 = vmax.f32 %v6321, %v6561
  %v7961 = vmax.f32 %v6325, %v6565
  %v7962 = vmax.f32 %v6327, %v6567
  %v7963 = vmax.f32 %v6329, %v6569
  %v7964 = vmax.f32 %v6331, %v6571
  %v7965 = vmax.f32 %v6335, %v6575
  %v7966 = vmax.f32 %v6337, %v6577
  %v7967 = vmax.f32 %v6339, %v6579
  %v7968 = vmax.f32 %v6341, %v6581
  %v7969 = vmax.f32 %v6345, %v6585
  %v7970 = vmax.f32 %v6347, %v6587
  %v7971 = vmax.f32 %v6349, %v6589
  %v7972 = vmax.f32 %v6351, %v6591
  %v7973 = vmax.f32 %v6355, %v6595
  %v7974 = vmax.f32 %v6357, %v6597
  %v7975 = vmax.f32 %v6359, %v6599
  %v7976 = vmax.f32 %v6361, %v6601
  %v7977 = vmax.f32 %v6365, %v6605
  %v7978 = vmax.f32 %v6367, %v6607
  %v7979 = vmax.f32 %v6369, %v6609
  %v7980 = vmax.f32 %v6371, %v6611
  %v7981 = vmax.f32 %v6375, %v6615
  %v7982 = vmax.f32 %v6377, %v6617
  %v7983 = vmax.f32 %v6379, %v6619
  %v7984 = vmax.f32 %v6381, %v6621
  %v7985 = vmax.f32 %v6385, %v6625
  %v7986 = vmax.f32 %v6387, %v6627
  %v7987 = vmax.f32 %v6389, %v6629
  %v7988 = vmax.f32 %v6391, %v6631
  %v7989 = vmax.f32 %v6395, %v6635
  %v7990 = vmax.f32 %v6397, %v6637
  %v7991 = vmax.f32 %v6399, %v6639
  %v7992 = vmax.f32 %v6401, %v6641
  %v7993 = vmax.f32 %v6405, %v6645
  %v7994 = vmax.f32 %v6407, %v6647
  %v7995 = vmax.f32 %v6409, %v6649
  %v7996 = vmax.f32 %v6411, %v6651
  %v7997 = vmax.f32 %v7901, %v7949
  %v7998 = vmax.f32 %v7902, %v7950
  %v7999 = vmax.f32 %v7903, %v7951
  %v8000 = vmax.f32 %v7904, %v7952
  %v8001 = vmax.f32 %v7905, %v7953
  %v8002 = vmax.f32 %v7906, %v7954
  %v8003 = vmax.f32 %v7907, %v7955
  %v8004 = vmax.f32 %v7908, %v7956
  %v8005 = vmax.f32 %v7909, %v7957
  %v8006 = vmax.f32 %v7910, %v7958
  %v8007 = vmax.f32 %v7911, %v7959
  %v8008 = vmax.f32 %v7912, %v7960
  %v8009 = vmax.f32 %v7913, %v7961
  %v8010 = vmax.f32 %v7914, %v7962
  %v8011 = vmax.f32 %v7915, %v7963
  %v8012 = vmax.f32 %v7916, %v7964
  %v8013 = vmax.f32 %v7917, %v7965
  %v8014 = vmax.f32 %v7918, %v7966
  %v8015 = vmax.f32 %v7919, %v7967
  %v8016 = vmax.f32 %v7920, %v7968
  %v8017 = vmax.f32 %v7921, %v7969
  %v8018 = vmax.f32 %v7922, %v7970
  %v8019 = vmax.f32 %v7923, %v7971
  %v8020 = vmax.f32 %v7924, %v7972
  %v8021 = vmax.f32 %v7925, %v7973
  %v8022 = vmax.f32 %v7926, %v7974
  %v8023 = vmax.f32 %v7927, %v7975
  %v8024 = vmax.f32 %v7928, %v7976
  %v8025 = vmax.f32 %v7929, %v7977
  %v8026 = vmax.f32 %v7930, %v7978
  %v8027 = vmax.f32 %v7931, %v7979
  %v8028 = vmax.f32 %v7932, %v7980
  %v8029 = vmax.f32 %v7933, %v7981
  %v8030 = vmax.f32 %v7934, %v7982
  %v8031 = vmax.f32 %v7935, %v7983
  %v8032 = vmax.f32 %v7936, %v7984
  %v8033 = vmax.f32 %v7937, %v7985
  %v8034 = vmax.f32 %v7938, %v7986
  %v8035 = vmax.f32 %v7939, %v7987
  %v8036 = vmax.f32 %v7940, %v7988
  %v8037 = vmax.f32 %v7941, %v7989
  %v8038 = vmax.f32 %v7942, %v7990
  %v8039 = vmax.f32 %v7943, %v7991
  %v8040 = vmax.f32 %v7944, %v7992
  %v8041 = vmax.f32 %v7945, %v7993
  %v8042 = vmax.f32 %v7946, %v7994
  %v8043 = vmax.f32 %v7947, %v7995
  %v8044 = vmax.f32 %v7948, %v7996
  %v8045 = vmax.f32 %v7997, 0.0
  %v8046 = vmax.f32 %v7998, 0.0
  %v8047 = vmax.f32 %v7999, 0.0
  %v8048 = vmax.f32 %v8000, 0.0
  %v8049 = vmax.f32 %v8001, 0.0
  %v8050 = vmax.f32 %v8002, 0.0
  %v8051 = vmax.f32 %v8003, 0.0
  %v8052 = vmax.f32 %v8004, 0.0
  %v8053 = vmax.f32 %v8005, 0.0
  %v8054 = vmax.f32 %v8006, 0.0
  %v8055 = vmax.f32 %v8007, 0.0
  %v8056 = vmax.f32 %v8008, 0.0
  %v8057 = vmax.f32 %v8009, 0.0
  %v8058 = vmax.f32 %v8010, 0.0
  %v8059 = vmax.f32 %v8011, 0.0
  %v8060 = vmax.f32 %v8012, 0.0
  %v8061 = vmax.f32 %v8013, 0.0
  %v8062 = vmax.f32 %v8014, 0.0
  %v8063 = vmax.f32 %v8015, 0.0
  %v8064 = vmax.f32 %v8016, 0.0
  %v8065 = vmax.f32 %v8017, 0.0
  %v8066 = vmax.f32 %v8018, 0.0
  %v8067 = vmax.f32 %v8019, 0.0
  %v8068 = vmax.f32 %v8020, 0.0
  %v8069 = vmax.f32 %v8021, 0.0
  %v8070 = vmax.f32 %v8022, 0.0
  %v8071 = vmax.f32 %v8023, 0.0
  %v8072 = vmax.f32 %v8024, 0.0
  %v8073 = vmax.f32 %v8025, 0.0
  %v8074 = vmax.f32 %v8026, 0.0
  %v8075 = vmax.f32 %v8027, 0.0
  %v8076 = vmax.f32 %v8028, 0.0
  %v8077 = vmax.f32 %v8029, 0.0
  %v8078 = vmax.f32 %v8030, 0.0
  %v8079 = vmax.f32 %v8031, 0.0
  %v8080 = vmax.f32 %v8032, 0.0
  %v8081 = vmax.f32 %v8033, 0.0
  %v8082 = vmax.f32 %v8034, 0.0
  %v8083 = vmax.f32 %v8035, 0.0
  %v8084 = vmax.f32 %v8036, 0.0
  %v8085 = vmax.f32 %v8037, 0.0
  %v8086 = vmax.f32 %v8038, 0.0
  %v8087 = vmax.f32 %v8039, 0.0
  %v8088 = vmax.f32 %v8040, 0.0
  %v8089 = vmax.f32 %v8041, 0.0
  %v8090 = vmax.f32 %v8042, 0.0
  %v8091 = vmax.f32 %v8043, 0.0
  %v8092 = vmax.f32 %v8044, 0.0
  %v8093 = vmax.f32 %v6655, %v6895
  %v8094 = vmax.f32 %v6657, %v6897
  %v8095 = vmax.f32 %v6659, %v6899
  %v8096 = vmax.f32 %v6661, %v6901
  %v8097 = vmax.f32 %v6665, %v6905
  %v8098 = vmax.f32 %v6667, %v6907
  %v8099 = vmax.f32 %v6669, %v6909
  %v8100 = vmax.f32 %v6671, %v6911
  %v8101 = vmax.f32 %v6675, %v6915
  %v8102 = vmax.f32 %v6677, %v6917
  %v8103 = vmax.f32 %v6679, %v6919
  %v8104 = vmax.f32 %v6681, %v6921
  %v8105 = vmax.f32 %v6685, %v6925
  %v8106 = vmax.f32 %v6687, %v6927
  %v8107 = vmax.f32 %v6689, %v6929
  %v8108 = vmax.f32 %v6691, %v6931
  %v8109 = vmax.f32 %v6695, %v6935
  %v8110 = vmax.f32 %v6697, %v6937
  %v8111 = vmax.f32 %v6699, %v6939
  %v8112 = vmax.f32 %v6701, %v6941
  %v8113 = vmax.f32 %v6705, %v6945
  %v8114 = vmax.f32 %v6707, %v6947
  %v8115 = vmax.f32 %v6709, %v6949
  %v8116 = vmax.f32 %v6711, %v6951
  %v8117 = vmax.f32 %v6715, %v6955
  %v8118 = vmax.f32 %v6717, %v6957
  %v8119 = vmax.f32 %v6719, %v6959
  %v8120 = vmax.f32 %v6721, %v6961
  %v8121 = vmax.f32 %v6725, %v6965
  %v8122 = vmax.f32 %v6727, %v6967
  %v8123 = vmax.f32 %v6729, %v6969
  %v8124 = vmax.f32 %v6731, %v6971
  %v8125 = vmax.f32 %v6735, %v6975
  %v8126 = vmax.f32 %v6737, %v6977
  %v8127 = vmax.f32 %v6739, %v6979
  %v8128 = vmax.f32 %v6741, %v6981
  %v8129 = vmax.f32 %v6745, %v6985
  %v8130 = vmax.f32 %v6747, %v6987
  %v8131 = vmax.f32 %v6749, %v6989
  %v8132 = vmax.f32 %v6751, %v6991
  %v8133 = vmax.f32 %v6755, %v6995
  %v8134 = vmax.f32 %v6757, %v6997
  %v8135 = vmax.f32 %v6759, %v6999
  %v8136 = vmax.f32 %v6761, %v7001
  %v8137 = vmax.f32 %v6765, %v7005
  %v8138 = vmax.f32 %v6767, %v7007
  %v8139 = vmax.f32 %v6769, %v7009
  %v8140 = vmax.f32 %v6771, %v7011
  %v8141 = vmax.f32 %v6775, %v7015
  %v8142 = vmax.f32 %v6777, %v7017
  %v8143 = vmax.f32 %v6779, %v7019
  %v8144 = vmax.f32 %v6781, %v7021
  %v8145 = vmax.f32 %v6785, %v7025
  %v8146 = vmax.f32 %v6787, %v7027
  %v8147 = vmax.f32 %v6789, %v7029
  %v8148 = vmax.f32 %v6791, %v7031
  %v8149 = vmax.f32 %v6795, %v7035
  %v8150 = vmax.f32 %v6797, %v7037
  %v8151 = vmax.f32 %v6799, %v7039
  %v8152 = vmax.f32 %v6801, %v7041
  %v8153 = vmax.f32 %v6805, %v7045
  %v8154 = vmax.f32 %v6807, %v7047
  %v8155 = vmax.f32 %v6809, %v7049
  %v8156 = vmax.f32 %v6811, %v7051
  %v8157 = vmax.f32 %v6815, %v7055
  %v8158 = vmax.f32 %v6817, %v7057
  %v8159 = vmax.f32 %v6819, %v7059
  %v8160 = vmax.f32 %v6821, %v7061
  %v8161 = vmax.f32 %v6825, %v7065
  %v8162 = vmax.f32 %v6827, %v7067
  %v8163 = vmax.f32 %v6829, %v7069
  %v8164 = vmax.f32 %v6831, %v7071
  %v8165 = vmax.f32 %v6835, %v7075
  %v8166 = vmax.f32 %v6837, %v7077
  %v8167 = vmax.f32 %v6839, %v7079
  %v8168 = vmax.f32 %v6841, %v7081
  %v8169 = vmax.f32 %v6845, %v7085
  %v8170 = vmax.f32 %v6847, %v7087
  %v8171 = vmax.f32 %v6849, %v7089
  %v8172 = vmax.f32 %v6851, %v7091
  %v8173 = vmax.f32 %v6855, %v7095
  %v8174 = vmax.f32 %v6857, %v7097
  %v8175 = vmax.f32 %v6859, %v7099
  %v8176 = vmax.f32 %v6861, %v7101
  %v8177 = vmax.f32 %v6865, %v7105
  %v8178 = vmax.f32 %v6867, %v7107
  %v8179 = vmax.f32 %v6869, %v7109
  %v8180 = vmax.f32 %v6871, %v7111
  %v8181 = vmax.f32 %v6875, %v7115
  %v8182 = vmax.f32 %v6877, %v7117
  %v8183 = vmax.f32 %v6879, %v7119
  %v8184 = vmax.f32 %v6881, %v7121
  %v8185 = vmax.f32 %v6885, %v7125
  %v8186 = vmax.f32 %v6887, %v7127
  %v8187 = vmax.f32 %v6889, %v7129
  %v8188 = vmax.f32 %v6891, %v7131
  %v8189 = vmax.f32 %v8093, %v8141
  %v8190 = vmax.f32 %v8094, %v8142
  %v8191 = vmax.f32 %v8095, %v8143
  %v8192 = vmax.f32 %v8096, %v8144
  %v8193 = vmax.f32 %v8097, %v8145
  %v8194 = vmax.f32 %v8098, %v8146
  %v8195 = vmax.f32 %v8099, %v8147
  %v8196 = vmax.f32 %v8100, %v8148
  %v8197 = vmax.f32 %v8101, %v8149
  %v8198 = vmax.f32 %v8102, %v8150
  %v8199 = vmax.f32 %v8103, %v8151
  %v8200 = vmax.f32 %v8104, %v8152
  %v8201 = vmax.f32 %v8105, %v8153
  %v8202 = vmax.f32 %v8106, %v8154
  %v8203 = vmax.f32 %v8107, %v8155
  %v8204 = vmax.f32 %v8108, %v8156
  %v8205 = vmax.f32 %v8109, %v8157
  %v8206 = vmax.f32 %v8110, %v8158
  %v8207 = vmax.f32 %v8111, %v8159
  %v8208 = vmax.f32 %v8112, %v8160
  %v8209 = vmax.f32 %v8113, %v8161
  %v8210 = vmax.f32 %v8114, %v8162
  %v8211 = vmax.f32 %v8115, %v8163
  %v8212 = vmax.f32 %v8116, %v8164
  %v8213 = vmax.f32 %v8117, %v8165
  %v8214 = vmax.f32 %v8118, %v8166
  %v8215 = vmax.f32 %v8119, %v8167
  %v8216 = vmax.f32 %v8120, %v8168
  %v8217 = vmax.f32 %v8121, %v8169
  %v8218 = vmax.f32 %v8122, %v8170
  %v8219 = vmax.f32 %v8123, %v8171
  %v8220 = vmax.f32 %v8124, %v8172
  %v8221 = vmax.f32 %v8125, %v8173
  %v8222 = vmax.f32 %v8126, %v8174
  %v8223 = vmax.f32 %v8127, %v8175
  %v8224 = vmax.f32 %v8128, %v8176
  %v8225 = vmax.f32 %v8129, %v8177
  %v8226 = vmax.f32 %v8130, %v8178
  %v8227 = vmax.f32 %v8131, %v8179
  %v8228 = vmax.f32 %v8132, %v8180
  %v8229 = vmax.f32 %v8133, %v8181
  %v8230 = vmax.f32 %v8134, %v8182
  %v8231 = vmax.f32 %v8135, %v8183
  %v8232 = vmax.f32 %v8136, %v8184
  %v8233 = vmax.f32 %v8137, %v8185
  %v8234 = vmax.f32 %v8138, %v8186
  %v8235 = vmax.f32 %v8139, %v8187
  %v8236 = vmax.f32 %v8140, %v8188
  %v8237 = vmax.f32 %v8189, 0.0
  %v8238 = vmax.f32 %v8190, 0.0
  %v8239 = vmax.f32 %v8191, 0.0
  %v8240 = vmax.f32 %v8192, 0.0
  %v8241 = vmax.f32 %v8193, 0.0
  %v8242 = vmax.f32 %v8194, 0.0
  %v8243 = vmax.f32 %v8195, 0.0
  %v8244 = vmax.f32 %v8196, 0.0
  %v8245 = vmax.f32 %v8197, 0.0
  %v8246 = vmax.f32 %v8198, 0.0
  %v8247 = vmax.f32 %v8199, 0.0
  %v8248 = vmax.f32 %v8200, 0.0
  %v8249 = vmax.f32 %v8201, 0.0
  %v8250 = vmax.f32 %v8202, 0.0
  %v8251 = vmax.f32 %v8203, 0.0
  %v8252 = vmax.f32 %v8204, 0.0
  %v8253 = vmax.f32 %v8205, 0.0
  %v8254 = vmax.f32 %v8206, 0.0
  %v8255 = vmax.f32 %v8207, 0.0
  %v8256 = vmax.f32 %v8208, 0.0
  %v8257 = vmax.f32 %v8209, 0.0
  %v8258 = vmax.f32 %v8210, 0.0
  %v8259 = vmax.f32 %v8211, 0.0
  %v8260 = vmax.f32 %v8212, 0.0
  %v8261 = vmax.f32 %v8213, 0.0
  %v8262 = vmax.f32 %v8214, 0.0
  %v8263 = vmax.f32 %v8215, 0.0
  %v8264 = vmax.f32 %v8216, 0.0
  %v8265 = vmax.f32 %v8217, 0.0
  %v8266 = vmax.f32 %v8218, 0.0
  %v8267 = vmax.f32 %v8219, 0.0
  %v8268 = vmax.f32 %v8220, 0.0
  %v8269 = vmax.f32 %v8221, 0.0
  %v8270 = vmax.f32 %v8222, 0.0
  %v8271 = vmax.f32 %v8223, 0.0
  %v8272 = vmax.f32 %v8224, 0.0
  %v8273 = vmax.f32 %v8225, 0.0
  %v8274 = vmax.f32 %v8226, 0.0
  %v8275 = vmax.f32 %v8227, 0.0
  %v8276 = vmax.f32 %v8228, 0.0
  %v8277 = vmax.f32 %v8229, 0.0
  %v8278 = vmax.f32 %v8230, 0.0
  %v8279 = vmax.f32 %v8231, 0.0
  %v8280 = vmax.f32 %v8232, 0.0
  %v8281 = vmax.f32 %v8233, 0.0
  %v8282 = vmax.f32 %v8234, 0.0
  %v8283 = vmax.f32 %v8235, 0.0
  %v8284 = vmax.f32 %v8236, 0.0
  %v8285 = vpack.c.bf16 %v7279, %v7277
  %v8286 = vpack.c.bf16 %v7280, %v7278
  %v8287 = vpack.c.bf16 %v7283, %v7281
  %v8288 = vpack.c.bf16 %v7284, %v7282
  %v8289 = vpack.c.bf16 %v7287, %v7285
  %v8290 = vpack.c.bf16 %v7288, %v7286
  %v8291 = vpack.c.bf16 %v7291, %v7289
  %v8292 = vpack.c.bf16 %v7292, %v7290
  %v8293 = vpack.c.bf16 %v7295, %v7293
  %v8294 = vpack.c.bf16 %v7296, %v7294
  %v8295 = vpack.c.bf16 %v7299, %v7297
  %v8296 = vpack.c.bf16 %v7300, %v7298
  %v8297 = vpack.c.bf16 %v7303, %v7301
  %v8298 = vpack.c.bf16 %v7304, %v7302
  %v8299 = vpack.c.bf16 %v7307, %v7305
  %v8300 = vpack.c.bf16 %v7308, %v7306
  %v8301 = vpack.c.bf16 %v7311, %v7309
  %v8302 = vpack.c.bf16 %v7312, %v7310
  %v8303 = vpack.c.bf16 %v7315, %v7313
  %v8304 = vpack.c.bf16 %v7316, %v7314
  %v8305 = vpack.c.bf16 %v7319, %v7317
  %v8306 = vpack.c.bf16 %v7320, %v7318
  %v8307 = vpack.c.bf16 %v7323, %v7321
  %v8308 = vpack.c.bf16 %v7324, %v7322
  %v8309 = vpack.c.bf16 %v7471, %v7469
  %v8310 = vpack.c.bf16 %v7472, %v7470
  %v8311 = vpack.c.bf16 %v7475, %v7473
  %v8312 = vpack.c.bf16 %v7476, %v7474
  %v8313 = vpack.c.bf16 %v7479, %v7477
  %v8314 = vpack.c.bf16 %v7480, %v7478
  %v8315 = vpack.c.bf16 %v7483, %v7481
  %v8316 = vpack.c.bf16 %v7484, %v7482
  %v8317 = vpack.c.bf16 %v7487, %v7485
  %v8318 = vpack.c.bf16 %v7488, %v7486
  %v8319 = vpack.c.bf16 %v7491, %v7489
  %v8320 = vpack.c.bf16 %v7492, %v7490
  %v8321 = vpack.c.bf16 %v7495, %v7493
  %v8322 = vpack.c.bf16 %v7496, %v7494
  %v8323 = vpack.c.bf16 %v7499, %v7497
  %v8324 = vpack.c.bf16 %v7500, %v7498
  %v8325 = vpack.c.bf16 %v7503, %v7501
  %v8326 = vpack.c.bf16 %v7504, %v7502
  %v8327 = vpack.c.bf16 %v7507, %v7505
  %v8328 = vpack.c.bf16 %v7508, %v7506
  %v8329 = vpack.c.bf16 %v7511, %v7509
  %v8330 = vpack.c.bf16 %v7512, %v7510
  %v8331 = vpack.c.bf16 %v7515, %v7513
  %v8332 = vpack.c.bf16 %v7516, %v7514
  %v8333 = vpack.c.bf16 %v7663, %v7661
  %v8334 = vpack.c.bf16 %v7664, %v7662
  %v8335 = vpack.c.bf16 %v7667, %v7665
  %v8336 = vpack.c.bf16 %v7668, %v7666
  %v8337 = vpack.c.bf16 %v7671, %v7669
  %v8338 = vpack.c.bf16 %v7672, %v7670
  %v8339 = vpack.c.bf16 %v7675, %v7673
  %v8340 = vpack.c.bf16 %v7676, %v7674
  %v8341 = vpack.c.bf16 %v7679, %v7677
  %v8342 = vpack.c.bf16 %v7680, %v7678
  %v8343 = vpack.c.bf16 %v7683, %v7681
  %v8344 = vpack.c.bf16 %v7684, %v7682
  %v8345 = vpack.c.bf16 %v7687, %v7685
  %v8346 = vpack.c.bf16 %v7688, %v7686
  %v8347 = vpack.c.bf16 %v7691, %v7689
  %v8348 = vpack.c.bf16 %v7692, %v7690
  %v8349 = vpack.c.bf16 %v7695, %v7693
  %v8350 = vpack.c.bf16 %v7696, %v7694
  %v8351 = vpack.c.bf16 %v7699, %v7697
  %v8352 = vpack.c.bf16 %v7700, %v7698
  %v8353 = vpack.c.bf16 %v7703, %v7701
  %v8354 = vpack.c.bf16 %v7704, %v7702
  %v8355 = vpack.c.bf16 %v7707, %v7705
  %v8356 = vpack.c.bf16 %v7708, %v7706
  %v8357 = vpack.c.bf16 %v7855, %v7853
  %v8358 = vpack.c.bf16 %v7856, %v7854
  %v8359 = vpack.c.bf16 %v7859, %v7857
  %v8360 = vpack.c.bf16 %v7860, %v7858
  %v8361 = vpack.c.bf16 %v7863, %v7861
  %v8362 = vpack.c.bf16 %v7864, %v7862
  %v8363 = vpack.c.bf16 %v7867, %v7865
  %v8364 = vpack.c.bf16 %v7868, %v7866
  %v8365 = vpack.c.bf16 %v7871, %v7869
  %v8366 = vpack.c.bf16 %v7872, %v7870
  %v8367 = vpack.c.bf16 %v7875, %v7873
  %v8368 = vpack.c.bf16 %v7876, %v7874
  %v8369 = vpack.c.bf16 %v7879, %v7877
  %v8370 = vpack.c.bf16 %v7880, %v7878
  %v8371 = vpack.c.bf16 %v7883, %v7881
  %v8372 = vpack.c.bf16 %v7884, %v7882
  %v8373 = vpack.c.bf16 %v7887, %v7885
  %v8374 = vpack.c.bf16 %v7888, %v7886
  %v8375 = vpack.c.bf16 %v7891, %v7889
  %v8376 = vpack.c.bf16 %v7892, %v7890
  %v8377 = vpack.c.bf16 %v7895, %v7893
  %v8378 = vpack.c.bf16 %v7896, %v7894
  %v8379 = vpack.c.bf16 %v7899, %v7897
  %v8380 = vpack.c.bf16 %v7900, %v7898
  %v8381 = vpack.c.bf16 %v8047, %v8045
  %v8382 = vpack.c.bf16 %v8048, %v8046
  %v8383 = vpack.c.bf16 %v8051, %v8049
  %v8384 = vpack.c.bf16 %v8052, %v8050
  %v8385 = vpack.c.bf16 %v8055, %v8053
  %v8386 = vpack.c.bf16 %v8056, %v8054
  %v8387 = vpack.c.bf16 %v8059, %v8057
  %v8388 = vpack.c.bf16 %v8060, %v8058
  %v8389 = vpack.c.bf16 %v8063, %v8061
  %v8390 = vpack.c.bf16 %v8064, %v8062
  %v8391 = vpack.c.bf16 %v8067, %v8065
  %v8392 = vpack.c.bf16 %v8068, %v8066
  %v8393 = vpack.c.bf16 %v8071, %v8069
  %v8394 = vpack.c.bf16 %v8072, %v8070
  %v8395 = vpack.c.bf16 %v8075, %v8073
  %v8396 = vpack.c.bf16 %v8076, %v8074
  %v8397 = vpack.c.bf16 %v8079, %v8077
  %v8398 = vpack.c.bf16 %v8080, %v8078
  %v8399 = vpack.c.bf16 %v8083, %v8081
  %v8400 = vpack.c.bf16 %v8084, %v8082
  %v8401 = vpack.c.bf16 %v8087, %v8085
  %v8402 = vpack.c.bf16 %v8088, %v8086
  %v8403 = vpack.c.bf16 %v8091, %v8089
  %v8404 = vpack.c.bf16 %v8092, %v8090
  %v8405 = vpack.c.bf16 %v8239, %v8237
  %v8406 = vpack.c.bf16 %v8240, %v8238
  %v8407 = vpack.c.bf16 %v8243, %v8241
  %v8408 = vpack.c.bf16 %v8244, %v8242
  %v8409 = vpack.c.bf16 %v8247, %v8245
  %v8410 = vpack.c.bf16 %v8248, %v8246
  %v8411 = vpack.c.bf16 %v8251, %v8249
  %v8412 = vpack.c.bf16 %v8252, %v8250
  %v8413 = vpack.c.bf16 %v8255, %v8253
  %v8414 = vpack.c.bf16 %v8256, %v8254
  %v8415 = vpack.c.bf16 %v8259, %v8257
  %v8416 = vpack.c.bf16 %v8260, %v8258
  %v8417 = vpack.c.bf16 %v8263, %v8261
  %v8418 = vpack.c.bf16 %v8264, %v8262
  %v8419 = vpack.c.bf16 %v8267, %v8265
  %v8420 = vpack.c.bf16 %v8268, %v8266
  %v8421 = vpack.c.bf16 %v8271, %v8269
  %v8422 = vpack.c.bf16 %v8272, %v8270
  %v8423 = vpack.c.bf16 %v8275, %v8273
  %v8424 = vpack.c.bf16 %v8276, %v8274
  %v8425 = vpack.c.bf16 %v8279, %v8277
  %v8426 = vpack.c.bf16 %v8280, %v8278
  %v8427 = vpack.c.bf16 %v8283, %v8281
  %v8428 = vpack.c.bf16 %v8284, %v8282
  %v8429 = vpack.c.bf16 1.0, 1.0
  %v8430 = vld [vmem:[%s2] sm:$0xff]
  %v8431 = vld [vmem:[%s2 + $0x8] sm:$0xff]
  %v8432 = vld [vmem:[%s2 + $0x10] sm:$0xff]
  %v8433 = vld [vmem:[%s2 + $0x18] sm:$0xff]
  %v8434 = vld [vmem:[%s2 + $0x20] sm:$0xff]
  %v8435 = vld [vmem:[%s2 + $0x28] sm:$0xff]
  %v8436 = vld [vmem:[%s2 + $0x30] sm:$0xff]
  %v8437 = vld [vmem:[%s2 + $0x38] sm:$0xff]
  %v8438 = vld [vmem:[%s2 + $0x40] sm:$0xff]
  %v8439 = vld [vmem:[%s2 + $0x48] sm:$0xff]
  %v8440 = vld [vmem:[%s2 + $0x50] sm:$0xff]
  %v8441 = vld [vmem:[%s2 + $0x58] sm:$0xff]
  %v8442 = vld [vmem:[%s2 + $0x60] sm:$0xff]
  %v8443 = vld [vmem:[%s2 + $0x68] sm:$0xff]
  %v8444 = vld [vmem:[%s2 + $0x70] sm:$0xff]
  %v8445 = vld [vmem:[%s2 + $0x78] sm:$0xff]
  %v8446 = vld [vmem:[%s2 + $0x80] sm:$0xff]
  %v8447 = vld [vmem:[%s2 + $0x88] sm:$0xff]
  %v8448 = vld [vmem:[%s2 + $0x90] sm:$0xff]
  %v8449 = vld [vmem:[%s2 + $0x98] sm:$0xff]
  %v8450 = vld [vmem:[%s2 + $0xa0] sm:$0xff]
  %v8451 = vld [vmem:[%s2 + $0xa8] sm:$0xff]
  %v8452 = vld [vmem:[%s2 + $0xb0] sm:$0xff]
  %v8453 = vld [vmem:[%s2 + $0xb8] sm:$0xff]
  %v8454 = vld [vmem:[%s2 + $0xc0] sm:$0xff]
  %v8455 = vld [vmem:[%s2 + $0xc8] sm:$0xff]
  %v8456 = vld [vmem:[%s2 + $0xd0] sm:$0xff]
  %v8457 = vld [vmem:[%s2 + $0xd8] sm:$0xff]
  %v8458 = vld [vmem:[%s2 + $0xe0] sm:$0xff]
  %v8459 = vld [vmem:[%s2 + $0xe8] sm:$0xff]
  %v8460 = vld [vmem:[%s2 + $0xf0] sm:$0xff]
  %v8461 = vld [vmem:[%s2 + $0xf8] sm:$0xff]
  %v8462 = vld [vmem:[%s2 + $0x100] sm:$0xff]
  %v8463 = vld [vmem:[%s2 + $0x108] sm:$0xff]
  %v8464 = vld [vmem:[%s2 + $0x110] sm:$0xff]
  %v8465 = vld [vmem:[%s2 + $0x118] sm:$0xff]
  %v8466 = vld [vmem:[%s2 + $0x120] sm:$0xff]
  %v8467 = vld [vmem:[%s2 + $0x128] sm:$0xff]
  %v8468 = vld [vmem:[%s2 + $0x130] sm:$0xff]
  %v8469 = vld [vmem:[%s2 + $0x138] sm:$0xff]
  %v8470 = vld [vmem:[%s2 + $0x140] sm:$0xff]
  %v8471 = vld [vmem:[%s2 + $0x148] sm:$0xff]
  %v8472 = vld [vmem:[%s2 + $0x150] sm:$0xff]
  %v8473 = vld [vmem:[%s2 + $0x158] sm:$0xff]
  %v8474 = vld [vmem:[%s2 + $0x160] sm:$0xff]
  %v8475 = vld [vmem:[%s2 + $0x168] sm:$0xff]
  %v8476 = vld [vmem:[%s2 + $0x170] sm:$0xff]
  %v8477 = vld [vmem:[%s2 + $0x178] sm:$0xff]
  %v8478 = vld [vmem:[%s2 + $0x180] sm:$0xff]
  %v8479 = vld [vmem:[%s2 + $0x188] sm:$0xff]
  %v8480 = vld [vmem:[%s2 + $0x190] sm:$0xff]
  %v8481 = vld [vmem:[%s2 + $0x198] sm:$0xff]
  %v8482 = vld [vmem:[%s2 + $0x1a0] sm:$0xff]
  %v8483 = vld [vmem:[%s2 + $0x1a8] sm:$0xff]
  %v8484 = vld [vmem:[%s2 + $0x1b0] sm:$0xff]
  %v8485 = vld [vmem:[%s2 + $0x1b8] sm:$0xff]
  %v8486 = vld [vmem:[%s2 + $0x1c0] sm:$0xff]
  %v8487 = vld [vmem:[%s2 + $0x1c8] sm:$0xff]
  %v8488 = vld [vmem:[%s2 + $0x1d0] sm:$0xff]
  %v8489 = vld [vmem:[%s2 + $0x1d8] sm:$0xff]
  %v8490 = vld [vmem:[%s2 + $0x1e0] sm:$0xff]
  %v8491 = vld [vmem:[%s2 + $0x1e8] sm:$0xff]
  %v8492 = vld [vmem:[%s2 + $0x1f0] sm:$0xff]
  %v8493 = vld [vmem:[%s2 + $0x1f8] sm:$0xff]
  %v8494 = vld [vmem:[%s2 + $0x200] sm:$0xff]
  %v8495 = vld [vmem:[%s2 + $0x208] sm:$0xff]
  %v8496 = vld [vmem:[%s2 + $0x210] sm:$0xff]
  %v8497 = vld [vmem:[%s2 + $0x218] sm:$0xff]
  %v8498 = vld [vmem:[%s2 + $0x220] sm:$0xff]
  %v8499 = vld [vmem:[%s2 + $0x228] sm:$0xff]
  %v8500 = vld [vmem:[%s2 + $0x230] sm:$0xff]
  %v8501 = vld [vmem:[%s2 + $0x238] sm:$0xff]
  %v8502 = vld [vmem:[%s2 + $0x240] sm:$0xff]
  %v8503 = vld [vmem:[%s2 + $0x248] sm:$0xff]
  %v8504 = vld [vmem:[%s2 + $0x250] sm:$0xff]
  %v8505 = vld [vmem:[%s2 + $0x258] sm:$0xff]
  %v8506 = vld [vmem:[%s2 + $0x260] sm:$0xff]
  %v8507 = vld [vmem:[%s2 + $0x268] sm:$0xff]
  %v8508 = vld [vmem:[%s2 + $0x270] sm:$0xff]
  %v8509 = vld [vmem:[%s2 + $0x278] sm:$0xff]
  %v8510 = vld [vmem:[%s2 + $0x280] sm:$0xff]
  %v8511 = vld [vmem:[%s2 + $0x288] sm:$0xff]
  %v8512 = vld [vmem:[%s2 + $0x290] sm:$0xff]
  %v8513 = vld [vmem:[%s2 + $0x298] sm:$0xff]
  %v8514 = vld [vmem:[%s2 + $0x2a0] sm:$0xff]
  %v8515 = vld [vmem:[%s2 + $0x2a8] sm:$0xff]
  %v8516 = vld [vmem:[%s2 + $0x2b0] sm:$0xff]
  %v8517 = vld [vmem:[%s2 + $0x2b8] sm:$0xff]
  %v8518 = vld [vmem:[%s2 + $0x2c0] sm:$0xff]
  %v8519 = vld [vmem:[%s2 + $0x2c8] sm:$0xff]
  %v8520 = vld [vmem:[%s2 + $0x2d0] sm:$0xff]
  %v8521 = vld [vmem:[%s2 + $0x2d8] sm:$0xff]
  %v8522 = vld [vmem:[%s2 + $0x2e0] sm:$0xff]
  %v8523 = vld [vmem:[%s2 + $0x2e8] sm:$0xff]
  %v8524 = vld [vmem:[%s2 + $0x2f0] sm:$0xff]
  %v8525 = vld [vmem:[%s2 + $0x2f8] sm:$0xff]
  %v8526 = vld [vmem:[%s2 + $0x300] sm:$0xff]
  %v8527 = vld [vmem:[%s2 + $0x308] sm:$0xff]
  %v8528 = vld [vmem:[%s2 + $0x310] sm:$0xff]
  %v8529 = vld [vmem:[%s2 + $0x318] sm:$0xff]
  %v8530 = vld [vmem:[%s2 + $0x320] sm:$0xff]
  %v8531 = vld [vmem:[%s2 + $0x328] sm:$0xff]
  %v8532 = vld [vmem:[%s2 + $0x330] sm:$0xff]
  %v8533 = vld [vmem:[%s2 + $0x338] sm:$0xff]
  %v8534 = vld [vmem:[%s2 + $0x340] sm:$0xff]
  %v8535 = vld [vmem:[%s2 + $0x348] sm:$0xff]
  %v8536 = vld [vmem:[%s2 + $0x350] sm:$0xff]
  %v8537 = vld [vmem:[%s2 + $0x358] sm:$0xff]
  %v8538 = vld [vmem:[%s2 + $0x360] sm:$0xff]
  %v8539 = vld [vmem:[%s2 + $0x368] sm:$0xff]
  %v8540 = vld [vmem:[%s2 + $0x370] sm:$0xff]
  %v8541 = vld [vmem:[%s2 + $0x378] sm:$0xff]
  %v8542 = vld [vmem:[%s2 + $0x380] sm:$0xff]
  %v8543 = vld [vmem:[%s2 + $0x388] sm:$0xff]
  %v8544 = vld [vmem:[%s2 + $0x390] sm:$0xff]
  %v8545 = vld [vmem:[%s2 + $0x398] sm:$0xff]
  %v8546 = vld [vmem:[%s2 + $0x3a0] sm:$0xff]
  %v8547 = vld [vmem:[%s2 + $0x3a8] sm:$0xff]
  %v8548 = vld [vmem:[%s2 + $0x3b0] sm:$0xff]
  %v8549 = vld [vmem:[%s2 + $0x3b8] sm:$0xff]
  %v8550 = vld [vmem:[%s2 + $0x3c0] sm:$0xff]
  %v8551 = vld [vmem:[%s2 + $0x3c8] sm:$0xff]
  %v8552 = vld [vmem:[%s2 + $0x3d0] sm:$0xff]
  %v8553 = vld [vmem:[%s2 + $0x3d8] sm:$0xff]
  %v8554 = vld [vmem:[%s2 + $0x3e0] sm:$0xff]
  %v8555 = vld [vmem:[%s2 + $0x3e8] sm:$0xff]
  %v8556 = vld [vmem:[%s2 + $0x3f0] sm:$0xff]
  %v8557 = vld [vmem:[%s2 + $0x3f8] sm:$0xff]
  %v8558 = vld [vmem:[%s2 + $0x400] sm:$0xff]
  %v8559 = vld [vmem:[%s2 + $0x408] sm:$0xff]
  %v8560 = vld [vmem:[%s2 + $0x410] sm:$0xff]
  %v8561 = vld [vmem:[%s2 + $0x418] sm:$0xff]
  %v8562 = vld [vmem:[%s2 + $0x420] sm:$0xff]
  %v8563 = vld [vmem:[%s2 + $0x428] sm:$0xff]
  %v8564 = vld [vmem:[%s2 + $0x430] sm:$0xff]
  %v8565 = vld [vmem:[%s2 + $0x438] sm:$0xff]
  %v8566 = vld [vmem:[%s2 + $0x440] sm:$0xff]
  %v8567 = vld [vmem:[%s2 + $0x448] sm:$0xff]
  %v8568 = vld [vmem:[%s2 + $0x450] sm:$0xff]
  %v8569 = vld [vmem:[%s2 + $0x458] sm:$0xff]
  %v8570 = vld [vmem:[%s2 + $0x460] sm:$0xff]
  %v8571 = vld [vmem:[%s2 + $0x468] sm:$0xff]
  %v8572 = vld [vmem:[%s2 + $0x470] sm:$0xff]
  %v8573 = vld [vmem:[%s2 + $0x478] sm:$0xff]
  %v8574 = vld [vmem:[%s2 + $0x480] sm:$0xff]
  %v8575 = vld [vmem:[%s2 + $0x488] sm:$0xff]
  %v8576 = vld [vmem:[%s2 + $0x490] sm:$0xff]
  %v8577 = vld [vmem:[%s2 + $0x498] sm:$0xff]
  %v8578 = vld [vmem:[%s2 + $0x4a0] sm:$0xff]
  %v8579 = vld [vmem:[%s2 + $0x4a8] sm:$0xff]
  %v8580 = vld [vmem:[%s2 + $0x4b0] sm:$0xff]
  %v8581 = vld [vmem:[%s2 + $0x4b8] sm:$0xff]
  %v8582 = vld [vmem:[%s2 + $0x4c0] sm:$0xff]
  %v8583 = vld [vmem:[%s2 + $0x4c8] sm:$0xff]
  %v8584 = vld [vmem:[%s2 + $0x4d0] sm:$0xff]
  %v8585 = vld [vmem:[%s2 + $0x4d8] sm:$0xff]
  %v8586 = vld [vmem:[%s2 + $0x4e0] sm:$0xff]
  %v8587 = vld [vmem:[%s2 + $0x4e8] sm:$0xff]
  %v8588 = vld [vmem:[%s2 + $0x4f0] sm:$0xff]
  %v8589 = vld [vmem:[%s2 + $0x4f8] sm:$0xff]
  %v8590 = vld [vmem:[%s2 + $0x500] sm:$0xff]
  %v8591 = vld [vmem:[%s2 + $0x508] sm:$0xff]
  %v8592 = vld [vmem:[%s2 + $0x510] sm:$0xff]
  %v8593 = vld [vmem:[%s2 + $0x518] sm:$0xff]
  %v8594 = vld [vmem:[%s2 + $0x520] sm:$0xff]
  %v8595 = vld [vmem:[%s2 + $0x528] sm:$0xff]
  %v8596 = vld [vmem:[%s2 + $0x530] sm:$0xff]
  %v8597 = vld [vmem:[%s2 + $0x538] sm:$0xff]
  %v8598 = vld [vmem:[%s2 + $0x540] sm:$0xff]
  %v8599 = vld [vmem:[%s2 + $0x548] sm:$0xff]
  %v8600 = vld [vmem:[%s2 + $0x550] sm:$0xff]
  %v8601 = vld [vmem:[%s2 + $0x558] sm:$0xff]
  %v8602 = vld [vmem:[%s2 + $0x560] sm:$0xff]
  %v8603 = vld [vmem:[%s2 + $0x568] sm:$0xff]
  %v8604 = vld [vmem:[%s2 + $0x570] sm:$0xff]
  %v8605 = vld [vmem:[%s2 + $0x578] sm:$0xff]
  %v8606 = vld [vmem:[%s2 + $0x580] sm:$0xff]
  %v8607 = vld [vmem:[%s2 + $0x588] sm:$0xff]
  %v8608 = vld [vmem:[%s2 + $0x590] sm:$0xff]
  %v8609 = vld [vmem:[%s2 + $0x598] sm:$0xff]
  %v8610 = vld [vmem:[%s2 + $0x5a0] sm:$0xff]
  %v8611 = vld [vmem:[%s2 + $0x5a8] sm:$0xff]
  %v8612 = vld [vmem:[%s2 + $0x5b0] sm:$0xff]
  %v8613 = vld [vmem:[%s2 + $0x5b8] sm:$0xff]
  %v8614 = vld [vmem:[%s2 + $0x5c0] sm:$0xff]
  %v8615 = vld [vmem:[%s2 + $0x5c8] sm:$0xff]
  %v8616 = vld [vmem:[%s2 + $0x5d0] sm:$0xff]
  %v8617 = vld [vmem:[%s2 + $0x5d8] sm:$0xff]
  %v8618 = vld [vmem:[%s2 + $0x5e0] sm:$0xff]
  %v8619 = vld [vmem:[%s2 + $0x5e8] sm:$0xff]
  %v8620 = vld [vmem:[%s2 + $0x5f0] sm:$0xff]
  %v8621 = vld [vmem:[%s2 + $0x5f8] sm:$0xff]
  %v8622 = vld [vmem:[%s2 + $0x600] sm:$0xff]
  %v8623 = vld [vmem:[%s2 + $0x608] sm:$0xff]
  %v8624 = vld [vmem:[%s2 + $0x610] sm:$0xff]
  %v8625 = vld [vmem:[%s2 + $0x618] sm:$0xff]
  %v8626 = vld [vmem:[%s2 + $0x620] sm:$0xff]
  %v8627 = vld [vmem:[%s2 + $0x628] sm:$0xff]
  %v8628 = vld [vmem:[%s2 + $0x630] sm:$0xff]
  %v8629 = vld [vmem:[%s2 + $0x638] sm:$0xff]
  %v8630 = vld [vmem:[%s2 + $0x640] sm:$0xff]
  %v8631 = vld [vmem:[%s2 + $0x648] sm:$0xff]
  %v8632 = vld [vmem:[%s2 + $0x650] sm:$0xff]
  %v8633 = vld [vmem:[%s2 + $0x658] sm:$0xff]
  %v8634 = vld [vmem:[%s2 + $0x660] sm:$0xff]
  %v8635 = vld [vmem:[%s2 + $0x668] sm:$0xff]
  %v8636 = vld [vmem:[%s2 + $0x670] sm:$0xff]
  %v8637 = vld [vmem:[%s2 + $0x678] sm:$0xff]
  %v8638 = vld [vmem:[%s2 + $0x680] sm:$0xff]
  %v8639 = vld [vmem:[%s2 + $0x688] sm:$0xff]
  %v8640 = vld [vmem:[%s2 + $0x690] sm:$0xff]
  %v8641 = vld [vmem:[%s2 + $0x698] sm:$0xff]
  %v8642 = vld [vmem:[%s2 + $0x6a0] sm:$0xff]
  %v8643 = vld [vmem:[%s2 + $0x6a8] sm:$0xff]
  %v8644 = vld [vmem:[%s2 + $0x6b0] sm:$0xff]
  %v8645 = vld [vmem:[%s2 + $0x6b8] sm:$0xff]
  %v8646 = vld [vmem:[%s2 + $0x6c0] sm:$0xff]
  %v8647 = vld [vmem:[%s2 + $0x6c8] sm:$0xff]
  %v8648 = vld [vmem:[%s2 + $0x6d0] sm:$0xff]
  %v8649 = vld [vmem:[%s2 + $0x6d8] sm:$0xff]
  %v8650 = vld [vmem:[%s2 + $0x6e0] sm:$0xff]
  %v8651 = vld [vmem:[%s2 + $0x6e8] sm:$0xff]
  %v8652 = vld [vmem:[%s2 + $0x6f0] sm:$0xff]
  %v8653 = vld [vmem:[%s2 + $0x6f8] sm:$0xff]
  %v8654 = vld [vmem:[%s2 + $0x700] sm:$0xff]
  %v8655 = vld [vmem:[%s2 + $0x708] sm:$0xff]
  %v8656 = vld [vmem:[%s2 + $0x710] sm:$0xff]
  %v8657 = vld [vmem:[%s2 + $0x718] sm:$0xff]
  %v8658 = vld [vmem:[%s2 + $0x720] sm:$0xff]
  %v8659 = vld [vmem:[%s2 + $0x728] sm:$0xff]
  %v8660 = vld [vmem:[%s2 + $0x730] sm:$0xff]
  %v8661 = vld [vmem:[%s2 + $0x738] sm:$0xff]
  %v8662 = vld [vmem:[%s2 + $0x740] sm:$0xff]
  %v8663 = vld [vmem:[%s2 + $0x748] sm:$0xff]
  %v8664 = vld [vmem:[%s2 + $0x750] sm:$0xff]
  %v8665 = vld [vmem:[%s2 + $0x758] sm:$0xff]
  %v8666 = vld [vmem:[%s2 + $0x760] sm:$0xff]
  %v8667 = vld [vmem:[%s2 + $0x768] sm:$0xff]
  %v8668 = vld [vmem:[%s2 + $0x770] sm:$0xff]
  %v8669 = vld [vmem:[%s2 + $0x778] sm:$0xff]
  %v8670 = vld [vmem:[%s2 + $0x780] sm:$0xff]
  %v8671 = vld [vmem:[%s2 + $0x788] sm:$0xff]
  %v8672 = vld [vmem:[%s2 + $0x790] sm:$0xff]
  %v8673 = vld [vmem:[%s2 + $0x798] sm:$0xff]
  %v8674 = vld [vmem:[%s2 + $0x7a0] sm:$0xff]
  %v8675 = vld [vmem:[%s2 + $0x7a8] sm:$0xff]
  %v8676 = vld [vmem:[%s2 + $0x7b0] sm:$0xff]
  %v8677 = vld [vmem:[%s2 + $0x7b8] sm:$0xff]
  %v8678 = vld [vmem:[%s2 + $0x7c0] sm:$0xff]
  %v8679 = vld [vmem:[%s2 + $0x7c8] sm:$0xff]
  %v8680 = vld [vmem:[%s2 + $0x7d0] sm:$0xff]
  %v8681 = vld [vmem:[%s2 + $0x7d8] sm:$0xff]
  %v8682 = vld [vmem:[%s2 + $0x7e0] sm:$0xff]
  %v8683 = vld [vmem:[%s2 + $0x7e8] sm:$0xff]
  %v8684 = vld [vmem:[%s2 + $0x7f0] sm:$0xff]
  %v8685 = vld [vmem:[%s2 + $0x7f8] sm:$0xff]
  %v8686 = vld [vmem:[%s2 + $0x800] sm:$0xff]
  %v8687 = vld [vmem:[%s2 + $0x808] sm:$0xff]
  %v8688 = vld [vmem:[%s2 + $0x810] sm:$0xff]
  %v8689 = vld [vmem:[%s2 + $0x818] sm:$0xff]
  %v8690 = vld [vmem:[%s2 + $0x820] sm:$0xff]
  %v8691 = vld [vmem:[%s2 + $0x828] sm:$0xff]
  %v8692 = vld [vmem:[%s2 + $0x830] sm:$0xff]
  %v8693 = vld [vmem:[%s2 + $0x838] sm:$0xff]
  %v8694 = vld [vmem:[%s2 + $0x840] sm:$0xff]
  %v8695 = vld [vmem:[%s2 + $0x848] sm:$0xff]
  %v8696 = vld [vmem:[%s2 + $0x850] sm:$0xff]
  %v8697 = vld [vmem:[%s2 + $0x858] sm:$0xff]
  %v8698 = vld [vmem:[%s2 + $0x860] sm:$0xff]
  %v8699 = vld [vmem:[%s2 + $0x868] sm:$0xff]
  %v8700 = vld [vmem:[%s2 + $0x870] sm:$0xff]
  %v8701 = vld [vmem:[%s2 + $0x878] sm:$0xff]
  %v8702 = vld [vmem:[%s2 + $0x880] sm:$0xff]
  %v8703 = vld [vmem:[%s2 + $0x888] sm:$0xff]
  %v8704 = vld [vmem:[%s2 + $0x890] sm:$0xff]
  %v8705 = vld [vmem:[%s2 + $0x898] sm:$0xff]
  %v8706 = vld [vmem:[%s2 + $0x8a0] sm:$0xff]
  %v8707 = vld [vmem:[%s2 + $0x8a8] sm:$0xff]
  %v8708 = vld [vmem:[%s2 + $0x8b0] sm:$0xff]
  %v8709 = vld [vmem:[%s2 + $0x8b8] sm:$0xff]
  %v8710 = vld [vmem:[%s2 + $0x8c0] sm:$0xff]
  %v8711 = vld [vmem:[%s2 + $0x8c8] sm:$0xff]
  %v8712 = vld [vmem:[%s2 + $0x8d0] sm:$0xff]
  %v8713 = vld [vmem:[%s2 + $0x8d8] sm:$0xff]
  %v8714 = vld [vmem:[%s2 + $0x8e0] sm:$0xff]
  %v8715 = vld [vmem:[%s2 + $0x8e8] sm:$0xff]
  %v8716 = vld [vmem:[%s2 + $0x8f0] sm:$0xff]
  %v8717 = vld [vmem:[%s2 + $0x8f8] sm:$0xff]
  %v8718 = vld [vmem:[%s2 + $0x900] sm:$0xff]
  %v8719 = vld [vmem:[%s2 + $0x908] sm:$0xff]
  %v8720 = vld [vmem:[%s2 + $0x910] sm:$0xff]
  %v8721 = vld [vmem:[%s2 + $0x918] sm:$0xff]
  %v8722 = vld [vmem:[%s2 + $0x920] sm:$0xff]
  %v8723 = vld [vmem:[%s2 + $0x928] sm:$0xff]
  %v8724 = vld [vmem:[%s2 + $0x930] sm:$0xff]
  %v8725 = vld [vmem:[%s2 + $0x938] sm:$0xff]
  %v8726 = vld [vmem:[%s2 + $0x940] sm:$0xff]
  %v8727 = vld [vmem:[%s2 + $0x948] sm:$0xff]
  %v8728 = vld [vmem:[%s2 + $0x950] sm:$0xff]
  %v8729 = vld [vmem:[%s2 + $0x958] sm:$0xff]
  %v8730 = vld [vmem:[%s2 + $0x960] sm:$0xff]
  %v8731 = vld [vmem:[%s2 + $0x968] sm:$0xff]
  %v8732 = vld [vmem:[%s2 + $0x970] sm:$0xff]
  %v8733 = vld [vmem:[%s2 + $0x978] sm:$0xff]
  %v8734 = vld [vmem:[%s2 + $0x980] sm:$0xff]
  %v8735 = vld [vmem:[%s2 + $0x988] sm:$0xff]
  %v8736 = vld [vmem:[%s2 + $0x990] sm:$0xff]
  %v8737 = vld [vmem:[%s2 + $0x998] sm:$0xff]
  %v8738 = vld [vmem:[%s2 + $0x9a0] sm:$0xff]
  %v8739 = vld [vmem:[%s2 + $0x9a8] sm:$0xff]
  %v8740 = vld [vmem:[%s2 + $0x9b0] sm:$0xff]
  %v8741 = vld [vmem:[%s2 + $0x9b8] sm:$0xff]
  %v8742 = vld [vmem:[%s2 + $0x9c0] sm:$0xff]
  %v8743 = vld [vmem:[%s2 + $0x9c8] sm:$0xff]
  %v8744 = vld [vmem:[%s2 + $0x9d0] sm:$0xff]
  %v8745 = vld [vmem:[%s2 + $0x9d8] sm:$0xff]
  %v8746 = vld [vmem:[%s2 + $0x9e0] sm:$0xff]
  %v8747 = vld [vmem:[%s2 + $0x9e8] sm:$0xff]
  %v8748 = vld [vmem:[%s2 + $0x9f0] sm:$0xff]
  %v8749 = vld [vmem:[%s2 + $0x9f8] sm:$0xff]
  %v9070 = vunpack.c.l.b16 %v8430
  %v9071 = vunpack.c.h.b16 %v8430
  %v9072 = vunpack.c.l.b16 %v8431
  %v9073 = vunpack.c.h.b16 %v8431
  %v9074 = vunpack.c.l.b16 %v8432
  %v9075 = vunpack.c.h.b16 %v8432
  %v9076 = vunpack.c.l.b16 %v8433
  %v9077 = vunpack.c.h.b16 %v8433
  %v9078 = vunpack.c.l.b16 %v8434
  %v9079 = vunpack.c.h.b16 %v8434
  %v9080 = vunpack.c.l.b16 %v8435
  %v9081 = vunpack.c.h.b16 %v8435
  %v9082 = vunpack.c.l.b16 %v8436
  %v9083 = vunpack.c.h.b16 %v8436
  %v9084 = vunpack.c.l.b16 %v8437
  %v9085 = vunpack.c.h.b16 %v8437
  %v9086 = vunpack.c.l.b16 %v8438
  %v9087 = vunpack.c.h.b16 %v8438
  %v9088 = vunpack.c.l.b16 %v8439
  %v9089 = vunpack.c.h.b16 %v8439
  %v9090 = vunpack.c.l.b16 %v8440
  %v9091 = vunpack.c.h.b16 %v8440
  %v9092 = vunpack.c.l.b16 %v8441
  %v9093 = vunpack.c.h.b16 %v8441
  %v9094 = vunpack.c.l.b16 %v8442
  %v9095 = vunpack.c.h.b16 %v8442
  %v9096 = vunpack.c.l.b16 %v8443
  %v9097 = vunpack.c.h.b16 %v8443
  %v9098 = vunpack.c.l.b16 %v8444
  %v9099 = vunpack.c.h.b16 %v8444
  %v9100 = vunpack.c.l.b16 %v8445
  %v9101 = vunpack.c.h.b16 %v8445
  %v9102 = vunpack.c.l.b16 %v8446
  %v9103 = vunpack.c.h.b16 %v8446
  %v9104 = vunpack.c.l.b16 %v8447
  %v9105 = vunpack.c.h.b16 %v8447
  %v9106 = vunpack.c.l.b16 %v8448
  %v9107 = vunpack.c.h.b16 %v8448
  %v9108 = vunpack.c.l.b16 %v8449
  %v9109 = vunpack.c.h.b16 %v8449
  %v9110 = vunpack.c.l.b16 %v8450
  %v9111 = vunpack.c.h.b16 %v8450
  %v9112 = vunpack.c.l.b16 %v8451
  %v9113 = vunpack.c.h.b16 %v8451
  %v9114 = vunpack.c.l.b16 %v8452
  %v9115 = vunpack.c.h.b16 %v8452
  %v9116 = vunpack.c.l.b16 %v8453
  %v9117 = vunpack.c.h.b16 %v8453
  %v9118 = vunpack.c.l.b16 %v8454
  %v9119 = vunpack.c.h.b16 %v8454
  %v9120 = vunpack.c.l.b16 %v8455
  %v9121 = vunpack.c.h.b16 %v8455
  %v9122 = vunpack.c.l.b16 %v8456
  %v9123 = vunpack.c.h.b16 %v8456
  %v9124 = vunpack.c.l.b16 %v8457
  %v9125 = vunpack.c.h.b16 %v8457
  %v9126 = vunpack.c.l.b16 %v8458
  %v9127 = vunpack.c.h.b16 %v8458
  %v9128 = vunpack.c.l.b16 %v8459
  %v9129 = vunpack.c.h.b16 %v8459
  %v9130 = vunpack.c.l.b16 %v8460
  %v9131 = vunpack.c.h.b16 %v8460
  %v9132 = vunpack.c.l.b16 %v8461
  %v9133 = vunpack.c.h.b16 %v8461
  %v9134 = vunpack.c.l.b16 %v8462
  %v9135 = vunpack.c.h.b16 %v8462
  %v9136 = vunpack.c.l.b16 %v8463
  %v9137 = vunpack.c.h.b16 %v8463
  %v9138 = vunpack.c.l.b16 %v8464
  %v9139 = vunpack.c.h.b16 %v8464
  %v9140 = vunpack.c.l.b16 %v8465
  %v9141 = vunpack.c.h.b16 %v8465
  %v9142 = vunpack.c.l.b16 %v8466
  %v9143 = vunpack.c.h.b16 %v8466
  %v9144 = vunpack.c.l.b16 %v8467
  %v9145 = vunpack.c.h.b16 %v8467
  %v9146 = vunpack.c.l.b16 %v8468
  %v9147 = vunpack.c.h.b16 %v8468
  %v9148 = vunpack.c.l.b16 %v8469
  %v9149 = vunpack.c.h.b16 %v8469
  %v9150 = vunpack.c.l.b16 %v8470
  %v9151 = vunpack.c.h.b16 %v8470
  %v9152 = vunpack.c.l.b16 %v8471
  %v9153 = vunpack.c.h.b16 %v8471
  %v9154 = vunpack.c.l.b16 %v8472
  %v9155 = vunpack.c.h.b16 %v8472
  %v9156 = vunpack.c.l.b16 %v8473
  %v9157 = vunpack.c.h.b16 %v8473
  %v9158 = vunpack.c.l.b16 %v8474
  %v9159 = vunpack.c.h.b16 %v8474
  %v9160 = vunpack.c.l.b16 %v8475
  %v9161 = vunpack.c.h.b16 %v8475
  %v9162 = vunpack.c.l.b16 %v8476
  %v9163 = vunpack.c.h.b16 %v8476
  %v9164 = vunpack.c.l.b16 %v8477
  %v9165 = vunpack.c.h.b16 %v8477
  %v9166 = vunpack.c.l.b16 %v8478
  %v9167 = vunpack.c.h.b16 %v8478
  %v9168 = vunpack.c.l.b16 %v8479
  %v9169 = vunpack.c.h.b16 %v8479
  %v9170 = vunpack.c.l.b16 %v8480
  %v9171 = vunpack.c.h.b16 %v8480
  %v9172 = vunpack.c.l.b16 %v8481
  %v9173 = vunpack.c.h.b16 %v8481
  %v9174 = vunpack.c.l.b16 %v8482
  %v9175 = vunpack.c.h.b16 %v8482
  %v9176 = vunpack.c.l.b16 %v8483
  %v9177 = vunpack.c.h.b16 %v8483
  %v9178 = vunpack.c.l.b16 %v8484
  %v9179 = vunpack.c.h.b16 %v8484
  %v9180 = vunpack.c.l.b16 %v8485
  %v9181 = vunpack.c.h.b16 %v8485
  %v9182 = vunpack.c.l.b16 %v8486
  %v9183 = vunpack.c.h.b16 %v8486
  %v9184 = vunpack.c.l.b16 %v8487
  %v9185 = vunpack.c.h.b16 %v8487
  %v9186 = vunpack.c.l.b16 %v8488
  %v9187 = vunpack.c.h.b16 %v8488
  %v9188 = vunpack.c.l.b16 %v8489
  %v9189 = vunpack.c.h.b16 %v8489
  %v9190 = vunpack.c.l.b16 %v8490
  %v9191 = vunpack.c.h.b16 %v8490
  %v9192 = vunpack.c.l.b16 %v8491
  %v9193 = vunpack.c.h.b16 %v8491
  %v9194 = vunpack.c.l.b16 %v8492
  %v9195 = vunpack.c.h.b16 %v8492
  %v9196 = vunpack.c.l.b16 %v8493
  %v9197 = vunpack.c.h.b16 %v8493
  %v9198 = vunpack.c.l.b16 %v8494
  %v9199 = vunpack.c.h.b16 %v8494
  %v9200 = vunpack.c.l.b16 %v8495
  %v9201 = vunpack.c.h.b16 %v8495
  %v9202 = vunpack.c.l.b16 %v8496
  %v9203 = vunpack.c.h.b16 %v8496
  %v9204 = vunpack.c.l.b16 %v8497
  %v9205 = vunpack.c.h.b16 %v8497
  %v9206 = vunpack.c.l.b16 %v8498
  %v9207 = vunpack.c.h.b16 %v8498
  %v9208 = vunpack.c.l.b16 %v8499
  %v9209 = vunpack.c.h.b16 %v8499
  %v9210 = vunpack.c.l.b16 %v8500
  %v9211 = vunpack.c.h.b16 %v8500
  %v9212 = vunpack.c.l.b16 %v8501
  %v9213 = vunpack.c.h.b16 %v8501
  %v9214 = vunpack.c.l.b16 %v8502
  %v9215 = vunpack.c.h.b16 %v8502
  %v9216 = vunpack.c.l.b16 %v8503
  %v9217 = vunpack.c.h.b16 %v8503
  %v9218 = vunpack.c.l.b16 %v8504
  %v9219 = vunpack.c.h.b16 %v8504
  %v9220 = vunpack.c.l.b16 %v8505
  %v9221 = vunpack.c.h.b16 %v8505
  %v9222 = vunpack.c.l.b16 %v8506
  %v9223 = vunpack.c.h.b16 %v8506
  %v9224 = vunpack.c.l.b16 %v8507
  %v9225 = vunpack.c.h.b16 %v8507
  %v9226 = vunpack.c.l.b16 %v8508
  %v9227 = vunpack.c.h.b16 %v8508
  %v9228 = vunpack.c.l.b16 %v8509
  %v9229 = vunpack.c.h.b16 %v8509
  %v9230 = vunpack.c.l.b16 %v8510
  %v9231 = vunpack.c.h.b16 %v8510
  %v9232 = vunpack.c.l.b16 %v8511
  %v9233 = vunpack.c.h.b16 %v8511
  %v9234 = vunpack.c.l.b16 %v8512
  %v9235 = vunpack.c.h.b16 %v8512
  %v9236 = vunpack.c.l.b16 %v8513
  %v9237 = vunpack.c.h.b16 %v8513
  %v9238 = vunpack.c.l.b16 %v8514
  %v9239 = vunpack.c.h.b16 %v8514
  %v9240 = vunpack.c.l.b16 %v8515
  %v9241 = vunpack.c.h.b16 %v8515
  %v9242 = vunpack.c.l.b16 %v8516
  %v9243 = vunpack.c.h.b16 %v8516
  %v9244 = vunpack.c.l.b16 %v8517
  %v9245 = vunpack.c.h.b16 %v8517
  %v9246 = vunpack.c.l.b16 %v8518
  %v9247 = vunpack.c.h.b16 %v8518
  %v9248 = vunpack.c.l.b16 %v8519
  %v9249 = vunpack.c.h.b16 %v8519
  %v9250 = vunpack.c.l.b16 %v8520
  %v9251 = vunpack.c.h.b16 %v8520
  %v9252 = vunpack.c.l.b16 %v8521
  %v9253 = vunpack.c.h.b16 %v8521
  %v9254 = vunpack.c.l.b16 %v8522
  %v9255 = vunpack.c.h.b16 %v8522
  %v9256 = vunpack.c.l.b16 %v8523
  %v9257 = vunpack.c.h.b16 %v8523
  %v9258 = vunpack.c.l.b16 %v8524
  %v9259 = vunpack.c.h.b16 %v8524
  %v9260 = vunpack.c.l.b16 %v8525
  %v9261 = vunpack.c.h.b16 %v8525
  %v9262 = vunpack.c.l.b16 %v8526
  %v9263 = vunpack.c.h.b16 %v8526
  %v9264 = vunpack.c.l.b16 %v8527
  %v9265 = vunpack.c.h.b16 %v8527
  %v9266 = vunpack.c.l.b16 %v8528
  %v9267 = vunpack.c.h.b16 %v8528
  %v9268 = vunpack.c.l.b16 %v8529
  %v9269 = vunpack.c.h.b16 %v8529
  %v9270 = vunpack.c.l.b16 %v8530
  %v9271 = vunpack.c.h.b16 %v8530
  %v9272 = vunpack.c.l.b16 %v8531
  %v9273 = vunpack.c.h.b16 %v8531
  %v9274 = vunpack.c.l.b16 %v8532
  %v9275 = vunpack.c.h.b16 %v8532
  %v9276 = vunpack.c.l.b16 %v8533
  %v9277 = vunpack.c.h.b16 %v8533
  %v9278 = vunpack.c.l.b16 %v8534
  %v9279 = vunpack.c.h.b16 %v8534
  %v9280 = vunpack.c.l.b16 %v8535
  %v9281 = vunpack.c.h.b16 %v8535
  %v9282 = vunpack.c.l.b16 %v8536
  %v9283 = vunpack.c.h.b16 %v8536
  %v9284 = vunpack.c.l.b16 %v8537
  %v9285 = vunpack.c.h.b16 %v8537
  %v9286 = vunpack.c.l.b16 %v8538
  %v9287 = vunpack.c.h.b16 %v8538
  %v9288 = vunpack.c.l.b16 %v8539
  %v9289 = vunpack.c.h.b16 %v8539
  %v9290 = vunpack.c.l.b16 %v8540
  %v9291 = vunpack.c.h.b16 %v8540
  %v9292 = vunpack.c.l.b16 %v8541
  %v9293 = vunpack.c.h.b16 %v8541
  %v9294 = vunpack.c.l.b16 %v8542
  %v9295 = vunpack.c.h.b16 %v8542
  %v9296 = vunpack.c.l.b16 %v8543
  %v9297 = vunpack.c.h.b16 %v8543
  %v9298 = vunpack.c.l.b16 %v8544
  %v9299 = vunpack.c.h.b16 %v8544
  %v9300 = vunpack.c.l.b16 %v8545
  %v9301 = vunpack.c.h.b16 %v8545
  %v9302 = vunpack.c.l.b16 %v8546
  %v9303 = vunpack.c.h.b16 %v8546
  %v9304 = vunpack.c.l.b16 %v8547
  %v9305 = vunpack.c.h.b16 %v8547
  %v9306 = vunpack.c.l.b16 %v8548
  %v9307 = vunpack.c.h.b16 %v8548
  %v9308 = vunpack.c.l.b16 %v8549
  %v9309 = vunpack.c.h.b16 %v8549
  %v9310 = vunpack.c.l.b16 %v8550
  %v9311 = vunpack.c.h.b16 %v8550
  %v9312 = vunpack.c.l.b16 %v8551
  %v9313 = vunpack.c.h.b16 %v8551
  %v9314 = vunpack.c.l.b16 %v8552
  %v9315 = vunpack.c.h.b16 %v8552
  %v9316 = vunpack.c.l.b16 %v8553
  %v9317 = vunpack.c.h.b16 %v8553
  %v9318 = vunpack.c.l.b16 %v8554
  %v9319 = vunpack.c.h.b16 %v8554
  %v9320 = vunpack.c.l.b16 %v8555
  %v9321 = vunpack.c.h.b16 %v8555
  %v9322 = vunpack.c.l.b16 %v8556
  %v9323 = vunpack.c.h.b16 %v8556
  %v9324 = vunpack.c.l.b16 %v8557
  %v9325 = vunpack.c.h.b16 %v8557
  %v9326 = vunpack.c.l.b16 %v8558
  %v9327 = vunpack.c.h.b16 %v8558
  %v9328 = vunpack.c.l.b16 %v8559
  %v9329 = vunpack.c.h.b16 %v8559
  %v9330 = vunpack.c.l.b16 %v8560
  %v9331 = vunpack.c.h.b16 %v8560
  %v9332 = vunpack.c.l.b16 %v8561
  %v9333 = vunpack.c.h.b16 %v8561
  %v9334 = vunpack.c.l.b16 %v8562
  %v9335 = vunpack.c.h.b16 %v8562
  %v9336 = vunpack.c.l.b16 %v8563
  %v9337 = vunpack.c.h.b16 %v8563
  %v9338 = vunpack.c.l.b16 %v8564
  %v9339 = vunpack.c.h.b16 %v8564
  %v9340 = vunpack.c.l.b16 %v8565
  %v9341 = vunpack.c.h.b16 %v8565
  %v9342 = vunpack.c.l.b16 %v8566
  %v9343 = vunpack.c.h.b16 %v8566
  %v9344 = vunpack.c.l.b16 %v8567
  %v9345 = vunpack.c.h.b16 %v8567
  %v9346 = vunpack.c.l.b16 %v8568
  %v9347 = vunpack.c.h.b16 %v8568
  %v9348 = vunpack.c.l.b16 %v8569
  %v9349 = vunpack.c.h.b16 %v8569
  %v9350 = vunpack.c.l.b16 %v8570
  %v9351 = vunpack.c.h.b16 %v8570
  %v9352 = vunpack.c.l.b16 %v8571
  %v9353 = vunpack.c.h.b16 %v8571
  %v9354 = vunpack.c.l.b16 %v8572
  %v9355 = vunpack.c.h.b16 %v8572
  %v9356 = vunpack.c.l.b16 %v8573
  %v9357 = vunpack.c.h.b16 %v8573
  %v9358 = vunpack.c.l.b16 %v8574
  %v9359 = vunpack.c.h.b16 %v8574
  %v9360 = vunpack.c.l.b16 %v8575
  %v9361 = vunpack.c.h.b16 %v8575
  %v9362 = vunpack.c.l.b16 %v8576
  %v9363 = vunpack.c.h.b16 %v8576
  %v9364 = vunpack.c.l.b16 %v8577
  %v9365 = vunpack.c.h.b16 %v8577
  %v9366 = vunpack.c.l.b16 %v8578
  %v9367 = vunpack.c.h.b16 %v8578
  %v9368 = vunpack.c.l.b16 %v8579
  %v9369 = vunpack.c.h.b16 %v8579
  %v9370 = vunpack.c.l.b16 %v8580
  %v9371 = vunpack.c.h.b16 %v8580
  %v9372 = vunpack.c.l.b16 %v8581
  %v9373 = vunpack.c.h.b16 %v8581
  %v9374 = vunpack.c.l.b16 %v8582
  %v9375 = vunpack.c.h.b16 %v8582
  %v9376 = vunpack.c.l.b16 %v8583
  %v9377 = vunpack.c.h.b16 %v8583
  %v9378 = vunpack.c.l.b16 %v8584
  %v9379 = vunpack.c.h.b16 %v8584
  %v9380 = vunpack.c.l.b16 %v8585
  %v9381 = vunpack.c.h.b16 %v8585
  %v9382 = vunpack.c.l.b16 %v8586
  %v9383 = vunpack.c.h.b16 %v8586
  %v9384 = vunpack.c.l.b16 %v8587
  %v9385 = vunpack.c.h.b16 %v8587
  %v9386 = vunpack.c.l.b16 %v8588
  %v9387 = vunpack.c.h.b16 %v8588
  %v9388 = vunpack.c.l.b16 %v8589
  %v9389 = vunpack.c.h.b16 %v8589
  %v9390 = vunpack.c.l.b16 %v8590
  %v9391 = vunpack.c.h.b16 %v8590
  %v9392 = vunpack.c.l.b16 %v8591
  %v9393 = vunpack.c.h.b16 %v8591
  %v9394 = vunpack.c.l.b16 %v8592
  %v9395 = vunpack.c.h.b16 %v8592
  %v9396 = vunpack.c.l.b16 %v8593
  %v9397 = vunpack.c.h.b16 %v8593
  %v9398 = vunpack.c.l.b16 %v8594
  %v9399 = vunpack.c.h.b16 %v8594
  %v9400 = vunpack.c.l.b16 %v8595
  %v9401 = vunpack.c.h.b16 %v8595
  %v9402 = vunpack.c.l.b16 %v8596
  %v9403 = vunpack.c.h.b16 %v8596
  %v9404 = vunpack.c.l.b16 %v8597
  %v9405 = vunpack.c.h.b16 %v8597
  %v9406 = vunpack.c.l.b16 %v8598
  %v9407 = vunpack.c.h.b16 %v8598
  %v9408 = vunpack.c.l.b16 %v8599
  %v9409 = vunpack.c.h.b16 %v8599
  %v9410 = vunpack.c.l.b16 %v8600
  %v9411 = vunpack.c.h.b16 %v8600
  %v9412 = vunpack.c.l.b16 %v8601
  %v9413 = vunpack.c.h.b16 %v8601
  %v9414 = vunpack.c.l.b16 %v8602
  %v9415 = vunpack.c.h.b16 %v8602
  %v9416 = vunpack.c.l.b16 %v8603
  %v9417 = vunpack.c.h.b16 %v8603
  %v9418 = vunpack.c.l.b16 %v8604
  %v9419 = vunpack.c.h.b16 %v8604
  %v9420 = vunpack.c.l.b16 %v8605
  %v9421 = vunpack.c.h.b16 %v8605
  %v9422 = vunpack.c.l.b16 %v8606
  %v9423 = vunpack.c.h.b16 %v8606
  %v9424 = vunpack.c.l.b16 %v8607
  %v9425 = vunpack.c.h.b16 %v8607
  %v9426 = vunpack.c.l.b16 %v8608
  %v9427 = vunpack.c.h.b16 %v8608
  %v9428 = vunpack.c.l.b16 %v8609
  %v9429 = vunpack.c.h.b16 %v8609
  %v9430 = vunpack.c.l.b16 %v8610
  %v9431 = vunpack.c.h.b16 %v8610
  %v9432 = vunpack.c.l.b16 %v8611
  %v9433 = vunpack.c.h.b16 %v8611
  %v9434 = vunpack.c.l.b16 %v8612
  %v9435 = vunpack.c.h.b16 %v8612
  %v9436 = vunpack.c.l.b16 %v8613
  %v9437 = vunpack.c.h.b16 %v8613
  %v9438 = vunpack.c.l.b16 %v8614
  %v9439 = vunpack.c.h.b16 %v8614
  %v9440 = vunpack.c.l.b16 %v8615
  %v9441 = vunpack.c.h.b16 %v8615
  %v9442 = vunpack.c.l.b16 %v8616
  %v9443 = vunpack.c.h.b16 %v8616
  %v9444 = vunpack.c.l.b16 %v8617
  %v9445 = vunpack.c.h.b16 %v8617
  %v9446 = vunpack.c.l.b16 %v8618
  %v9447 = vunpack.c.h.b16 %v8618
  %v9448 = vunpack.c.l.b16 %v8619
  %v9449 = vunpack.c.h.b16 %v8619
  %v9450 = vunpack.c.l.b16 %v8620
  %v9451 = vunpack.c.h.b16 %v8620
  %v9452 = vunpack.c.l.b16 %v8621
  %v9453 = vunpack.c.h.b16 %v8621
  %v9454 = vunpack.c.l.b16 %v8622
  %v9455 = vunpack.c.h.b16 %v8622
  %v9456 = vunpack.c.l.b16 %v8623
  %v9457 = vunpack.c.h.b16 %v8623
  %v9458 = vunpack.c.l.b16 %v8624
  %v9459 = vunpack.c.h.b16 %v8624
  %v9460 = vunpack.c.l.b16 %v8625
  %v9461 = vunpack.c.h.b16 %v8625
  %v9462 = vunpack.c.l.b16 %v8626
  %v9463 = vunpack.c.h.b16 %v8626
  %v9464 = vunpack.c.l.b16 %v8627
  %v9465 = vunpack.c.h.b16 %v8627
  %v9466 = vunpack.c.l.b16 %v8628
  %v9467 = vunpack.c.h.b16 %v8628
  %v9468 = vunpack.c.l.b16 %v8629
  %v9469 = vunpack.c.h.b16 %v8629
  %v9470 = vunpack.c.l.b16 %v8630
  %v9471 = vunpack.c.h.b16 %v8630
  %v9472 = vunpack.c.l.b16 %v8631
  %v9473 = vunpack.c.h.b16 %v8631
  %v9474 = vunpack.c.l.b16 %v8632
  %v9475 = vunpack.c.h.b16 %v8632
  %v9476 = vunpack.c.l.b16 %v8633
  %v9477 = vunpack.c.h.b16 %v8633
  %v9478 = vunpack.c.l.b16 %v8634
  %v9479 = vunpack.c.h.b16 %v8634
  %v9480 = vunpack.c.l.b16 %v8635
  %v9481 = vunpack.c.h.b16 %v8635
  %v9482 = vunpack.c.l.b16 %v8636
  %v9483 = vunpack.c.h.b16 %v8636
  %v9484 = vunpack.c.l.b16 %v8637
  %v9485 = vunpack.c.h.b16 %v8637
  %v9486 = vunpack.c.l.b16 %v8638
  %v9487 = vunpack.c.h.b16 %v8638
  %v9488 = vunpack.c.l.b16 %v8639
  %v9489 = vunpack.c.h.b16 %v8639
  %v9490 = vunpack.c.l.b16 %v8640
  %v9491 = vunpack.c.h.b16 %v8640
  %v9492 = vunpack.c.l.b16 %v8641
  %v9493 = vunpack.c.h.b16 %v8641
  %v9494 = vunpack.c.l.b16 %v8642
  %v9495 = vunpack.c.h.b16 %v8642
  %v9496 = vunpack.c.l.b16 %v8643
  %v9497 = vunpack.c.h.b16 %v8643
  %v9498 = vunpack.c.l.b16 %v8644
  %v9499 = vunpack.c.h.b16 %v8644
  %v9500 = vunpack.c.l.b16 %v8645
  %v9501 = vunpack.c.h.b16 %v8645
  %v9502 = vunpack.c.l.b16 %v8646
  %v9503 = vunpack.c.h.b16 %v8646
  %v9504 = vunpack.c.l.b16 %v8647
  %v9505 = vunpack.c.h.b16 %v8647
  %v9506 = vunpack.c.l.b16 %v8648
  %v9507 = vunpack.c.h.b16 %v8648
  %v9508 = vunpack.c.l.b16 %v8649
  %v9509 = vunpack.c.h.b16 %v8649
  %v9510 = vunpack.c.l.b16 %v8650
  %v9511 = vunpack.c.h.b16 %v8650
  %v9512 = vunpack.c.l.b16 %v8651
  %v9513 = vunpack.c.h.b16 %v8651
  %v9514 = vunpack.c.l.b16 %v8652
  %v9515 = vunpack.c.h.b16 %v8652
  %v9516 = vunpack.c.l.b16 %v8653
  %v9517 = vunpack.c.h.b16 %v8653
  %v9518 = vunpack.c.l.b16 %v8654
  %v9519 = vunpack.c.h.b16 %v8654
  %v9520 = vunpack.c.l.b16 %v8655
  %v9521 = vunpack.c.h.b16 %v8655
  %v9522 = vunpack.c.l.b16 %v8656
  %v9523 = vunpack.c.h.b16 %v8656
  %v9524 = vunpack.c.l.b16 %v8657
  %v9525 = vunpack.c.h.b16 %v8657
  %v9526 = vunpack.c.l.b16 %v8658
  %v9527 = vunpack.c.h.b16 %v8658
  %v9528 = vunpack.c.l.b16 %v8659
  %v9529 = vunpack.c.h.b16 %v8659
  %v9530 = vunpack.c.l.b16 %v8660
  %v9531 = vunpack.c.h.b16 %v8660
  %v9532 = vunpack.c.l.b16 %v8661
  %v9533 = vunpack.c.h.b16 %v8661
  %v9534 = vunpack.c.l.b16 %v8662
  %v9535 = vunpack.c.h.b16 %v8662
  %v9536 = vunpack.c.l.b16 %v8663
  %v9537 = vunpack.c.h.b16 %v8663
  %v9538 = vunpack.c.l.b16 %v8664
  %v9539 = vunpack.c.h.b16 %v8664
  %v9540 = vunpack.c.l.b16 %v8665
  %v9541 = vunpack.c.h.b16 %v8665
  %v9542 = vunpack.c.l.b16 %v8666
  %v9543 = vunpack.c.h.b16 %v8666
  %v9544 = vunpack.c.l.b16 %v8667
  %v9545 = vunpack.c.h.b16 %v8667
  %v9546 = vunpack.c.l.b16 %v8668
  %v9547 = vunpack.c.h.b16 %v8668
  %v9548 = vunpack.c.l.b16 %v8669
  %v9549 = vunpack.c.h.b16 %v8669
  %v9550 = vunpack.c.l.b16 %v8670
  %v9551 = vunpack.c.h.b16 %v8670
  %v9552 = vunpack.c.l.b16 %v8671
  %v9553 = vunpack.c.h.b16 %v8671
  %v9554 = vunpack.c.l.b16 %v8672
  %v9555 = vunpack.c.h.b16 %v8672
  %v9556 = vunpack.c.l.b16 %v8673
  %v9557 = vunpack.c.h.b16 %v8673
  %v9558 = vunpack.c.l.b16 %v8674
  %v9559 = vunpack.c.h.b16 %v8674
  %v9560 = vunpack.c.l.b16 %v8675
  %v9561 = vunpack.c.h.b16 %v8675
  %v9562 = vunpack.c.l.b16 %v8676
  %v9563 = vunpack.c.h.b16 %v8676
  %v9564 = vunpack.c.l.b16 %v8677
  %v9565 = vunpack.c.h.b16 %v8677
  %v9566 = vunpack.c.l.b16 %v8678
  %v9567 = vunpack.c.h.b16 %v8678
  %v9568 = vunpack.c.l.b16 %v8679
  %v9569 = vunpack.c.h.b16 %v8679
  %v9570 = vunpack.c.l.b16 %v8680
  %v9571 = vunpack.c.h.b16 %v8680
  %v9572 = vunpack.c.l.b16 %v8681
  %v9573 = vunpack.c.h.b16 %v8681
  %v9574 = vunpack.c.l.b16 %v8682
  %v9575 = vunpack.c.h.b16 %v8682
  %v9576 = vunpack.c.l.b16 %v8683
  %v9577 = vunpack.c.h.b16 %v8683
  %v9578 = vunpack.c.l.b16 %v8684
  %v9579 = vunpack.c.h.b16 %v8684
  %v9580 = vunpack.c.l.b16 %v8685
  %v9581 = vunpack.c.h.b16 %v8685
  %v9582 = vunpack.c.l.b16 %v8686
  %v9583 = vunpack.c.h.b16 %v8686
  %v9584 = vunpack.c.l.b16 %v8687
  %v9585 = vunpack.c.h.b16 %v8687
  %v9586 = vunpack.c.l.b16 %v8688
  %v9587 = vunpack.c.h.b16 %v8688
  %v9588 = vunpack.c.l.b16 %v8689
  %v9589 = vunpack.c.h.b16 %v8689
  %v9590 = vunpack.c.l.b16 %v8690
  %v9591 = vunpack.c.h.b16 %v8690
  %v9592 = vunpack.c.l.b16 %v8691
  %v9593 = vunpack.c.h.b16 %v8691
  %v9594 = vunpack.c.l.b16 %v8692
  %v9595 = vunpack.c.h.b16 %v8692
  %v9596 = vunpack.c.l.b16 %v8693
  %v9597 = vunpack.c.h.b16 %v8693
  %v9598 = vunpack.c.l.b16 %v8694
  %v9599 = vunpack.c.h.b16 %v8694
  %v9600 = vunpack.c.l.b16 %v8695
  %v9601 = vunpack.c.h.b16 %v8695
  %v9602 = vunpack.c.l.b16 %v8696
  %v9603 = vunpack.c.h.b16 %v8696
  %v9604 = vunpack.c.l.b16 %v8697
  %v9605 = vunpack.c.h.b16 %v8697
  %v9606 = vunpack.c.l.b16 %v8698
  %v9607 = vunpack.c.h.b16 %v8698
  %v9608 = vunpack.c.l.b16 %v8699
  %v9609 = vunpack.c.h.b16 %v8699
  %v9610 = vunpack.c.l.b16 %v8700
  %v9611 = vunpack.c.h.b16 %v8700
  %v9612 = vunpack.c.l.b16 %v8701
  %v9613 = vunpack.c.h.b16 %v8701
  %v9614 = vunpack.c.l.b16 %v8702
  %v9615 = vunpack.c.h.b16 %v8702
  %v9616 = vunpack.c.l.b16 %v8703
  %v9617 = vunpack.c.h.b16 %v8703
  %v9618 = vunpack.c.l.b16 %v8704
  %v9619 = vunpack.c.h.b16 %v8704
  %v9620 = vunpack.c.l.b16 %v8705
  %v9621 = vunpack.c.h.b16 %v8705
  %v9622 = vunpack.c.l.b16 %v8706
  %v9623 = vunpack.c.h.b16 %v8706
  %v9624 = vunpack.c.l.b16 %v8707
  %v9625 = vunpack.c.h.b16 %v8707
  %v9626 = vunpack.c.l.b16 %v8708
  %v9627 = vunpack.c.h.b16 %v8708
  %v9628 = vunpack.c.l.b16 %v8709
  %v9629 = vunpack.c.h.b16 %v8709
  %v9630 = vunpack.c.l.b16 %v8710
  %v9631 = vunpack.c.h.b16 %v8710
  %v9632 = vunpack.c.l.b16 %v8711
  %v9633 = vunpack.c.h.b16 %v8711
  %v9634 = vunpack.c.l.b16 %v8712
  %v9635 = vunpack.c.h.b16 %v8712
  %v9636 = vunpack.c.l.b16 %v8713
  %v9637 = vunpack.c.h.b16 %v8713
  %v9638 = vunpack.c.l.b16 %v8714
  %v9639 = vunpack.c.h.b16 %v8714
  %v9640 = vunpack.c.l.b16 %v8715
  %v9641 = vunpack.c.h.b16 %v8715
  %v9642 = vunpack.c.l.b16 %v8716
  %v9643 = vunpack.c.h.b16 %v8716
  %v9644 = vunpack.c.l.b16 %v8717
  %v9645 = vunpack.c.h.b16 %v8717
  %v9646 = vunpack.c.l.b16 %v8718
  %v9647 = vunpack.c.h.b16 %v8718
  %v9648 = vunpack.c.l.b16 %v8719
  %v9649 = vunpack.c.h.b16 %v8719
  %v9650 = vunpack.c.l.b16 %v8720
  %v9651 = vunpack.c.h.b16 %v8720
  %v9652 = vunpack.c.l.b16 %v8721
  %v9653 = vunpack.c.h.b16 %v8721
  %v9654 = vunpack.c.l.b16 %v8722
  %v9655 = vunpack.c.h.b16 %v8722
  %v9656 = vunpack.c.l.b16 %v8723
  %v9657 = vunpack.c.h.b16 %v8723
  %v9658 = vunpack.c.l.b16 %v8724
  %v9659 = vunpack.c.h.b16 %v8724
  %v9660 = vunpack.c.l.b16 %v8725
  %v9661 = vunpack.c.h.b16 %v8725
  %v9662 = vunpack.c.l.b16 %v8726
  %v9663 = vunpack.c.h.b16 %v8726
  %v9664 = vunpack.c.l.b16 %v8727
  %v9665 = vunpack.c.h.b16 %v8727
  %v9666 = vunpack.c.l.b16 %v8728
  %v9667 = vunpack.c.h.b16 %v8728
  %v9668 = vunpack.c.l.b16 %v8729
  %v9669 = vunpack.c.h.b16 %v8729
  %v9670 = vunpack.c.l.b16 %v8730
  %v9671 = vunpack.c.h.b16 %v8730
  %v9672 = vunpack.c.l.b16 %v8731
  %v9673 = vunpack.c.h.b16 %v8731
  %v9674 = vunpack.c.l.b16 %v8732
  %v9675 = vunpack.c.h.b16 %v8732
  %v9676 = vunpack.c.l.b16 %v8733
  %v9677 = vunpack.c.h.b16 %v8733
  %v9678 = vunpack.c.l.b16 %v8734
  %v9679 = vunpack.c.h.b16 %v8734
  %v9680 = vunpack.c.l.b16 %v8735
  %v9681 = vunpack.c.h.b16 %v8735
  %v9682 = vunpack.c.l.b16 %v8736
  %v9683 = vunpack.c.h.b16 %v8736
  %v9684 = vunpack.c.l.b16 %v8737
  %v9685 = vunpack.c.h.b16 %v8737
  %v9686 = vunpack.c.l.b16 %v8738
  %v9687 = vunpack.c.h.b16 %v8738
  %v9688 = vunpack.c.l.b16 %v8739
  %v9689 = vunpack.c.h.b16 %v8739
  %v9690 = vunpack.c.l.b16 %v8740
  %v9691 = vunpack.c.h.b16 %v8740
  %v9692 = vunpack.c.l.b16 %v8741
  %v9693 = vunpack.c.h.b16 %v8741
  %v9694 = vunpack.c.l.b16 %v8742
  %v9695 = vunpack.c.h.b16 %v8742
  %v9696 = vunpack.c.l.b16 %v8743
  %v9697 = vunpack.c.h.b16 %v8743
  %v9698 = vunpack.c.l.b16 %v8744
  %v9699 = vunpack.c.h.b16 %v8744
  %v9700 = vunpack.c.l.b16 %v8745
  %v9701 = vunpack.c.h.b16 %v8745
  %v9702 = vunpack.c.l.b16 %v8746
  %v9703 = vunpack.c.h.b16 %v8746
  %v9704 = vunpack.c.l.b16 %v8747
  %v9705 = vunpack.c.h.b16 %v8747
  %v9706 = vunpack.c.l.b16 %v8748
  %v9707 = vunpack.c.h.b16 %v8748
  %v9708 = vunpack.c.l.b16 %v8749
  %v9709 = vunpack.c.h.b16 %v8749
  %v9710 = vpack.c.b16 %v9080, %v9070
  %v9711 = vpack.c.b16 %v9081, %v9071
  %v9712 = vpack.c.b16 %v9082, %v9072
  %v9713 = vpack.c.b16 %v9083, %v9073
  %v9714 = vpack.c.b16 %v9084, %v9074
  %v9715 = vpack.c.b16 %v9085, %v9075
  %v9716 = vpack.c.b16 %v9086, %v9076
  %v9717 = vpack.c.b16 %v9087, %v9077
  %v9718 = vpack.c.b16 %v9088, %v9078
  %v9719 = vpack.c.b16 %v9089, %v9079
  %v9720 = vpack.c.b16 %v9100, %v9090
  %v9721 = vpack.c.b16 %v9101, %v9091
  %v9722 = vpack.c.b16 %v9102, %v9092
  %v9723 = vpack.c.b16 %v9103, %v9093
  %v9724 = vpack.c.b16 %v9104, %v9094
  %v9725 = vpack.c.b16 %v9105, %v9095
  %v9726 = vpack.c.b16 %v9106, %v9096
  %v9727 = vpack.c.b16 %v9107, %v9097
  %v9728 = vpack.c.b16 %v9108, %v9098
  %v9729 = vpack.c.b16 %v9109, %v9099
  %v9730 = vpack.c.b16 %v9120, %v9110
  %v9731 = vpack.c.b16 %v9121, %v9111
  %v9732 = vpack.c.b16 %v9122, %v9112
  %v9733 = vpack.c.b16 %v9123, %v9113
  %v9734 = vpack.c.b16 %v9124, %v9114
  %v9735 = vpack.c.b16 %v9125, %v9115
  %v9736 = vpack.c.b16 %v9126, %v9116
  %v9737 = vpack.c.b16 %v9127, %v9117
  %v9738 = vpack.c.b16 %v9128, %v9118
  %v9739 = vpack.c.b16 %v9129, %v9119
  %v9740 = vpack.c.b16 %v9140, %v9130
  %v9741 = vpack.c.b16 %v9141, %v9131
  %v9742 = vpack.c.b16 %v9142, %v9132
  %v9743 = vpack.c.b16 %v9143, %v9133
  %v9744 = vpack.c.b16 %v9144, %v9134
  %v9745 = vpack.c.b16 %v9145, %v9135
  %v9746 = vpack.c.b16 %v9146, %v9136
  %v9747 = vpack.c.b16 %v9147, %v9137
  %v9748 = vpack.c.b16 %v9148, %v9138
  %v9749 = vpack.c.b16 %v9149, %v9139
  %v9750 = vpack.c.b16 %v9160, %v9150
  %v9751 = vpack.c.b16 %v9161, %v9151
  %v9752 = vpack.c.b16 %v9162, %v9152
  %v9753 = vpack.c.b16 %v9163, %v9153
  %v9754 = vpack.c.b16 %v9164, %v9154
  %v9755 = vpack.c.b16 %v9165, %v9155
  %v9756 = vpack.c.b16 %v9166, %v9156
  %v9757 = vpack.c.b16 %v9167, %v9157
  %v9758 = vpack.c.b16 %v9168, %v9158
  %v9759 = vpack.c.b16 %v9169, %v9159
  %v9760 = vpack.c.b16 %v9180, %v9170
  %v9761 = vpack.c.b16 %v9181, %v9171
  %v9762 = vpack.c.b16 %v9182, %v9172
  %v9763 = vpack.c.b16 %v9183, %v9173
  %v9764 = vpack.c.b16 %v9184, %v9174
  %v9765 = vpack.c.b16 %v9185, %v9175
  %v9766 = vpack.c.b16 %v9186, %v9176
  %v9767 = vpack.c.b16 %v9187, %v9177
  %v9768 = vpack.c.b16 %v9188, %v9178
  %v9769 = vpack.c.b16 %v9189, %v9179
  %v9770 = vpack.c.b16 %v9200, %v9190
  %v9771 = vpack.c.b16 %v9201, %v9191
  %v9772 = vpack.c.b16 %v9202, %v9192
  %v9773 = vpack.c.b16 %v9203, %v9193
  %v9774 = vpack.c.b16 %v9204, %v9194
  %v9775 = vpack.c.b16 %v9205, %v9195
  %v9776 = vpack.c.b16 %v9206, %v9196
  %v9777 = vpack.c.b16 %v9207, %v9197
  %v9778 = vpack.c.b16 %v9208, %v9198
  %v9779 = vpack.c.b16 %v9209, %v9199
  %v9780 = vpack.c.b16 %v9220, %v9210
  %v9781 = vpack.c.b16 %v9221, %v9211
  %v9782 = vpack.c.b16 %v9222, %v9212
  %v9783 = vpack.c.b16 %v9223, %v9213
  %v9784 = vpack.c.b16 %v9224, %v9214
  %v9785 = vpack.c.b16 %v9225, %v9215
  %v9786 = vpack.c.b16 %v9226, %v9216
  %v9787 = vpack.c.b16 %v9227, %v9217
  %v9788 = vpack.c.b16 %v9228, %v9218
  %v9789 = vpack.c.b16 %v9229, %v9219
  %v9790 = vpack.c.b16 %v9240, %v9230
  %v9791 = vpack.c.b16 %v9241, %v9231
  %v9792 = vpack.c.b16 %v9242, %v9232
  %v9793 = vpack.c.b16 %v9243, %v9233
  %v9794 = vpack.c.b16 %v9244, %v9234
  %v9795 = vpack.c.b16 %v9245, %v9235
  %v9796 = vpack.c.b16 %v9246, %v9236
  %v9797 = vpack.c.b16 %v9247, %v9237
  %v9798 = vpack.c.b16 %v9248, %v9238
  %v9799 = vpack.c.b16 %v9249, %v9239
  %v9800 = vpack.c.b16 %v9260, %v9250
  %v9801 = vpack.c.b16 %v9261, %v9251
  %v9802 = vpack.c.b16 %v9262, %v9252
  %v9803 = vpack.c.b16 %v9263, %v9253
  %v9804 = vpack.c.b16 %v9264, %v9254
  %v9805 = vpack.c.b16 %v9265, %v9255
  %v9806 = vpack.c.b16 %v9266, %v9256
  %v9807 = vpack.c.b16 %v9267, %v9257
  %v9808 = vpack.c.b16 %v9268, %v9258
  %v9809 = vpack.c.b16 %v9269, %v9259
  %v9810 = vpack.c.b16 %v9280, %v9270
  %v9811 = vpack.c.b16 %v9281, %v9271
  %v9812 = vpack.c.b16 %v9282, %v9272
  %v9813 = vpack.c.b16 %v9283, %v9273
  %v9814 = vpack.c.b16 %v9284, %v9274
  %v9815 = vpack.c.b16 %v9285, %v9275
  %v9816 = vpack.c.b16 %v9286, %v9276
  %v9817 = vpack.c.b16 %v9287, %v9277
  %v9818 = vpack.c.b16 %v9288, %v9278
  %v9819 = vpack.c.b16 %v9289, %v9279
  %v9820 = vpack.c.b16 %v9300, %v9290
  %v9821 = vpack.c.b16 %v9301, %v9291
  %v9822 = vpack.c.b16 %v9302, %v9292
  %v9823 = vpack.c.b16 %v9303, %v9293
  %v9824 = vpack.c.b16 %v9304, %v9294
  %v9825 = vpack.c.b16 %v9305, %v9295
  %v9826 = vpack.c.b16 %v9306, %v9296
  %v9827 = vpack.c.b16 %v9307, %v9297
  %v9828 = vpack.c.b16 %v9308, %v9298
  %v9829 = vpack.c.b16 %v9309, %v9299
  %v9830 = vpack.c.b16 %v9320, %v9310
  %v9831 = vpack.c.b16 %v9321, %v9311
  %v9832 = vpack.c.b16 %v9322, %v9312
  %v9833 = vpack.c.b16 %v9323, %v9313
  %v9834 = vpack.c.b16 %v9324, %v9314
  %v9835 = vpack.c.b16 %v9325, %v9315
  %v9836 = vpack.c.b16 %v9326, %v9316
  %v9837 = vpack.c.b16 %v9327, %v9317
  %v9838 = vpack.c.b16 %v9328, %v9318
  %v9839 = vpack.c.b16 %v9329, %v9319
  %v9840 = vpack.c.b16 %v9340, %v9330
  %v9841 = vpack.c.b16 %v9341, %v9331
  %v9842 = vpack.c.b16 %v9342, %v9332
  %v9843 = vpack.c.b16 %v9343, %v9333
  %v9844 = vpack.c.b16 %v9344, %v9334
  %v9845 = vpack.c.b16 %v9345, %v9335
  %v9846 = vpack.c.b16 %v9346, %v9336
  %v9847 = vpack.c.b16 %v9347, %v9337
  %v9848 = vpack.c.b16 %v9348, %v9338
  %v9849 = vpack.c.b16 %v9349, %v9339
  %v9850 = vpack.c.b16 %v9360, %v9350
  %v9851 = vpack.c.b16 %v9361, %v9351
  %v9852 = vpack.c.b16 %v9362, %v9352
  %v9853 = vpack.c.b16 %v9363, %v9353
  %v9854 = vpack.c.b16 %v9364, %v9354
  %v9855 = vpack.c.b16 %v9365, %v9355
  %v9856 = vpack.c.b16 %v9366, %v9356
  %v9857 = vpack.c.b16 %v9367, %v9357
  %v9858 = vpack.c.b16 %v9368, %v9358
  %v9859 = vpack.c.b16 %v9369, %v9359
  %v9860 = vpack.c.b16 %v9380, %v9370
  %v9861 = vpack.c.b16 %v9381, %v9371
  %v9862 = vpack.c.b16 %v9382, %v9372
  %v9863 = vpack.c.b16 %v9383, %v9373
  %v9864 = vpack.c.b16 %v9384, %v9374
  %v9865 = vpack.c.b16 %v9385, %v9375
  %v9866 = vpack.c.b16 %v9386, %v9376
  %v9867 = vpack.c.b16 %v9387, %v9377
  %v9868 = vpack.c.b16 %v9388, %v9378
  %v9869 = vpack.c.b16 %v9389, %v9379
  %v9870 = vpack.c.b16 %v9400, %v9390
  %v9871 = vpack.c.b16 %v9401, %v9391
  %v9872 = vpack.c.b16 %v9402, %v9392
  %v9873 = vpack.c.b16 %v9403, %v9393
  %v9874 = vpack.c.b16 %v9404, %v9394
  %v9875 = vpack.c.b16 %v9405, %v9395
  %v9876 = vpack.c.b16 %v9406, %v9396
  %v9877 = vpack.c.b16 %v9407, %v9397
  %v9878 = vpack.c.b16 %v9408, %v9398
  %v9879 = vpack.c.b16 %v9409, %v9399
  %v9880 = vpack.c.b16 %v9420, %v9410
  %v9881 = vpack.c.b16 %v9421, %v9411
  %v9882 = vpack.c.b16 %v9422, %v9412
  %v9883 = vpack.c.b16 %v9423, %v9413
  %v9884 = vpack.c.b16 %v9424, %v9414
  %v9885 = vpack.c.b16 %v9425, %v9415
  %v9886 = vpack.c.b16 %v9426, %v9416
  %v9887 = vpack.c.b16 %v9427, %v9417
  %v9888 = vpack.c.b16 %v9428, %v9418
  %v9889 = vpack.c.b16 %v9429, %v9419
  %v9890 = vpack.c.b16 %v9440, %v9430
  %v9891 = vpack.c.b16 %v9441, %v9431
  %v9892 = vpack.c.b16 %v9442, %v9432
  %v9893 = vpack.c.b16 %v9443, %v9433
  %v9894 = vpack.c.b16 %v9444, %v9434
  %v9895 = vpack.c.b16 %v9445, %v9435
  %v9896 = vpack.c.b16 %v9446, %v9436
  %v9897 = vpack.c.b16 %v9447, %v9437
  %v9898 = vpack.c.b16 %v9448, %v9438
  %v9899 = vpack.c.b16 %v9449, %v9439
  %v9900 = vpack.c.b16 %v9460, %v9450
  %v9901 = vpack.c.b16 %v9461, %v9451
  %v9902 = vpack.c.b16 %v9462, %v9452
  %v9903 = vpack.c.b16 %v9463, %v9453
  %v9904 = vpack.c.b16 %v9464, %v9454
  %v9905 = vpack.c.b16 %v9465, %v9455
  %v9906 = vpack.c.b16 %v9466, %v9456
  %v9907 = vpack.c.b16 %v9467, %v9457
  %v9908 = vpack.c.b16 %v9468, %v9458
  %v9909 = vpack.c.b16 %v9469, %v9459
  %v9910 = vpack.c.b16 %v9480, %v9470
  %v9911 = vpack.c.b16 %v9481, %v9471
  %v9912 = vpack.c.b16 %v9482, %v9472
  %v9913 = vpack.c.b16 %v9483, %v9473
  %v9914 = vpack.c.b16 %v9484, %v9474
  %v9915 = vpack.c.b16 %v9485, %v9475
  %v9916 = vpack.c.b16 %v9486, %v9476
  %v9917 = vpack.c.b16 %v9487, %v9477
  %v9918 = vpack.c.b16 %v9488, %v9478
  %v9919 = vpack.c.b16 %v9489, %v9479
  %v9920 = vpack.c.b16 %v9500, %v9490
  %v9921 = vpack.c.b16 %v9501, %v9491
  %v9922 = vpack.c.b16 %v9502, %v9492
  %v9923 = vpack.c.b16 %v9503, %v9493
  %v9924 = vpack.c.b16 %v9504, %v9494
  %v9925 = vpack.c.b16 %v9505, %v9495
  %v9926 = vpack.c.b16 %v9506, %v9496
  %v9927 = vpack.c.b16 %v9507, %v9497
  %v9928 = vpack.c.b16 %v9508, %v9498
  %v9929 = vpack.c.b16 %v9509, %v9499
  %v9930 = vpack.c.b16 %v9520, %v9510
  %v9931 = vpack.c.b16 %v9521, %v9511
  %v9932 = vpack.c.b16 %v9522, %v9512
  %v9933 = vpack.c.b16 %v9523, %v9513
  %v9934 = vpack.c.b16 %v9524, %v9514
  %v9935 = vpack.c.b16 %v9525, %v9515
  %v9936 = vpack.c.b16 %v9526, %v9516
  %v9937 = vpack.c.b16 %v9527, %v9517
  %v9938 = vpack.c.b16 %v9528, %v9518
  %v9939 = vpack.c.b16 %v9529, %v9519
  %v9940 = vpack.c.b16 %v9540, %v9530
  %v9941 = vpack.c.b16 %v9541, %v9531
  %v9942 = vpack.c.b16 %v9542, %v9532
  %v9943 = vpack.c.b16 %v9543, %v9533
  %v9944 = vpack.c.b16 %v9544, %v9534
  %v9945 = vpack.c.b16 %v9545, %v9535
  %v9946 = vpack.c.b16 %v9546, %v9536
  %v9947 = vpack.c.b16 %v9547, %v9537
  %v9948 = vpack.c.b16 %v9548, %v9538
  %v9949 = vpack.c.b16 %v9549, %v9539
  %v9950 = vpack.c.b16 %v9560, %v9550
  %v9951 = vpack.c.b16 %v9561, %v9551
  %v9952 = vpack.c.b16 %v9562, %v9552
  %v9953 = vpack.c.b16 %v9563, %v9553
  %v9954 = vpack.c.b16 %v9564, %v9554
  %v9955 = vpack.c.b16 %v9565, %v9555
  %v9956 = vpack.c.b16 %v9566, %v9556
  %v9957 = vpack.c.b16 %v9567, %v9557
  %v9958 = vpack.c.b16 %v9568, %v9558
  %v9959 = vpack.c.b16 %v9569, %v9559
  %v9960 = vpack.c.b16 %v9580, %v9570
  %v9961 = vpack.c.b16 %v9581, %v9571
  %v9962 = vpack.c.b16 %v9582, %v9572
  %v9963 = vpack.c.b16 %v9583, %v9573
  %v9964 = vpack.c.b16 %v9584, %v9574
  %v9965 = vpack.c.b16 %v9585, %v9575
  %v9966 = vpack.c.b16 %v9586, %v9576
  %v9967 = vpack.c.b16 %v9587, %v9577
  %v9968 = vpack.c.b16 %v9588, %v9578
  %v9969 = vpack.c.b16 %v9589, %v9579
  %v9970 = vpack.c.b16 %v9600, %v9590
  %v9971 = vpack.c.b16 %v9601, %v9591
  %v9972 = vpack.c.b16 %v9602, %v9592
  %v9973 = vpack.c.b16 %v9603, %v9593
  %v9974 = vpack.c.b16 %v9604, %v9594
  %v9975 = vpack.c.b16 %v9605, %v9595
  %v9976 = vpack.c.b16 %v9606, %v9596
  %v9977 = vpack.c.b16 %v9607, %v9597
  %v9978 = vpack.c.b16 %v9608, %v9598
  %v9979 = vpack.c.b16 %v9609, %v9599
  %v9980 = vpack.c.b16 %v9620, %v9610
  %v9981 = vpack.c.b16 %v9621, %v9611
  %v9982 = vpack.c.b16 %v9622, %v9612
  %v9983 = vpack.c.b16 %v9623, %v9613
  %v9984 = vpack.c.b16 %v9624, %v9614
  %v9985 = vpack.c.b16 %v9625, %v9615
  %v9986 = vpack.c.b16 %v9626, %v9616
  %v9987 = vpack.c.b16 %v9627, %v9617
  %v9988 = vpack.c.b16 %v9628, %v9618
  %v9989 = vpack.c.b16 %v9629, %v9619
  %v9990 = vpack.c.b16 %v9640, %v9630
  %v9991 = vpack.c.b16 %v9641, %v9631
  %v9992 = vpack.c.b16 %v9642, %v9632
  %v9993 = vpack.c.b16 %v9643, %v9633
  %v9994 = vpack.c.b16 %v9644, %v9634
  %v9995 = vpack.c.b16 %v9645, %v9635
  %v9996 = vpack.c.b16 %v9646, %v9636
  %v9997 = vpack.c.b16 %v9647, %v9637
  %v9998 = vpack.c.b16 %v9648, %v9638
  %v9999 = vpack.c.b16 %v9649, %v9639
  %v10000 = vpack.c.b16 %v9660, %v9650
  %v10001 = vpack.c.b16 %v9661, %v9651
  %v10002 = vpack.c.b16 %v9662, %v9652
  %v10003 = vpack.c.b16 %v9663, %v9653
  %v10004 = vpack.c.b16 %v9664, %v9654
  %v10005 = vpack.c.b16 %v9665, %v9655
  %v10006 = vpack.c.b16 %v9666, %v9656
  %v10007 = vpack.c.b16 %v9667, %v9657
  %v10008 = vpack.c.b16 %v9668, %v9658
  %v10009 = vpack.c.b16 %v9669, %v9659
  %v10010 = vpack.c.b16 %v9680, %v9670
  %v10011 = vpack.c.b16 %v9681, %v9671
  %v10012 = vpack.c.b16 %v9682, %v9672
  %v10013 = vpack.c.b16 %v9683, %v9673
  %v10014 = vpack.c.b16 %v9684, %v9674
  %v10015 = vpack.c.b16 %v9685, %v9675
  %v10016 = vpack.c.b16 %v9686, %v9676
  %v10017 = vpack.c.b16 %v9687, %v9677
  %v10018 = vpack.c.b16 %v9688, %v9678
  %v10019 = vpack.c.b16 %v9689, %v9679
  %v10020 = vpack.c.b16 %v9700, %v9690
  %v10021 = vpack.c.b16 %v9701, %v9691
  %v10022 = vpack.c.b16 %v9702, %v9692
  %v10023 = vpack.c.b16 %v9703, %v9693
  %v10024 = vpack.c.b16 %v9704, %v9694
  %v10025 = vpack.c.b16 %v9705, %v9695
  %v10026 = vpack.c.b16 %v9706, %v9696
  %v10027 = vpack.c.b16 %v9707, %v9697
  %v10028 = vpack.c.b16 %v9708, %v9698
  %v10029 = vpack.c.b16 %v9709, %v9699
  %vm10318 = vcmask 7168
  %v10320 = vsel %vm10318, %v9719, 0
  %v10323 = vsel %vm10318, %v9729, 0
  %v10326 = vsel %vm10318, %v9739, 0
  %v10329 = vsel %vm10318, %v9749, 0
  %v10332 = vsel %vm10318, %v9759, 0
  %v10335 = vsel %vm10318, %v9769, 0
  %v10338 = vsel %vm10318, %v9779, 0
  %v10341 = vsel %vm10318, %v9789, 0
  %v10344 = vsel %vm10318, %v9799, 0
  %v10347 = vsel %vm10318, %v9809, 0
  %v10350 = vsel %vm10318, %v9819, 0
  %v10353 = vsel %vm10318, %v9829, 0
  %v10356 = vsel %vm10318, %v9839, 0
  %v10359 = vsel %vm10318, %v9849, 0
  %v10362 = vsel %vm10318, %v9859, 0
  %v10365 = vsel %vm10318, %v9869, 0
  %v10368 = vsel %vm10318, %v9879, 0
  %v10371 = vsel %vm10318, %v9889, 0
  %v10374 = vsel %vm10318, %v9899, 0
  %v10377 = vsel %vm10318, %v9909, 0
  %v10380 = vsel %vm10318, %v9919, 0
  %v10383 = vsel %vm10318, %v9929, 0
  %v10386 = vsel %vm10318, %v9939, 0
  %v10389 = vsel %vm10318, %v9949, 0
  %v10392 = vsel %vm10318, %v9959, 0
  %v10395 = vsel %vm10318, %v9969, 0
  %v10398 = vsel %vm10318, %v9979, 0
  %v10401 = vsel %vm10318, %v9989, 0
  %v10404 = vsel %vm10318, %v9999, 0
  %v10407 = vsel %vm10318, %v10009, 0
  %v10410 = vsel %vm10318, %v10019, 0
  %v10413 = vsel %vm10318, %v10029, 0
  %vm10415 = vcmask 1040384
  %v10416 = vsel 0, 4294967295, 65535
  %v10417 = vsel %vm10415, %v10416, 0
  %v10419 = vand.u32 %v8429, %v10417
  %10421 = vmatprep.subr.bf16.mxu0 %v8286
  %10422 = vmatpush1.bf16.msra.mxu0 %v8285
  %10423 = vmatprep.subr.bf16.mxu0 %v8288
  %10424 = vmatpush1.bf16.msra.mxu0 %v8287
  %10425 = vmatprep.subr.bf16.mxu0 %v8290
  %10426 = vmatpush1.bf16.msra.mxu0 %v8289
  %10427 = vmatprep.subr.bf16.mxu0 %v8292
  %10428 = vmatpush1.bf16.msra.mxu0 %v8291
  %10429 = vmatprep.subr.bf16.mxu0 %v8294
  %10430 = vmatpush1.bf16.msra.mxu0 %v8293
  %10431 = vmatprep.subr.bf16.mxu0 %v8296
  %10432 = vmatpush1.bf16.msra.mxu0 %v8295
  %10433 = vmatprep.subr.bf16.mxu0 %v8298
  %10434 = vmatpush1.bf16.msra.mxu0 %v8297
  %10435 = vmatprep.subr.bf16.mxu0 %v8300
  %10436 = vmatpush1.bf16.msra.mxu0 %v8299
  %10437 = vmatprep.subr.bf16.mxu0 %v8302
  %10438 = vmatpush1.bf16.msra.mxu0 %v8301
  %10439 = vmatprep.subr.bf16.mxu0 %v8304
  %10440 = vmatpush1.bf16.msra.mxu0 %v8303
  %10441 = vmatprep.subr.bf16.mxu0 %v8306
  %10442 = vmatpush1.bf16.msra.mxu0 %v8305
  %10443 = vmatprep.subr.bf16.mxu0 %v8308
  %10444 = vmatpush1.bf16.msra.mxu0 %v8307
  %10445 = vmatprep.subr.bf16.mxu0 %v8310
  %10446 = vmatpush1.bf16.msra.mxu0 %v8309
  %10447 = vmatprep.subr.bf16.mxu0 %v8312
  %10448 = vmatpush1.bf16.msra.mxu0 %v8311
  %10449 = vmatprep.subr.bf16.mxu0 %v8314
  %10450 = vmatpush1.bf16.msra.mxu0 %v8313
  %10451 = vmatprep.subr.bf16.mxu0 %v8316
  %10452 = vmatpush1.bf16.msra.mxu0 %v8315
  %10453 = vmatprep.mubr.bf16.mxu0 %v9711
  %10454 = vmatmul.mubr.bf16.gmra.mrb[0].mxu0 %v9710
  %v10455 = vpop.f32.mrb[0].mxu0
  %v10456 = vadd.f32 0.0, %v10455
  %v10457 = vpop.f32.mrb[0].mxu0
  %v10458 = vadd.f32 0.0, %v10457
  %v10459 = vpop.f32.mrb[0].mxu0
  %v10460 = vadd.f32 0.0, %v10459
  %v10461 = vpop.f32.mrb[0].mxu0
  %v10462 = vadd.f32 0.0, %v10461
  %10463 = vmatprep.mubr.bf16.mxu0 %v9721
  %10464 = vmatmul.mubr.bf16.gmra.mrb[0].mxu0 %v9720
  %v10465 = vpop.f32.mrb[0].mxu0
  %v10466 = vadd.f32 0.0, %v10465
  %v10467 = vpop.f32.mrb[0].mxu0
  %v10468 = vadd.f32 0.0, %v10467
  %v10469 = vpop.f32.mrb[0].mxu0
  %v10470 = vadd.f32 0.0, %v10469
  %v10471 = vpop.f32.mrb[0].mxu0
  %v10472 = vadd.f32 0.0, %v10471
  %10473 = vmatprep.mubr.bf16.mxu0 %v9731
  %10474 = vmatmul.mubr.bf16.gmra.mrb[0].mxu0 %v9730
  %v10475 = vpop.f32.mrb[0].mxu0
  %v10476 = vadd.f32 0.0, %v10475
  %v10477 = vpop.f32.mrb[0].mxu0
  %v10478 = vadd.f32 0.0, %v10477
  %v10479 = vpop.f32.mrb[0].mxu0
  %v10480 = vadd.f32 0.0, %v10479
  %v10481 = vpop.f32.mrb[0].mxu0
  %v10482 = vadd.f32 0.0, %v10481
  %10483 = vmatprep.mubr.bf16.mxu0 %v9741
  %10484 = vmatmul.mubr.bf16.gmra.mrb[0].mxu0 %v9740
  %v10485 = vpop.f32.mrb[0].mxu0
  %v10486 = vadd.f32 0.0, %v10485
  %v10487 = vpop.f32.mrb[0].mxu0
  %v10488 = vadd.f32 0.0, %v10487
  %v10489 = vpop.f32.mrb[0].mxu0
  %v10490 = vadd.f32 0.0, %v10489
  %v10491 = vpop.f32.mrb[0].mxu0
  %v10492 = vadd.f32 0.0, %v10491
  %10493 = vmatprep.mubr.bf16.mxu0 %v9751
  %10494 = vmatmul.mubr.bf16.gmra.mrb[0].mxu0 %v9750
  %v10495 = vpop.f32.mrb[0].mxu0
  %v10496 = vadd.f32 0.0, %v10495
  %v10497 = vpop.f32.mrb[0].mxu0
  %v10498 = vadd.f32 0.0, %v10497
  %v10499 = vpop.f32.mrb[0].mxu0
  %v10500 = vadd.f32 0.0, %v10499
  %v10501 = vpop.f32.mrb[0].mxu0
  %v10502 = vadd.f32 0.0, %v10501
  %10503 = vmatprep.mubr.bf16.mxu0 %v9761
  %10504 = vmatmul.mubr.bf16.gmra.mrb[0].mxu0 %v9760
  %v10505 = vpop.f32.mrb[0].mxu0
  %v10506 = vadd.f32 0.0, %v10505
  %v10507 = vpop.f32.mrb[0].mxu0
  %v10508 = vadd.f32 0.0, %v10507
  %v10509 = vpop.f32.mrb[0].mxu0
  %v10510 = vadd.f32 0.0, %v10509
  %v10511 = vpop.f32.mrb[0].mxu0
  %v10512 = vadd.f32 0.0, %v10511
  %10513 = vmatprep.mubr.bf16.mxu0 %v9771
  %10514 = vmatmul.mubr.bf16.gmra.mrb[0].mxu0 %v9770
  %v10515 = vpop.f32.mrb[0].mxu0
  %v10516 = vadd.f32 0.0, %v10515
  %v10517 = vpop.f32.mrb[0].mxu0
  %v10518 = vadd.f32 0.0, %v10517
  %v10519 = vpop.f32.mrb[0].mxu0
  %v10520 = vadd.f32 0.0, %v10519
  %v10521 = vpop.f32.mrb[0].mxu0
  %v10522 = vadd.f32 0.0, %v10521
  %10523 = vmatprep.mubr.bf16.mxu0 %v9781
  %10524 = vmatmul.mubr.bf16.gmra.mrb[0].mxu0 %v9780
  %v10525 = vpop.f32.mrb[0].mxu0
  %v10526 = vadd.f32 0.0, %v10525
  %v10527 = vpop.f32.mrb[0].mxu0
  %v10528 = vadd.f32 0.0, %v10527
  %v10529 = vpop.f32.mrb[0].mxu0
  %v10530 = vadd.f32 0.0, %v10529
  %v10531 = vpop.f32.mrb[0].mxu0
  %v10532 = vadd.f32 0.0, %v10531
  %10533 = vmatprep.mubr.bf16.mxu0 %v9791
  %10534 = vmatmul.mubr.bf16.gmra.mrb[0].mxu0 %v9790
  %v10535 = vpop.f32.mrb[0].mxu0
  %v10536 = vadd.f32 0.0, %v10535
  %v10537 = vpop.f32.mrb[0].mxu0
  %v10538 = vadd.f32 0.0, %v10537
  %v10539 = vpop.f32.mrb[0].mxu0
  %v10540 = vadd.f32 0.0, %v10539
  %v10541 = vpop.f32.mrb[0].mxu0
  %v10542 = vadd.f32 0.0, %v10541
  %10543 = vmatprep.mubr.bf16.mxu0 %v9801
  %10544 = vmatmul.mubr.bf16.gmra.mrb[0].mxu0 %v9800
  %v10545 = vpop.f32.mrb[0].mxu0
  %v10546 = vadd.f32 0.0, %v10545
  %v10547 = vpop.f32.mrb[0].mxu0
  %v10548 = vadd.f32 0.0, %v10547
  %v10549 = vpop.f32.mrb[0].mxu0
  %v10550 = vadd.f32 0.0, %v10549
  %v10551 = vpop.f32.mrb[0].mxu0
  %v10552 = vadd.f32 0.0, %v10551
  %10553 = vmatprep.mubr.bf16.mxu0 %v9811
  %10554 = vmatmul.mubr.bf16.gmra.mrb[0].mxu0 %v9810
  %v10555 = vpop.f32.mrb[0].mxu0
  %v10556 = vadd.f32 0.0, %v10555
  %v10557 = vpop.f32.mrb[0].mxu0
  %v10558 = vadd.f32 0.0, %v10557
  %v10559 = vpop.f32.mrb[0].mxu0
  %v10560 = vadd.f32 0.0, %v10559
  %v10561 = vpop.f32.mrb[0].mxu0
  %v10562 = vadd.f32 0.0, %v10561
  %10563 = vmatprep.mubr.bf16.mxu0 %v9821
  %10564 = vmatmul.mubr.bf16.gmra.mrb[0].mxu0 %v9820
  %v10565 = vpop.f32.mrb[0].mxu0
  %v10566 = vadd.f32 0.0, %v10565
  %v10567 = vpop.f32.mrb[0].mxu0
  %v10568 = vadd.f32 0.0, %v10567
  %v10569 = vpop.f32.mrb[0].mxu0
  %v10570 = vadd.f32 0.0, %v10569
  %v10571 = vpop.f32.mrb[0].mxu0
  %v10572 = vadd.f32 0.0, %v10571
  %10573 = vmatprep.mubr.bf16.mxu0 %v9831
  %10574 = vmatmul.mubr.bf16.gmra.mrb[0].mxu0 %v9830
  %v10575 = vpop.f32.mrb[0].mxu0
  %v10576 = vadd.f32 0.0, %v10575
  %v10577 = vpop.f32.mrb[0].mxu0
  %v10578 = vadd.f32 0.0, %v10577
  %v10579 = vpop.f32.mrb[0].mxu0
  %v10580 = vadd.f32 0.0, %v10579
  %v10581 = vpop.f32.mrb[0].mxu0
  %v10582 = vadd.f32 0.0, %v10581
  %10583 = vmatprep.mubr.bf16.mxu0 %v9841
  %10584 = vmatmul.mubr.bf16.gmra.mrb[0].mxu0 %v9840
  %v10585 = vpop.f32.mrb[0].mxu0
  %v10586 = vadd.f32 0.0, %v10585
  %v10587 = vpop.f32.mrb[0].mxu0
  %v10588 = vadd.f32 0.0, %v10587
  %v10589 = vpop.f32.mrb[0].mxu0
  %v10590 = vadd.f32 0.0, %v10589
  %v10591 = vpop.f32.mrb[0].mxu0
  %v10592 = vadd.f32 0.0, %v10591
  %10593 = vmatprep.mubr.bf16.mxu0 %v9851
  %10594 = vmatmul.mubr.bf16.gmra.mrb[0].mxu0 %v9850
  %v10595 = vpop.f32.mrb[0].mxu0
  %v10596 = vadd.f32 0.0, %v10595
  %v10597 = vpop.f32.mrb[0].mxu0
  %v10598 = vadd.f32 0.0, %v10597
  %v10599 = vpop.f32.mrb[0].mxu0
  %v10600 = vadd.f32 0.0, %v10599
  %v10601 = vpop.f32.mrb[0].mxu0
  %v10602 = vadd.f32 0.0, %v10601
  %10603 = vmatprep.mubr.bf16.mxu0 %v9861
  %10604 = vmatmul.mubr.bf16.gmra.mrb[0].mxu0 %v9860
  %v10605 = vpop.f32.mrb[0].mxu0
  %v10606 = vadd.f32 0.0, %v10605
  %v10607 = vpop.f32.mrb[0].mxu0
  %v10608 = vadd.f32 0.0, %v10607
  %v10609 = vpop.f32.mrb[0].mxu0
  %v10610 = vadd.f32 0.0, %v10609
  %v10611 = vpop.f32.mrb[0].mxu0
  %v10612 = vadd.f32 0.0, %v10611
  %10613 = vmatprep.mubr.bf16.mxu0 %v9871
  %10614 = vmatmul.mubr.bf16.gmra.mrb[0].mxu0 %v9870
  %v10615 = vpop.f32.mrb[0].mxu0
  %v10616 = vadd.f32 0.0, %v10615
  %v10617 = vpop.f32.mrb[0].mxu0
  %v10618 = vadd.f32 0.0, %v10617
  %v10619 = vpop.f32.mrb[0].mxu0
  %v10620 = vadd.f32 0.0, %v10619
  %v10621 = vpop.f32.mrb[0].mxu0
  %v10622 = vadd.f32 0.0, %v10621
  %10623 = vmatprep.mubr.bf16.mxu0 %v9881
  %10624 = vmatmul.mubr.bf16.gmra.mrb[0].mxu0 %v9880
  %v10625 = vpop.f32.mrb[0].mxu0
  %v10626 = vadd.f32 0.0, %v10625
  %v10627 = vpop.f32.mrb[0].mxu0
  %v10628 = vadd.f32 0.0, %v10627
  %v10629 = vpop.f32.mrb[0].mxu0
  %v10630 = vadd.f32 0.0, %v10629
  %v10631 = vpop.f32.mrb[0].mxu0
  %v10632 = vadd.f32 0.0, %v10631
  %10633 = vmatprep.mubr.bf16.mxu0 %v9891
  %10634 = vmatmul.mubr.bf16.gmra.mrb[0].mxu0 %v9890
  %v10635 = vpop.f32.mrb[0].mxu0
  %v10636 = vadd.f32 0.0, %v10635
  %v10637 = vpop.f32.mrb[0].mxu0
  %v10638 = vadd.f32 0.0, %v10637
  %v10639 = vpop.f32.mrb[0].mxu0
  %v10640 = vadd.f32 0.0, %v10639
  %v10641 = vpop.f32.mrb[0].mxu0
  %v10642 = vadd.f32 0.0, %v10641
  %10643 = vmatprep.mubr.bf16.mxu0 %v9901
  %10644 = vmatmul.mubr.bf16.gmra.mrb[0].mxu0 %v9900
  %v10645 = vpop.f32.mrb[0].mxu0
  %v10646 = vadd.f32 0.0, %v10645
  %v10647 = vpop.f32.mrb[0].mxu0
  %v10648 = vadd.f32 0.0, %v10647
  %v10649 = vpop.f32.mrb[0].mxu0
  %v10650 = vadd.f32 0.0, %v10649
  %v10651 = vpop.f32.mrb[0].mxu0
  %v10652 = vadd.f32 0.0, %v10651
  %10653 = vmatprep.mubr.bf16.mxu0 %v9911
  %10654 = vmatmul.mubr.bf16.gmra.mrb[0].mxu0 %v9910
  %v10655 = vpop.f32.mrb[0].mxu0
  %v10656 = vadd.f32 0.0, %v10655
  %v10657 = vpop.f32.mrb[0].mxu0
  %v10658 = vadd.f32 0.0, %v10657
  %v10659 = vpop.f32.mrb[0].mxu0
  %v10660 = vadd.f32 0.0, %v10659
  %v10661 = vpop.f32.mrb[0].mxu0
  %v10662 = vadd.f32 0.0, %v10661
  %10663 = vmatprep.mubr.bf16.mxu0 %v9921
  %10664 = vmatmul.mubr.bf16.gmra.mrb[0].mxu0 %v9920
  %v10665 = vpop.f32.mrb[0].mxu0
  %v10666 = vadd.f32 0.0, %v10665
  %v10667 = vpop.f32.mrb[0].mxu0
  %v10668 = vadd.f32 0.0, %v10667
  %v10669 = vpop.f32.mrb[0].mxu0
  %v10670 = vadd.f32 0.0, %v10669
  %v10671 = vpop.f32.mrb[0].mxu0
  %v10672 = vadd.f32 0.0, %v10671
  %10673 = vmatprep.mubr.bf16.mxu0 %v9931
  %10674 = vmatmul.mubr.bf16.gmra.mrb[0].mxu0 %v9930
  %v10675 = vpop.f32.mrb[0].mxu0
  %v10676 = vadd.f32 0.0, %v10675
  %v10677 = vpop.f32.mrb[0].mxu0
  %v10678 = vadd.f32 0.0, %v10677
  %v10679 = vpop.f32.mrb[0].mxu0
  %v10680 = vadd.f32 0.0, %v10679
  %v10681 = vpop.f32.mrb[0].mxu0
  %v10682 = vadd.f32 0.0, %v10681
  %10683 = vmatprep.mubr.bf16.mxu0 %v9941
  %10684 = vmatmul.mubr.bf16.gmra.mrb[0].mxu0 %v9940
  %v10685 = vpop.f32.mrb[0].mxu0
  %v10686 = vadd.f32 0.0, %v10685
  %v10687 = vpop.f32.mrb[0].mxu0
  %v10688 = vadd.f32 0.0, %v10687
  %v10689 = vpop.f32.mrb[0].mxu0
  %v10690 = vadd.f32 0.0, %v10689
  %v10691 = vpop.f32.mrb[0].mxu0
  %v10692 = vadd.f32 0.0, %v10691
  %10693 = vmatprep.mubr.bf16.mxu0 %v9951
  %10694 = vmatmul.mubr.bf16.gmra.mrb[0].mxu0 %v9950
  %v10695 = vpop.f32.mrb[0].mxu0
  %v10696 = vadd.f32 0.0, %v10695
  %v10697 = vpop.f32.mrb[0].mxu0
  %v10698 = vadd.f32 0.0, %v10697
  %v10699 = vpop.f32.mrb[0].mxu0
  %v10700 = vadd.f32 0.0, %v10699
  %v10701 = vpop.f32.mrb[0].mxu0
  %v10702 = vadd.f32 0.0, %v10701
  %10703 = vmatprep.mubr.bf16.mxu0 %v9961
  %10704 = vmatmul.mubr.bf16.gmra.mrb[0].mxu0 %v9960
  %v10705 = vpop.f32.mrb[0].mxu0
  %v10706 = vadd.f32 0.0, %v10705
  %v10707 = vpop.f32.mrb[0].mxu0
  %v10708 = vadd.f32 0.0, %v10707
  %v10709 = vpop.f32.mrb[0].mxu0
  %v10710 = vadd.f32 0.0, %v10709
  %v10711 = vpop.f32.mrb[0].mxu0
  %v10712 = vadd.f32 0.0, %v10711
  %10713 = vmatprep.mubr.bf16.mxu0 %v9971
  %10714 = vmatmul.mubr.bf16.gmra.mrb[0].mxu0 %v9970
  %v10715 = vpop.f32.mrb[0].mxu0
  %v10716 = vadd.f32 0.0, %v10715
  %v10717 = vpop.f32.mrb[0].mxu0
  %v10718 = vadd.f32 0.0, %v10717
  %v10719 = vpop.f32.mrb[0].mxu0
  %v10720 = vadd.f32 0.0, %v10719
  %v10721 = vpop.f32.mrb[0].mxu0
  %v10722 = vadd.f32 0.0, %v10721
  %10723 = vmatprep.mubr.bf16.mxu0 %v9981
  %10724 = vmatmul.mubr.bf16.gmra.mrb[0].mxu0 %v9980
  %v10725 = vpop.f32.mrb[0].mxu0
  %v10726 = vadd.f32 0.0, %v10725
  %v10727 = vpop.f32.mrb[0].mxu0
  %v10728 = vadd.f32 0.0, %v10727
  %v10729 = vpop.f32.mrb[0].mxu0
  %v10730 = vadd.f32 0.0, %v10729
  %v10731 = vpop.f32.mrb[0].mxu0
  %v10732 = vadd.f32 0.0, %v10731
  %10733 = vmatprep.mubr.bf16.mxu0 %v9991
  %10734 = vmatmul.mubr.bf16.gmra.mrb[0].mxu0 %v9990
  %v10735 = vpop.f32.mrb[0].mxu0
  %v10736 = vadd.f32 0.0, %v10735
  %v10737 = vpop.f32.mrb[0].mxu0
  %v10738 = vadd.f32 0.0, %v10737
  %v10739 = vpop.f32.mrb[0].mxu0
  %v10740 = vadd.f32 0.0, %v10739
  %v10741 = vpop.f32.mrb[0].mxu0
  %v10742 = vadd.f32 0.0, %v10741
  %10743 = vmatprep.mubr.bf16.mxu0 %v10001
  %10744 = vmatmul.mubr.bf16.gmra.mrb[0].mxu0 %v10000
  %v10745 = vpop.f32.mrb[0].mxu0
  %v10746 = vadd.f32 0.0, %v10745
  %v10747 = vpop.f32.mrb[0].mxu0
  %v10748 = vadd.f32 0.0, %v10747
  %v10749 = vpop.f32.mrb[0].mxu0
  %v10750 = vadd.f32 0.0, %v10749
  %v10751 = vpop.f32.mrb[0].mxu0
  %v10752 = vadd.f32 0.0, %v10751
  %10753 = vmatprep.mubr.bf16.mxu0 %v10011
  %10754 = vmatmul.mubr.bf16.gmra.mrb[0].mxu0 %v10010
  %v10755 = vpop.f32.mrb[0].mxu0
  %v10756 = vadd.f32 0.0, %v10755
  %v10757 = vpop.f32.mrb[0].mxu0
  %v10758 = vadd.f32 0.0, %v10757
  %v10759 = vpop.f32.mrb[0].mxu0
  %v10760 = vadd.f32 0.0, %v10759
  %v10761 = vpop.f32.mrb[0].mxu0
  %v10762 = vadd.f32 0.0, %v10761
  %10763 = vmatprep.mubr.bf16.mxu0 %v10021
  %10764 = vmatmul.mubr.bf16.gmra.mrb[0].mxu0 %v10020
  %v10765 = vpop.f32.mrb[0].mxu0
  %v10766 = vadd.f32 0.0, %v10765
  %v10767 = vpop.f32.mrb[0].mxu0
  %v10768 = vadd.f32 0.0, %v10767
  %v10769 = vpop.f32.mrb[0].mxu0
  %v10770 = vadd.f32 0.0, %v10769
  %v10771 = vpop.f32.mrb[0].mxu0
  %v10772 = vadd.f32 0.0, %v10771
  %10773 = vdwg.mxu0
  %10774 = vmatprep.subr.bf16.mxu0 %v8318
  %10775 = vmatpush1.bf16.msra.mxu0 %v8317
  %10776 = vmatprep.subr.bf16.mxu0 %v8320
  %10777 = vmatpush1.bf16.msra.mxu0 %v8319
  %10778 = vmatprep.subr.bf16.mxu0 %v8322
  %10779 = vmatpush1.bf16.msra.mxu0 %v8321
  %10780 = vmatprep.subr.bf16.mxu0 %v8324
  %10781 = vmatpush1.bf16.msra.mxu0 %v8323
  %10782 = vmatprep.subr.bf16.mxu0 %v8326
  %10783 = vmatpush1.bf16.msra.mxu0 %v8325
  %10784 = vmatprep.subr.bf16.mxu0 %v8328
  %10785 = vmatpush1.bf16.msra.mxu0 %v8327
  %10786 = vmatprep.subr.bf16.mxu0 %v8330
  %10787 = vmatpush1.bf16.msra.mxu0 %v8329
  %10788 = vmatprep.subr.bf16.mxu0 %v8332
  %10789 = vmatpush1.bf16.msra.mxu0 %v8331
  %10790 = vmatprep.subr.bf16.mxu0 %v8334
  %10791 = vmatpush1.bf16.msra.mxu0 %v8333
  %10792 = vmatprep.subr.bf16.mxu0 %v8336
  %10793 = vmatpush1.bf16.msra.mxu0 %v8335
  %10794 = vmatprep.subr.bf16.mxu0 %v8338
  %10795 = vmatpush1.bf16.msra.mxu0 %v8337
  %10796 = vmatprep.subr.bf16.mxu0 %v8340
  %10797 = vmatpush1.bf16.msra.mxu0 %v8339
  %10798 = vmatprep.subr.bf16.mxu0 %v8342
  %10799 = vmatpush1.bf16.msra.mxu0 %v8341
  %10800 = vmatprep.subr.bf16.mxu0 %v8344
  %10801 = vmatpush1.bf16.msra.mxu0 %v8343
  %10802 = vmatprep.subr.bf16.mxu0 %v8346
  %10803 = vmatpush1.bf16.msra.mxu0 %v8345
  %10804 = vmatprep.subr.bf16.mxu0 %v8348
  %10805 = vmatpush1.bf16.msra.mxu0 %v8347
  %10806 = vmatprep.mubr.bf16.mxu0 %v9713
  %10807 = vmatmul.mubr.bf16.gmra.mrb[0].mxu0 %v9712
  %v10808 = vpop.f32.mrb[0].mxu0
  %v10809 = vadd.f32 %v10456, %v10808
  %v10810 = vpop.f32.mrb[0].mxu0
  %v10811 = vadd.f32 %v10458, %v10810
  %v10812 = vpop.f32.mrb[0].mxu0
  %v10813 = vadd.f32 %v10460, %v10812
  %v10814 = vpop.f32.mrb[0].mxu0
  %v10815 = vadd.f32 %v10462, %v10814
  %10816 = vmatprep.mubr.bf16.mxu0 %v9723
  %10817 = vmatmul.mubr.bf16.gmra.mrb[0].mxu0 %v9722
  %v10818 = vpop.f32.mrb[0].mxu0
  %v10819 = vadd.f32 %v10466, %v10818
  %v10820 = vpop.f32.mrb[0].mxu0
  %v10821 = vadd.f32 %v10468, %v10820
  %v10822 = vpop.f32.mrb[0].mxu0
  %v10823 = vadd.f32 %v10470, %v10822
  %v10824 = vpop.f32.mrb[0].mxu0
  %v10825 = vadd.f32 %v10472, %v10824
  %10826 = vmatprep.mubr.bf16.mxu0 %v9733
  %10827 = vmatmul.mubr.bf16.gmra.mrb[0].mxu0 %v9732
  %v10828 = vpop.f32.mrb[0].mxu0
  %v10829 = vadd.f32 %v10476, %v10828
  %v10830 = vpop.f32.mrb[0].mxu0
  %v10831 = vadd.f32 %v10478, %v10830
  %v10832 = vpop.f32.mrb[0].mxu0
  %v10833 = vadd.f32 %v10480, %v10832
  %v10834 = vpop.f32.mrb[0].mxu0
  %v10835 = vadd.f32 %v10482, %v10834
  %10836 = vmatprep.mubr.bf16.mxu0 %v9743
  %10837 = vmatmul.mubr.bf16.gmra.mrb[0].mxu0 %v9742
  %v10838 = vpop.f32.mrb[0].mxu0
  %v10839 = vadd.f32 %v10486, %v10838
  %v10840 = vpop.f32.mrb[0].mxu0
  %v10841 = vadd.f32 %v10488, %v10840
  %v10842 = vpop.f32.mrb[0].mxu0
  %v10843 = vadd.f32 %v10490, %v10842
  %v10844 = vpop.f32.mrb[0].mxu0
  %v10845 = vadd.f32 %v10492, %v10844
  %10846 = vmatprep.mubr.bf16.mxu0 %v9753
  %10847 = vmatmul.mubr.bf16.gmra.mrb[0].mxu0 %v9752
  %v10848 = vpop.f32.mrb[0].mxu0
  %v10849 = vadd.f32 %v10496, %v10848
  %v10850 = vpop.f32.mrb[0].mxu0
  %v10851 = vadd.f32 %v10498, %v10850
  %v10852 = vpop.f32.mrb[0].mxu0
  %v10853 = vadd.f32 %v10500, %v10852
  %v10854 = vpop.f32.mrb[0].mxu0
  %v10855 = vadd.f32 %v10502, %v10854
  %10856 = vmatprep.mubr.bf16.mxu0 %v9763
  %10857 = vmatmul.mubr.bf16.gmra.mrb[0].mxu0 %v9762
  %v10858 = vpop.f32.mrb[0].mxu0
  %v10859 = vadd.f32 %v10506, %v10858
  %v10860 = vpop.f32.mrb[0].mxu0
  %v10861 = vadd.f32 %v10508, %v10860
  %v10862 = vpop.f32.mrb[0].mxu0
  %v10863 = vadd.f32 %v10510, %v10862
  %v10864 = vpop.f32.mrb[0].mxu0
  %v10865 = vadd.f32 %v10512, %v10864
  %10866 = vmatprep.mubr.bf16.mxu0 %v9773
  %10867 = vmatmul.mubr.bf16.gmra.mrb[0].mxu0 %v9772
  %v10868 = vpop.f32.mrb[0].mxu0
  %v10869 = vadd.f32 %v10516, %v10868
  %v10870 = vpop.f32.mrb[0].mxu0
  %v10871 = vadd.f32 %v10518, %v10870
  %v10872 = vpop.f32.mrb[0].mxu0
  %v10873 = vadd.f32 %v10520, %v10872
  %v10874 = vpop.f32.mrb[0].mxu0
  %v10875 = vadd.f32 %v10522, %v10874
  %10876 = vmatprep.mubr.bf16.mxu0 %v9783
  %10877 = vmatmul.mubr.bf16.gmra.mrb[0].mxu0 %v9782
  %v10878 = vpop.f32.mrb[0].mxu0
  %v10879 = vadd.f32 %v10526, %v10878
  %v10880 = vpop.f32.mrb[0].mxu0
  %v10881 = vadd.f32 %v10528, %v10880
  %v10882 = vpop.f32.mrb[0].mxu0
  %v10883 = vadd.f32 %v10530, %v10882
  %v10884 = vpop.f32.mrb[0].mxu0
  %v10885 = vadd.f32 %v10532, %v10884
  %10886 = vmatprep.mubr.bf16.mxu0 %v9793
  %10887 = vmatmul.mubr.bf16.gmra.mrb[0].mxu0 %v9792
  %v10888 = vpop.f32.mrb[0].mxu0
  %v10889 = vadd.f32 %v10536, %v10888
  %v10890 = vpop.f32.mrb[0].mxu0
  %v10891 = vadd.f32 %v10538, %v10890
  %v10892 = vpop.f32.mrb[0].mxu0
  %v10893 = vadd.f32 %v10540, %v10892
  %v10894 = vpop.f32.mrb[0].mxu0
  %v10895 = vadd.f32 %v10542, %v10894
  %10896 = vmatprep.mubr.bf16.mxu0 %v9803
  %10897 = vmatmul.mubr.bf16.gmra.mrb[0].mxu0 %v9802
  %v10898 = vpop.f32.mrb[0].mxu0
  %v10899 = vadd.f32 %v10546, %v10898
  %v10900 = vpop.f32.mrb[0].mxu0
  %v10901 = vadd.f32 %v10548, %v10900
  %v10902 = vpop.f32.mrb[0].mxu0
  %v10903 = vadd.f32 %v10550, %v10902
  %v10904 = vpop.f32.mrb[0].mxu0
  %v10905 = vadd.f32 %v10552, %v10904
  %10906 = vmatprep.mubr.bf16.mxu0 %v9813
  %10907 = vmatmul.mubr.bf16.gmra.mrb[0].mxu0 %v9812
  %v10908 = vpop.f32.mrb[0].mxu0
  %v10909 = vadd.f32 %v10556, %v10908
  %v10910 = vpop.f32.mrb[0].mxu0
  %v10911 = vadd.f32 %v10558, %v10910
  %v10912 = vpop.f32.mrb[0].mxu0
  %v10913 = vadd.f32 %v10560, %v10912
  %v10914 = vpop.f32.mrb[0].mxu0
  %v10915 = vadd.f32 %v10562, %v10914
  %10916 = vmatprep.mubr.bf16.mxu0 %v9823
  %10917 = vmatmul.mubr.bf16.gmra.mrb[0].mxu0 %v9822
  %v10918 = vpop.f32.mrb[0].mxu0
  %v10919 = vadd.f32 %v10566, %v10918
  %v10920 = vpop.f32.mrb[0].mxu0
  %v10921 = vadd.f32 %v10568, %v10920
  %v10922 = vpop.f32.mrb[0].mxu0
  %v10923 = vadd.f32 %v10570, %v10922
  %v10924 = vpop.f32.mrb[0].mxu0
  %v10925 = vadd.f32 %v10572, %v10924
  %10926 = vmatprep.mubr.bf16.mxu0 %v9833
  %10927 = vmatmul.mubr.bf16.gmra.mrb[0].mxu0 %v9832
  %v10928 = vpop.f32.mrb[0].mxu0
  %v10929 = vadd.f32 %v10576, %v10928
  %v10930 = vpop.f32.mrb[0].mxu0
  %v10931 = vadd.f32 %v10578, %v10930
  %v10932 = vpop.f32.mrb[0].mxu0
  %v10933 = vadd.f32 %v10580, %v10932
  %v10934 = vpop.f32.mrb[0].mxu0
  %v10935 = vadd.f32 %v10582, %v10934
  %10936 = vmatprep.mubr.bf16.mxu0 %v9843
  %10937 = vmatmul.mubr.bf16.gmra.mrb[0].mxu0 %v9842
  %v10938 = vpop.f32.mrb[0].mxu0
  %v10939 = vadd.f32 %v10586, %v10938
  %v10940 = vpop.f32.mrb[0].mxu0
  %v10941 = vadd.f32 %v10588, %v10940
  %v10942 = vpop.f32.mrb[0].mxu0
  %v10943 = vadd.f32 %v10590, %v10942
  %v10944 = vpop.f32.mrb[0].mxu0
  %v10945 = vadd.f32 %v10592, %v10944
  %10946 = vmatprep.mubr.bf16.mxu0 %v9853
  %10947 = vmatmul.mubr.bf16.gmra.mrb[0].mxu0 %v9852
  %v10948 = vpop.f32.mrb[0].mxu0
  %v10949 = vadd.f32 %v10596, %v10948
  %v10950 = vpop.f32.mrb[0].mxu0
  %v10951 = vadd.f32 %v10598, %v10950
  %v10952 = vpop.f32.mrb[0].mxu0
  %v10953 = vadd.f32 %v10600, %v10952
  %v10954 = vpop.f32.mrb[0].mxu0
  %v10955 = vadd.f32 %v10602, %v10954
  %10956 = vmatprep.mubr.bf16.mxu0 %v9863
  %10957 = vmatmul.mubr.bf16.gmra.mrb[0].mxu0 %v9862
  %v10958 = vpop.f32.mrb[0].mxu0
  %v10959 = vadd.f32 %v10606, %v10958
  %v10960 = vpop.f32.mrb[0].mxu0
  %v10961 = vadd.f32 %v10608, %v10960
  %v10962 = vpop.f32.mrb[0].mxu0
  %v10963 = vadd.f32 %v10610, %v10962
  %v10964 = vpop.f32.mrb[0].mxu0
  %v10965 = vadd.f32 %v10612, %v10964
  %10966 = vmatprep.mubr.bf16.mxu0 %v9873
  %10967 = vmatmul.mubr.bf16.gmra.mrb[0].mxu0 %v9872
  %v10968 = vpop.f32.mrb[0].mxu0
  %v10969 = vadd.f32 %v10616, %v10968
  %v10970 = vpop.f32.mrb[0].mxu0
  %v10971 = vadd.f32 %v10618, %v10970
  %v10972 = vpop.f32.mrb[0].mxu0
  %v10973 = vadd.f32 %v10620, %v10972
  %v10974 = vpop.f32.mrb[0].mxu0
  %v10975 = vadd.f32 %v10622, %v10974
  %10976 = vmatprep.mubr.bf16.mxu0 %v9883
  %10977 = vmatmul.mubr.bf16.gmra.mrb[0].mxu0 %v9882
  %v10978 = vpop.f32.mrb[0].mxu0
  %v10979 = vadd.f32 %v10626, %v10978
  %v10980 = vpop.f32.mrb[0].mxu0
  %v10981 = vadd.f32 %v10628, %v10980
  %v10982 = vpop.f32.mrb[0].mxu0
  %v10983 = vadd.f32 %v10630, %v10982
  %v10984 = vpop.f32.mrb[0].mxu0
  %v10985 = vadd.f32 %v10632, %v10984
  %10986 = vmatprep.mubr.bf16.mxu0 %v9893
  %10987 = vmatmul.mubr.bf16.gmra.mrb[0].mxu0 %v9892
  %v10988 = vpop.f32.mrb[0].mxu0
  %v10989 = vadd.f32 %v10636, %v10988
  %v10990 = vpop.f32.mrb[0].mxu0
  %v10991 = vadd.f32 %v10638, %v10990
  %v10992 = vpop.f32.mrb[0].mxu0
  %v10993 = vadd.f32 %v10640, %v10992
  %v10994 = vpop.f32.mrb[0].mxu0
  %v10995 = vadd.f32 %v10642, %v10994
  %10996 = vmatprep.mubr.bf16.mxu0 %v9903
  %10997 = vmatmul.mubr.bf16.gmra.mrb[0].mxu0 %v9902
  %v10998 = vpop.f32.mrb[0].mxu0
  %v10999 = vadd.f32 %v10646, %v10998
  %v11000 = vpop.f32.mrb[0].mxu0
  %v11001 = vadd.f32 %v10648, %v11000
  %v11002 = vpop.f32.mrb[0].mxu0
  %v11003 = vadd.f32 %v10650, %v11002
  %v11004 = vpop.f32.mrb[0].mxu0
  %v11005 = vadd.f32 %v10652, %v11004
  %11006 = vmatprep.mubr.bf16.mxu0 %v9913
  %11007 = vmatmul.mubr.bf16.gmra.mrb[0].mxu0 %v9912
  %v11008 = vpop.f32.mrb[0].mxu0
  %v11009 = vadd.f32 %v10656, %v11008
  %v11010 = vpop.f32.mrb[0].mxu0
  %v11011 = vadd.f32 %v10658, %v11010
  %v11012 = vpop.f32.mrb[0].mxu0
  %v11013 = vadd.f32 %v10660, %v11012
  %v11014 = vpop.f32.mrb[0].mxu0
  %v11015 = vadd.f32 %v10662, %v11014
  %11016 = vmatprep.mubr.bf16.mxu0 %v9923
  %11017 = vmatmul.mubr.bf16.gmra.mrb[0].mxu0 %v9922
  %v11018 = vpop.f32.mrb[0].mxu0
  %v11019 = vadd.f32 %v10666, %v11018
  %v11020 = vpop.f32.mrb[0].mxu0
  %v11021 = vadd.f32 %v10668, %v11020
  %v11022 = vpop.f32.mrb[0].mxu0
  %v11023 = vadd.f32 %v10670, %v11022
  %v11024 = vpop.f32.mrb[0].mxu0
  %v11025 = vadd.f32 %v10672, %v11024
  %11026 = vmatprep.mubr.bf16.mxu0 %v9933
  %11027 = vmatmul.mubr.bf16.gmra.mrb[0].mxu0 %v9932
  %v11028 = vpop.f32.mrb[0].mxu0
  %v11029 = vadd.f32 %v10676, %v11028
  %v11030 = vpop.f32.mrb[0].mxu0
  %v11031 = vadd.f32 %v10678, %v11030
  %v11032 = vpop.f32.mrb[0].mxu0
  %v11033 = vadd.f32 %v10680, %v11032
  %v11034 = vpop.f32.mrb[0].mxu0
  %v11035 = vadd.f32 %v10682, %v11034
  %11036 = vmatprep.mubr.bf16.mxu0 %v9943
  %11037 = vmatmul.mubr.bf16.gmra.mrb[0].mxu0 %v9942
  %v11038 = vpop.f32.mrb[0].mxu0
  %v11039 = vadd.f32 %v10686, %v11038
  %v11040 = vpop.f32.mrb[0].mxu0
  %v11041 = vadd.f32 %v10688, %v11040
  %v11042 = vpop.f32.mrb[0].mxu0
  %v11043 = vadd.f32 %v10690, %v11042
  %v11044 = vpop.f32.mrb[0].mxu0
  %v11045 = vadd.f32 %v10692, %v11044
  %11046 = vmatprep.mubr.bf16.mxu0 %v9953
  %11047 = vmatmul.mubr.bf16.gmra.mrb[0].mxu0 %v9952
  %v11048 = vpop.f32.mrb[0].mxu0
  %v11049 = vadd.f32 %v10696, %v11048
  %v11050 = vpop.f32.mrb[0].mxu0
  %v11051 = vadd.f32 %v10698, %v11050
  %v11052 = vpop.f32.mrb[0].mxu0
  %v11053 = vadd.f32 %v10700, %v11052
  %v11054 = vpop.f32.mrb[0].mxu0
  %v11055 = vadd.f32 %v10702, %v11054
  %11056 = vmatprep.mubr.bf16.mxu0 %v9963
  %11057 = vmatmul.mubr.bf16.gmra.mrb[0].mxu0 %v9962
  %v11058 = vpop.f32.mrb[0].mxu0
  %v11059 = vadd.f32 %v10706, %v11058
  %v11060 = vpop.f32.mrb[0].mxu0
  %v11061 = vadd.f32 %v10708, %v11060
  %v11062 = vpop.f32.mrb[0].mxu0
  %v11063 = vadd.f32 %v10710, %v11062
  %v11064 = vpop.f32.mrb[0].mxu0
  %v11065 = vadd.f32 %v10712, %v11064
  %11066 = vmatprep.mubr.bf16.mxu0 %v9973
  %11067 = vmatmul.mubr.bf16.gmra.mrb[0].mxu0 %v9972
  %v11068 = vpop.f32.mrb[0].mxu0
  %v11069 = vadd.f32 %v10716, %v11068
  %v11070 = vpop.f32.mrb[0].mxu0
  %v11071 = vadd.f32 %v10718, %v11070
  %v11072 = vpop.f32.mrb[0].mxu0
  %v11073 = vadd.f32 %v10720, %v11072
  %v11074 = vpop.f32.mrb[0].mxu0
  %v11075 = vadd.f32 %v10722, %v11074
  %11076 = vmatprep.mubr.bf16.mxu0 %v9983
  %11077 = vmatmul.mubr.bf16.gmra.mrb[0].mxu0 %v9982
  %v11078 = vpop.f32.mrb[0].mxu0
  %v11079 = vadd.f32 %v10726, %v11078
  %v11080 = vpop.f32.mrb[0].mxu0
  %v11081 = vadd.f32 %v10728, %v11080
  %v11082 = vpop.f32.mrb[0].mxu0
  %v11083 = vadd.f32 %v10730, %v11082
  %v11084 = vpop.f32.mrb[0].mxu0
  %v11085 = vadd.f32 %v10732, %v11084
  %11086 = vmatprep.mubr.bf16.mxu0 %v9993
  %11087 = vmatmul.mubr.bf16.gmra.mrb[0].mxu0 %v9992
  %v11088 = vpop.f32.mrb[0].mxu0
  %v11089 = vadd.f32 %v10736, %v11088
  %v11090 = vpop.f32.mrb[0].mxu0
  %v11091 = vadd.f32 %v10738, %v11090
  %v11092 = vpop.f32.mrb[0].mxu0
  %v11093 = vadd.f32 %v10740, %v11092
  %v11094 = vpop.f32.mrb[0].mxu0
  %v11095 = vadd.f32 %v10742, %v11094
  %11096 = vmatprep.mubr.bf16.mxu0 %v10003
  %11097 = vmatmul.mubr.bf16.gmra.mrb[0].mxu0 %v10002
  %v11098 = vpop.f32.mrb[0].mxu0
  %v11099 = vadd.f32 %v10746, %v11098
  %v11100 = vpop.f32.mrb[0].mxu0
  %v11101 = vadd.f32 %v10748, %v11100
  %v11102 = vpop.f32.mrb[0].mxu0
  %v11103 = vadd.f32 %v10750, %v11102
  %v11104 = vpop.f32.mrb[0].mxu0
  %v11105 = vadd.f32 %v10752, %v11104
  %11106 = vmatprep.mubr.bf16.mxu0 %v10013
  %11107 = vmatmul.mubr.bf16.gmra.mrb[0].mxu0 %v10012
  %v11108 = vpop.f32.mrb[0].mxu0
  %v11109 = vadd.f32 %v10756, %v11108
  %v11110 = vpop.f32.mrb[0].mxu0
  %v11111 = vadd.f32 %v10758, %v11110
  %v11112 = vpop.f32.mrb[0].mxu0
  %v11113 = vadd.f32 %v10760, %v11112
  %v11114 = vpop.f32.mrb[0].mxu0
  %v11115 = vadd.f32 %v10762, %v11114
  %11116 = vmatprep.mubr.bf16.mxu0 %v10023
  %11117 = vmatmul.mubr.bf16.gmra.mrb[0].mxu0 %v10022
  %v11118 = vpop.f32.mrb[0].mxu0
  %v11119 = vadd.f32 %v10766, %v11118
  %v11120 = vpop.f32.mrb[0].mxu0
  %v11121 = vadd.f32 %v10768, %v11120
  %v11122 = vpop.f32.mrb[0].mxu0
  %v11123 = vadd.f32 %v10770, %v11122
  %v11124 = vpop.f32.mrb[0].mxu0
  %v11125 = vadd.f32 %v10772, %v11124
  %11126 = vdwg.mxu0
  %11127 = vmatprep.subr.bf16.mxu0 %v8350
  %11128 = vmatpush1.bf16.msra.mxu0 %v8349
  %11129 = vmatprep.subr.bf16.mxu0 %v8352
  %11130 = vmatpush1.bf16.msra.mxu0 %v8351
  %11131 = vmatprep.subr.bf16.mxu0 %v8354
  %11132 = vmatpush1.bf16.msra.mxu0 %v8353
  %11133 = vmatprep.subr.bf16.mxu0 %v8356
  %11134 = vmatpush1.bf16.msra.mxu0 %v8355
  %11135 = vmatprep.subr.bf16.mxu0 %v8358
  %11136 = vmatpush1.bf16.msra.mxu0 %v8357
  %11137 = vmatprep.subr.bf16.mxu0 %v8360
  %11138 = vmatpush1.bf16.msra.mxu0 %v8359
  %11139 = vmatprep.subr.bf16.mxu0 %v8362
  %11140 = vmatpush1.bf16.msra.mxu0 %v8361
  %11141 = vmatprep.subr.bf16.mxu0 %v8364
  %11142 = vmatpush1.bf16.msra.mxu0 %v8363
  %11143 = vmatprep.subr.bf16.mxu0 %v8366
  %11144 = vmatpush1.bf16.msra.mxu0 %v8365
  %11145 = vmatprep.subr.bf16.mxu0 %v8368
  %11146 = vmatpush1.bf16.msra.mxu0 %v8367
  %11147 = vmatprep.subr.bf16.mxu0 %v8370
  %11148 = vmatpush1.bf16.msra.mxu0 %v8369
  %11149 = vmatprep.subr.bf16.mxu0 %v8372
  %11150 = vmatpush1.bf16.msra.mxu0 %v8371
  %11151 = vmatprep.subr.bf16.mxu0 %v8374
  %11152 = vmatpush1.bf16.msra.mxu0 %v8373
  %11153 = vmatprep.subr.bf16.mxu0 %v8376
  %11154 = vmatpush1.bf16.msra.mxu0 %v8375
  %11155 = vmatprep.subr.bf16.mxu0 %v8378
  %11156 = vmatpush1.bf16.msra.mxu0 %v8377
  %11157 = vmatprep.subr.bf16.mxu0 %v8380
  %11158 = vmatpush1.bf16.msra.mxu0 %v8379
  %11159 = vmatprep.mubr.bf16.mxu0 %v9715
  %11160 = vmatmul.mubr.bf16.gmra.mrb[0].mxu0 %v9714
  %v11161 = vpop.f32.mrb[0].mxu0
  %v11162 = vadd.f32 %v10809, %v11161
  %v11163 = vpop.f32.mrb[0].mxu0
  %v11164 = vadd.f32 %v10811, %v11163
  %v11165 = vpop.f32.mrb[0].mxu0
  %v11166 = vadd.f32 %v10813, %v11165
  %v11167 = vpop.f32.mrb[0].mxu0
  %v11168 = vadd.f32 %v10815, %v11167
  %11169 = vmatprep.mubr.bf16.mxu0 %v9725
  %11170 = vmatmul.mubr.bf16.gmra.mrb[0].mxu0 %v9724
  %v11171 = vpop.f32.mrb[0].mxu0
  %v11172 = vadd.f32 %v10819, %v11171
  %v11173 = vpop.f32.mrb[0].mxu0
  %v11174 = vadd.f32 %v10821, %v11173
  %v11175 = vpop.f32.mrb[0].mxu0
  %v11176 = vadd.f32 %v10823, %v11175
  %v11177 = vpop.f32.mrb[0].mxu0
  %v11178 = vadd.f32 %v10825, %v11177
  %11179 = vmatprep.mubr.bf16.mxu0 %v9735
  %11180 = vmatmul.mubr.bf16.gmra.mrb[0].mxu0 %v9734
  %v11181 = vpop.f32.mrb[0].mxu0
  %v11182 = vadd.f32 %v10829, %v11181
  %v11183 = vpop.f32.mrb[0].mxu0
  %v11184 = vadd.f32 %v10831, %v11183
  %v11185 = vpop.f32.mrb[0].mxu0
  %v11186 = vadd.f32 %v10833, %v11185
  %v11187 = vpop.f32.mrb[0].mxu0
  %v11188 = vadd.f32 %v10835, %v11187
  %11189 = vmatprep.mubr.bf16.mxu0 %v9745
  %11190 = vmatmul.mubr.bf16.gmra.mrb[0].mxu0 %v9744
  %v11191 = vpop.f32.mrb[0].mxu0
  %v11192 = vadd.f32 %v10839, %v11191
  %v11193 = vpop.f32.mrb[0].mxu0
  %v11194 = vadd.f32 %v10841, %v11193
  %v11195 = vpop.f32.mrb[0].mxu0
  %v11196 = vadd.f32 %v10843, %v11195
  %v11197 = vpop.f32.mrb[0].mxu0
  %v11198 = vadd.f32 %v10845, %v11197
  %11199 = vmatprep.mubr.bf16.mxu0 %v9755
  %11200 = vmatmul.mubr.bf16.gmra.mrb[0].mxu0 %v9754
  %v11201 = vpop.f32.mrb[0].mxu0
  %v11202 = vadd.f32 %v10849, %v11201
  %v11203 = vpop.f32.mrb[0].mxu0
  %v11204 = vadd.f32 %v10851, %v11203
  %v11205 = vpop.f32.mrb[0].mxu0
  %v11206 = vadd.f32 %v10853, %v11205
  %v11207 = vpop.f32.mrb[0].mxu0
  %v11208 = vadd.f32 %v10855, %v11207
  %11209 = vmatprep.mubr.bf16.mxu0 %v9765
  %11210 = vmatmul.mubr.bf16.gmra.mrb[0].mxu0 %v9764
  %v11211 = vpop.f32.mrb[0].mxu0
  %v11212 = vadd.f32 %v10859, %v11211
  %v11213 = vpop.f32.mrb[0].mxu0
  %v11214 = vadd.f32 %v10861, %v11213
  %v11215 = vpop.f32.mrb[0].mxu0
  %v11216 = vadd.f32 %v10863, %v11215
  %v11217 = vpop.f32.mrb[0].mxu0
  %v11218 = vadd.f32 %v10865, %v11217
  %11219 = vmatprep.mubr.bf16.mxu0 %v9775
  %11220 = vmatmul.mubr.bf16.gmra.mrb[0].mxu0 %v9774
  %v11221 = vpop.f32.mrb[0].mxu0
  %v11222 = vadd.f32 %v10869, %v11221
  %v11223 = vpop.f32.mrb[0].mxu0
  %v11224 = vadd.f32 %v10871, %v11223
  %v11225 = vpop.f32.mrb[0].mxu0
  %v11226 = vadd.f32 %v10873, %v11225
  %v11227 = vpop.f32.mrb[0].mxu0
  %v11228 = vadd.f32 %v10875, %v11227
  %11229 = vmatprep.mubr.bf16.mxu0 %v9785
  %11230 = vmatmul.mubr.bf16.gmra.mrb[0].mxu0 %v9784
  %v11231 = vpop.f32.mrb[0].mxu0
  %v11232 = vadd.f32 %v10879, %v11231
  %v11233 = vpop.f32.mrb[0].mxu0
  %v11234 = vadd.f32 %v10881, %v11233
  %v11235 = vpop.f32.mrb[0].mxu0
  %v11236 = vadd.f32 %v10883, %v11235
  %v11237 = vpop.f32.mrb[0].mxu0
  %v11238 = vadd.f32 %v10885, %v11237
  %11239 = vmatprep.mubr.bf16.mxu0 %v9795
  %11240 = vmatmul.mubr.bf16.gmra.mrb[0].mxu0 %v9794
  %v11241 = vpop.f32.mrb[0].mxu0
  %v11242 = vadd.f32 %v10889, %v11241
  %v11243 = vpop.f32.mrb[0].mxu0
  %v11244 = vadd.f32 %v10891, %v11243
  %v11245 = vpop.f32.mrb[0].mxu0
  %v11246 = vadd.f32 %v10893, %v11245
  %v11247 = vpop.f32.mrb[0].mxu0
  %v11248 = vadd.f32 %v10895, %v11247
  %11249 = vmatprep.mubr.bf16.mxu0 %v9805
  %11250 = vmatmul.mubr.bf16.gmra.mrb[0].mxu0 %v9804
  %v11251 = vpop.f32.mrb[0].mxu0
  %v11252 = vadd.f32 %v10899, %v11251
  %v11253 = vpop.f32.mrb[0].mxu0
  %v11254 = vadd.f32 %v10901, %v11253
  %v11255 = vpop.f32.mrb[0].mxu0
  %v11256 = vadd.f32 %v10903, %v11255
  %v11257 = vpop.f32.mrb[0].mxu0
  %v11258 = vadd.f32 %v10905, %v11257
  %11259 = vmatprep.mubr.bf16.mxu0 %v9815
  %11260 = vmatmul.mubr.bf16.gmra.mrb[0].mxu0 %v9814
  %v11261 = vpop.f32.mrb[0].mxu0
  %v11262 = vadd.f32 %v10909, %v11261
  %v11263 = vpop.f32.mrb[0].mxu0
  %v11264 = vadd.f32 %v10911, %v11263
  %v11265 = vpop.f32.mrb[0].mxu0
  %v11266 = vadd.f32 %v10913, %v11265
  %v11267 = vpop.f32.mrb[0].mxu0
  %v11268 = vadd.f32 %v10915, %v11267
  %11269 = vmatprep.mubr.bf16.mxu0 %v9825
  %11270 = vmatmul.mubr.bf16.gmra.mrb[0].mxu0 %v9824
  %v11271 = vpop.f32.mrb[0].mxu0
  %v11272 = vadd.f32 %v10919, %v11271
  %v11273 = vpop.f32.mrb[0].mxu0
  %v11274 = vadd.f32 %v10921, %v11273
  %v11275 = vpop.f32.mrb[0].mxu0
  %v11276 = vadd.f32 %v10923, %v11275
  %v11277 = vpop.f32.mrb[0].mxu0
  %v11278 = vadd.f32 %v10925, %v11277
  %11279 = vmatprep.mubr.bf16.mxu0 %v9835
  %11280 = vmatmul.mubr.bf16.gmra.mrb[0].mxu0 %v9834
  %v11281 = vpop.f32.mrb[0].mxu0
  %v11282 = vadd.f32 %v10929, %v11281
  %v11283 = vpop.f32.mrb[0].mxu0
  %v11284 = vadd.f32 %v10931, %v11283
  %v11285 = vpop.f32.mrb[0].mxu0
  %v11286 = vadd.f32 %v10933, %v11285
  %v11287 = vpop.f32.mrb[0].mxu0
  %v11288 = vadd.f32 %v10935, %v11287
  %11289 = vmatprep.mubr.bf16.mxu0 %v9845
  %11290 = vmatmul.mubr.bf16.gmra.mrb[0].mxu0 %v9844
  %v11291 = vpop.f32.mrb[0].mxu0
  %v11292 = vadd.f32 %v10939, %v11291
  %v11293 = vpop.f32.mrb[0].mxu0
  %v11294 = vadd.f32 %v10941, %v11293
  %v11295 = vpop.f32.mrb[0].mxu0
  %v11296 = vadd.f32 %v10943, %v11295
  %v11297 = vpop.f32.mrb[0].mxu0
  %v11298 = vadd.f32 %v10945, %v11297
  %11299 = vmatprep.mubr.bf16.mxu0 %v9855
  %11300 = vmatmul.mubr.bf16.gmra.mrb[0].mxu0 %v9854
  %v11301 = vpop.f32.mrb[0].mxu0
  %v11302 = vadd.f32 %v10949, %v11301
  %v11303 = vpop.f32.mrb[0].mxu0
  %v11304 = vadd.f32 %v10951, %v11303
  %v11305 = vpop.f32.mrb[0].mxu0
  %v11306 = vadd.f32 %v10953, %v11305
  %v11307 = vpop.f32.mrb[0].mxu0
  %v11308 = vadd.f32 %v10955, %v11307
  %11309 = vmatprep.mubr.bf16.mxu0 %v9865
  %11310 = vmatmul.mubr.bf16.gmra.mrb[0].mxu0 %v9864
  %v11311 = vpop.f32.mrb[0].mxu0
  %v11312 = vadd.f32 %v10959, %v11311
  %v11313 = vpop.f32.mrb[0].mxu0
  %v11314 = vadd.f32 %v10961, %v11313
  %v11315 = vpop.f32.mrb[0].mxu0
  %v11316 = vadd.f32 %v10963, %v11315
  %v11317 = vpop.f32.mrb[0].mxu0
  %v11318 = vadd.f32 %v10965, %v11317
  %11319 = vmatprep.mubr.bf16.mxu0 %v9875
  %11320 = vmatmul.mubr.bf16.gmra.mrb[0].mxu0 %v9874
  %v11321 = vpop.f32.mrb[0].mxu0
  %v11322 = vadd.f32 %v10969, %v11321
  %v11323 = vpop.f32.mrb[0].mxu0
  %v11324 = vadd.f32 %v10971, %v11323
  %v11325 = vpop.f32.mrb[0].mxu0
  %v11326 = vadd.f32 %v10973, %v11325
  %v11327 = vpop.f32.mrb[0].mxu0
  %v11328 = vadd.f32 %v10975, %v11327
  %11329 = vmatprep.mubr.bf16.mxu0 %v9885
  %11330 = vmatmul.mubr.bf16.gmra.mrb[0].mxu0 %v9884
  %v11331 = vpop.f32.mrb[0].mxu0
  %v11332 = vadd.f32 %v10979, %v11331
  %v11333 = vpop.f32.mrb[0].mxu0
  %v11334 = vadd.f32 %v10981, %v11333
  %v11335 = vpop.f32.mrb[0].mxu0
  %v11336 = vadd.f32 %v10983, %v11335
  %v11337 = vpop.f32.mrb[0].mxu0
  %v11338 = vadd.f32 %v10985, %v11337
  %11339 = vmatprep.mubr.bf16.mxu0 %v9895
  %11340 = vmatmul.mubr.bf16.gmra.mrb[0].mxu0 %v9894
  %v11341 = vpop.f32.mrb[0].mxu0
  %v11342 = vadd.f32 %v10989, %v11341
  %v11343 = vpop.f32.mrb[0].mxu0
  %v11344 = vadd.f32 %v10991, %v11343
  %v11345 = vpop.f32.mrb[0].mxu0
  %v11346 = vadd.f32 %v10993, %v11345
  %v11347 = vpop.f32.mrb[0].mxu0
  %v11348 = vadd.f32 %v10995, %v11347
  %11349 = vmatprep.mubr.bf16.mxu0 %v9905
  %11350 = vmatmul.mubr.bf16.gmra.mrb[0].mxu0 %v9904
  %v11351 = vpop.f32.mrb[0].mxu0
  %v11352 = vadd.f32 %v10999, %v11351
  %v11353 = vpop.f32.mrb[0].mxu0
  %v11354 = vadd.f32 %v11001, %v11353
  %v11355 = vpop.f32.mrb[0].mxu0
  %v11356 = vadd.f32 %v11003, %v11355
  %v11357 = vpop.f32.mrb[0].mxu0
  %v11358 = vadd.f32 %v11005, %v11357
  %11359 = vmatprep.mubr.bf16.mxu0 %v9915
  %11360 = vmatmul.mubr.bf16.gmra.mrb[0].mxu0 %v9914
  %v11361 = vpop.f32.mrb[0].mxu0
  %v11362 = vadd.f32 %v11009, %v11361
  %v11363 = vpop.f32.mrb[0].mxu0
  %v11364 = vadd.f32 %v11011, %v11363
  %v11365 = vpop.f32.mrb[0].mxu0
  %v11366 = vadd.f32 %v11013, %v11365
  %v11367 = vpop.f32.mrb[0].mxu0
  %v11368 = vadd.f32 %v11015, %v11367
  %11369 = vmatprep.mubr.bf16.mxu0 %v9925
  %11370 = vmatmul.mubr.bf16.gmra.mrb[0].mxu0 %v9924
  %v11371 = vpop.f32.mrb[0].mxu0
  %v11372 = vadd.f32 %v11019, %v11371
  %v11373 = vpop.f32.mrb[0].mxu0
  %v11374 = vadd.f32 %v11021, %v11373
  %v11375 = vpop.f32.mrb[0].mxu0
  %v11376 = vadd.f32 %v11023, %v11375
  %v11377 = vpop.f32.mrb[0].mxu0
  %v11378 = vadd.f32 %v11025, %v11377
  %11379 = vmatprep.mubr.bf16.mxu0 %v9935
  %11380 = vmatmul.mubr.bf16.gmra.mrb[0].mxu0 %v9934
  %v11381 = vpop.f32.mrb[0].mxu0
  %v11382 = vadd.f32 %v11029, %v11381
  %v11383 = vpop.f32.mrb[0].mxu0
  %v11384 = vadd.f32 %v11031, %v11383
  %v11385 = vpop.f32.mrb[0].mxu0
  %v11386 = vadd.f32 %v11033, %v11385
  %v11387 = vpop.f32.mrb[0].mxu0
  %v11388 = vadd.f32 %v11035, %v11387
  %11389 = vmatprep.mubr.bf16.mxu0 %v9945
  %11390 = vmatmul.mubr.bf16.gmra.mrb[0].mxu0 %v9944
  %v11391 = vpop.f32.mrb[0].mxu0
  %v11392 = vadd.f32 %v11039, %v11391
  %v11393 = vpop.f32.mrb[0].mxu0
  %v11394 = vadd.f32 %v11041, %v11393
  %v11395 = vpop.f32.mrb[0].mxu0
  %v11396 = vadd.f32 %v11043, %v11395
  %v11397 = vpop.f32.mrb[0].mxu0
  %v11398 = vadd.f32 %v11045, %v11397
  %11399 = vmatprep.mubr.bf16.mxu0 %v9955
  %11400 = vmatmul.mubr.bf16.gmra.mrb[0].mxu0 %v9954
  %v11401 = vpop.f32.mrb[0].mxu0
  %v11402 = vadd.f32 %v11049, %v11401
  %v11403 = vpop.f32.mrb[0].mxu0
  %v11404 = vadd.f32 %v11051, %v11403
  %v11405 = vpop.f32.mrb[0].mxu0
  %v11406 = vadd.f32 %v11053, %v11405
  %v11407 = vpop.f32.mrb[0].mxu0
  %v11408 = vadd.f32 %v11055, %v11407
  %11409 = vmatprep.mubr.bf16.mxu0 %v9965
  %11410 = vmatmul.mubr.bf16.gmra.mrb[0].mxu0 %v9964
  %v11411 = vpop.f32.mrb[0].mxu0
  %v11412 = vadd.f32 %v11059, %v11411
  %v11413 = vpop.f32.mrb[0].mxu0
  %v11414 = vadd.f32 %v11061, %v11413
  %v11415 = vpop.f32.mrb[0].mxu0
  %v11416 = vadd.f32 %v11063, %v11415
  %v11417 = vpop.f32.mrb[0].mxu0
  %v11418 = vadd.f32 %v11065, %v11417
  %11419 = vmatprep.mubr.bf16.mxu0 %v9975
  %11420 = vmatmul.mubr.bf16.gmra.mrb[0].mxu0 %v9974
  %v11421 = vpop.f32.mrb[0].mxu0
  %v11422 = vadd.f32 %v11069, %v11421
  %v11423 = vpop.f32.mrb[0].mxu0
  %v11424 = vadd.f32 %v11071, %v11423
  %v11425 = vpop.f32.mrb[0].mxu0
  %v11426 = vadd.f32 %v11073, %v11425
  %v11427 = vpop.f32.mrb[0].mxu0
  %v11428 = vadd.f32 %v11075, %v11427
  %11429 = vmatprep.mubr.bf16.mxu0 %v9985
  %11430 = vmatmul.mubr.bf16.gmra.mrb[0].mxu0 %v9984
  %v11431 = vpop.f32.mrb[0].mxu0
  %v11432 = vadd.f32 %v11079, %v11431
  %v11433 = vpop.f32.mrb[0].mxu0
  %v11434 = vadd.f32 %v11081, %v11433
  %v11435 = vpop.f32.mrb[0].mxu0
  %v11436 = vadd.f32 %v11083, %v11435
  %v11437 = vpop.f32.mrb[0].mxu0
  %v11438 = vadd.f32 %v11085, %v11437
  %11439 = vmatprep.mubr.bf16.mxu0 %v9995
  %11440 = vmatmul.mubr.bf16.gmra.mrb[0].mxu0 %v9994
  %v11441 = vpop.f32.mrb[0].mxu0
  %v11442 = vadd.f32 %v11089, %v11441
  %v11443 = vpop.f32.mrb[0].mxu0
  %v11444 = vadd.f32 %v11091, %v11443
  %v11445 = vpop.f32.mrb[0].mxu0
  %v11446 = vadd.f32 %v11093, %v11445
  %v11447 = vpop.f32.mrb[0].mxu0
  %v11448 = vadd.f32 %v11095, %v11447
  %11449 = vmatprep.mubr.bf16.mxu0 %v10005
  %11450 = vmatmul.mubr.bf16.gmra.mrb[0].mxu0 %v10004
  %v11451 = vpop.f32.mrb[0].mxu0
  %v11452 = vadd.f32 %v11099, %v11451
  %v11453 = vpop.f32.mrb[0].mxu0
  %v11454 = vadd.f32 %v11101, %v11453
  %v11455 = vpop.f32.mrb[0].mxu0
  %v11456 = vadd.f32 %v11103, %v11455
  %v11457 = vpop.f32.mrb[0].mxu0
  %v11458 = vadd.f32 %v11105, %v11457
  %11459 = vmatprep.mubr.bf16.mxu0 %v10015
  %11460 = vmatmul.mubr.bf16.gmra.mrb[0].mxu0 %v10014
  %v11461 = vpop.f32.mrb[0].mxu0
  %v11462 = vadd.f32 %v11109, %v11461
  %v11463 = vpop.f32.mrb[0].mxu0
  %v11464 = vadd.f32 %v11111, %v11463
  %v11465 = vpop.f32.mrb[0].mxu0
  %v11466 = vadd.f32 %v11113, %v11465
  %v11467 = vpop.f32.mrb[0].mxu0
  %v11468 = vadd.f32 %v11115, %v11467
  %11469 = vmatprep.mubr.bf16.mxu0 %v10025
  %11470 = vmatmul.mubr.bf16.gmra.mrb[0].mxu0 %v10024
  %v11471 = vpop.f32.mrb[0].mxu0
  %v11472 = vadd.f32 %v11119, %v11471
  %v11473 = vpop.f32.mrb[0].mxu0
  %v11474 = vadd.f32 %v11121, %v11473
  %v11475 = vpop.f32.mrb[0].mxu0
  %v11476 = vadd.f32 %v11123, %v11475
  %v11477 = vpop.f32.mrb[0].mxu0
  %v11478 = vadd.f32 %v11125, %v11477
  %11479 = vdwg.mxu0
  %11480 = vmatprep.subr.bf16.mxu0 %v8382
  %11481 = vmatpush1.bf16.msra.mxu0 %v8381
  %11482 = vmatprep.subr.bf16.mxu0 %v8384
  %11483 = vmatpush1.bf16.msra.mxu0 %v8383
  %11484 = vmatprep.subr.bf16.mxu0 %v8386
  %11485 = vmatpush1.bf16.msra.mxu0 %v8385
  %11486 = vmatprep.subr.bf16.mxu0 %v8388
  %11487 = vmatpush1.bf16.msra.mxu0 %v8387
  %11488 = vmatprep.subr.bf16.mxu0 %v8390
  %11489 = vmatpush1.bf16.msra.mxu0 %v8389
  %11490 = vmatprep.subr.bf16.mxu0 %v8392
  %11491 = vmatpush1.bf16.msra.mxu0 %v8391
  %11492 = vmatprep.subr.bf16.mxu0 %v8394
  %11493 = vmatpush1.bf16.msra.mxu0 %v8393
  %11494 = vmatprep.subr.bf16.mxu0 %v8396
  %11495 = vmatpush1.bf16.msra.mxu0 %v8395
  %11496 = vmatprep.subr.bf16.mxu0 %v8398
  %11497 = vmatpush1.bf16.msra.mxu0 %v8397
  %11498 = vmatprep.subr.bf16.mxu0 %v8400
  %11499 = vmatpush1.bf16.msra.mxu0 %v8399
  %11500 = vmatprep.subr.bf16.mxu0 %v8402
  %11501 = vmatpush1.bf16.msra.mxu0 %v8401
  %11502 = vmatprep.subr.bf16.mxu0 %v8404
  %11503 = vmatpush1.bf16.msra.mxu0 %v8403
  %11504 = vmatprep.subr.bf16.mxu0 %v8406
  %11505 = vmatpush1.bf16.msra.mxu0 %v8405
  %11506 = vmatprep.subr.bf16.mxu0 %v8408
  %11507 = vmatpush1.bf16.msra.mxu0 %v8407
  %11508 = vmatprep.subr.bf16.mxu0 %v8410
  %11509 = vmatpush1.bf16.msra.mxu0 %v8409
  %11510 = vmatprep.subr.bf16.mxu0 %v8412
  %11511 = vmatpush1.bf16.msra.mxu0 %v8411
  %11512 = vmatprep.mubr.bf16.mxu0 %v9717
  %11513 = vmatmul.mubr.bf16.gmra.mrb[0].mxu0 %v9716
  %v11514 = vpop.f32.mrb[0].mxu0
  %v11515 = vadd.f32 %v11162, %v11514
  %v11516 = vpop.f32.mrb[0].mxu0
  %v11517 = vadd.f32 %v11164, %v11516
  %v11518 = vpop.f32.mrb[0].mxu0
  %v11519 = vadd.f32 %v11166, %v11518
  %v11520 = vpop.f32.mrb[0].mxu0
  %v11521 = vadd.f32 %v11168, %v11520
  %11522 = vmatprep.mubr.bf16.mxu0 %v9727
  %11523 = vmatmul.mubr.bf16.gmra.mrb[0].mxu0 %v9726
  %v11524 = vpop.f32.mrb[0].mxu0
  %v11525 = vadd.f32 %v11172, %v11524
  %v11526 = vpop.f32.mrb[0].mxu0
  %v11527 = vadd.f32 %v11174, %v11526
  %v11528 = vpop.f32.mrb[0].mxu0
  %v11529 = vadd.f32 %v11176, %v11528
  %v11530 = vpop.f32.mrb[0].mxu0
  %v11531 = vadd.f32 %v11178, %v11530
  %11532 = vmatprep.mubr.bf16.mxu0 %v9737
  %11533 = vmatmul.mubr.bf16.gmra.mrb[0].mxu0 %v9736
  %v11534 = vpop.f32.mrb[0].mxu0
  %v11535 = vadd.f32 %v11182, %v11534
  %v11536 = vpop.f32.mrb[0].mxu0
  %v11537 = vadd.f32 %v11184, %v11536
  %v11538 = vpop.f32.mrb[0].mxu0
  %v11539 = vadd.f32 %v11186, %v11538
  %v11540 = vpop.f32.mrb[0].mxu0
  %v11541 = vadd.f32 %v11188, %v11540
  %11542 = vmatprep.mubr.bf16.mxu0 %v9747
  %11543 = vmatmul.mubr.bf16.gmra.mrb[0].mxu0 %v9746
  %v11544 = vpop.f32.mrb[0].mxu0
  %v11545 = vadd.f32 %v11192, %v11544
  %v11546 = vpop.f32.mrb[0].mxu0
  %v11547 = vadd.f32 %v11194, %v11546
  %v11548 = vpop.f32.mrb[0].mxu0
  %v11549 = vadd.f32 %v11196, %v11548
  %v11550 = vpop.f32.mrb[0].mxu0
  %v11551 = vadd.f32 %v11198, %v11550
  %11552 = vmatprep.mubr.bf16.mxu0 %v9757
  %11553 = vmatmul.mubr.bf16.gmra.mrb[0].mxu0 %v9756
  %v11554 = vpop.f32.mrb[0].mxu0
  %v11555 = vadd.f32 %v11202, %v11554
  %v11556 = vpop.f32.mrb[0].mxu0
  %v11557 = vadd.f32 %v11204, %v11556
  %v11558 = vpop.f32.mrb[0].mxu0
  %v11559 = vadd.f32 %v11206, %v11558
  %v11560 = vpop.f32.mrb[0].mxu0
  %v11561 = vadd.f32 %v11208, %v11560
  %11562 = vmatprep.mubr.bf16.mxu0 %v9767
  %11563 = vmatmul.mubr.bf16.gmra.mrb[0].mxu0 %v9766
  %v11564 = vpop.f32.mrb[0].mxu0
  %v11565 = vadd.f32 %v11212, %v11564
  %v11566 = vpop.f32.mrb[0].mxu0
  %v11567 = vadd.f32 %v11214, %v11566
  %v11568 = vpop.f32.mrb[0].mxu0
  %v11569 = vadd.f32 %v11216, %v11568
  %v11570 = vpop.f32.mrb[0].mxu0
  %v11571 = vadd.f32 %v11218, %v11570
  %11572 = vmatprep.mubr.bf16.mxu0 %v9777
  %11573 = vmatmul.mubr.bf16.gmra.mrb[0].mxu0 %v9776
  %v11574 = vpop.f32.mrb[0].mxu0
  %v11575 = vadd.f32 %v11222, %v11574
  %v11576 = vpop.f32.mrb[0].mxu0
  %v11577 = vadd.f32 %v11224, %v11576
  %v11578 = vpop.f32.mrb[0].mxu0
  %v11579 = vadd.f32 %v11226, %v11578
  %v11580 = vpop.f32.mrb[0].mxu0
  %v11581 = vadd.f32 %v11228, %v11580
  %11582 = vmatprep.mubr.bf16.mxu0 %v9787
  %11583 = vmatmul.mubr.bf16.gmra.mrb[0].mxu0 %v9786
  %v11584 = vpop.f32.mrb[0].mxu0
  %v11585 = vadd.f32 %v11232, %v11584
  %v11586 = vpop.f32.mrb[0].mxu0
  %v11587 = vadd.f32 %v11234, %v11586
  %v11588 = vpop.f32.mrb[0].mxu0
  %v11589 = vadd.f32 %v11236, %v11588
  %v11590 = vpop.f32.mrb[0].mxu0
  %v11591 = vadd.f32 %v11238, %v11590
  %11592 = vmatprep.mubr.bf16.mxu0 %v9797
  %11593 = vmatmul.mubr.bf16.gmra.mrb[0].mxu0 %v9796
  %v11594 = vpop.f32.mrb[0].mxu0
  %v11595 = vadd.f32 %v11242, %v11594
  %v11596 = vpop.f32.mrb[0].mxu0
  %v11597 = vadd.f32 %v11244, %v11596
  %v11598 = vpop.f32.mrb[0].mxu0
  %v11599 = vadd.f32 %v11246, %v11598
  %v11600 = vpop.f32.mrb[0].mxu0
  %v11601 = vadd.f32 %v11248, %v11600
  %11602 = vmatprep.mubr.bf16.mxu0 %v9807
  %11603 = vmatmul.mubr.bf16.gmra.mrb[0].mxu0 %v9806
  %v11604 = vpop.f32.mrb[0].mxu0
  %v11605 = vadd.f32 %v11252, %v11604
  %v11606 = vpop.f32.mrb[0].mxu0
  %v11607 = vadd.f32 %v11254, %v11606
  %v11608 = vpop.f32.mrb[0].mxu0
  %v11609 = vadd.f32 %v11256, %v11608
  %v11610 = vpop.f32.mrb[0].mxu0
  %v11611 = vadd.f32 %v11258, %v11610
  %11612 = vmatprep.mubr.bf16.mxu0 %v9817
  %11613 = vmatmul.mubr.bf16.gmra.mrb[0].mxu0 %v9816
  %v11614 = vpop.f32.mrb[0].mxu0
  %v11615 = vadd.f32 %v11262, %v11614
  %v11616 = vpop.f32.mrb[0].mxu0
  %v11617 = vadd.f32 %v11264, %v11616
  %v11618 = vpop.f32.mrb[0].mxu0
  %v11619 = vadd.f32 %v11266, %v11618
  %v11620 = vpop.f32.mrb[0].mxu0
  %v11621 = vadd.f32 %v11268, %v11620
  %11622 = vmatprep.mubr.bf16.mxu0 %v9827
  %11623 = vmatmul.mubr.bf16.gmra.mrb[0].mxu0 %v9826
  %v11624 = vpop.f32.mrb[0].mxu0
  %v11625 = vadd.f32 %v11272, %v11624
  %v11626 = vpop.f32.mrb[0].mxu0
  %v11627 = vadd.f32 %v11274, %v11626
  %v11628 = vpop.f32.mrb[0].mxu0
  %v11629 = vadd.f32 %v11276, %v11628
  %v11630 = vpop.f32.mrb[0].mxu0
  %v11631 = vadd.f32 %v11278, %v11630
  %11632 = vmatprep.mubr.bf16.mxu0 %v9837
  %11633 = vmatmul.mubr.bf16.gmra.mrb[0].mxu0 %v9836
  %v11634 = vpop.f32.mrb[0].mxu0
  %v11635 = vadd.f32 %v11282, %v11634
  %v11636 = vpop.f32.mrb[0].mxu0
  %v11637 = vadd.f32 %v11284, %v11636
  %v11638 = vpop.f32.mrb[0].mxu0
  %v11639 = vadd.f32 %v11286, %v11638
  %v11640 = vpop.f32.mrb[0].mxu0
  %v11641 = vadd.f32 %v11288, %v11640
  %11642 = vmatprep.mubr.bf16.mxu0 %v9847
  %11643 = vmatmul.mubr.bf16.gmra.mrb[0].mxu0 %v9846
  %v11644 = vpop.f32.mrb[0].mxu0
  %v11645 = vadd.f32 %v11292, %v11644
  %v11646 = vpop.f32.mrb[0].mxu0
  %v11647 = vadd.f32 %v11294, %v11646
  %v11648 = vpop.f32.mrb[0].mxu0
  %v11649 = vadd.f32 %v11296, %v11648
  %v11650 = vpop.f32.mrb[0].mxu0
  %v11651 = vadd.f32 %v11298, %v11650
  %11652 = vmatprep.mubr.bf16.mxu0 %v9857
  %11653 = vmatmul.mubr.bf16.gmra.mrb[0].mxu0 %v9856
  %v11654 = vpop.f32.mrb[0].mxu0
  %v11655 = vadd.f32 %v11302, %v11654
  %v11656 = vpop.f32.mrb[0].mxu0
  %v11657 = vadd.f32 %v11304, %v11656
  %v11658 = vpop.f32.mrb[0].mxu0
  %v11659 = vadd.f32 %v11306, %v11658
  %v11660 = vpop.f32.mrb[0].mxu0
  %v11661 = vadd.f32 %v11308, %v11660
  %11662 = vmatprep.mubr.bf16.mxu0 %v9867
  %11663 = vmatmul.mubr.bf16.gmra.mrb[0].mxu0 %v9866
  %v11664 = vpop.f32.mrb[0].mxu0
  %v11665 = vadd.f32 %v11312, %v11664
  %v11666 = vpop.f32.mrb[0].mxu0
  %v11667 = vadd.f32 %v11314, %v11666
  %v11668 = vpop.f32.mrb[0].mxu0
  %v11669 = vadd.f32 %v11316, %v11668
  %v11670 = vpop.f32.mrb[0].mxu0
  %v11671 = vadd.f32 %v11318, %v11670
  %11672 = vmatprep.mubr.bf16.mxu0 %v9877
  %11673 = vmatmul.mubr.bf16.gmra.mrb[0].mxu0 %v9876
  %v11674 = vpop.f32.mrb[0].mxu0
  %v11675 = vadd.f32 %v11322, %v11674
  %v11676 = vpop.f32.mrb[0].mxu0
  %v11677 = vadd.f32 %v11324, %v11676
  %v11678 = vpop.f32.mrb[0].mxu0
  %v11679 = vadd.f32 %v11326, %v11678
  %v11680 = vpop.f32.mrb[0].mxu0
  %v11681 = vadd.f32 %v11328, %v11680
  %11682 = vmatprep.mubr.bf16.mxu0 %v9887
  %11683 = vmatmul.mubr.bf16.gmra.mrb[0].mxu0 %v9886
  %v11684 = vpop.f32.mrb[0].mxu0
  %v11685 = vadd.f32 %v11332, %v11684
  %v11686 = vpop.f32.mrb[0].mxu0
  %v11687 = vadd.f32 %v11334, %v11686
  %v11688 = vpop.f32.mrb[0].mxu0
  %v11689 = vadd.f32 %v11336, %v11688
  %v11690 = vpop.f32.mrb[0].mxu0
  %v11691 = vadd.f32 %v11338, %v11690
  %11692 = vmatprep.mubr.bf16.mxu0 %v9897
  %11693 = vmatmul.mubr.bf16.gmra.mrb[0].mxu0 %v9896
  %v11694 = vpop.f32.mrb[0].mxu0
  %v11695 = vadd.f32 %v11342, %v11694
  %v11696 = vpop.f32.mrb[0].mxu0
  %v11697 = vadd.f32 %v11344, %v11696
  %v11698 = vpop.f32.mrb[0].mxu0
  %v11699 = vadd.f32 %v11346, %v11698
  %v11700 = vpop.f32.mrb[0].mxu0
  %v11701 = vadd.f32 %v11348, %v11700
  %11702 = vmatprep.mubr.bf16.mxu0 %v9907
  %11703 = vmatmul.mubr.bf16.gmra.mrb[0].mxu0 %v9906
  %v11704 = vpop.f32.mrb[0].mxu0
  %v11705 = vadd.f32 %v11352, %v11704
  %v11706 = vpop.f32.mrb[0].mxu0
  %v11707 = vadd.f32 %v11354, %v11706
  %v11708 = vpop.f32.mrb[0].mxu0
  %v11709 = vadd.f32 %v11356, %v11708
  %v11710 = vpop.f32.mrb[0].mxu0
  %v11711 = vadd.f32 %v11358, %v11710
  %11712 = vmatprep.mubr.bf16.mxu0 %v9917
  %11713 = vmatmul.mubr.bf16.gmra.mrb[0].mxu0 %v9916
  %v11714 = vpop.f32.mrb[0].mxu0
  %v11715 = vadd.f32 %v11362, %v11714
  %v11716 = vpop.f32.mrb[0].mxu0
  %v11717 = vadd.f32 %v11364, %v11716
  %v11718 = vpop.f32.mrb[0].mxu0
  %v11719 = vadd.f32 %v11366, %v11718
  %v11720 = vpop.f32.mrb[0].mxu0
  %v11721 = vadd.f32 %v11368, %v11720
  %11722 = vmatprep.mubr.bf16.mxu0 %v9927
  %11723 = vmatmul.mubr.bf16.gmra.mrb[0].mxu0 %v9926
  %v11724 = vpop.f32.mrb[0].mxu0
  %v11725 = vadd.f32 %v11372, %v11724
  %v11726 = vpop.f32.mrb[0].mxu0
  %v11727 = vadd.f32 %v11374, %v11726
  %v11728 = vpop.f32.mrb[0].mxu0
  %v11729 = vadd.f32 %v11376, %v11728
  %v11730 = vpop.f32.mrb[0].mxu0
  %v11731 = vadd.f32 %v11378, %v11730
  %11732 = vmatprep.mubr.bf16.mxu0 %v9937
  %11733 = vmatmul.mubr.bf16.gmra.mrb[0].mxu0 %v9936
  %v11734 = vpop.f32.mrb[0].mxu0
  %v11735 = vadd.f32 %v11382, %v11734
  %v11736 = vpop.f32.mrb[0].mxu0
  %v11737 = vadd.f32 %v11384, %v11736
  %v11738 = vpop.f32.mrb[0].mxu0
  %v11739 = vadd.f32 %v11386, %v11738
  %v11740 = vpop.f32.mrb[0].mxu0
  %v11741 = vadd.f32 %v11388, %v11740
  %11742 = vmatprep.mubr.bf16.mxu0 %v9947
  %11743 = vmatmul.mubr.bf16.gmra.mrb[0].mxu0 %v9946
  %v11744 = vpop.f32.mrb[0].mxu0
  %v11745 = vadd.f32 %v11392, %v11744
  %v11746 = vpop.f32.mrb[0].mxu0
  %v11747 = vadd.f32 %v11394, %v11746
  %v11748 = vpop.f32.mrb[0].mxu0
  %v11749 = vadd.f32 %v11396, %v11748
  %v11750 = vpop.f32.mrb[0].mxu0
  %v11751 = vadd.f32 %v11398, %v11750
  %11752 = vmatprep.mubr.bf16.mxu0 %v9957
  %11753 = vmatmul.mubr.bf16.gmra.mrb[0].mxu0 %v9956
  %v11754 = vpop.f32.mrb[0].mxu0
  %v11755 = vadd.f32 %v11402, %v11754
  %v11756 = vpop.f32.mrb[0].mxu0
  %v11757 = vadd.f32 %v11404, %v11756
  %v11758 = vpop.f32.mrb[0].mxu0
  %v11759 = vadd.f32 %v11406, %v11758
  %v11760 = vpop.f32.mrb[0].mxu0
  %v11761 = vadd.f32 %v11408, %v11760
  %11762 = vmatprep.mubr.bf16.mxu0 %v9967
  %11763 = vmatmul.mubr.bf16.gmra.mrb[0].mxu0 %v9966
  %v11764 = vpop.f32.mrb[0].mxu0
  %v11765 = vadd.f32 %v11412, %v11764
  %v11766 = vpop.f32.mrb[0].mxu0
  %v11767 = vadd.f32 %v11414, %v11766
  %v11768 = vpop.f32.mrb[0].mxu0
  %v11769 = vadd.f32 %v11416, %v11768
  %v11770 = vpop.f32.mrb[0].mxu0
  %v11771 = vadd.f32 %v11418, %v11770
  %11772 = vmatprep.mubr.bf16.mxu0 %v9977
  %11773 = vmatmul.mubr.bf16.gmra.mrb[0].mxu0 %v9976
  %v11774 = vpop.f32.mrb[0].mxu0
  %v11775 = vadd.f32 %v11422, %v11774
  %v11776 = vpop.f32.mrb[0].mxu0
  %v11777 = vadd.f32 %v11424, %v11776
  %v11778 = vpop.f32.mrb[0].mxu0
  %v11779 = vadd.f32 %v11426, %v11778
  %v11780 = vpop.f32.mrb[0].mxu0
  %v11781 = vadd.f32 %v11428, %v11780
  %11782 = vmatprep.mubr.bf16.mxu0 %v9987
  %11783 = vmatmul.mubr.bf16.gmra.mrb[0].mxu0 %v9986
  %v11784 = vpop.f32.mrb[0].mxu0
  %v11785 = vadd.f32 %v11432, %v11784
  %v11786 = vpop.f32.mrb[0].mxu0
  %v11787 = vadd.f32 %v11434, %v11786
  %v11788 = vpop.f32.mrb[0].mxu0
  %v11789 = vadd.f32 %v11436, %v11788
  %v11790 = vpop.f32.mrb[0].mxu0
  %v11791 = vadd.f32 %v11438, %v11790
  %11792 = vmatprep.mubr.bf16.mxu0 %v9997
  %11793 = vmatmul.mubr.bf16.gmra.mrb[0].mxu0 %v9996
  %v11794 = vpop.f32.mrb[0].mxu0
  %v11795 = vadd.f32 %v11442, %v11794
  %v11796 = vpop.f32.mrb[0].mxu0
  %v11797 = vadd.f32 %v11444, %v11796
  %v11798 = vpop.f32.mrb[0].mxu0
  %v11799 = vadd.f32 %v11446, %v11798
  %v11800 = vpop.f32.mrb[0].mxu0
  %v11801 = vadd.f32 %v11448, %v11800
  %11802 = vmatprep.mubr.bf16.mxu0 %v10007
  %11803 = vmatmul.mubr.bf16.gmra.mrb[0].mxu0 %v10006
  %v11804 = vpop.f32.mrb[0].mxu0
  %v11805 = vadd.f32 %v11452, %v11804
  %v11806 = vpop.f32.mrb[0].mxu0
  %v11807 = vadd.f32 %v11454, %v11806
  %v11808 = vpop.f32.mrb[0].mxu0
  %v11809 = vadd.f32 %v11456, %v11808
  %v11810 = vpop.f32.mrb[0].mxu0
  %v11811 = vadd.f32 %v11458, %v11810
  %11812 = vmatprep.mubr.bf16.mxu0 %v10017
  %11813 = vmatmul.mubr.bf16.gmra.mrb[0].mxu0 %v10016
  %v11814 = vpop.f32.mrb[0].mxu0
  %v11815 = vadd.f32 %v11462, %v11814
  %v11816 = vpop.f32.mrb[0].mxu0
  %v11817 = vadd.f32 %v11464, %v11816
  %v11818 = vpop.f32.mrb[0].mxu0
  %v11819 = vadd.f32 %v11466, %v11818
  %v11820 = vpop.f32.mrb[0].mxu0
  %v11821 = vadd.f32 %v11468, %v11820
  %11822 = vmatprep.mubr.bf16.mxu0 %v10027
  %11823 = vmatmul.mubr.bf16.gmra.mrb[0].mxu0 %v10026
  %v11824 = vpop.f32.mrb[0].mxu0
  %v11825 = vadd.f32 %v11472, %v11824
  %v11826 = vpop.f32.mrb[0].mxu0
  %v11827 = vadd.f32 %v11474, %v11826
  %v11828 = vpop.f32.mrb[0].mxu0
  %v11829 = vadd.f32 %v11476, %v11828
  %v11830 = vpop.f32.mrb[0].mxu0
  %v11831 = vadd.f32 %v11478, %v11830
  %11832 = vdwg.mxu0
  %11833 = vmatprep.subr.bf16.mxu0 %v8414
  %11834 = vmatpush1.bf16.msra.mxu0 %v8413
  %11835 = vmatprep.subr.bf16.mxu0 %v8416
  %11836 = vmatpush1.bf16.msra.mxu0 %v8415
  %11837 = vmatprep.subr.bf16.mxu0 %v8418
  %11838 = vmatpush1.bf16.msra.mxu0 %v8417
  %11839 = vmatprep.subr.bf16.mxu0 %v8420
  %11840 = vmatpush1.bf16.msra.mxu0 %v8419
  %11841 = vmatprep.subr.bf16.mxu0 %v8422
  %11842 = vmatpush1.bf16.msra.mxu0 %v8421
  %11843 = vmatprep.subr.bf16.mxu0 %v8424
  %11844 = vmatpush1.bf16.msra.mxu0 %v8423
  %11845 = vmatprep.subr.bf16.mxu0 %v8426
  %11846 = vmatpush1.bf16.msra.mxu0 %v8425
  %11847 = vmatprep.subr.bf16.mxu0 %v8428
  %11848 = vmatpush1.bf16.msra.mxu0 %v8427
  %11849 = vmatprep.subr.bf16.mxu0 %v10419
  %11850 = vmatpush1.bf16.msra.mxu0 %v10419
  %11851 = vmatprep.subr.bf16.mxu0 0
  %11852 = vmatpush1.bf16.msra.mxu0 0
  %11853 = vmatprep.subr.bf16.mxu0 0
  %11854 = vmatpush1.bf16.msra.mxu0 0
  %11855 = vmatprep.subr.bf16.mxu0 0
  %11856 = vmatpush1.bf16.msra.mxu0 0
  %11857 = vmatprep.subr.bf16.mxu0 0
  %11858 = vmatpush1.bf16.msra.mxu0 0
  %11859 = vmatprep.subr.bf16.mxu0 0
  %11860 = vmatpush1.bf16.msra.mxu0 0
  %11861 = vmatprep.subr.bf16.mxu0 0
  %11862 = vmatpush1.bf16.msra.mxu0 0
  %11863 = vmatprep.subr.bf16.mxu0 0
  %11864 = vmatpush1.bf16.msra.mxu0 0
  %11865 = vmatprep.mubr.bf16.mxu0 %v10320
  %11866 = vmatmul.mubr.bf16.gmra.mrb[0].mxu0 %v9718
  %v11867 = vpop.f32.mrb[0].mxu0
  %v11868 = vadd.f32 %v11515, %v11867
  %v11869 = vpop.f32.mrb[0].mxu0
  %v11870 = vadd.f32 %v11517, %v11869
  %v11871 = vpop.f32.mrb[0].mxu0
  %v11872 = vadd.f32 %v11519, %v11871
  %v11873 = vpop.f32.mrb[0].mxu0
  %v11874 = vadd.f32 %v11521, %v11873
  %11875 = vmatprep.mubr.bf16.mxu0 %v10323
  %11876 = vmatmul.mubr.bf16.gmra.mrb[0].mxu0 %v9728
  %v11877 = vpop.f32.mrb[0].mxu0
  %v11878 = vadd.f32 %v11525, %v11877
  %v11879 = vpop.f32.mrb[0].mxu0
  %v11880 = vadd.f32 %v11527, %v11879
  %v11881 = vpop.f32.mrb[0].mxu0
  %v11882 = vadd.f32 %v11529, %v11881
  %v11883 = vpop.f32.mrb[0].mxu0
  %v11884 = vadd.f32 %v11531, %v11883
  %11885 = vmatprep.mubr.bf16.mxu0 %v10326
  %11886 = vmatmul.mubr.bf16.gmra.mrb[0].mxu0 %v9738
  %v11887 = vpop.f32.mrb[0].mxu0
  %v11888 = vadd.f32 %v11535, %v11887
  %v11889 = vpop.f32.mrb[0].mxu0
  %v11890 = vadd.f32 %v11537, %v11889
  %v11891 = vpop.f32.mrb[0].mxu0
  %v11892 = vadd.f32 %v11539, %v11891
  %v11893 = vpop.f32.mrb[0].mxu0
  %v11894 = vadd.f32 %v11541, %v11893
  %11895 = vmatprep.mubr.bf16.mxu0 %v10329
  %11896 = vmatmul.mubr.bf16.gmra.mrb[0].mxu0 %v9748
  %v11897 = vpop.f32.mrb[0].mxu0
  %v11898 = vadd.f32 %v11545, %v11897
  %v11899 = vpop.f32.mrb[0].mxu0
  %v11900 = vadd.f32 %v11547, %v11899
  %v11901 = vpop.f32.mrb[0].mxu0
  %v11902 = vadd.f32 %v11549, %v11901
  %v11903 = vpop.f32.mrb[0].mxu0
  %v11904 = vadd.f32 %v11551, %v11903
  %11905 = vmatprep.mubr.bf16.mxu0 %v10332
  %11906 = vmatmul.mubr.bf16.gmra.mrb[0].mxu0 %v9758
  %v11907 = vpop.f32.mrb[0].mxu0
  %v11908 = vadd.f32 %v11555, %v11907
  %v11909 = vpop.f32.mrb[0].mxu0
  %v11910 = vadd.f32 %v11557, %v11909
  %v11911 = vpop.f32.mrb[0].mxu0
  %v11912 = vadd.f32 %v11559, %v11911
  %v11913 = vpop.f32.mrb[0].mxu0
  %v11914 = vadd.f32 %v11561, %v11913
  %11915 = vmatprep.mubr.bf16.mxu0 %v10335
  %11916 = vmatmul.mubr.bf16.gmra.mrb[0].mxu0 %v9768
  %v11917 = vpop.f32.mrb[0].mxu0
  %v11918 = vadd.f32 %v11565, %v11917
  %v11919 = vpop.f32.mrb[0].mxu0
  %v11920 = vadd.f32 %v11567, %v11919
  %v11921 = vpop.f32.mrb[0].mxu0
  %v11922 = vadd.f32 %v11569, %v11921
  %v11923 = vpop.f32.mrb[0].mxu0
  %v11924 = vadd.f32 %v11571, %v11923
  %11925 = vmatprep.mubr.bf16.mxu0 %v10338
  %11926 = vmatmul.mubr.bf16.gmra.mrb[0].mxu0 %v9778
  %v11927 = vpop.f32.mrb[0].mxu0
  %v11928 = vadd.f32 %v11575, %v11927
  %v11929 = vpop.f32.mrb[0].mxu0
  %v11930 = vadd.f32 %v11577, %v11929
  %v11931 = vpop.f32.mrb[0].mxu0
  %v11932 = vadd.f32 %v11579, %v11931
  %v11933 = vpop.f32.mrb[0].mxu0
  %v11934 = vadd.f32 %v11581, %v11933
  %11935 = vmatprep.mubr.bf16.mxu0 %v10341
  %11936 = vmatmul.mubr.bf16.gmra.mrb[0].mxu0 %v9788
  %v11937 = vpop.f32.mrb[0].mxu0
  %v11938 = vadd.f32 %v11585, %v11937
  %v11939 = vpop.f32.mrb[0].mxu0
  %v11940 = vadd.f32 %v11587, %v11939
  %v11941 = vpop.f32.mrb[0].mxu0
  %v11942 = vadd.f32 %v11589, %v11941
  %v11943 = vpop.f32.mrb[0].mxu0
  %v11944 = vadd.f32 %v11591, %v11943
  %11945 = vmatprep.mubr.bf16.mxu0 %v10344
  %11946 = vmatmul.mubr.bf16.gmra.mrb[0].mxu0 %v9798
  %v11947 = vpop.f32.mrb[0].mxu0
  %v11948 = vadd.f32 %v11595, %v11947
  %v11949 = vpop.f32.mrb[0].mxu0
  %v11950 = vadd.f32 %v11597, %v11949
  %v11951 = vpop.f32.mrb[0].mxu0
  %v11952 = vadd.f32 %v11599, %v11951
  %v11953 = vpop.f32.mrb[0].mxu0
  %v11954 = vadd.f32 %v11601, %v11953
  %11955 = vmatprep.mubr.bf16.mxu0 %v10347
  %11956 = vmatmul.mubr.bf16.gmra.mrb[0].mxu0 %v9808
  %v11957 = vpop.f32.mrb[0].mxu0
  %v11958 = vadd.f32 %v11605, %v11957
  %v11959 = vpop.f32.mrb[0].mxu0
  %v11960 = vadd.f32 %v11607, %v11959
  %v11961 = vpop.f32.mrb[0].mxu0
  %v11962 = vadd.f32 %v11609, %v11961
  %v11963 = vpop.f32.mrb[0].mxu0
  %v11964 = vadd.f32 %v11611, %v11963
  %11965 = vmatprep.mubr.bf16.mxu0 %v10350
  %11966 = vmatmul.mubr.bf16.gmra.mrb[0].mxu0 %v9818
  %v11967 = vpop.f32.mrb[0].mxu0
  %v11968 = vadd.f32 %v11615, %v11967
  %v11969 = vpop.f32.mrb[0].mxu0
  %v11970 = vadd.f32 %v11617, %v11969
  %v11971 = vpop.f32.mrb[0].mxu0
  %v11972 = vadd.f32 %v11619, %v11971
  %v11973 = vpop.f32.mrb[0].mxu0
  %v11974 = vadd.f32 %v11621, %v11973
  %11975 = vmatprep.mubr.bf16.mxu0 %v10353
  %11976 = vmatmul.mubr.bf16.gmra.mrb[0].mxu0 %v9828
  %v11977 = vpop.f32.mrb[0].mxu0
  %v11978 = vadd.f32 %v11625, %v11977
  %v11979 = vpop.f32.mrb[0].mxu0
  %v11980 = vadd.f32 %v11627, %v11979
  %v11981 = vpop.f32.mrb[0].mxu0
  %v11982 = vadd.f32 %v11629, %v11981
  %v11983 = vpop.f32.mrb[0].mxu0
  %v11984 = vadd.f32 %v11631, %v11983
  %11985 = vmatprep.mubr.bf16.mxu0 %v10356
  %11986 = vmatmul.mubr.bf16.gmra.mrb[0].mxu0 %v9838
  %v11987 = vpop.f32.mrb[0].mxu0
  %v11988 = vadd.f32 %v11635, %v11987
  %v11989 = vpop.f32.mrb[0].mxu0
  %v11990 = vadd.f32 %v11637, %v11989
  %v11991 = vpop.f32.mrb[0].mxu0
  %v11992 = vadd.f32 %v11639, %v11991
  %v11993 = vpop.f32.mrb[0].mxu0
  %v11994 = vadd.f32 %v11641, %v11993
  %11995 = vmatprep.mubr.bf16.mxu0 %v10359
  %11996 = vmatmul.mubr.bf16.gmra.mrb[0].mxu0 %v9848
  %v11997 = vpop.f32.mrb[0].mxu0
  %v11998 = vadd.f32 %v11645, %v11997
  %v11999 = vpop.f32.mrb[0].mxu0
  %v12000 = vadd.f32 %v11647, %v11999
  %v12001 = vpop.f32.mrb[0].mxu0
  %v12002 = vadd.f32 %v11649, %v12001
  %v12003 = vpop.f32.mrb[0].mxu0
  %v12004 = vadd.f32 %v11651, %v12003
  %12005 = vmatprep.mubr.bf16.mxu0 %v10362
  %12006 = vmatmul.mubr.bf16.gmra.mrb[0].mxu0 %v9858
  %v12007 = vpop.f32.mrb[0].mxu0
  %v12008 = vadd.f32 %v11655, %v12007
  %v12009 = vpop.f32.mrb[0].mxu0
  %v12010 = vadd.f32 %v11657, %v12009
  %v12011 = vpop.f32.mrb[0].mxu0
  %v12012 = vadd.f32 %v11659, %v12011
  %v12013 = vpop.f32.mrb[0].mxu0
  %v12014 = vadd.f32 %v11661, %v12013
  %12015 = vmatprep.mubr.bf16.mxu0 %v10365
  %12016 = vmatmul.mubr.bf16.gmra.mrb[0].mxu0 %v9868
  %v12017 = vpop.f32.mrb[0].mxu0
  %v12018 = vadd.f32 %v11665, %v12017
  %v12019 = vpop.f32.mrb[0].mxu0
  %v12020 = vadd.f32 %v11667, %v12019
  %v12021 = vpop.f32.mrb[0].mxu0
  %v12022 = vadd.f32 %v11669, %v12021
  %v12023 = vpop.f32.mrb[0].mxu0
  %v12024 = vadd.f32 %v11671, %v12023
  %12025 = vmatprep.mubr.bf16.mxu0 %v10368
  %12026 = vmatmul.mubr.bf16.gmra.mrb[0].mxu0 %v9878
  %v12027 = vpop.f32.mrb[0].mxu0
  %v12028 = vadd.f32 %v11675, %v12027
  %v12029 = vpop.f32.mrb[0].mxu0
  %v12030 = vadd.f32 %v11677, %v12029
  %v12031 = vpop.f32.mrb[0].mxu0
  %v12032 = vadd.f32 %v11679, %v12031
  %v12033 = vpop.f32.mrb[0].mxu0
  %v12034 = vadd.f32 %v11681, %v12033
  %12035 = vmatprep.mubr.bf16.mxu0 %v10371
  %12036 = vmatmul.mubr.bf16.gmra.mrb[0].mxu0 %v9888
  %v12037 = vpop.f32.mrb[0].mxu0
  %v12038 = vadd.f32 %v11685, %v12037
  %v12039 = vpop.f32.mrb[0].mxu0
  %v12040 = vadd.f32 %v11687, %v12039
  %v12041 = vpop.f32.mrb[0].mxu0
  %v12042 = vadd.f32 %v11689, %v12041
  %v12043 = vpop.f32.mrb[0].mxu0
  %v12044 = vadd.f32 %v11691, %v12043
  %12045 = vmatprep.mubr.bf16.mxu0 %v10374
  %12046 = vmatmul.mubr.bf16.gmra.mrb[0].mxu0 %v9898
  %v12047 = vpop.f32.mrb[0].mxu0
  %v12048 = vadd.f32 %v11695, %v12047
  %v12049 = vpop.f32.mrb[0].mxu0
  %v12050 = vadd.f32 %v11697, %v12049
  %v12051 = vpop.f32.mrb[0].mxu0
  %v12052 = vadd.f32 %v11699, %v12051
  %v12053 = vpop.f32.mrb[0].mxu0
  %v12054 = vadd.f32 %v11701, %v12053
  %12055 = vmatprep.mubr.bf16.mxu0 %v10377
  %12056 = vmatmul.mubr.bf16.gmra.mrb[0].mxu0 %v9908
  %v12057 = vpop.f32.mrb[0].mxu0
  %v12058 = vadd.f32 %v11705, %v12057
  %v12059 = vpop.f32.mrb[0].mxu0
  %v12060 = vadd.f32 %v11707, %v12059
  %v12061 = vpop.f32.mrb[0].mxu0
  %v12062 = vadd.f32 %v11709, %v12061
  %v12063 = vpop.f32.mrb[0].mxu0
  %v12064 = vadd.f32 %v11711, %v12063
  %12065 = vmatprep.mubr.bf16.mxu0 %v10380
  %12066 = vmatmul.mubr.bf16.gmra.mrb[0].mxu0 %v9918
  %v12067 = vpop.f32.mrb[0].mxu0
  %v12068 = vadd.f32 %v11715, %v12067
  %v12069 = vpop.f32.mrb[0].mxu0
  %v12070 = vadd.f32 %v11717, %v12069
  %v12071 = vpop.f32.mrb[0].mxu0
  %v12072 = vadd.f32 %v11719, %v12071
  %v12073 = vpop.f32.mrb[0].mxu0
  %v12074 = vadd.f32 %v11721, %v12073
  %12075 = vmatprep.mubr.bf16.mxu0 %v10383
  %12076 = vmatmul.mubr.bf16.gmra.mrb[0].mxu0 %v9928
  %v12077 = vpop.f32.mrb[0].mxu0
  %v12078 = vadd.f32 %v11725, %v12077
  %v12079 = vpop.f32.mrb[0].mxu0
  %v12080 = vadd.f32 %v11727, %v12079
  %v12081 = vpop.f32.mrb[0].mxu0
  %v12082 = vadd.f32 %v11729, %v12081
  %v12083 = vpop.f32.mrb[0].mxu0
  %v12084 = vadd.f32 %v11731, %v12083
  %12085 = vmatprep.mubr.bf16.mxu0 %v10386
  %12086 = vmatmul.mubr.bf16.gmra.mrb[0].mxu0 %v9938
  %v12087 = vpop.f32.mrb[0].mxu0
  %v12088 = vadd.f32 %v11735, %v12087
  %v12089 = vpop.f32.mrb[0].mxu0
  %v12090 = vadd.f32 %v11737, %v12089
  %v12091 = vpop.f32.mrb[0].mxu0
  %v12092 = vadd.f32 %v11739, %v12091
  %v12093 = vpop.f32.mrb[0].mxu0
  %v12094 = vadd.f32 %v11741, %v12093
  %12095 = vmatprep.mubr.bf16.mxu0 %v10389
  %12096 = vmatmul.mubr.bf16.gmra.mrb[0].mxu0 %v9948
  %v12097 = vpop.f32.mrb[0].mxu0
  %v12098 = vadd.f32 %v11745, %v12097
  %v12099 = vpop.f32.mrb[0].mxu0
  %v12100 = vadd.f32 %v11747, %v12099
  %v12101 = vpop.f32.mrb[0].mxu0
  %v12102 = vadd.f32 %v11749, %v12101
  %v12103 = vpop.f32.mrb[0].mxu0
  %v12104 = vadd.f32 %v11751, %v12103
  %12105 = vmatprep.mubr.bf16.mxu0 %v10392
  %12106 = vmatmul.mubr.bf16.gmra.mrb[0].mxu0 %v9958
  %v12107 = vpop.f32.mrb[0].mxu0
  %v12108 = vadd.f32 %v11755, %v12107
  %v12109 = vpop.f32.mrb[0].mxu0
  %v12110 = vadd.f32 %v11757, %v12109
  %v12111 = vpop.f32.mrb[0].mxu0
  %v12112 = vadd.f32 %v11759, %v12111
  %v12113 = vpop.f32.mrb[0].mxu0
  %v12114 = vadd.f32 %v11761, %v12113
  %12115 = vmatprep.mubr.bf16.mxu0 %v10395
  %12116 = vmatmul.mubr.bf16.gmra.mrb[0].mxu0 %v9968
  %v12117 = vpop.f32.mrb[0].mxu0
  %v12118 = vadd.f32 %v11765, %v12117
  %v12119 = vpop.f32.mrb[0].mxu0
  %v12120 = vadd.f32 %v11767, %v12119
  %v12121 = vpop.f32.mrb[0].mxu0
  %v12122 = vadd.f32 %v11769, %v12121
  %v12123 = vpop.f32.mrb[0].mxu0
  %v12124 = vadd.f32 %v11771, %v12123
  %12125 = vmatprep.mubr.bf16.mxu0 %v10398
  %12126 = vmatmul.mubr.bf16.gmra.mrb[0].mxu0 %v9978
  %v12127 = vpop.f32.mrb[0].mxu0
  %v12128 = vadd.f32 %v11775, %v12127
  %v12129 = vpop.f32.mrb[0].mxu0
  %v12130 = vadd.f32 %v11777, %v12129
  %v12131 = vpop.f32.mrb[0].mxu0
  %v12132 = vadd.f32 %v11779, %v12131
  %v12133 = vpop.f32.mrb[0].mxu0
  %v12134 = vadd.f32 %v11781, %v12133
  %12135 = vmatprep.mubr.bf16.mxu0 %v10401
  %12136 = vmatmul.mubr.bf16.gmra.mrb[0].mxu0 %v9988
  %v12137 = vpop.f32.mrb[0].mxu0
  %v12138 = vadd.f32 %v11785, %v12137
  %v12139 = vpop.f32.mrb[0].mxu0
  %v12140 = vadd.f32 %v11787, %v12139
  %v12141 = vpop.f32.mrb[0].mxu0
  %v12142 = vadd.f32 %v11789, %v12141
  %v12143 = vpop.f32.mrb[0].mxu0
  %v12144 = vadd.f32 %v11791, %v12143
  %12145 = vmatprep.mubr.bf16.mxu0 %v10404
  %12146 = vmatmul.mubr.bf16.gmra.mrb[0].mxu0 %v9998
  %v12147 = vpop.f32.mrb[0].mxu0
  %v12148 = vadd.f32 %v11795, %v12147
  %v12149 = vpop.f32.mrb[0].mxu0
  %v12150 = vadd.f32 %v11797, %v12149
  %v12151 = vpop.f32.mrb[0].mxu0
  %v12152 = vadd.f32 %v11799, %v12151
  %v12153 = vpop.f32.mrb[0].mxu0
  %v12154 = vadd.f32 %v11801, %v12153
  %12155 = vmatprep.mubr.bf16.mxu0 %v10407
  %12156 = vmatmul.mubr.bf16.gmra.mrb[0].mxu0 %v10008
  %v12157 = vpop.f32.mrb[0].mxu0
  %v12158 = vadd.f32 %v11805, %v12157
  %v12159 = vpop.f32.mrb[0].mxu0
  %v12160 = vadd.f32 %v11807, %v12159
  %v12161 = vpop.f32.mrb[0].mxu0
  %v12162 = vadd.f32 %v11809, %v12161
  %v12163 = vpop.f32.mrb[0].mxu0
  %v12164 = vadd.f32 %v11811, %v12163
  %12165 = vmatprep.mubr.bf16.mxu0 %v10410
  %12166 = vmatmul.mubr.bf16.gmra.mrb[0].mxu0 %v10018
  %v12167 = vpop.f32.mrb[0].mxu0
  %v12168 = vadd.f32 %v11815, %v12167
  %v12169 = vpop.f32.mrb[0].mxu0
  %v12170 = vadd.f32 %v11817, %v12169
  %v12171 = vpop.f32.mrb[0].mxu0
  %v12172 = vadd.f32 %v11819, %v12171
  %v12173 = vpop.f32.mrb[0].mxu0
  %v12174 = vadd.f32 %v11821, %v12173
  %12175 = vmatprep.mubr.bf16.mxu0 %v10413
  %12176 = vmatmul.mubr.bf16.gmra.mrb[0].mxu0 %v10028
  %v12177 = vpop.f32.mrb[0].mxu0
  %v12178 = vadd.f32 %v11825, %v12177
  %v12179 = vpop.f32.mrb[0].mxu0
  %v12180 = vadd.f32 %v11827, %v12179
  %v12181 = vpop.f32.mrb[0].mxu0
  %v12182 = vadd.f32 %v11829, %v12181
  %v12183 = vpop.f32.mrb[0].mxu0
  %v12184 = vadd.f32 %v11831, %v12183
  %12185 = vdwg.mxu0
  %v12186 = vmax.f32 %v11868, %v11948
  %v12187 = vmax.f32 %v11870, %v11950
  %v12188 = vmax.f32 %v11872, %v11952
  %v12189 = vmax.f32 %v11874, %v11954
  %v12190 = vmax.f32 %v11878, %v11958
  %v12191 = vmax.f32 %v11880, %v11960
  %v12192 = vmax.f32 %v11882, %v11962
  %v12193 = vmax.f32 %v11884, %v11964
  %v12194 = vmax.f32 %v11888, %v11968
  %v12195 = vmax.f32 %v11890, %v11970
  %v12196 = vmax.f32 %v11892, %v11972
  %v12197 = vmax.f32 %v11894, %v11974
  %v12198 = vmax.f32 %v11898, %v11978
  %v12199 = vmax.f32 %v11900, %v11980
  %v12200 = vmax.f32 %v11902, %v11982
  %v12201 = vmax.f32 %v11904, %v11984
  %v12202 = vmax.f32 %v11908, %v11988
  %v12203 = vmax.f32 %v11910, %v11990
  %v12204 = vmax.f32 %v11912, %v11992
  %v12205 = vmax.f32 %v11914, %v11994
  %v12206 = vmax.f32 %v11918, %v11998
  %v12207 = vmax.f32 %v11920, %v12000
  %v12208 = vmax.f32 %v11922, %v12002
  %v12209 = vmax.f32 %v11924, %v12004
  %v12210 = vmax.f32 %v11928, %v12008
  %v12211 = vmax.f32 %v11930, %v12010
  %v12212 = vmax.f32 %v11932, %v12012
  %v12213 = vmax.f32 %v11934, %v12014
  %v12214 = vmax.f32 %v11938, %v12018
  %v12215 = vmax.f32 %v11940, %v12020
  %v12216 = vmax.f32 %v11942, %v12022
  %v12217 = vmax.f32 %v11944, %v12024
  %v12218 = vmax.f32 %v12186, %v12202
  %v12219 = vmax.f32 %v12187, %v12203
  %v12220 = vmax.f32 %v12188, %v12204
  %v12221 = vmax.f32 %v12189, %v12205
  %v12222 = vmax.f32 %v12190, %v12206
  %v12223 = vmax.f32 %v12191, %v12207
  %v12224 = vmax.f32 %v12192, %v12208
  %v12225 = vmax.f32 %v12193, %v12209
  %v12226 = vmax.f32 %v12194, %v12210
  %v12227 = vmax.f32 %v12195, %v12211
  %v12228 = vmax.f32 %v12196, %v12212
  %v12229 = vmax.f32 %v12197, %v12213
  %v12230 = vmax.f32 %v12198, %v12214
  %v12231 = vmax.f32 %v12199, %v12215
  %v12232 = vmax.f32 %v12200, %v12216
  %v12233 = vmax.f32 %v12201, %v12217
  %v12234 = vmax.f32 %v12218, 0.0
  %v12235 = vmax.f32 %v12219, 0.0
  %v12236 = vmax.f32 %v12220, 0.0
  %v12237 = vmax.f32 %v12221, 0.0
  %v12238 = vmax.f32 %v12222, 0.0
  %v12239 = vmax.f32 %v12223, 0.0
  %v12240 = vmax.f32 %v12224, 0.0
  %v12241 = vmax.f32 %v12225, 0.0
  %v12242 = vmax.f32 %v12226, 0.0
  %v12243 = vmax.f32 %v12227, 0.0
  %v12244 = vmax.f32 %v12228, 0.0
  %v12245 = vmax.f32 %v12229, 0.0
  %v12246 = vmax.f32 %v12230, 0.0
  %v12247 = vmax.f32 %v12231, 0.0
  %v12248 = vmax.f32 %v12232, 0.0
  %v12249 = vmax.f32 %v12233, 0.0
  %v12250 = vmax.f32 %v12028, %v12108
  %v12251 = vmax.f32 %v12030, %v12110
  %v12252 = vmax.f32 %v12032, %v12112
  %v12253 = vmax.f32 %v12034, %v12114
  %v12254 = vmax.f32 %v12038, %v12118
  %v12255 = vmax.f32 %v12040, %v12120
  %v12256 = vmax.f32 %v12042, %v12122
  %v12257 = vmax.f32 %v12044, %v12124
  %v12258 = vmax.f32 %v12048, %v12128
  %v12259 = vmax.f32 %v12050, %v12130
  %v12260 = vmax.f32 %v12052, %v12132
  %v12261 = vmax.f32 %v12054, %v12134
  %v12262 = vmax.f32 %v12058, %v12138
  %v12263 = vmax.f32 %v12060, %v12140
  %v12264 = vmax.f32 %v12062, %v12142
  %v12265 = vmax.f32 %v12064, %v12144
  %v12266 = vmax.f32 %v12068, %v12148
  %v12267 = vmax.f32 %v12070, %v12150
  %v12268 = vmax.f32 %v12072, %v12152
  %v12269 = vmax.f32 %v12074, %v12154
  %v12270 = vmax.f32 %v12078, %v12158
  %v12271 = vmax.f32 %v12080, %v12160
  %v12272 = vmax.f32 %v12082, %v12162
  %v12273 = vmax.f32 %v12084, %v12164
  %v12274 = vmax.f32 %v12088, %v12168
  %v12275 = vmax.f32 %v12090, %v12170
  %v12276 = vmax.f32 %v12092, %v12172
  %v12277 = vmax.f32 %v12094, %v12174
  %v12278 = vmax.f32 %v12098, %v12178
  %v12279 = vmax.f32 %v12100, %v12180
  %v12280 = vmax.f32 %v12102, %v12182
  %v12281 = vmax.f32 %v12104, %v12184
  %v12282 = vmax.f32 %v12250, %v12266
  %v12283 = vmax.f32 %v12251, %v12267
  %v12284 = vmax.f32 %v12252, %v12268
  %v12285 = vmax.f32 %v12253, %v12269
  %v12286 = vmax.f32 %v12254, %v12270
  %v12287 = vmax.f32 %v12255, %v12271
  %v12288 = vmax.f32 %v12256, %v12272
  %v12289 = vmax.f32 %v12257, %v12273
  %v12290 = vmax.f32 %v12258, %v12274
  %v12291 = vmax.f32 %v12259, %v12275
  %v12292 = vmax.f32 %v12260, %v12276
  %v12293 = vmax.f32 %v12261, %v12277
  %v12294 = vmax.f32 %v12262, %v12278
  %v12295 = vmax.f32 %v12263, %v12279
  %v12296 = vmax.f32 %v12264, %v12280
  %v12297 = vmax.f32 %v12265, %v12281
  %v12298 = vmax.f32 %v12282, 0.0
  %v12299 = vmax.f32 %v12283, 0.0
  %v12300 = vmax.f32 %v12284, 0.0
  %v12301 = vmax.f32 %v12285, 0.0
  %v12302 = vmax.f32 %v12286, 0.0
  %v12303 = vmax.f32 %v12287, 0.0
  %v12304 = vmax.f32 %v12288, 0.0
  %v12305 = vmax.f32 %v12289, 0.0
  %v12306 = vmax.f32 %v12290, 0.0
  %v12307 = vmax.f32 %v12291, 0.0
  %v12308 = vmax.f32 %v12292, 0.0
  %v12309 = vmax.f32 %v12293, 0.0
  %v12310 = vmax.f32 %v12294, 0.0
  %v12311 = vmax.f32 %v12295, 0.0
  %v12312 = vmax.f32 %v12296, 0.0
  %v12313 = vmax.f32 %v12297, 0.0
  %v12314 = vpack.c.bf16 %v12236, %v12234
  %v12315 = vpack.c.bf16 %v12237, %v12235
  %v12316 = vpack.c.bf16 %v12240, %v12238
  %v12317 = vpack.c.bf16 %v12241, %v12239
  %v12318 = vpack.c.bf16 %v12244, %v12242
  %v12319 = vpack.c.bf16 %v12245, %v12243
  %v12320 = vpack.c.bf16 %v12248, %v12246
  %v12321 = vpack.c.bf16 %v12249, %v12247
  %v12322 = vpack.c.bf16 %v12300, %v12298
  %v12323 = vpack.c.bf16 %v12301, %v12299
  %v12324 = vpack.c.bf16 %v12304, %v12302
  %v12325 = vpack.c.bf16 %v12305, %v12303
  %v12326 = vpack.c.bf16 %v12308, %v12306
  %v12327 = vpack.c.bf16 %v12309, %v12307
  %v12328 = vpack.c.bf16 %v12312, %v12310
  %v12329 = vpack.c.bf16 %v12313, %v12311
  %v12330 = vld [vmem:[%s3] sm:$0xff]
  %v12331 = vld [vmem:[%s3 + $0x8] sm:$0xff]
  %v12332 = vld [vmem:[%s3 + $0x10] sm:$0xff]
  %v12333 = vld [vmem:[%s3 + $0x18] sm:$0xff]
  %v12334 = vld [vmem:[%s3 + $0x20] sm:$0xff]
  %v12335 = vld [vmem:[%s3 + $0x28] sm:$0xff]
  %v12336 = vld [vmem:[%s3 + $0x30] sm:$0xff]
  %v12337 = vld [vmem:[%s3 + $0x38] sm:$0xff]
  %v12346 = vunpack.c.l.b16 %v12330
  %v12347 = vunpack.c.h.b16 %v12330
  %v12348 = vunpack.c.l.b16 %v12331
  %v12349 = vunpack.c.h.b16 %v12331
  %v12350 = vunpack.c.l.b16 %v12332
  %v12351 = vunpack.c.h.b16 %v12332
  %v12352 = vunpack.c.l.b16 %v12333
  %v12353 = vunpack.c.h.b16 %v12333
  %v12354 = vunpack.c.l.b16 %v12334
  %v12355 = vunpack.c.h.b16 %v12334
  %v12356 = vunpack.c.l.b16 %v12335
  %v12357 = vunpack.c.h.b16 %v12335
  %v12358 = vunpack.c.l.b16 %v12336
  %v12359 = vunpack.c.h.b16 %v12336
  %v12360 = vunpack.c.l.b16 %v12337
  %v12361 = vunpack.c.h.b16 %v12337
  %v12362 = vpack.c.b16 %v12348, %v12346
  %v12363 = vpack.c.b16 %v12349, %v12347
  %v12364 = vpack.c.b16 %v12352, %v12350
  %v12365 = vpack.c.b16 %v12353, %v12351
  %v12366 = vpack.c.b16 %v12356, %v12354
  %v12367 = vpack.c.b16 %v12357, %v12355
  %v12368 = vpack.c.b16 %v12360, %v12358
  %v12369 = vpack.c.b16 %v12361, %v12359
  %v12375 = vsel %vm10318, %v12363, 0
  %v12378 = vsel %vm10318, %v12365, 0
  %v12381 = vsel %vm10318, %v12367, 0
  %v12384 = vsel %vm10318, %v12369, 0
  %12386 = vmatprep.subr.bf16.mxu0 %v12315
  %12387 = vmatpush1.bf16.msra.mxu0 %v12314
  %12388 = vmatprep.subr.bf16.mxu0 %v12317
  %12389 = vmatpush1.bf16.msra.mxu0 %v12316
  %12390 = vmatprep.subr.bf16.mxu0 %v12319
  %12391 = vmatpush1.bf16.msra.mxu0 %v12318
  %12392 = vmatprep.subr.bf16.mxu0 %v12321
  %12393 = vmatpush1.bf16.msra.mxu0 %v12320
  %12394 = vmatprep.subr.bf16.mxu0 %v12323
  %12395 = vmatpush1.bf16.msra.mxu0 %v12322
  %12396 = vmatprep.subr.bf16.mxu0 %v12325
  %12397 = vmatpush1.bf16.msra.mxu0 %v12324
  %12398 = vmatprep.subr.bf16.mxu0 %v12327
  %12399 = vmatpush1.bf16.msra.mxu0 %v12326
  %12400 = vmatprep.subr.bf16.mxu0 %v12329
  %12401 = vmatpush1.bf16.msra.mxu0 %v12328
  %12402 = vmatprep.subr.bf16.mxu0 %v10419
  %12403 = vmatpush1.bf16.msra.mxu0 %v10419
  %12404 = vmatprep.subr.bf16.mxu0 0
  %12405 = vmatpush1.bf16.msra.mxu0 0
  %12406 = vmatprep.subr.bf16.mxu0 0
  %12407 = vmatpush1.bf16.msra.mxu0 0
  %12408 = vmatprep.subr.bf16.mxu0 0
  %12409 = vmatpush1.bf16.msra.mxu0 0
  %12410 = vmatprep.subr.bf16.mxu0 0
  %12411 = vmatpush1.bf16.msra.mxu0 0
  %12412 = vmatprep.subr.bf16.mxu0 0
  %12413 = vmatpush1.bf16.msra.mxu0 0
  %12414 = vmatprep.subr.bf16.mxu0 0
  %12415 = vmatpush1.bf16.msra.mxu0 0
  %12416 = vmatprep.subr.bf16.mxu0 0
  %12417 = vmatpush1.bf16.msra.mxu0 0
  %12418 = vmatprep.mubr.bf16.mxu0 %v12375
  %12419 = vmatmul.mubr.bf16.gmra.mrb[0].mxu0 %v12362
  %v12420 = vpop.f32.mrb[0].mxu0
  %v12421 = vadd.f32 0.0, %v12420
  %v12422 = vpop.f32.mrb[0].mxu0
  %v12423 = vadd.f32 0.0, %v12422
  %v12424 = vpop.f32.mrb[0].mxu0
  %v12425 = vadd.f32 0.0, %v12424
  %v12426 = vpop.f32.mrb[0].mxu0
  %v12427 = vadd.f32 0.0, %v12426
  %12428 = vmatprep.mubr.bf16.mxu0 %v12378
  %12429 = vmatmul.mubr.bf16.gmra.mrb[0].mxu0 %v12364
  %v12430 = vpop.f32.mrb[0].mxu0
  %v12431 = vadd.f32 0.0, %v12430
  %v12432 = vpop.f32.mrb[0].mxu0
  %v12433 = vadd.f32 0.0, %v12432
  %v12434 = vpop.f32.mrb[0].mxu0
  %v12435 = vadd.f32 0.0, %v12434
  %v12436 = vpop.f32.mrb[0].mxu0
  %v12437 = vadd.f32 0.0, %v12436
  %12438 = vmatprep.mubr.bf16.mxu0 %v12381
  %12439 = vmatmul.mubr.bf16.gmra.mrb[0].mxu0 %v12366
  %v12440 = vpop.f32.mrb[0].mxu0
  %v12441 = vadd.f32 0.0, %v12440
  %v12442 = vpop.f32.mrb[0].mxu0
  %v12443 = vadd.f32 0.0, %v12442
  %v12444 = vpop.f32.mrb[0].mxu0
  %v12445 = vadd.f32 0.0, %v12444
  %v12446 = vpop.f32.mrb[0].mxu0
  %v12447 = vadd.f32 0.0, %v12446
  %12448 = vmatprep.mubr.bf16.mxu0 %v12384
  %12449 = vmatmul.mubr.bf16.gmra.mrb[0].mxu0 %v12368
  %v12450 = vpop.f32.mrb[0].mxu0
  %v12451 = vadd.f32 0.0, %v12450
  %v12452 = vpop.f32.mrb[0].mxu0
  %v12453 = vadd.f32 0.0, %v12452
  %v12454 = vpop.f32.mrb[0].mxu0
  %v12455 = vadd.f32 0.0, %v12454
  %v12456 = vpop.f32.mrb[0].mxu0
  %v12457 = vadd.f32 0.0, %v12456
  %12458 = vdwg.mxu0
  %v12459 = vmax.f32 %v12421, 0.0
  %v12460 = vmax.f32 %v12423, 0.0
  %v12461 = vmax.f32 %v12425, 0.0
  %v12462 = vmax.f32 %v12427, 0.0
  %v12463 = vmax.f32 %v12431, 0.0
  %v12464 = vmax.f32 %v12433, 0.0
  %v12465 = vmax.f32 %v12435, 0.0
  %v12466 = vmax.f32 %v12437, 0.0
  %v12467 = vmax.f32 %v12441, 0.0
  %v12468 = vmax.f32 %v12443, 0.0
  %v12469 = vmax.f32 %v12445, 0.0
  %v12470 = vmax.f32 %v12447, 0.0
  %v12471 = vmax.f32 %v12451, 0.0
  %v12472 = vmax.f32 %v12453, 0.0
  %v12473 = vmax.f32 %v12455, 0.0
  %v12474 = vmax.f32 %v12457, 0.0
  %v12475 = vpack.c.bf16 %v12461, %v12459
  %v12476 = vpack.c.bf16 %v12462, %v12460
  %v12477 = vpack.c.bf16 %v12465, %v12463
  %v12478 = vpack.c.bf16 %v12466, %v12464
  %v12479 = vpack.c.bf16 %v12469, %v12467
  %v12480 = vpack.c.bf16 %v12470, %v12468
  %v12481 = vpack.c.bf16 %v12473, %v12471
  %v12482 = vpack.c.bf16 %v12474, %v12472
  %v12483 = vld [vmem:[%s4] sm:$0xf]
  %v12484 = vld [vmem:[%s4 + $0x4] sm:$0xf]
  %v12485 = vld [vmem:[%s4 + $0x8] sm:$0xf]
  %v12486 = vld [vmem:[%s4 + $0xc] sm:$0xf]
  %v12487 = vld [vmem:[%s4 + $0x10] sm:$0xf]
  %v12488 = vld [vmem:[%s4 + $0x14] sm:$0xf]
  %v12489 = vld [vmem:[%s4 + $0x18] sm:$0xf]
  %v12490 = vld [vmem:[%s4 + $0x1c] sm:$0xf]
  %v12491 = vld [vmem:[%s4 + $0x20] sm:$0xf]
  %v12492 = vld [vmem:[%s4 + $0x24] sm:$0xf]
  %v12493 = vld [vmem:[%s4 + $0x28] sm:$0xf]
  %v12494 = vld [vmem:[%s4 + $0x2c] sm:$0xf]
  %v12495 = vld [vmem:[%s4 + $0x30] sm:$0xf]
  %v12496 = vld [vmem:[%s4 + $0x34] sm:$0xf]
  %v12497 = vld [vmem:[%s4 + $0x38] sm:$0xf]
  %v12498 = vld [vmem:[%s4 + $0x3c] sm:$0xf]
  %v12499 = vld [vmem:[%s4 + $0x40] sm:$0xf]
  %v12500 = vld [vmem:[%s4 + $0x44] sm:$0xf]
  %v12501 = vld [vmem:[%s4 + $0x48] sm:$0xf]
  %v12502 = vld [vmem:[%s4 + $0x4c] sm:$0xf]
  %v12503 = vld [vmem:[%s4 + $0x50] sm:$0xf]
  %v12504 = vld [vmem:[%s4 + $0x54] sm:$0xf]
  %v12505 = vld [vmem:[%s4 + $0x58] sm:$0xf]
  %v12506 = vld [vmem:[%s4 + $0x5c] sm:$0xf]
  %v12507 = vld [vmem:[%s4 + $0x60] sm:$0xf]
  %v12533 = vunpack.c.l.b16 %v12483
  %v12534 = vunpack.c.l.b16 %v12484
  %v12535 = vunpack.c.l.b16 %v12485
  %v12536 = vunpack.c.l.b16 %v12486
  %v12537 = vunpack.c.l.b16 %v12487
  %v12538 = vunpack.c.l.b16 %v12488
  %v12539 = vunpack.c.l.b16 %v12489
  %v12540 = vunpack.c.l.b16 %v12490
  %v12541 = vunpack.c.l.b16 %v12491
  %v12542 = vunpack.c.l.b16 %v12492
  %v12543 = vunpack.c.l.b16 %v12493
  %v12544 = vunpack.c.l.b16 %v12494
  %v12545 = vunpack.c.l.b16 %v12495
  %v12546 = vunpack.c.l.b16 %v12496
  %v12547 = vunpack.c.l.b16 %v12497
  %v12548 = vunpack.c.l.b16 %v12498
  %v12549 = vunpack.c.l.b16 %v12499
  %v12550 = vunpack.c.l.b16 %v12500
  %v12551 = vunpack.c.l.b16 %v12501
  %v12552 = vunpack.c.l.b16 %v12502
  %v12553 = vunpack.c.l.b16 %v12503
  %v12554 = vunpack.c.l.b16 %v12504
  %v12555 = vunpack.c.l.b16 %v12505
  %v12556 = vunpack.c.l.b16 %v12506
  %v12557 = vunpack.c.l.b16 %v12507
  %v12558 = vpack.c.b16 %v12534, %v12533
  %v12559 = vpack.c.b16 %v12536, %v12535
  %v12560 = vpack.c.b16 %v12538, %v12537
  %v12561 = vpack.c.b16 %v12540, %v12539
  %v12562 = vpack.c.b16 %v12542, %v12541
  %v12563 = vpack.c.b16 %v12544, %v12543
  %v12564 = vpack.c.b16 %v12546, %v12545
  %v12565 = vpack.c.b16 %v12548, %v12547
  %v12566 = vpack.c.b16 %v12550, %v12549
  %v12567 = vpack.c.b16 %v12552, %v12551
  %v12568 = vpack.c.b16 %v12554, %v12553
  %v12569 = vpack.c.b16 %v12556, %v12555
  %v12570 = vpack.c.b16 %v12557, %v12557
  %vm12571 = vcmask 531456
  %v12573 = vsel %vm12571, %v12558, 0
  %v12576 = vsel %vm12571, %v12559, 0
  %v12579 = vsel %vm12571, %v12560, 0
  %v12582 = vsel %vm12571, %v12561, 0
  %v12585 = vsel %vm12571, %v12562, 0
  %v12588 = vsel %vm12571, %v12563, 0
  %v12591 = vsel %vm12571, %v12564, 0
  %v12594 = vsel %vm12571, %v12565, 0
  %v12597 = vsel %vm12571, %v12566, 0
  %v12600 = vsel %vm12571, %v12567, 0
  %v12603 = vsel %vm12571, %v12568, 0
  %v12606 = vsel %vm12571, %v12569, 0
  %v12609 = vsel %vm12571, %v12570, 0
  %12611 = vmatprep.subr.bf16.mxu0 %v12476
  %12612 = vmatpush1.bf16.msra.mxu0 %v12475
  %12613 = vmatprep.subr.bf16.mxu0 %v12478
  %12614 = vmatpush1.bf16.msra.mxu0 %v12477
  %12615 = vmatprep.subr.bf16.mxu0 %v12480
  %12616 = vmatpush1.bf16.msra.mxu0 %v12479
  %12617 = vmatprep.subr.bf16.mxu0 %v12482
  %12618 = vmatpush1.bf16.msra.mxu0 %v12481
  %12619 = vmatprep.subr.bf16.mxu0 %v10419
  %12620 = vmatpush1.bf16.msra.mxu0 %v10419
  %12621 = vmatprep.subr.bf16.mxu0 0
  %12622 = vmatpush1.bf16.msra.mxu0 0
  %12623 = vmatprep.subr.bf16.mxu0 0
  %12624 = vmatpush1.bf16.msra.mxu0 0
  %12625 = vmatprep.subr.bf16.mxu0 0
  %12626 = vmatpush1.bf16.msra.mxu0 0
  %12627 = vmatprep.subr.bf16.mxu0 0
  %12628 = vmatpush1.bf16.msra.mxu0 0
  %12629 = vmatprep.subr.bf16.mxu0 0
  %12630 = vmatpush1.bf16.msra.mxu0 0
  %12631 = vmatprep.subr.bf16.mxu0 0
  %12632 = vmatpush1.bf16.msra.mxu0 0
  %12633 = vmatprep.subr.bf16.mxu0 0
  %12634 = vmatpush1.bf16.msra.mxu0 0
  %12635 = vmatprep.subr.bf16.mxu0 0
  %12636 = vmatpush1.bf16.msra.mxu0 0
  %12637 = vmatprep.subr.bf16.mxu0 0
  %12638 = vmatpush1.bf16.msra.mxu0 0
  %12639 = vmatprep.subr.bf16.mxu0 0
  %12640 = vmatpush1.bf16.msra.mxu0 0
  %12641 = vmatprep.subr.bf16.mxu0 0
  %12642 = vmatpush1.bf16.msra.mxu0 0
  %12643 = vmatprep.mubr.bf16.mxu0 0
  %12644 = vmatmul.mubr.bf16.gmra.mrb[0].mxu0 %v12573
  %v12645 = vpop.f32.mrb[0].mxu0
  %v12646 = vadd.f32 0.0, %v12645
  %v12647 = vpop.f32.mrb[0].mxu0
  %v12648 = vadd.f32 0.0, %v12647
  %v12649 = vpop.f32.mrb[0].mxu0
  %v12650 = vadd.f32 0.0, %v12649
  %v12651 = vpop.f32.mrb[0].mxu0
  %v12652 = vadd.f32 0.0, %v12651
  %12653 = vmatprep.mubr.bf16.mxu0 0
  %12654 = vmatmul.mubr.bf16.gmra.mrb[0].mxu0 %v12576
  %v12655 = vpop.f32.mrb[0].mxu0
  %v12656 = vadd.f32 0.0, %v12655
  %v12657 = vpop.f32.mrb[0].mxu0
  %v12658 = vadd.f32 0.0, %v12657
  %v12659 = vpop.f32.mrb[0].mxu0
  %v12660 = vadd.f32 0.0, %v12659
  %v12661 = vpop.f32.mrb[0].mxu0
  %v12662 = vadd.f32 0.0, %v12661
  %12663 = vmatprep.mubr.bf16.mxu0 0
  %12664 = vmatmul.mubr.bf16.gmra.mrb[0].mxu0 %v12579
  %v12665 = vpop.f32.mrb[0].mxu0
  %v12666 = vadd.f32 0.0, %v12665
  %v12667 = vpop.f32.mrb[0].mxu0
  %v12668 = vadd.f32 0.0, %v12667
  %v12669 = vpop.f32.mrb[0].mxu0
  %v12670 = vadd.f32 0.0, %v12669
  %v12671 = vpop.f32.mrb[0].mxu0
  %v12672 = vadd.f32 0.0, %v12671
  %12673 = vmatprep.mubr.bf16.mxu0 0
  %12674 = vmatmul.mubr.bf16.gmra.mrb[0].mxu0 %v12582
  %v12675 = vpop.f32.mrb[0].mxu0
  %v12676 = vadd.f32 0.0, %v12675
  %v12677 = vpop.f32.mrb[0].mxu0
  %v12678 = vadd.f32 0.0, %v12677
  %v12679 = vpop.f32.mrb[0].mxu0
  %v12680 = vadd.f32 0.0, %v12679
  %v12681 = vpop.f32.mrb[0].mxu0
  %v12682 = vadd.f32 0.0, %v12681
  %12683 = vmatprep.mubr.bf16.mxu0 0
  %12684 = vmatmul.mubr.bf16.gmra.mrb[0].mxu0 %v12585
  %v12685 = vpop.f32.mrb[0].mxu0
  %v12686 = vadd.f32 0.0, %v12685
  %v12687 = vpop.f32.mrb[0].mxu0
  %v12688 = vadd.f32 0.0, %v12687
  %v12689 = vpop.f32.mrb[0].mxu0
  %v12690 = vadd.f32 0.0, %v12689
  %v12691 = vpop.f32.mrb[0].mxu0
  %v12692 = vadd.f32 0.0, %v12691
  %12693 = vmatprep.mubr.bf16.mxu0 0
  %12694 = vmatmul.mubr.bf16.gmra.mrb[0].mxu0 %v12588
  %v12695 = vpop.f32.mrb[0].mxu0
  %v12696 = vadd.f32 0.0, %v12695
  %v12697 = vpop.f32.mrb[0].mxu0
  %v12698 = vadd.f32 0.0, %v12697
  %v12699 = vpop.f32.mrb[0].mxu0
  %v12700 = vadd.f32 0.0, %v12699
  %v12701 = vpop.f32.mrb[0].mxu0
  %v12702 = vadd.f32 0.0, %v12701
  %12703 = vmatprep.mubr.bf16.mxu0 0
  %12704 = vmatmul.mubr.bf16.gmra.mrb[0].mxu0 %v12591
  %v12705 = vpop.f32.mrb[0].mxu0
  %v12706 = vadd.f32 0.0, %v12705
  %v12707 = vpop.f32.mrb[0].mxu0
  %v12708 = vadd.f32 0.0, %v12707
  %v12709 = vpop.f32.mrb[0].mxu0
  %v12710 = vadd.f32 0.0, %v12709
  %v12711 = vpop.f32.mrb[0].mxu0
  %v12712 = vadd.f32 0.0, %v12711
  %12713 = vmatprep.mubr.bf16.mxu0 0
  %12714 = vmatmul.mubr.bf16.gmra.mrb[0].mxu0 %v12594
  %v12715 = vpop.f32.mrb[0].mxu0
  %v12716 = vadd.f32 0.0, %v12715
  %v12717 = vpop.f32.mrb[0].mxu0
  %v12718 = vadd.f32 0.0, %v12717
  %v12719 = vpop.f32.mrb[0].mxu0
  %v12720 = vadd.f32 0.0, %v12719
  %v12721 = vpop.f32.mrb[0].mxu0
  %v12722 = vadd.f32 0.0, %v12721
  %12723 = vmatprep.mubr.bf16.mxu0 0
  %12724 = vmatmul.mubr.bf16.gmra.mrb[0].mxu0 %v12597
  %v12725 = vpop.f32.mrb[0].mxu0
  %v12726 = vadd.f32 0.0, %v12725
  %v12727 = vpop.f32.mrb[0].mxu0
  %v12728 = vadd.f32 0.0, %v12727
  %v12729 = vpop.f32.mrb[0].mxu0
  %v12730 = vadd.f32 0.0, %v12729
  %v12731 = vpop.f32.mrb[0].mxu0
  %v12732 = vadd.f32 0.0, %v12731
  %12733 = vmatprep.mubr.bf16.mxu0 0
  %12734 = vmatmul.mubr.bf16.gmra.mrb[0].mxu0 %v12600
  %v12735 = vpop.f32.mrb[0].mxu0
  %v12736 = vadd.f32 0.0, %v12735
  %v12737 = vpop.f32.mrb[0].mxu0
  %v12738 = vadd.f32 0.0, %v12737
  %v12739 = vpop.f32.mrb[0].mxu0
  %v12740 = vadd.f32 0.0, %v12739
  %v12741 = vpop.f32.mrb[0].mxu0
  %v12742 = vadd.f32 0.0, %v12741
  %12743 = vmatprep.mubr.bf16.mxu0 0
  %12744 = vmatmul.mubr.bf16.gmra.mrb[0].mxu0 %v12603
  %v12745 = vpop.f32.mrb[0].mxu0
  %v12746 = vadd.f32 0.0, %v12745
  %v12747 = vpop.f32.mrb[0].mxu0
  %v12748 = vadd.f32 0.0, %v12747
  %v12749 = vpop.f32.mrb[0].mxu0
  %v12750 = vadd.f32 0.0, %v12749
  %v12751 = vpop.f32.mrb[0].mxu0
  %v12752 = vadd.f32 0.0, %v12751
  %12753 = vmatprep.mubr.bf16.mxu0 0
  %12754 = vmatmul.mubr.bf16.gmra.mrb[0].mxu0 %v12606
  %v12755 = vpop.f32.mrb[0].mxu0
  %v12756 = vadd.f32 0.0, %v12755
  %v12757 = vpop.f32.mrb[0].mxu0
  %v12758 = vadd.f32 0.0, %v12757
  %v12759 = vpop.f32.mrb[0].mxu0
  %v12760 = vadd.f32 0.0, %v12759
  %v12761 = vpop.f32.mrb[0].mxu0
  %v12762 = vadd.f32 0.0, %v12761
  %12763 = vmatprep.mubr.bf16.mxu0 0
  %12764 = vmatmul.mubr.bf16.gmra.mrb[0].mxu0 %v12609
  %v12765 = vpop.f32.mrb[0].mxu0
  %v12766 = vadd.f32 0.0, %v12765
  %v12767 = vpop.f32.mrb[0].mxu0
  %v12768 = vadd.f32 0.0, %v12767
  %v12769 = vpop.f32.mrb[0].mxu0
  %v12770 = vpop.f32.mrb[0].mxu0
  %12771 = vdwg.mxu0
  %v12772 = vmax.f32 %v12646, 0.0
  %v12773 = vmax.f32 %v12648, 0.0
  %v12774 = vmax.f32 %v12650, 0.0
  %v12775 = vmax.f32 %v12652, 0.0
  %v12776 = vmax.f32 %v12656, 0.0
  %v12777 = vmax.f32 %v12658, 0.0
  %v12778 = vmax.f32 %v12660, 0.0
  %v12779 = vmax.f32 %v12662, 0.0
  %v12780 = vmax.f32 %v12666, 0.0
  %v12781 = vmax.f32 %v12668, 0.0
  %v12782 = vmax.f32 %v12670, 0.0
  %v12783 = vmax.f32 %v12672, 0.0
  %v12784 = vmax.f32 %v12676, 0.0
  %v12785 = vmax.f32 %v12678, 0.0
  %v12786 = vmax.f32 %v12680, 0.0
  %v12787 = vmax.f32 %v12682, 0.0
  %v12788 = vmax.f32 %v12686, 0.0
  %v12789 = vmax.f32 %v12688, 0.0
  %v12790 = vmax.f32 %v12690, 0.0
  %v12791 = vmax.f32 %v12692, 0.0
  %v12792 = vmax.f32 %v12696, 0.0
  %v12793 = vmax.f32 %v12698, 0.0
  %v12794 = vmax.f32 %v12700, 0.0
  %v12795 = vmax.f32 %v12702, 0.0
  %v12796 = vmax.f32 %v12706, 0.0
  %v12797 = vmax.f32 %v12708, 0.0
  %v12798 = vmax.f32 %v12710, 0.0
  %v12799 = vmax.f32 %v12712, 0.0
  %v12800 = vmax.f32 %v12716, 0.0
  %v12801 = vmax.f32 %v12718, 0.0
  %v12802 = vmax.f32 %v12720, 0.0
  %v12803 = vmax.f32 %v12722, 0.0
  %v12804 = vmax.f32 %v12726, 0.0
  %v12805 = vmax.f32 %v12728, 0.0
  %v12806 = vmax.f32 %v12730, 0.0
  %v12807 = vmax.f32 %v12732, 0.0
  %v12808 = vmax.f32 %v12736, 0.0
  %v12809 = vmax.f32 %v12738, 0.0
  %v12810 = vmax.f32 %v12740, 0.0
  %v12811 = vmax.f32 %v12742, 0.0
  %v12812 = vmax.f32 %v12746, 0.0
  %v12813 = vmax.f32 %v12748, 0.0
  %v12814 = vmax.f32 %v12750, 0.0
  %v12815 = vmax.f32 %v12752, 0.0
  %v12816 = vmax.f32 %v12756, 0.0
  %v12817 = vmax.f32 %v12758, 0.0
  %v12818 = vmax.f32 %v12760, 0.0
  %v12819 = vmax.f32 %v12762, 0.0
  %v12820 = vmax.f32 %v12766, 0.0
  %v12821 = vmax.f32 %v12768, 0.0
  %v12822 = vpack.c.bf16 %v12774, %v12772
  %v12823 = vpack.c.bf16 %v12775, %v12773
  %v12824 = vpack.c.bf16 %v12778, %v12776
  %v12825 = vpack.c.bf16 %v12779, %v12777
  %v12826 = vpack.c.bf16 %v12782, %v12780
  %v12827 = vpack.c.bf16 %v12783, %v12781
  %v12828 = vpack.c.bf16 %v12786, %v12784
  %v12829 = vpack.c.bf16 %v12787, %v12785
  %v12830 = vpack.c.bf16 %v12790, %v12788
  %v12831 = vpack.c.bf16 %v12791, %v12789
  %v12832 = vpack.c.bf16 %v12794, %v12792
  %v12833 = vpack.c.bf16 %v12795, %v12793
  %v12834 = vpack.c.bf16 %v12798, %v12796
  %v12835 = vpack.c.bf16 %v12799, %v12797
  %v12836 = vpack.c.bf16 %v12802, %v12800
  %v12837 = vpack.c.bf16 %v12803, %v12801
  %v12838 = vpack.c.bf16 %v12806, %v12804
  %v12839 = vpack.c.bf16 %v12807, %v12805
  %v12840 = vpack.c.bf16 %v12810, %v12808
  %v12841 = vpack.c.bf16 %v12811, %v12809
  %v12842 = vpack.c.bf16 %v12814, %v12812
  %v12843 = vpack.c.bf16 %v12815, %v12813
  %v12844 = vpack.c.bf16 %v12818, %v12816
  %v12845 = vpack.c.bf16 %v12819, %v12817
  %v12846 = vpack.c.bf16 1.0, %v12820
  %v12847 = vpack.c.bf16 1.0, %v12821
  %v12848 = vld [vmem:[%s5] sm:$0xff]
  %v12849 = vld [vmem:[%s5 + $0x8] sm:$0x11]
  %v12852 = vunpack.c.l.b16 %v12848
  %v12853 = vunpack.c.h.b16 %v12848
  %v12854 = vunpack.c.l.b16 %v12849
  %v12855 = vunpack.c.h.b16 %v12849
  %v12856 = vpack.c.b16 %v12854, %v12852
  %v12857 = vpack.c.b16 %v12855, %v12853
  %vm12859 = vcmask 596992
  %v12861 = vsel %vm12859, %v12857, 0
  %vm12863 = vcmask 1043456
  %vm12864 = vcmask 1044480
  %v12865 = vsel %vm12863, 4294967295, 65535
  %v12866 = vsel %vm12864, %v12865, 0
  %v12868 = vand.u32 %v12846, %v12866
  %v12871 = vand.u32 %v12847, %v12866
  %12873 = vmatprep.subr.bf16.mxu0 %v12823
  %12874 = vmatpush1.bf16.msra.mxu0 %v12822
  %12875 = vmatprep.subr.bf16.mxu0 %v12825
  %12876 = vmatpush1.bf16.msra.mxu0 %v12824
  %12877 = vmatprep.subr.bf16.mxu0 %v12827
  %12878 = vmatpush1.bf16.msra.mxu0 %v12826
  %12879 = vmatprep.subr.bf16.mxu0 %v12829
  %12880 = vmatpush1.bf16.msra.mxu0 %v12828
  %12881 = vmatprep.subr.bf16.mxu0 %v12831
  %12882 = vmatpush1.bf16.msra.mxu0 %v12830
  %12883 = vmatprep.subr.bf16.mxu0 %v12833
  %12884 = vmatpush1.bf16.msra.mxu0 %v12832
  %12885 = vmatprep.subr.bf16.mxu0 %v12835
  %12886 = vmatpush1.bf16.msra.mxu0 %v12834
  %12887 = vmatprep.subr.bf16.mxu0 %v12837
  %12888 = vmatpush1.bf16.msra.mxu0 %v12836
  %12889 = vmatprep.subr.bf16.mxu0 %v12839
  %12890 = vmatpush1.bf16.msra.mxu0 %v12838
  %12891 = vmatprep.subr.bf16.mxu0 %v12841
  %12892 = vmatpush1.bf16.msra.mxu0 %v12840
  %12893 = vmatprep.subr.bf16.mxu0 %v12843
  %12894 = vmatpush1.bf16.msra.mxu0 %v12842
  %12895 = vmatprep.subr.bf16.mxu0 %v12845
  %12896 = vmatpush1.bf16.msra.mxu0 %v12844
  %12897 = vmatprep.subr.bf16.mxu0 %v12871
  %12898 = vmatpush1.bf16.msra.mxu0 %v12868
  %12899 = vmatprep.subr.bf16.mxu0 0
  %12900 = vmatpush1.bf16.msra.mxu0 0
  %12901 = vmatprep.subr.bf16.mxu0 0
  %12902 = vmatpush1.bf16.msra.mxu0 0
  %12903 = vmatprep.subr.bf16.mxu0 0
  %12904 = vmatpush1.bf16.msra.mxu0 0
  %12905 = vmatprep.mubr.bf16.mxu0 %v12861
  %12906 = vmatmul.mubr.bf16.gmra.mrb[0].mxu0 %v12856
  %v12907 = vpop.f32.mrb[0].mxu0
  %v12908 = vadd.f32 0.0, %v12907
  %v12909 = vpop.f32.mrb[0].mxu0
  %v12910 = vadd.f32 0.0, %v12909
  %v12911 = vpop.f32.mrb[0].mxu0
  %v12912 = vadd.f32 0.0, %v12911
  %v12913 = vpop.f32.mrb[0].mxu0
  %v12914 = vadd.f32 0.0, %v12913
  %12915 = vdwg.mxu0
  %v12916 = vmax.f32 %v12908, 0.0
  %v12917 = vmax.f32 %v12912, 0.0
  %v12918 = vmax.f32 %v12910, 0.0
  %v12919 = vmax.f32 %v12914, 0.0
  %v12922 = vrot.slane %v12918, 6
  %v12923 = vrot.slane %v12919, 6
  %v12924 = vsel %vm4210, %v12922, %v12923
  %v12927 = vsel %vm4210, %v12917, %v12922
  %v12928 = vsel %vm12863, %v12924, 1.0
  %v12929 = vpack.c.bf16 %v12927, %v12916
  %v12930 = vpack.c.bf16 %v12928, %v12928
  %v12931 = vld [vmem:[%s6] sm:$0x1]
  %vm12932 = vcmask 171008
  %v12934 = vsel %vm12932, %v12931, 0
  %v12937 = vand.u32 %v12930, %v4213
  %12939 = vmatprep.subr.bf16.mxu0 0
  %12940 = vmatpush1.bf16.msra.mxu0 %v12929
  %12941 = vmatprep.subr.bf16.mxu0 0
  %12942 = vmatpush1.bf16.msra.mxu0 %v12937
  %12943 = vmatprep.subr.bf16.mxu0 0
  %12944 = vmatpush1.bf16.msra.mxu0 0
  %12945 = vmatprep.subr.bf16.mxu0 0
  %12946 = vmatpush1.bf16.msra.mxu0 0
  %12947 = vmatprep.subr.bf16.mxu0 0
  %12948 = vmatpush1.bf16.msra.mxu0 0
  %12949 = vmatprep.subr.bf16.mxu0 0
  %12950 = vmatpush1.bf16.msra.mxu0 0
  %12951 = vmatprep.subr.bf16.mxu0 0
  %12952 = vmatpush1.bf16.msra.mxu0 0
  %12953 = vmatprep.subr.bf16.mxu0 0
  %12954 = vmatpush1.bf16.msra.mxu0 0
  %12955 = vmatprep.subr.bf16.mxu0 0
  %12956 = vmatpush1.bf16.msra.mxu0 0
  %12957 = vmatprep.subr.bf16.mxu0 0
  %12958 = vmatpush1.bf16.msra.mxu0 0
  %12959 = vmatprep.subr.bf16.mxu0 0
  %12960 = vmatpush1.bf16.msra.mxu0 0
  %12961 = vmatprep.subr.bf16.mxu0 0
  %12962 = vmatpush1.bf16.msra.mxu0 0
  %12963 = vmatprep.subr.bf16.mxu0 0
  %12964 = vmatpush1.bf16.msra.mxu0 0
  %12965 = vmatprep.subr.bf16.mxu0 0
  %12966 = vmatpush1.bf16.msra.mxu0 0
  %12967 = vmatprep.subr.bf16.mxu0 0
  %12968 = vmatpush1.bf16.msra.mxu0 0
  %12969 = vmatprep.subr.bf16.mxu0 0
  %12970 = vmatpush1.bf16.msra.mxu0 0
  %12971 = vmatprep.mubr.bf16.mxu0 0
  %12972 = vmatmul.mubr.bf16.gmra.mrb[0].mxu0 %v12934
  %v12973 = vpop.f32.mrb[0].mxu0
  %v12974 = vadd.f32 0.0, %v12973
  %v12975 = vpop.f32.mrb[0].mxu0
  %v12976 = vpop.f32.mrb[0].mxu0
  %v12977 = vpop.f32.mrb[0].mxu0
  %12978 = vdwg.mxu0
  %v12981 = vrot.slane %v12908, 6
  %v12982 = vrot.slane %v12912, 6
  %v12983 = vsel %vm4210, %v12981, %v12982
  %v12988 = vrot.slane %v12910, 4
  %v12989 = vrot.slane %v12914, 4
  %v12990 = vsel %vm12863, %v12988, %v12989
  %v12993 = vsel %vm4210, %v12974, %v12981
  %v12994 = vsel %vm12863, %v12983, %v12988
  %12995 = vst [vmem:[%s7] sm:$0xff] %v12993
  %12996 = vst [vmem:[%s7 + $0x8] sm:$0xff] %v12994
  %12997 = vst [vmem:[%s7 + $0x10] sm:$0x3f] %v12990
  // Predicated region
  $region30: #{_lambda_.1} parent=0 // pred_check
    _
  $region31: #{_lambda_.1} parent=0 // pred_check_branch
    %12999 = sbr.rel (0) target = $region33
  $region32: #{_lambda_.1} parent=0 // pred_region
    _
  $region33: #{_lambda_.1} parent=0 // pred_fallthru
    _
  // Predicated region
  $region34: #{_lambda_.1} parent=0 // pred_check
    _
  $region35: #{_lambda_.1} parent=0 // pred_check_branch
    %13001 = sbr.rel (0) target = $region37
  $region36: #{_lambda_.1} parent=0 // pred_region
    _
  $region37: #{_lambda_.1} parent=0 // pred_fallthru
    _

</llo_original>
